<compile_context>
chip_gen: v7x
topology: tpu7x:2x2x1
jax: 0.10.0
libtpu: 0.0.40
codegen_flags: <defaults>
</compile_context>

<pallas_src>
import functools

import jax
import jax.numpy as jnp
from jax.experimental import pallas as pl
from jax.experimental.pallas import tpu as pltpu


# ----------------------------------------------------------------------------
# Tiled Pallas GEMM kernel:  out = act(A @ B + bias),  A/B bf16, accum f32
# ----------------------------------------------------------------------------
def _mm_kernel(a_ref, b_ref, bias_ref, o_ref, acc_ref, *, act):
    k = pl.program_id(2)

    @pl.when(k == 0)
    def _():
        acc_ref[...] = jnp.zeros_like(acc_ref)

    acc_ref[...] += jnp.dot(a_ref[...], b_ref[...],
                            preferred_element_type=jnp.float32)

    @pl.when(k == pl.num_programs(2) - 1)
    def _():
        acc = acc_ref[...] + bias_ref[...]
        if act == "relu":
            acc = jnp.maximum(acc, 0.0)
        o_ref[...] = acc


def _round_up(x, m):
    return ((x + m - 1) // m) * m


def _pick_tile(dim, unit, cap):
    """Pad `dim` to a multiple of `unit`; pick the largest tile that is a
    multiple of `unit`, divides the padded dim, and is <= cap."""
    dp = _round_up(max(dim, unit), unit)
    best = unit
    t = unit
    limit = min(dp, cap)
    while t <= limit:
        if dp % t == 0:
            best = t
        t += unit
    return dp, best


@functools.lru_cache(maxsize=None)
def _get_mm(Mp, Kp, Np, tm, tk, tn, act):
    grid = (Mp // tm, Np // tn, Kp // tk)
    return pl.pallas_call(
        functools.partial(_mm_kernel, act=act),
        out_shape=jax.ShapeDtypeStruct((Mp, Np), jnp.float32),
        grid_spec=pltpu.PrefetchScalarGridSpec(
            num_scalar_prefetch=0,
            grid=grid,
            in_specs=[
                pl.BlockSpec((tm, tk), lambda i, j, k: (i, k)),
                pl.BlockSpec((tk, tn), lambda i, j, k: (k, j)),
                pl.BlockSpec((1, tn), lambda i, j, k: (0, j)),
            ],
            out_specs=pl.BlockSpec((tm, tn), lambda i, j, k: (i, j)),
            scratch_shapes=[pltpu.VMEM((tm, tn), jnp.float32)],
        ),
        compiler_params=pltpu.CompilerParams(
            dimension_semantics=("parallel", "parallel", "arbitrary")),
    )


def matmul_bias_act(a, wm_p, bias_p, act="none"):
    """act(a @ W + b).  `wm_p` is the pre-padded bf16 weight matrix (Kp, Np),
    `bias_p` the pre-padded f32 bias (1, Np).  Returns (M, Np) f32."""
    M, K = a.shape
    Kp, Np = wm_p.shape
    Mp, tm = _pick_tile(M, 8, 256)
    _, tk = _pick_tile(Kp, 128, 1024)
    _, tn = _pick_tile(Np, 128, 256)
    a_p = a.astype(jnp.bfloat16)
    if (Mp, Kp) != (M, K):
        a_p = jnp.pad(a_p, ((0, Mp - M), (0, Kp - K)))
    out = _get_mm(Mp, Kp, Np, tm, tk, tn, act)(a_p, wm_p, bias_p)
    return out[:M]


# ----------------------------------------------------------------------------
# Convolution helpers (NHWC internal layout, im2col glue + Pallas GEMM)
# ----------------------------------------------------------------------------
def _im2col_nhwc(x, kh, kw, stride, padding):
    """x: (N,H,W,C) -> patches (N*Ho*Wo, kh*kw*C), column order (kh, kw, C)."""
    N, H, W, C = x.shape
    Ho = (H + 2 * padding - kh) // stride + 1
    Wo = (W + 2 * padding - kw) // stride + 1
    xp = jnp.pad(x, ((0, 0), (padding, padding), (padding, padding), (0, 0)))
    cols = []
    for i in range(kh):
        for j in range(kw):
            cols.append(xp[:, i:i + (Ho - 1) * stride + 1:stride,
                              j:j + (Wo - 1) * stride + 1:stride, :])
    pat = jnp.concatenate(cols, axis=-1)            # (N, Ho, Wo, kh*kw*C)
    return pat.reshape(N * Ho * Wo, kh * kw * C), Ho, Wo


def conv2d(x, layer, stride=1, padding=0, act="none"):
    """PyTorch-semantics Conv2d on NHWC activations."""
    N = x.shape[0]
    kh, kw, cout = layer["kh"], layer["kw"], layer["cout"]
    pat, Ho, Wo = _im2col_nhwc(x, kh, kw, stride, padding)
    out = matmul_bias_act(pat, layer["wm"], layer["bias"], act)
    return out[:, :cout].reshape(N, Ho, Wo, cout)


def conv_transpose2d(x, layer, act="none"):
    """PyTorch ConvTranspose2d via zero-insertion + equivalent conv (NHWC)."""
    N, H, W, C = x.shape
    stride, padding, kh = layer["stride"], layer["padding"], layer["kh"]
    xd = jnp.zeros((N, (H - 1) * stride + 1, (W - 1) * stride + 1, C), x.dtype)
    xd = xd.at[:, ::stride, ::stride, :].set(x)
    return conv2d(xd, layer, stride=1, padding=kh - 1 - padding, act=act)


# ----------------------------------------------------------------------------
# NestedUNet forward (mirrors the PyTorch module)
# ----------------------------------------------------------------------------
def nested_unet_forward(x_nchw, p):
    x = jnp.transpose(x_nchw, (0, 2, 3, 1))        # NCHW -> NHWC (once)

    # Down path: strided conv + ReLU, then ResBlock (conv3x3 + ReLU)
    x0_0 = conv2d(conv2d(x, p["Down0_0"], stride=2, padding=1, act="relu"),
                  p["conv0_0"], padding=1, act="relu")
    x0_1 = conv2d(conv2d(x0_0, p["Down0_1"], stride=2, padding=1, act="relu"),
                  p["conv0_1"], padding=1, act="relu")
    x0_2 = conv2d(conv2d(x0_1, p["Down0_2"], stride=2, padding=1, act="relu"),
                  p["conv0_2"], padding=1, act="relu")

    # Up path
    up0_1 = conv_transpose2d(x0_2, p["Up1"], act="relu")
    h, w = x0_1.shape[1], x0_1.shape[2]
    up0_1 = up0_1[:, :h, :w, :]                    # crop like [:, :, 0:h, 0:w]

    up0_2 = conv_transpose2d(
        conv2d(jnp.concatenate([up0_1, x0_1], axis=-1), p["conv0_3"],
               padding=1, act="relu"),
        p["Up2"], act="relu")

    up0_3 = conv_transpose2d(
        conv2d(jnp.concatenate([up0_2, x0_0], axis=-1), p["conv0_4"],
               padding=1, act="relu"),
        p["Up3"], act="relu")

    return jnp.transpose(up0_3, (0, 3, 1, 2))      # NHWC -> NCHW (once)


# ----------------------------------------------------------------------------
# Parameter init (PyTorch layouts) + one-time GEMM-ready prep (pad/reshape)
# ----------------------------------------------------------------------------
def init_params(seed=0):
    key = jax.random.PRNGKey(seed)

    def nxt():
        nonlocal key
        key, sub = jax.random.split(key)
        return sub

    def conv(o, i, k):                              # Conv2d weight (O, I, kh, kw)
        return {"w": jax.random.normal(nxt(), (o, i, k, k), jnp.float32) * 0.05,
                "b": jax.random.normal(nxt(), (o,), jnp.float32) * 0.01}

    def deconv(i, o, k):                            # ConvTranspose2d weight (I, O, kh, kw)
        return {"w": jax.random.normal(nxt(), (i, o, k, k), jnp.float32) * 0.05,
                "b": jax.random.normal(nxt(), (o,), jnp.float32) * 0.01}

    nf = 64
    return {
        "Down0_0": conv(nf, nf, 3), "conv0_0": conv(nf, nf, 3),
        "Down0_1": conv(nf, nf, 3), "conv0_1": conv(nf, nf, 3),
        "Down0_2": conv(nf, nf, 3), "conv0_2": conv(nf, nf, 3),
        "Up1": deconv(nf, nf, 4),
        "conv0_3": conv(nf, 2 * nf, 3),
        "Up2": deconv(nf, nf, 4),
        "conv0_4": conv(nf, 2 * nf, 3),
        "Up3": deconv(nf, nf, 4),
    }


def _prep_conv(w, b):
    """Conv2d weight (Cout, Cin, kh, kw) -> padded bf16 GEMM matrix (Kp, Np)
    with column order matching the NHWC im2col (kh, kw, Cin)."""
    cout, cin, kh, kw = w.shape
    K = cin * kh * kw
    Kp = _round_up(K, 128)
    Np = _round_up(cout, 128)
    wm = jnp.transpose(w, (2, 3, 1, 0)).reshape(K, cout)
    wm_p = jnp.zeros((Kp, Np), jnp.bfloat16).at[:K, :cout].set(
        wm.astype(jnp.bfloat16))
    b_p = jnp.zeros((1, Np), jnp.float32).at[0, :cout].set(
        b.astype(jnp.float32))
    return {"wm": wm_p, "bias": b_p, "kh": kh, "kw": kw,
            "cin": cin, "cout": cout}


def prep_params(raw):
    p = {}
    for name in ("Down0_0", "conv0_0", "Down0_1", "conv0_1",
                 "Down0_2", "conv0_2", "conv0_3", "conv0_4"):
        p[name] = _prep_conv(raw[name]["w"], raw[name]["b"])
    for name in ("Up1", "Up2", "Up3"):
        w = raw[name]["w"]                          # (Cin, Cout, kh, kw)
        weq = jnp.transpose(jnp.flip(w, axis=(2, 3)), (1, 0, 2, 3))
        lay = _prep_conv(weq, raw[name]["b"])
        lay["stride"] = 2
        lay["padding"] = 1
        p[name] = lay
    return p


# ----------------------------------------------------------------------------
if __name__ == "__main__":
    N, C_in, H, W = 2, 64, 16, 16                   # NestedUNet takes nf=64 ch
    key = jax.random.PRNGKey(0)
    x = jax.random.normal(key, (N, C_in, H, W), jnp.float32) * 0.1

    params = prep_params(init_params(seed=0))
    fwd = jax.jit(lambda inp: nested_unet_forward(inp, params))

    out = jax.block_until_ready(fwd(x))
    assert out.shape == (N, 64, H, W), out.shape
    assert bool(jnp.all(jnp.isfinite(out)))
    print("KERNEL_OK")
</pallas_src>

<mosaic_0001>
module attributes {stable_mosaic.version = 11 : i64} {
  func.func @_mm_kernel(%arg0: i32, %arg1: i32, %arg2: i32, %arg3: memref<128x640xbf16, #tpu.memory_space<vmem>>, %arg4: memref<640x128xbf16, #tpu.memory_space<vmem>>, %arg5: memref<1x128xf32, #tpu.memory_space<vmem>>, %arg6: memref<128x128xf32, #tpu.memory_space<vmem>>, %arg7: memref<128x128xf32, #tpu.memory_space<vmem>>) attributes {dimension_semantics = [#tpu.dimension_semantics<parallel>, #tpu.dimension_semantics<parallel>, #tpu.dimension_semantics<arbitrary>], iteration_bounds = array<i64: 1, 1, 1>, scalar_prefetch = 0 : i64, scratch_operands = 1 : i64, tpu.core_type = #tpu.core_type<tc>, window_params = [{transform_indices = @transform_0, window_bounds = array<i64: 128, 640>}, {transform_indices = @transform_1, window_bounds = array<i64: 640, 128>}, {transform_indices = @transform_2, window_bounds = array<i64: 1, 128>}, {transform_indices = @transform_3, window_bounds = array<i64: 128, 128>}]} {
    %c0_i32 = arith.constant 0 : i32
    %0 = arith.cmpi eq, %arg2, %c0_i32 : i32
    %1 = arith.extui %0 : i1 to i32
    %c0_i32_0 = arith.constant 0 : i32
    %2 = arith.cmpi ne, %1, %c0_i32_0 : i32
    scf.if %2 {
      %cst_10 = arith.constant 0.000000e+00 : f32
      %12 = vector.broadcast %cst_10 : f32 to vector<128x128xf32>
      %c0_11 = arith.constant 0 : index
      %c0_12 = arith.constant 0 : index
      %13 = vector.load %arg7[%c0_11, %c0_12] : memref<128x128xf32, #tpu.memory_space<vmem>>, vector<128x128xf32>
      tpu.vector_store %arg7[%c0_11, %c0_12], %12 {strides = array<i32>} : memref<128x128xf32, #tpu.memory_space<vmem>>, vector<128x128xf32>,
    } else {
    }
    %c0 = arith.constant 0 : index
    %c0_1 = arith.constant 0 : index
    %3 = vector.load %arg7[%c0, %c0_1] : memref<128x128xf32, #tpu.memory_space<vmem>>, vector<128x128xf32>
    %c0_2 = arith.constant 0 : index
    %c0_3 = arith.constant 0 : index
    %4 = vector.load %arg3[%c0_2, %c0_3] : memref<128x640xbf16, #tpu.memory_space<vmem>>, vector<128x640xbf16>
    %c0_4 = arith.constant 0 : index
    %c0_5 = arith.constant 0 : index
    %5 = vector.load %arg4[%c0_4, %c0_5] : memref<640x128xbf16, #tpu.memory_space<vmem>>, vector<640x128xbf16>
    %cst = arith.constant dense<0.000000e+00> : vector<128x128xf32>
    %6 = tpu.matmul %4, %5, %cst {dimension_numbers = #tpu.dot_dimension_numbers<[1], [0], [0], [1], [0, 0, 1, 1], [], []>} : vector<128x640xbf16>, vector<640x128xbf16>, vector<128x128xf32> -> vector<128x128xf32>
    %7 = arith.addf %3, %6 : vector<128x128xf32>
    %c0_6 = arith.constant 0 : index
    %c0_7 = arith.constant 0 : index
    %8 = vector.load %arg7[%c0_6, %c0_7] : memref<128x128xf32, #tpu.memory_space<vmem>>, vector<128x128xf32>
    tpu.vector_store %arg7[%c0_6, %c0_7], %7 {strides = array<i32>} : memref<128x128xf32, #tpu.memory_space<vmem>>, vector<128x128xf32>,
    %c0_i32_8 = arith.constant 0 : i32
    %9 = arith.cmpi eq, %arg2, %c0_i32_8 : i32
    %10 = arith.extui %9 : i1 to i32
    %c0_i32_9 = arith.constant 0 : i32
    %11 = arith.cmpi ne, %10, %c0_i32_9 : i32
    scf.if %11 {
      %c0_10 = arith.constant 0 : index
      %c0_11 = arith.constant 0 : index
      %12 = vector.load %arg7[%c0_10, %c0_11] : memref<128x128xf32, #tpu.memory_space<vmem>>, vector<128x128xf32>
      %c0_12 = arith.constant 0 : index
      %c0_13 = arith.constant 0 : index
      %13 = vector.load %arg5[%c0_12, %c0_13] : memref<1x128xf32, #tpu.memory_space<vmem>>, vector<1x128xf32>
      %14 = vector.broadcast %13 : vector<1x128xf32> to vector<128x128xf32>
      %15 = arith.addf %12, %14 : vector<128x128xf32>
      %cst_14 = arith.constant 0.000000e+00 : f32
      %16 = vector.broadcast %cst_14 : f32 to vector<128x128xf32>
      %17 = arith.maximumf %15, %16 : vector<128x128xf32>
      %c0_15 = arith.constant 0 : index
      %c0_16 = arith.constant 0 : index
      %18 = vector.load %arg6[%c0_15, %c0_16] : memref<128x128xf32, #tpu.memory_space<vmem>>, vector<128x128xf32>
      tpu.vector_store %arg6[%c0_15, %c0_16], %17 {strides = array<i32>} : memref<128x128xf32, #tpu.memory_space<vmem>>, vector<128x128xf32>,
    } else {
    }
    return
  }
  func.func @transform_0(%arg0: i32, %arg1: i32, %arg2: i32) -> (i32, i32) {
    %c0_i32 = arith.constant 0 : i32
    return %arg0, %arg2 : i32, i32
  }
  func.func @transform_1(%arg0: i32, %arg1: i32, %arg2: i32) -> (i32, i32) {
    %c0_i32 = arith.constant 0 : i32
    return %arg2, %arg1 : i32, i32
  }
  func.func @transform_2(%arg0: i32, %arg1: i32, %arg2: i32) -> (i32, i32) {
    %c0_i32 = arith.constant 0 : i32
    %c0_i32_0 = arith.constant 0 : i32
    return %c0_i32, %arg1 : i32, i32
  }
  func.func @transform_3(%arg0: i32, %arg1: i32, %arg2: i32) -> (i32, i32) {
    %c0_i32 = arith.constant 0 : i32
    return %arg0, %arg1 : i32, i32
  }
}

module attributes {stable_mosaic.version = 11 : i64} {
  func.func @_mm_kernel(%arg0: i32, %arg1: i32, %arg2: i32, %arg3: memref<32x640xbf16, #tpu.memory_space<vmem>>, %arg4: memref<640x128xbf16, #tpu.memory_space<vmem>>, %arg5: memref<1x128xf32, #tpu.memory_space<vmem>>, %arg6: memref<32x128xf32, #tpu.memory_space<vmem>>, %arg7: memref<32x128xf32, #tpu.memory_space<vmem>>) attributes {dimension_semantics = [#tpu.dimension_semantics<parallel>, #tpu.dimension_semantics<parallel>, #tpu.dimension_semantics<arbitrary>], iteration_bounds = array<i64: 1, 1, 1>, scalar_prefetch = 0 : i64, scratch_operands = 1 : i64, tpu.core_type = #tpu.core_type<tc>, window_params = [{transform_indices = @transform_0, window_bounds = array<i64: 32, 640>}, {transform_indices = @transform_1, window_bounds = array<i64: 640, 128>}, {transform_indices = @transform_2, window_bounds = array<i64: 1, 128>}, {transform_indices = @transform_3, window_bounds = array<i64: 32, 128>}]} {
    %c0_i32 = arith.constant 0 : i32
    %0 = arith.cmpi eq, %arg2, %c0_i32 : i32
    %1 = arith.extui %0 : i1 to i32
    %c0_i32_0 = arith.constant 0 : i32
    %2 = arith.cmpi ne, %1, %c0_i32_0 : i32
    scf.if %2 {
      %cst_10 = arith.constant 0.000000e+00 : f32
      %12 = vector.broadcast %cst_10 : f32 to vector<32x128xf32>
      %c0_11 = arith.constant 0 : index
      %c0_12 = arith.constant 0 : index
      %13 = vector.load %arg7[%c0_11, %c0_12] : memref<32x128xf32, #tpu.memory_space<vmem>>, vector<32x128xf32>
      tpu.vector_store %arg7[%c0_11, %c0_12], %12 {strides = array<i32>} : memref<32x128xf32, #tpu.memory_space<vmem>>, vector<32x128xf32>,
    } else {
    }
    %c0 = arith.constant 0 : index
    %c0_1 = arith.constant 0 : index
    %3 = vector.load %arg7[%c0, %c0_1] : memref<32x128xf32, #tpu.memory_space<vmem>>, vector<32x128xf32>
    %c0_2 = arith.constant 0 : index
    %c0_3 = arith.constant 0 : index
    %4 = vector.load %arg3[%c0_2, %c0_3] : memref<32x640xbf16, #tpu.memory_space<vmem>>, vector<32x640xbf16>
    %c0_4 = arith.constant 0 : index
    %c0_5 = arith.constant 0 : index
    %5 = vector.load %arg4[%c0_4, %c0_5] : memref<640x128xbf16, #tpu.memory_space<vmem>>, vector<640x128xbf16>
    %cst = arith.constant dense<0.000000e+00> : vector<32x128xf32>
    %6 = tpu.matmul %4, %5, %cst {dimension_numbers = #tpu.dot_dimension_numbers<[1], [0], [0], [1], [0, 0, 1, 1], [], []>} : vector<32x640xbf16>, vector<640x128xbf16>, vector<32x128xf32> -> vector<32x128xf32>
    %7 = arith.addf %3, %6 : vector<32x128xf32>
    %c0_6 = arith.constant 0 : index
    %c0_7 = arith.constant 0 : index
    %8 = vector.load %arg7[%c0_6, %c0_7] : memref<32x128xf32, #tpu.memory_space<vmem>>, vector<32x128xf32>
    tpu.vector_store %arg7[%c0_6, %c0_7], %7 {strides = array<i32>} : memref<32x128xf32, #tpu.memory_space<vmem>>, vector<32x128xf32>,
    %c0_i32_8 = arith.constant 0 : i32
    %9 = arith.cmpi eq, %arg2, %c0_i32_8 : i32
    %10 = arith.extui %9 : i1 to i32
    %c0_i32_9 = arith.constant 0 : i32
    %11 = arith.cmpi ne, %10, %c0_i32_9 : i32
    scf.if %11 {
      %c0_10 = arith.constant 0 : index
      %c0_11 = arith.constant 0 : index
      %12 = vector.load %arg7[%c0_10, %c0_11] : memref<32x128xf32, #tpu.memory_space<vmem>>, vector<32x128xf32>
      %c0_12 = arith.constant 0 : index
      %c0_13 = arith.constant 0 : index
      %13 = vector.load %arg5[%c0_12, %c0_13] : memref<1x128xf32, #tpu.memory_space<vmem>>, vector<1x128xf32>
      %14 = vector.broadcast %13 : vector<1x128xf32> to vector<32x128xf32>
      %15 = arith.addf %12, %14 : vector<32x128xf32>
      %cst_14 = arith.constant 0.000000e+00 : f32
      %16 = vector.broadcast %cst_14 : f32 to vector<32x128xf32>
      %17 = arith.maximumf %15, %16 : vector<32x128xf32>
      %c0_15 = arith.constant 0 : index
      %c0_16 = arith.constant 0 : index
      %18 = vector.load %arg6[%c0_15, %c0_16] : memref<32x128xf32, #tpu.memory_space<vmem>>, vector<32x128xf32>
      tpu.vector_store %arg6[%c0_15, %c0_16], %17 {strides = array<i32>} : memref<32x128xf32, #tpu.memory_space<vmem>>, vector<32x128xf32>,
    } else {
    }
    return
  }
  func.func @transform_0(%arg0: i32, %arg1: i32, %arg2: i32) -> (i32, i32) {
    %c0_i32 = arith.constant 0 : i32
    return %arg0, %arg2 : i32, i32
  }
  func.func @transform_1(%arg0: i32, %arg1: i32, %arg2: i32) -> (i32, i32) {
    %c0_i32 = arith.constant 0 : i32
    return %arg2, %arg1 : i32, i32
  }
  func.func @transform_2(%arg0: i32, %arg1: i32, %arg2: i32) -> (i32, i32) {
    %c0_i32 = arith.constant 0 : i32
    %c0_i32_0 = arith.constant 0 : i32
    return %c0_i32, %arg1 : i32, i32
  }
  func.func @transform_3(%arg0: i32, %arg1: i32, %arg2: i32) -> (i32, i32) {
    %c0_i32 = arith.constant 0 : i32
    return %arg0, %arg1 : i32, i32
  }
}

module attributes {stable_mosaic.version = 11 : i64} {
  func.func @_mm_kernel(%arg0: i32, %arg1: i32, %arg2: i32, %arg3: memref<8x640xbf16, #tpu.memory_space<vmem>>, %arg4: memref<640x128xbf16, #tpu.memory_space<vmem>>, %arg5: memref<1x128xf32, #tpu.memory_space<vmem>>, %arg6: memref<8x128xf32, #tpu.memory_space<vmem>>, %arg7: memref<8x128xf32, #tpu.memory_space<vmem>>) attributes {dimension_semantics = [#tpu.dimension_semantics<parallel>, #tpu.dimension_semantics<parallel>, #tpu.dimension_semantics<arbitrary>], iteration_bounds = array<i64: 1, 1, 1>, scalar_prefetch = 0 : i64, scratch_operands = 1 : i64, tpu.core_type = #tpu.core_type<tc>, window_params = [{transform_indices = @transform_0, window_bounds = array<i64: 8, 640>}, {transform_indices = @transform_1, window_bounds = array<i64: 640, 128>}, {transform_indices = @transform_2, window_bounds = array<i64: 1, 128>}, {transform_indices = @transform_3, window_bounds = array<i64: 8, 128>}]} {
    %c0_i32 = arith.constant 0 : i32
    %0 = arith.cmpi eq, %arg2, %c0_i32 : i32
    %1 = arith.extui %0 : i1 to i32
    %c0_i32_0 = arith.constant 0 : i32
    %2 = arith.cmpi ne, %1, %c0_i32_0 : i32
    scf.if %2 {
      %cst_10 = arith.constant 0.000000e+00 : f32
      %12 = vector.broadcast %cst_10 : f32 to vector<8x128xf32>
      %c0_11 = arith.constant 0 : index
      %c0_12 = arith.constant 0 : index
      %13 = vector.load %arg7[%c0_11, %c0_12] : memref<8x128xf32, #tpu.memory_space<vmem>>, vector<8x128xf32>
      tpu.vector_store %arg7[%c0_11, %c0_12], %12 {strides = array<i32>} : memref<8x128xf32, #tpu.memory_space<vmem>>, vector<8x128xf32>,
    } else {
    }
    %c0 = arith.constant 0 : index
    %c0_1 = arith.constant 0 : index
    %3 = vector.load %arg7[%c0, %c0_1] : memref<8x128xf32, #tpu.memory_space<vmem>>, vector<8x128xf32>
    %c0_2 = arith.constant 0 : index
    %c0_3 = arith.constant 0 : index
    %4 = vector.load %arg3[%c0_2, %c0_3] : memref<8x640xbf16, #tpu.memory_space<vmem>>, vector<8x640xbf16>
    %c0_4 = arith.constant 0 : index
    %c0_5 = arith.constant 0 : index
    %5 = vector.load %arg4[%c0_4, %c0_5] : memref<640x128xbf16, #tpu.memory_space<vmem>>, vector<640x128xbf16>
    %cst = arith.constant dense<0.000000e+00> : vector<8x128xf32>
    %6 = tpu.matmul %4, %5, %cst {dimension_numbers = #tpu.dot_dimension_numbers<[1], [0], [0], [1], [0, 0, 1, 1], [], []>} : vector<8x640xbf16>, vector<640x128xbf16>, vector<8x128xf32> -> vector<8x128xf32>
    %7 = arith.addf %3, %6 : vector<8x128xf32>
    %c0_6 = arith.constant 0 : index
    %c0_7 = arith.constant 0 : index
    %8 = vector.load %arg7[%c0_6, %c0_7] : memref<8x128xf32, #tpu.memory_space<vmem>>, vector<8x128xf32>
    tpu.vector_store %arg7[%c0_6, %c0_7], %7 {strides = array<i32>} : memref<8x128xf32, #tpu.memory_space<vmem>>, vector<8x128xf32>,
    %c0_i32_8 = arith.constant 0 : i32
    %9 = arith.cmpi eq, %arg2, %c0_i32_8 : i32
    %10 = arith.extui %9 : i1 to i32
    %c0_i32_9 = arith.constant 0 : i32
    %11 = arith.cmpi ne, %10, %c0_i32_9 : i32
    scf.if %11 {
      %c0_10 = arith.constant 0 : index
      %c0_11 = arith.constant 0 : index
      %12 = vector.load %arg7[%c0_10, %c0_11] : memref<8x128xf32, #tpu.memory_space<vmem>>, vector<8x128xf32>
      %c0_12 = arith.constant 0 : index
      %c0_13 = arith.constant 0 : index
      %13 = vector.load %arg5[%c0_12, %c0_13] : memref<1x128xf32, #tpu.memory_space<vmem>>, vector<1x128xf32>
      %14 = vector.broadcast %13 : vector<1x128xf32> to vector<8x128xf32>
      %15 = arith.addf %12, %14 : vector<8x128xf32>
      %cst_14 = arith.constant 0.000000e+00 : f32
      %16 = vector.broadcast %cst_14 : f32 to vector<8x128xf32>
      %17 = arith.maximumf %15, %16 : vector<8x128xf32>
      %c0_15 = arith.constant 0 : index
      %c0_16 = arith.constant 0 : index
      %18 = vector.load %arg6[%c0_15, %c0_16] : memref<8x128xf32, #tpu.memory_space<vmem>>, vector<8x128xf32>
      tpu.vector_store %arg6[%c0_15, %c0_16], %17 {strides = array<i32>} : memref<8x128xf32, #tpu.memory_space<vmem>>, vector<8x128xf32>,
    } else {
    }
    return
  }
  func.func @transform_0(%arg0: i32, %arg1: i32, %arg2: i32) -> (i32, i32) {
    %c0_i32 = arith.constant 0 : i32
    return %arg0, %arg2 : i32, i32
  }
  func.func @transform_1(%arg0: i32, %arg1: i32, %arg2: i32) -> (i32, i32) {
    %c0_i32 = arith.constant 0 : i32
    return %arg2, %arg1 : i32, i32
  }
  func.func @transform_2(%arg0: i32, %arg1: i32, %arg2: i32) -> (i32, i32) {
    %c0_i32 = arith.constant 0 : i32
    %c0_i32_0 = arith.constant 0 : i32
    return %c0_i32, %arg1 : i32, i32
  }
  func.func @transform_3(%arg0: i32, %arg1: i32, %arg2: i32) -> (i32, i32) {
    %c0_i32 = arith.constant 0 : i32
    return %arg0, %arg1 : i32, i32
  }
}

module attributes {stable_mosaic.version = 11 : i64} {
  func.func @_mm_kernel(%arg0: i32, %arg1: i32, %arg2: i32, %arg3: memref<32x1024xbf16, #tpu.memory_space<vmem>>, %arg4: memref<1024x128xbf16, #tpu.memory_space<vmem>>, %arg5: memref<1x128xf32, #tpu.memory_space<vmem>>, %arg6: memref<32x128xf32, #tpu.memory_space<vmem>>, %arg7: memref<32x128xf32, #tpu.memory_space<vmem>>) attributes {dimension_semantics = [#tpu.dimension_semantics<parallel>, #tpu.dimension_semantics<parallel>, #tpu.dimension_semantics<arbitrary>], iteration_bounds = array<i64: 1, 1, 1>, scalar_prefetch = 0 : i64, scratch_operands = 1 : i64, tpu.core_type = #tpu.core_type<tc>, window_params = [{transform_indices = @transform_0, window_bounds = array<i64: 32, 1024>}, {transform_indices = @transform_1, window_bounds = array<i64: 1024, 128>}, {transform_indices = @transform_2, window_bounds = array<i64: 1, 128>}, {transform_indices = @transform_3, window_bounds = array<i64: 32, 128>}]} {
    %c0_i32 = arith.constant 0 : i32
    %0 = arith.cmpi eq, %arg2, %c0_i32 : i32
    %1 = arith.extui %0 : i1 to i32
    %c0_i32_0 = arith.constant 0 : i32
    %2 = arith.cmpi ne, %1, %c0_i32_0 : i32
    scf.if %2 {
      %cst_10 = arith.constant 0.000000e+00 : f32
      %12 = vector.broadcast %cst_10 : f32 to vector<32x128xf32>
      %c0_11 = arith.constant 0 : index
      %c0_12 = arith.constant 0 : index
      %13 = vector.load %arg7[%c0_11, %c0_12] : memref<32x128xf32, #tpu.memory_space<vmem>>, vector<32x128xf32>
      tpu.vector_store %arg7[%c0_11, %c0_12], %12 {strides = array<i32>} : memref<32x128xf32, #tpu.memory_space<vmem>>, vector<32x128xf32>,
    } else {
    }
    %c0 = arith.constant 0 : index
    %c0_1 = arith.constant 0 : index
    %3 = vector.load %arg7[%c0, %c0_1] : memref<32x128xf32, #tpu.memory_space<vmem>>, vector<32x128xf32>
    %c0_2 = arith.constant 0 : index
    %c0_3 = arith.constant 0 : index
    %4 = vector.load %arg3[%c0_2, %c0_3] : memref<32x1024xbf16, #tpu.memory_space<vmem>>, vector<32x1024xbf16>
    %c0_4 = arith.constant 0 : index
    %c0_5 = arith.constant 0 : index
    %5 = vector.load %arg4[%c0_4, %c0_5] : memref<1024x128xbf16, #tpu.memory_space<vmem>>, vector<1024x128xbf16>
    %cst = arith.constant dense<0.000000e+00> : vector<32x128xf32>
    %6 = tpu.matmul %4, %5, %cst {dimension_numbers = #tpu.dot_dimension_numbers<[1], [0], [0], [1], [0, 0, 1, 1], [], []>} : vector<32x1024xbf16>, vector<1024x128xbf16>, vector<32x128xf32> -> vector<32x128xf32>
    %7 = arith.addf %3, %6 : vector<32x128xf32>
    %c0_6 = arith.constant 0 : index
    %c0_7 = arith.constant 0 : index
    %8 = vector.load %arg7[%c0_6, %c0_7] : memref<32x128xf32, #tpu.memory_space<vmem>>, vector<32x128xf32>
    tpu.vector_store %arg7[%c0_6, %c0_7], %7 {strides = array<i32>} : memref<32x128xf32, #tpu.memory_space<vmem>>, vector<32x128xf32>,
    %c0_i32_8 = arith.constant 0 : i32
    %9 = arith.cmpi eq, %arg2, %c0_i32_8 : i32
    %10 = arith.extui %9 : i1 to i32
    %c0_i32_9 = arith.constant 0 : i32
    %11 = arith.cmpi ne, %10, %c0_i32_9 : i32
    scf.if %11 {
      %c0_10 = arith.constant 0 : index
      %c0_11 = arith.constant 0 : index
      %12 = vector.load %arg7[%c0_10, %c0_11] : memref<32x128xf32, #tpu.memory_space<vmem>>, vector<32x128xf32>
      %c0_12 = arith.constant 0 : index
      %c0_13 = arith.constant 0 : index
      %13 = vector.load %arg5[%c0_12, %c0_13] : memref<1x128xf32, #tpu.memory_space<vmem>>, vector<1x128xf32>
      %14 = vector.broadcast %13 : vector<1x128xf32> to vector<32x128xf32>
      %15 = arith.addf %12, %14 : vector<32x128xf32>
      %cst_14 = arith.constant 0.000000e+00 : f32
      %16 = vector.broadcast %cst_14 : f32 to vector<32x128xf32>
      %17 = arith.maximumf %15, %16 : vector<32x128xf32>
      %c0_15 = arith.constant 0 : index
      %c0_16 = arith.constant 0 : index
      %18 = vector.load %arg6[%c0_15, %c0_16] : memref<32x128xf32, #tpu.memory_space<vmem>>, vector<32x128xf32>
      tpu.vector_store %arg6[%c0_15, %c0_16], %17 {strides = array<i32>} : memref<32x128xf32, #tpu.memory_space<vmem>>, vector<32x128xf32>,
    } else {
    }
    return
  }
  func.func @transform_0(%arg0: i32, %arg1: i32, %arg2: i32) -> (i32, i32) {
    %c0_i32 = arith.constant 0 : i32
    return %arg0, %arg2 : i32, i32
  }
  func.func @transform_1(%arg0: i32, %arg1: i32, %arg2: i32) -> (i32, i32) {
    %c0_i32 = arith.constant 0 : i32
    return %arg2, %arg1 : i32, i32
  }
  func.func @transform_2(%arg0: i32, %arg1: i32, %arg2: i32) -> (i32, i32) {
    %c0_i32 = arith.constant 0 : i32
    %c0_i32_0 = arith.constant 0 : i32
    return %c0_i32, %arg1 : i32, i32
  }
  func.func @transform_3(%arg0: i32, %arg1: i32, %arg2: i32) -> (i32, i32) {
    %c0_i32 = arith.constant 0 : i32
    return %arg0, %arg1 : i32, i32
  }
}

module attributes {stable_mosaic.version = 11 : i64} {
  func.func @_mm_kernel(%arg0: i32, %arg1: i32, %arg2: i32, %arg3: memref<32x384xbf16, #tpu.memory_space<vmem>>, %arg4: memref<384x128xbf16, #tpu.memory_space<vmem>>, %arg5: memref<1x128xf32, #tpu.memory_space<vmem>>, %arg6: memref<32x128xf32, #tpu.memory_space<vmem>>, %arg7: memref<32x128xf32, #tpu.memory_space<vmem>>) attributes {dimension_semantics = [#tpu.dimension_semantics<parallel>, #tpu.dimension_semantics<parallel>, #tpu.dimension_semantics<arbitrary>], iteration_bounds = array<i64: 1, 1, 3>, scalar_prefetch = 0 : i64, scratch_operands = 1 : i64, tpu.core_type = #tpu.core_type<tc>, window_params = [{transform_indices = @transform_0, window_bounds = array<i64: 32, 384>}, {transform_indices = @transform_1, window_bounds = array<i64: 384, 128>}, {transform_indices = @transform_2, window_bounds = array<i64: 1, 128>}, {transform_indices = @transform_3, window_bounds = array<i64: 32, 128>}]} {
    %c0_i32 = arith.constant 0 : i32
    %0 = arith.cmpi eq, %arg2, %c0_i32 : i32
    %1 = arith.extui %0 : i1 to i32
    %c0_i32_0 = arith.constant 0 : i32
    %2 = arith.cmpi ne, %1, %c0_i32_0 : i32
    scf.if %2 {
      %cst_9 = arith.constant 0.000000e+00 : f32
      %12 = vector.broadcast %cst_9 : f32 to vector<32x128xf32>
      %c0_10 = arith.constant 0 : index
      %c0_11 = arith.constant 0 : index
      %13 = vector.load %arg7[%c0_10, %c0_11] : memref<32x128xf32, #tpu.memory_space<vmem>>, vector<32x128xf32>
      tpu.vector_store %arg7[%c0_10, %c0_11], %12 {strides = array<i32>} : memref<32x128xf32, #tpu.memory_space<vmem>>, vector<32x128xf32>,
    } else {
    }
    %c0 = arith.constant 0 : index
    %c0_1 = arith.constant 0 : index
    %3 = vector.load %arg7[%c0, %c0_1] : memref<32x128xf32, #tpu.memory_space<vmem>>, vector<32x128xf32>
    %c0_2 = arith.constant 0 : index
    %c0_3 = arith.constant 0 : index
    %4 = vector.load %arg3[%c0_2, %c0_3] : memref<32x384xbf16, #tpu.memory_space<vmem>>, vector<32x384xbf16>
    %c0_4 = arith.constant 0 : index
    %c0_5 = arith.constant 0 : index
    %5 = vector.load %arg4[%c0_4, %c0_5] : memref<384x128xbf16, #tpu.memory_space<vmem>>, vector<384x128xbf16>
    %cst = arith.constant dense<0.000000e+00> : vector<32x128xf32>
    %6 = tpu.matmul %4, %5, %cst {dimension_numbers = #tpu.dot_dimension_numbers<[1], [0], [0], [1], [0, 0, 1, 1], [], []>} : vector<32x384xbf16>, vector<384x128xbf16>, vector<32x128xf32> -> vector<32x128xf32>
    %7 = arith.addf %3, %6 : vector<32x128xf32>
    %c0_6 = arith.constant 0 : index
    %c0_7 = arith.constant 0 : index
    %8 = vector.load %arg7[%c0_6, %c0_7] : memref<32x128xf32, #tpu.memory_space<vmem>>, vector<32x128xf32>
    tpu.vector_store %arg7[%c0_6, %c0_7], %7 {strides = array<i32>} : memref<32x128xf32, #tpu.memory_space<vmem>>, vector<32x128xf32>,
    %c2_i32 = arith.constant 2 : i32
    %9 = arith.cmpi eq, %arg2, %c2_i32 : i32
    %10 = arith.extui %9 : i1 to i32
    %c0_i32_8 = arith.constant 0 : i32
    %11 = arith.cmpi ne, %10, %c0_i32_8 : i32
    scf.if %11 {
      %c0_9 = arith.constant 0 : index
      %c0_10 = arith.constant 0 : index
      %12 = vector.load %arg7[%c0_9, %c0_10] : memref<32x128xf32, #tpu.memory_space<vmem>>, vector<32x128xf32>
      %c0_11 = arith.constant 0 : index
      %c0_12 = arith.constant 0 : index
      %13 = vector.load %arg5[%c0_11, %c0_12] : memref<1x128xf32, #tpu.memory_space<vmem>>, vector<1x128xf32>
      %14 = vector.broadcast %13 : vector<1x128xf32> to vector<32x128xf32>
      %15 = arith.addf %12, %14 : vector<32x128xf32>
      %cst_13 = arith.constant 0.000000e+00 : f32
      %16 = vector.broadcast %cst_13 : f32 to vector<32x128xf32>
      %17 = arith.maximumf %15, %16 : vector<32x128xf32>
      %c0_14 = arith.constant 0 : index
      %c0_15 = arith.constant 0 : index
      %18 = vector.load %arg6[%c0_14, %c0_15] : memref<32x128xf32, #tpu.memory_space<vmem>>, vector<32x128xf32>
      tpu.vector_store %arg6[%c0_14, %c0_15], %17 {strides = array<i32>} : memref<32x128xf32, #tpu.memory_space<vmem>>, vector<32x128xf32>,
    } else {
    }
    return
  }
  func.func @transform_0(%arg0: i32, %arg1: i32, %arg2: i32) -> (i32, i32) {
    %c0_i32 = arith.constant 0 : i32
    return %arg0, %arg2 : i32, i32
  }
  func.func @transform_1(%arg0: i32, %arg1: i32, %arg2: i32) -> (i32, i32) {
    %c0_i32 = arith.constant 0 : i32
    return %arg2, %arg1 : i32, i32
  }
  func.func @transform_2(%arg0: i32, %arg1: i32, %arg2: i32) -> (i32, i32) {
    %c0_i32 = arith.constant 0 : i32
    %c0_i32_0 = arith.constant 0 : i32
    return %c0_i32, %arg1 : i32, i32
  }
  func.func @transform_3(%arg0: i32, %arg1: i32, %arg2: i32) -> (i32, i32) {
    %c0_i32 = arith.constant 0 : i32
    return %arg0, %arg1 : i32, i32
  }
}

module attributes {stable_mosaic.version = 11 : i64} {
  func.func @_mm_kernel(%arg0: i32, %arg1: i32, %arg2: i32, %arg3: memref<128x1024xbf16, #tpu.memory_space<vmem>>, %arg4: memref<1024x128xbf16, #tpu.memory_space<vmem>>, %arg5: memref<1x128xf32, #tpu.memory_space<vmem>>, %arg6: memref<128x128xf32, #tpu.memory_space<vmem>>, %arg7: memref<128x128xf32, #tpu.memory_space<vmem>>) attributes {dimension_semantics = [#tpu.dimension_semantics<parallel>, #tpu.dimension_semantics<parallel>, #tpu.dimension_semantics<arbitrary>], iteration_bounds = array<i64: 1, 1, 1>, scalar_prefetch = 0 : i64, scratch_operands = 1 : i64, tpu.core_type = #tpu.core_type<tc>, window_params = [{transform_indices = @transform_0, window_bounds = array<i64: 128, 1024>}, {transform_indices = @transform_1, window_bounds = array<i64: 1024, 128>}, {transform_indices = @transform_2, window_bounds = array<i64: 1, 128>}, {transform_indices = @transform_3, window_bounds = array<i64: 128, 128>}]} {
    %c0_i32 = arith.constant 0 : i32
    %0 = arith.cmpi eq, %arg2, %c0_i32 : i32
    %1 = arith.extui %0 : i1 to i32
    %c0_i32_0 = arith.constant 0 : i32
    %2 = arith.cmpi ne, %1, %c0_i32_0 : i32
    scf.if %2 {
      %cst_10 = arith.constant 0.000000e+00 : f32
      %12 = vector.broadcast %cst_10 : f32 to vector<128x128xf32>
      %c0_11 = arith.constant 0 : index
      %c0_12 = arith.constant 0 : index
      %13 = vector.load %arg7[%c0_11, %c0_12] : memref<128x128xf32, #tpu.memory_space<vmem>>, vector<128x128xf32>
      tpu.vector_store %arg7[%c0_11, %c0_12], %12 {strides = array<i32>} : memref<128x128xf32, #tpu.memory_space<vmem>>, vector<128x128xf32>,
    } else {
    }
    %c0 = arith.constant 0 : index
    %c0_1 = arith.constant 0 : index
    %3 = vector.load %arg7[%c0, %c0_1] : memref<128x128xf32, #tpu.memory_space<vmem>>, vector<128x128xf32>
    %c0_2 = arith.constant 0 : index
    %c0_3 = arith.constant 0 : index
    %4 = vector.load %arg3[%c0_2, %c0_3] : memref<128x1024xbf16, #tpu.memory_space<vmem>>, vector<128x1024xbf16>
    %c0_4 = arith.constant 0 : index
    %c0_5 = arith.constant 0 : index
    %5 = vector.load %arg4[%c0_4, %c0_5] : memref<1024x128xbf16, #tpu.memory_space<vmem>>, vector<1024x128xbf16>
    %cst = arith.constant dense<0.000000e+00> : vector<128x128xf32>
    %6 = tpu.matmul %4, %5, %cst {dimension_numbers = #tpu.dot_dimension_numbers<[1], [0], [0], [1], [0, 0, 1, 1], [], []>} : vector<128x1024xbf16>, vector<1024x128xbf16>, vector<128x128xf32> -> vector<128x128xf32>
    %7 = arith.addf %3, %6 : vector<128x128xf32>
    %c0_6 = arith.constant 0 : index
    %c0_7 = arith.constant 0 : index
    %8 = vector.load %arg7[%c0_6, %c0_7] : memref<128x128xf32, #tpu.memory_space<vmem>>, vector<128x128xf32>
    tpu.vector_store %arg7[%c0_6, %c0_7], %7 {strides = array<i32>} : memref<128x128xf32, #tpu.memory_space<vmem>>, vector<128x128xf32>,
    %c0_i32_8 = arith.constant 0 : i32
    %9 = arith.cmpi eq, %arg2, %c0_i32_8 : i32
    %10 = arith.extui %9 : i1 to i32
    %c0_i32_9 = arith.constant 0 : i32
    %11 = arith.cmpi ne, %10, %c0_i32_9 : i32
    scf.if %11 {
      %c0_10 = arith.constant 0 : index
      %c0_11 = arith.constant 0 : index
      %12 = vector.load %arg7[%c0_10, %c0_11] : memref<128x128xf32, #tpu.memory_space<vmem>>, vector<128x128xf32>
      %c0_12 = arith.constant 0 : index
      %c0_13 = arith.constant 0 : index
      %13 = vector.load %arg5[%c0_12, %c0_13] : memref<1x128xf32, #tpu.memory_space<vmem>>, vector<1x128xf32>
      %14 = vector.broadcast %13 : vector<1x128xf32> to vector<128x128xf32>
      %15 = arith.addf %12, %14 : vector<128x128xf32>
      %cst_14 = arith.constant 0.000000e+00 : f32
      %16 = vector.broadcast %cst_14 : f32 to vector<128x128xf32>
      %17 = arith.maximumf %15, %16 : vector<128x128xf32>
      %c0_15 = arith.constant 0 : index
      %c0_16 = arith.constant 0 : index
      %18 = vector.load %arg6[%c0_15, %c0_16] : memref<128x128xf32, #tpu.memory_space<vmem>>, vector<128x128xf32>
      tpu.vector_store %arg6[%c0_15, %c0_16], %17 {strides = array<i32>} : memref<128x128xf32, #tpu.memory_space<vmem>>, vector<128x128xf32>,
    } else {
    }
    return
  }
  func.func @transform_0(%arg0: i32, %arg1: i32, %arg2: i32) -> (i32, i32) {
    %c0_i32 = arith.constant 0 : i32
    return %arg0, %arg2 : i32, i32
  }
  func.func @transform_1(%arg0: i32, %arg1: i32, %arg2: i32) -> (i32, i32) {
    %c0_i32 = arith.constant 0 : i32
    return %arg2, %arg1 : i32, i32
  }
  func.func @transform_2(%arg0: i32, %arg1: i32, %arg2: i32) -> (i32, i32) {
    %c0_i32 = arith.constant 0 : i32
    %c0_i32_0 = arith.constant 0 : i32
    return %c0_i32, %arg1 : i32, i32
  }
  func.func @transform_3(%arg0: i32, %arg1: i32, %arg2: i32) -> (i32, i32) {
    %c0_i32 = arith.constant 0 : i32
    return %arg0, %arg1 : i32, i32
  }
}

module attributes {stable_mosaic.version = 11 : i64} {
  func.func @_mm_kernel(%arg0: i32, %arg1: i32, %arg2: i32, %arg3: memref<128x384xbf16, #tpu.memory_space<vmem>>, %arg4: memref<384x128xbf16, #tpu.memory_space<vmem>>, %arg5: memref<1x128xf32, #tpu.memory_space<vmem>>, %arg6: memref<128x128xf32, #tpu.memory_space<vmem>>, %arg7: memref<128x128xf32, #tpu.memory_space<vmem>>) attributes {dimension_semantics = [#tpu.dimension_semantics<parallel>, #tpu.dimension_semantics<parallel>, #tpu.dimension_semantics<arbitrary>], iteration_bounds = array<i64: 1, 1, 3>, scalar_prefetch = 0 : i64, scratch_operands = 1 : i64, tpu.core_type = #tpu.core_type<tc>, window_params = [{transform_indices = @transform_0, window_bounds = array<i64: 128, 384>}, {transform_indices = @transform_1, window_bounds = array<i64: 384, 128>}, {transform_indices = @transform_2, window_bounds = array<i64: 1, 128>}, {transform_indices = @transform_3, window_bounds = array<i64: 128, 128>}]} {
    %c0_i32 = arith.constant 0 : i32
    %0 = arith.cmpi eq, %arg2, %c0_i32 : i32
    %1 = arith.extui %0 : i1 to i32
    %c0_i32_0 = arith.constant 0 : i32
    %2 = arith.cmpi ne, %1, %c0_i32_0 : i32
    scf.if %2 {
      %cst_9 = arith.constant 0.000000e+00 : f32
      %12 = vector.broadcast %cst_9 : f32 to vector<128x128xf32>
      %c0_10 = arith.constant 0 : index
      %c0_11 = arith.constant 0 : index
      %13 = vector.load %arg7[%c0_10, %c0_11] : memref<128x128xf32, #tpu.memory_space<vmem>>, vector<128x128xf32>
      tpu.vector_store %arg7[%c0_10, %c0_11], %12 {strides = array<i32>} : memref<128x128xf32, #tpu.memory_space<vmem>>, vector<128x128xf32>,
    } else {
    }
    %c0 = arith.constant 0 : index
    %c0_1 = arith.constant 0 : index
    %3 = vector.load %arg7[%c0, %c0_1] : memref<128x128xf32, #tpu.memory_space<vmem>>, vector<128x128xf32>
    %c0_2 = arith.constant 0 : index
    %c0_3 = arith.constant 0 : index
    %4 = vector.load %arg3[%c0_2, %c0_3] : memref<128x384xbf16, #tpu.memory_space<vmem>>, vector<128x384xbf16>
    %c0_4 = arith.constant 0 : index
    %c0_5 = arith.constant 0 : index
    %5 = vector.load %arg4[%c0_4, %c0_5] : memref<384x128xbf16, #tpu.memory_space<vmem>>, vector<384x128xbf16>
    %cst = arith.constant dense<0.000000e+00> : vector<128x128xf32>
    %6 = tpu.matmul %4, %5, %cst {dimension_numbers = #tpu.dot_dimension_numbers<[1], [0], [0], [1], [0, 0, 1, 1], [], []>} : vector<128x384xbf16>, vector<384x128xbf16>, vector<128x128xf32> -> vector<128x128xf32>
    %7 = arith.addf %3, %6 : vector<128x128xf32>
    %c0_6 = arith.constant 0 : index
    %c0_7 = arith.constant 0 : index
    %8 = vector.load %arg7[%c0_6, %c0_7] : memref<128x128xf32, #tpu.memory_space<vmem>>, vector<128x128xf32>
    tpu.vector_store %arg7[%c0_6, %c0_7], %7 {strides = array<i32>} : memref<128x128xf32, #tpu.memory_space<vmem>>, vector<128x128xf32>,
    %c2_i32 = arith.constant 2 : i32
    %9 = arith.cmpi eq, %arg2, %c2_i32 : i32
    %10 = arith.extui %9 : i1 to i32
    %c0_i32_8 = arith.constant 0 : i32
    %11 = arith.cmpi ne, %10, %c0_i32_8 : i32
    scf.if %11 {
      %c0_9 = arith.constant 0 : index
      %c0_10 = arith.constant 0 : index
      %12 = vector.load %arg7[%c0_9, %c0_10] : memref<128x128xf32, #tpu.memory_space<vmem>>, vector<128x128xf32>
      %c0_11 = arith.constant 0 : index
      %c0_12 = arith.constant 0 : index
      %13 = vector.load %arg5[%c0_11, %c0_12] : memref<1x128xf32, #tpu.memory_space<vmem>>, vector<1x128xf32>
      %14 = vector.broadcast %13 : vector<1x128xf32> to vector<128x128xf32>
      %15 = arith.addf %12, %14 : vector<128x128xf32>
      %cst_13 = arith.constant 0.000000e+00 : f32
      %16 = vector.broadcast %cst_13 : f32 to vector<128x128xf32>
      %17 = arith.maximumf %15, %16 : vector<128x128xf32>
      %c0_14 = arith.constant 0 : index
      %c0_15 = arith.constant 0 : index
      %18 = vector.load %arg6[%c0_14, %c0_15] : memref<128x128xf32, #tpu.memory_space<vmem>>, vector<128x128xf32>
      tpu.vector_store %arg6[%c0_14, %c0_15], %17 {strides = array<i32>} : memref<128x128xf32, #tpu.memory_space<vmem>>, vector<128x128xf32>,
    } else {
    }
    return
  }
  func.func @transform_0(%arg0: i32, %arg1: i32, %arg2: i32) -> (i32, i32) {
    %c0_i32 = arith.constant 0 : i32
    return %arg0, %arg2 : i32, i32
  }
  func.func @transform_1(%arg0: i32, %arg1: i32, %arg2: i32) -> (i32, i32) {
    %c0_i32 = arith.constant 0 : i32
    return %arg2, %arg1 : i32, i32
  }
  func.func @transform_2(%arg0: i32, %arg1: i32, %arg2: i32) -> (i32, i32) {
    %c0_i32 = arith.constant 0 : i32
    %c0_i32_0 = arith.constant 0 : i32
    return %c0_i32, %arg1 : i32, i32
  }
  func.func @transform_3(%arg0: i32, %arg1: i32, %arg2: i32) -> (i32, i32) {
    %c0_i32 = arith.constant 0 : i32
    return %arg0, %arg1 : i32, i32
  }
}

module attributes {stable_mosaic.version = 11 : i64} {
  func.func @_mm_kernel(%arg0: i32, %arg1: i32, %arg2: i32, %arg3: memref<256x1024xbf16, #tpu.memory_space<vmem>>, %arg4: memref<1024x128xbf16, #tpu.memory_space<vmem>>, %arg5: memref<1x128xf32, #tpu.memory_space<vmem>>, %arg6: memref<256x128xf32, #tpu.memory_space<vmem>>, %arg7: memref<256x128xf32, #tpu.memory_space<vmem>>) attributes {dimension_semantics = [#tpu.dimension_semantics<parallel>, #tpu.dimension_semantics<parallel>, #tpu.dimension_semantics<arbitrary>], iteration_bounds = array<i64: 2, 1, 1>, scalar_prefetch = 0 : i64, scratch_operands = 1 : i64, tpu.core_type = #tpu.core_type<tc>, window_params = [{transform_indices = @transform_0, window_bounds = array<i64: 256, 1024>}, {transform_indices = @transform_1, window_bounds = array<i64: 1024, 128>}, {transform_indices = @transform_2, window_bounds = array<i64: 1, 128>}, {transform_indices = @transform_3, window_bounds = array<i64: 256, 128>}]} {
    %c0_i32 = arith.constant 0 : i32
    %0 = arith.cmpi eq, %arg2, %c0_i32 : i32
    %1 = arith.extui %0 : i1 to i32
    %c0_i32_0 = arith.constant 0 : i32
    %2 = arith.cmpi ne, %1, %c0_i32_0 : i32
    scf.if %2 {
      %cst_10 = arith.constant 0.000000e+00 : f32
      %12 = vector.broadcast %cst_10 : f32 to vector<256x128xf32>
      %c0_11 = arith.constant 0 : index
      %c0_12 = arith.constant 0 : index
      %13 = vector.load %arg7[%c0_11, %c0_12] : memref<256x128xf32, #tpu.memory_space<vmem>>, vector<256x128xf32>
      tpu.vector_store %arg7[%c0_11, %c0_12], %12 {strides = array<i32>} : memref<256x128xf32, #tpu.memory_space<vmem>>, vector<256x128xf32>,
    } else {
    }
    %c0 = arith.constant 0 : index
    %c0_1 = arith.constant 0 : index
    %3 = vector.load %arg7[%c0, %c0_1] : memref<256x128xf32, #tpu.memory_space<vmem>>, vector<256x128xf32>
    %c0_2 = arith.constant 0 : index
    %c0_3 = arith.constant 0 : index
    %4 = vector.load %arg3[%c0_2, %c0_3] : memref<256x1024xbf16, #tpu.memory_space<vmem>>, vector<256x1024xbf16>
    %c0_4 = arith.constant 0 : index
    %c0_5 = arith.constant 0 : index
    %5 = vector.load %arg4[%c0_4, %c0_5] : memref<1024x128xbf16, #tpu.memory_space<vmem>>, vector<1024x128xbf16>
    %cst = arith.constant dense<0.000000e+00> : vector<256x128xf32>
    %6 = tpu.matmul %4, %5, %cst {dimension_numbers = #tpu.dot_dimension_numbers<[1], [0], [0], [1], [0, 0, 1, 1], [], []>} : vector<256x1024xbf16>, vector<1024x128xbf16>, vector<256x128xf32> -> vector<256x128xf32>
    %7 = arith.addf %3, %6 : vector<256x128xf32>
    %c0_6 = arith.constant 0 : index
    %c0_7 = arith.constant 0 : index
    %8 = vector.load %arg7[%c0_6, %c0_7] : memref<256x128xf32, #tpu.memory_space<vmem>>, vector<256x128xf32>
    tpu.vector_store %arg7[%c0_6, %c0_7], %7 {strides = array<i32>} : memref<256x128xf32, #tpu.memory_space<vmem>>, vector<256x128xf32>,
    %c0_i32_8 = arith.constant 0 : i32
    %9 = arith.cmpi eq, %arg2, %c0_i32_8 : i32
    %10 = arith.extui %9 : i1 to i32
    %c0_i32_9 = arith.constant 0 : i32
    %11 = arith.cmpi ne, %10, %c0_i32_9 : i32
    scf.if %11 {
      %c0_10 = arith.constant 0 : index
      %c0_11 = arith.constant 0 : index
      %12 = vector.load %arg7[%c0_10, %c0_11] : memref<256x128xf32, #tpu.memory_space<vmem>>, vector<256x128xf32>
      %c0_12 = arith.constant 0 : index
      %c0_13 = arith.constant 0 : index
      %13 = vector.load %arg5[%c0_12, %c0_13] : memref<1x128xf32, #tpu.memory_space<vmem>>, vector<1x128xf32>
      %14 = vector.broadcast %13 : vector<1x128xf32> to vector<256x128xf32>
      %15 = arith.addf %12, %14 : vector<256x128xf32>
      %cst_14 = arith.constant 0.000000e+00 : f32
      %16 = vector.broadcast %cst_14 : f32 to vector<256x128xf32>
      %17 = arith.maximumf %15, %16 : vector<256x128xf32>
      %c0_15 = arith.constant 0 : index
      %c0_16 = arith.constant 0 : index
      %18 = vector.load %arg6[%c0_15, %c0_16] : memref<256x128xf32, #tpu.memory_space<vmem>>, vector<256x128xf32>
      tpu.vector_store %arg6[%c0_15, %c0_16], %17 {strides = array<i32>} : memref<256x128xf32, #tpu.memory_space<vmem>>, vector<256x128xf32>,
    } else {
    }
    return
  }
  func.func @transform_0(%arg0: i32, %arg1: i32, %arg2: i32) -> (i32, i32) {
    %c0_i32 = arith.constant 0 : i32
    return %arg0, %arg2 : i32, i32
  }
  func.func @transform_1(%arg0: i32, %arg1: i32, %arg2: i32) -> (i32, i32) {
    %c0_i32 = arith.constant 0 : i32
    return %arg2, %arg1 : i32, i32
  }
  func.func @transform_2(%arg0: i32, %arg1: i32, %arg2: i32) -> (i32, i32) {
    %c0_i32 = arith.constant 0 : i32
    %c0_i32_0 = arith.constant 0 : i32
    return %c0_i32, %arg1 : i32, i32
  }
  func.func @transform_3(%arg0: i32, %arg1: i32, %arg2: i32) -> (i32, i32) {
    %c0_i32 = arith.constant 0 : i32
    return %arg0, %arg1 : i32, i32
  }
}

</mosaic_0001>

<llo_original>
// kernel: _lambda_.11
$region0: #{_lambda_.11}
  #allocation0 [shape = 'u32[]', space=smem, size = 0x4, offset = 0x4, fixed_abs, tag = 'smem constant byte address 0x4 - core index']
  #allocation1 [shape = 'u32[144,128]{1,0:T(1,128)}', space=vmem, size = 0x12000, scoped, tag = 'internal scratch']
  #allocation2 [shape = 'f32[128,128]{1,0:T(8,128)}', space=vmem, size = 0x10000, scoped, tag = 'scratch operand']
  %s0 = inlined_call_operand.vmem [shape: bf16[128,640], index: 0, kind: input, shape index: {}]
  %s1 = inlined_call_operand.vmem [shape: bf16[640,128], index: 1, kind: input, shape index: {}]
  %s2 = inlined_call_operand.vmem [shape: f32[1,128], index: 2, kind: input, shape index: {}]
  %s3 = inlined_call_operand.vmem [shape: f32[128,128], index: 3, kind: output, shape index: {}]
  %s4 = sld [smem:[#allocation0]]
  $region30: #{_lambda_.11} parent=0
    _
  %s6 = ssub.s32 1, %s4
  %s7 = scalar_select 0, %s6, %s4
  // Predicated region
  $region2: #{_lambda_.11} parent=0 // pred_check
    _
  $region3: #{_lambda_.11} parent=0 // pred_check_branch
    %9 = sbr.rel (0) target = $region5
  $region4: #{_lambda_.11} parent=0 // pred_region
    _
  $region5: #{_lambda_.11} parent=0 // pred_fallthru
    _
  // Predicated region
  $region6: #{_lambda_.11} parent=0 // pred_check
    _
  $region7: #{_lambda_.11} parent=0 // pred_check_branch
    %11 = sbr.rel (0) target = $region9
  $region8: #{_lambda_.11} parent=0 // pred_region
    _
  $region9: #{_lambda_.11} parent=0 // pred_fallthru
    _
  // Predicated region
  $region10: #{_lambda_.11} parent=0 // pred_check
    _
  $region11: #{_lambda_.11} parent=0 // pred_check_branch
    %13 = sbr.rel (0) target = $region13
  $region12: #{_lambda_.11} parent=0 // pred_region
    _
  $region13: #{_lambda_.11} parent=0 // pred_fallthru
    _
  %p15 = scmp.eq.s32.totalorder 0, 0
  // Predicated region
  $region14: #{_lambda_.11} parent=0 // pred_check
    %p16 = pneg %p15
  $region15: #{_lambda_.11} parent=0 // pred_check_branch
    %18 = sbr.rel (%p16) target = $region17
  $region16: #{_lambda_.11} parent=0 // pred_region
    %19 = vst [vmem:[#allocation2] sm:$0xff] 0.0
    %20 = vst [vmem:[#allocation2 + $0x8] sm:$0xff] 0.0
    %21 = vst [vmem:[#allocation2 + $0x10] sm:$0xff] 0.0
    %22 = vst [vmem:[#allocation2 + $0x18] sm:$0xff] 0.0
    %23 = vst [vmem:[#allocation2 + $0x20] sm:$0xff] 0.0
    %24 = vst [vmem:[#allocation2 + $0x28] sm:$0xff] 0.0
    %25 = vst [vmem:[#allocation2 + $0x30] sm:$0xff] 0.0
    %26 = vst [vmem:[#allocation2 + $0x38] sm:$0xff] 0.0
    %27 = vst [vmem:[#allocation2 + $0x40] sm:$0xff] 0.0
    %28 = vst [vmem:[#allocation2 + $0x48] sm:$0xff] 0.0
    %29 = vst [vmem:[#allocation2 + $0x50] sm:$0xff] 0.0
    %30 = vst [vmem:[#allocation2 + $0x58] sm:$0xff] 0.0
    %31 = vst [vmem:[#allocation2 + $0x60] sm:$0xff] 0.0
    %32 = vst [vmem:[#allocation2 + $0x68] sm:$0xff] 0.0
    %33 = vst [vmem:[#allocation2 + $0x70] sm:$0xff] 0.0
    %34 = vst [vmem:[#allocation2 + $0x78] sm:$0xff] 0.0
  $region17: #{_lambda_.11} parent=0 // pred_fallthru
    _
  %v35 = vld [vmem:[#allocation2] sm:$0xff]
  %v36 = vld [vmem:[#allocation2 + $0x8] sm:$0xff]
  %v37 = vld [vmem:[#allocation2 + $0x10] sm:$0xff]
  %v38 = vld [vmem:[#allocation2 + $0x18] sm:$0xff]
  %v39 = vld [vmem:[#allocation2 + $0x20] sm:$0xff]
  %v40 = vld [vmem:[#allocation2 + $0x28] sm:$0xff]
  %v41 = vld [vmem:[#allocation2 + $0x30] sm:$0xff]
  %v42 = vld [vmem:[#allocation2 + $0x38] sm:$0xff]
  %v43 = vld [vmem:[#allocation2 + $0x40] sm:$0xff]
  %v44 = vld [vmem:[#allocation2 + $0x48] sm:$0xff]
  %v45 = vld [vmem:[#allocation2 + $0x50] sm:$0xff]
  %v46 = vld [vmem:[#allocation2 + $0x58] sm:$0xff]
  %v47 = vld [vmem:[#allocation2 + $0x60] sm:$0xff]
  %v48 = vld [vmem:[#allocation2 + $0x68] sm:$0xff]
  %v49 = vld [vmem:[#allocation2 + $0x70] sm:$0xff]
  %v50 = vld [vmem:[#allocation2 + $0x78] sm:$0xff]
  %v51 = vld [vmem:[%s0] sm:$0xff]
  %v52 = vld [vmem:[%s0 + $0x8] sm:$0xff]
  %v53 = vld [vmem:[%s0 + $0x10] sm:$0xf]
  %v54 = vld [vmem:[%s0 + $0x14] sm:$0xff]
  %v55 = vld [vmem:[%s0 + $0x1c] sm:$0xff]
  %v56 = vld [vmem:[%s0 + $0x24] sm:$0xf]
  %v57 = vld [vmem:[%s0 + $0x28] sm:$0xff]
  %v58 = vld [vmem:[%s0 + $0x30] sm:$0xff]
  %v59 = vld [vmem:[%s0 + $0x38] sm:$0xf]
  %v60 = vld [vmem:[%s0 + $0x3c] sm:$0xff]
  %v61 = vld [vmem:[%s0 + $0x44] sm:$0xff]
  %v62 = vld [vmem:[%s0 + $0x4c] sm:$0xf]
  %v63 = vld [vmem:[%s0 + $0x50] sm:$0xff]
  %v64 = vld [vmem:[%s0 + $0x58] sm:$0xff]
  %v65 = vld [vmem:[%s0 + $0x60] sm:$0xf]
  %v66 = vld [vmem:[%s0 + $0x64] sm:$0xff]
  %v67 = vld [vmem:[%s0 + $0x6c] sm:$0xff]
  %v68 = vld [vmem:[%s0 + $0x74] sm:$0xf]
  %v69 = vld [vmem:[%s0 + $0x78] sm:$0xff]
  %v70 = vld [vmem:[%s0 + $0x80] sm:$0xff]
  %v71 = vld [vmem:[%s0 + $0x88] sm:$0xf]
  %v72 = vld [vmem:[%s0 + $0x8c] sm:$0xff]
  %v73 = vld [vmem:[%s0 + $0x94] sm:$0xff]
  %v74 = vld [vmem:[%s0 + $0x9c] sm:$0xf]
  %v75 = vld [vmem:[%s0 + $0xa0] sm:$0xff]
  %v76 = vld [vmem:[%s0 + $0xa8] sm:$0xff]
  %v77 = vld [vmem:[%s0 + $0xb0] sm:$0xf]
  %v78 = vld [vmem:[%s0 + $0xb4] sm:$0xff]
  %v79 = vld [vmem:[%s0 + $0xbc] sm:$0xff]
  %v80 = vld [vmem:[%s0 + $0xc4] sm:$0xf]
  %v81 = vld [vmem:[%s0 + $0xc8] sm:$0xff]
  %v82 = vld [vmem:[%s0 + $0xd0] sm:$0xff]
  %v83 = vld [vmem:[%s0 + $0xd8] sm:$0xf]
  %v84 = vld [vmem:[%s0 + $0xdc] sm:$0xff]
  %v85 = vld [vmem:[%s0 + $0xe4] sm:$0xff]
  %v86 = vld [vmem:[%s0 + $0xec] sm:$0xf]
  %v87 = vld [vmem:[%s0 + $0xf0] sm:$0xff]
  %v88 = vld [vmem:[%s0 + $0xf8] sm:$0xff]
  %v89 = vld [vmem:[%s0 + $0x100] sm:$0xf]
  %v90 = vld [vmem:[%s0 + $0x104] sm:$0xff]
  %v91 = vld [vmem:[%s0 + $0x10c] sm:$0xff]
  %v92 = vld [vmem:[%s0 + $0x114] sm:$0xf]
  %v93 = vld [vmem:[%s0 + $0x118] sm:$0xff]
  %v94 = vld [vmem:[%s0 + $0x120] sm:$0xff]
  %v95 = vld [vmem:[%s0 + $0x128] sm:$0xf]
  %v96 = vld [vmem:[%s0 + $0x12c] sm:$0xff]
  %v97 = vld [vmem:[%s0 + $0x134] sm:$0xff]
  %v98 = vld [vmem:[%s0 + $0x13c] sm:$0xf]
  %v99 = vld [vmem:[%s1] sm:$0xf]
  %v100 = vld [vmem:[%s1 + $0x4] sm:$0xf]
  %v101 = vld [vmem:[%s1 + $0x8] sm:$0xf]
  %v102 = vld [vmem:[%s1 + $0xc] sm:$0xf]
  %v103 = vld [vmem:[%s1 + $0x10] sm:$0xf]
  %v104 = vld [vmem:[%s1 + $0x14] sm:$0xf]
  %v105 = vld [vmem:[%s1 + $0x18] sm:$0xf]
  %v106 = vld [vmem:[%s1 + $0x1c] sm:$0xf]
  %v107 = vld [vmem:[%s1 + $0x20] sm:$0xf]
  %v108 = vld [vmem:[%s1 + $0x24] sm:$0xf]
  %v109 = vld [vmem:[%s1 + $0x28] sm:$0xf]
  %v110 = vld [vmem:[%s1 + $0x2c] sm:$0xf]
  %v111 = vld [vmem:[%s1 + $0x30] sm:$0xf]
  %v112 = vld [vmem:[%s1 + $0x34] sm:$0xf]
  %v113 = vld [vmem:[%s1 + $0x38] sm:$0xf]
  %v114 = vld [vmem:[%s1 + $0x3c] sm:$0xf]
  %v115 = vld [vmem:[%s1 + $0x40] sm:$0xf]
  %v116 = vld [vmem:[%s1 + $0x44] sm:$0xf]
  %v117 = vld [vmem:[%s1 + $0x48] sm:$0xf]
  %v118 = vld [vmem:[%s1 + $0x4c] sm:$0xf]
  %v119 = vld [vmem:[%s1 + $0x50] sm:$0xf]
  %v120 = vld [vmem:[%s1 + $0x54] sm:$0xf]
  %v121 = vld [vmem:[%s1 + $0x58] sm:$0xf]
  %v122 = vld [vmem:[%s1 + $0x5c] sm:$0xf]
  %v123 = vld [vmem:[%s1 + $0x60] sm:$0xf]
  %v124 = vld [vmem:[%s1 + $0x64] sm:$0xf]
  %v125 = vld [vmem:[%s1 + $0x68] sm:$0xf]
  %v126 = vld [vmem:[%s1 + $0x6c] sm:$0xf]
  %v127 = vld [vmem:[%s1 + $0x70] sm:$0xf]
  %v128 = vld [vmem:[%s1 + $0x74] sm:$0xf]
  %v129 = vld [vmem:[%s1 + $0x78] sm:$0xf]
  %v130 = vld [vmem:[%s1 + $0x7c] sm:$0xf]
  %v131 = vld [vmem:[%s1 + $0x80] sm:$0xf]
  %v132 = vld [vmem:[%s1 + $0x84] sm:$0xf]
  %v133 = vld [vmem:[%s1 + $0x88] sm:$0xf]
  %v134 = vld [vmem:[%s1 + $0x8c] sm:$0xf]
  %v135 = vld [vmem:[%s1 + $0x90] sm:$0xf]
  %v136 = vld [vmem:[%s1 + $0x94] sm:$0xf]
  %v137 = vld [vmem:[%s1 + $0x98] sm:$0xf]
  %v138 = vld [vmem:[%s1 + $0x9c] sm:$0xf]
  %v139 = vld [vmem:[%s1 + $0xa0] sm:$0xf]
  %v140 = vld [vmem:[%s1 + $0xa4] sm:$0xf]
  %v141 = vld [vmem:[%s1 + $0xa8] sm:$0xf]
  %v142 = vld [vmem:[%s1 + $0xac] sm:$0xf]
  %v143 = vld [vmem:[%s1 + $0xb0] sm:$0xf]
  %v144 = vld [vmem:[%s1 + $0xb4] sm:$0xf]
  %v145 = vld [vmem:[%s1 + $0xb8] sm:$0xf]
  %v146 = vld [vmem:[%s1 + $0xbc] sm:$0xf]
  %v147 = vld [vmem:[%s1 + $0xc0] sm:$0xf]
  %v148 = vld [vmem:[%s1 + $0xc4] sm:$0xf]
  %v149 = vld [vmem:[%s1 + $0xc8] sm:$0xf]
  %v150 = vld [vmem:[%s1 + $0xcc] sm:$0xf]
  %v151 = vld [vmem:[%s1 + $0xd0] sm:$0xf]
  %v152 = vld [vmem:[%s1 + $0xd4] sm:$0xf]
  %v153 = vld [vmem:[%s1 + $0xd8] sm:$0xf]
  %v154 = vld [vmem:[%s1 + $0xdc] sm:$0xf]
  %v155 = vld [vmem:[%s1 + $0xe0] sm:$0xf]
  %v156 = vld [vmem:[%s1 + $0xe4] sm:$0xf]
  %v157 = vld [vmem:[%s1 + $0xe8] sm:$0xf]
  %v158 = vld [vmem:[%s1 + $0xec] sm:$0xf]
  %v159 = vld [vmem:[%s1 + $0xf0] sm:$0xf]
  %v160 = vld [vmem:[%s1 + $0xf4] sm:$0xf]
  %v161 = vld [vmem:[%s1 + $0xf8] sm:$0xf]
  %v162 = vld [vmem:[%s1 + $0xfc] sm:$0xf]
  %v163 = vld [vmem:[%s1 + $0x100] sm:$0xf]
  %v164 = vld [vmem:[%s1 + $0x104] sm:$0xf]
  %v165 = vld [vmem:[%s1 + $0x108] sm:$0xf]
  %v166 = vld [vmem:[%s1 + $0x10c] sm:$0xf]
  %v167 = vld [vmem:[%s1 + $0x110] sm:$0xf]
  %v168 = vld [vmem:[%s1 + $0x114] sm:$0xf]
  %v169 = vld [vmem:[%s1 + $0x118] sm:$0xf]
  %v170 = vld [vmem:[%s1 + $0x11c] sm:$0xf]
  %v171 = vld [vmem:[%s1 + $0x120] sm:$0xf]
  %v172 = vld [vmem:[%s1 + $0x124] sm:$0xf]
  %v173 = vld [vmem:[%s1 + $0x128] sm:$0xf]
  %v174 = vld [vmem:[%s1 + $0x12c] sm:$0xf]
  %v175 = vld [vmem:[%s1 + $0x130] sm:$0xf]
  %v176 = vld [vmem:[%s1 + $0x134] sm:$0xf]
  %v177 = vld [vmem:[%s1 + $0x138] sm:$0xf]
  %v178 = vld [vmem:[%s1 + $0x13c] sm:$0xf]
  %v227 = vunpack.c.l.b16 %v51
  %v228 = vunpack.c.h.b16 %v51
  %v229 = vunpack.c.l.b16 %v52
  %v230 = vunpack.c.h.b16 %v52
  %v231 = vunpack.c.l.b16 %v53
  %v232 = vunpack.c.l.b16 %v54
  %v233 = vunpack.c.h.b16 %v54
  %v234 = vunpack.c.l.b16 %v55
  %v235 = vunpack.c.h.b16 %v55
  %v236 = vunpack.c.l.b16 %v56
  %v237 = vunpack.c.l.b16 %v57
  %v238 = vunpack.c.h.b16 %v57
  %v239 = vunpack.c.l.b16 %v58
  %v240 = vunpack.c.h.b16 %v58
  %v241 = vunpack.c.l.b16 %v59
  %v242 = vunpack.c.l.b16 %v60
  %v243 = vunpack.c.h.b16 %v60
  %v244 = vunpack.c.l.b16 %v61
  %v245 = vunpack.c.h.b16 %v61
  %v246 = vunpack.c.l.b16 %v62
  %v247 = vunpack.c.l.b16 %v63
  %v248 = vunpack.c.h.b16 %v63
  %v249 = vunpack.c.l.b16 %v64
  %v250 = vunpack.c.h.b16 %v64
  %v251 = vunpack.c.l.b16 %v65
  %v252 = vunpack.c.l.b16 %v66
  %v253 = vunpack.c.h.b16 %v66
  %v254 = vunpack.c.l.b16 %v67
  %v255 = vunpack.c.h.b16 %v67
  %v256 = vunpack.c.l.b16 %v68
  %v257 = vunpack.c.l.b16 %v69
  %v258 = vunpack.c.h.b16 %v69
  %v259 = vunpack.c.l.b16 %v70
  %v260 = vunpack.c.h.b16 %v70
  %v261 = vunpack.c.l.b16 %v71
  %v262 = vunpack.c.l.b16 %v72
  %v263 = vunpack.c.h.b16 %v72
  %v264 = vunpack.c.l.b16 %v73
  %v265 = vunpack.c.h.b16 %v73
  %v266 = vunpack.c.l.b16 %v74
  %v267 = vunpack.c.l.b16 %v75
  %v268 = vunpack.c.h.b16 %v75
  %v269 = vunpack.c.l.b16 %v76
  %v270 = vunpack.c.h.b16 %v76
  %v271 = vunpack.c.l.b16 %v77
  %v272 = vunpack.c.l.b16 %v78
  %v273 = vunpack.c.h.b16 %v78
  %v274 = vunpack.c.l.b16 %v79
  %v275 = vunpack.c.h.b16 %v79
  %v276 = vunpack.c.l.b16 %v80
  %v277 = vunpack.c.l.b16 %v81
  %v278 = vunpack.c.h.b16 %v81
  %v279 = vunpack.c.l.b16 %v82
  %v280 = vunpack.c.h.b16 %v82
  %v281 = vunpack.c.l.b16 %v83
  %v282 = vunpack.c.l.b16 %v84
  %v283 = vunpack.c.h.b16 %v84
  %v284 = vunpack.c.l.b16 %v85
  %v285 = vunpack.c.h.b16 %v85
  %v286 = vunpack.c.l.b16 %v86
  %v287 = vunpack.c.l.b16 %v87
  %v288 = vunpack.c.h.b16 %v87
  %v289 = vunpack.c.l.b16 %v88
  %v290 = vunpack.c.h.b16 %v88
  %v291 = vunpack.c.l.b16 %v89
  %v292 = vunpack.c.l.b16 %v90
  %v293 = vunpack.c.h.b16 %v90
  %v294 = vunpack.c.l.b16 %v91
  %v295 = vunpack.c.h.b16 %v91
  %v296 = vunpack.c.l.b16 %v92
  %v297 = vunpack.c.l.b16 %v93
  %v298 = vunpack.c.h.b16 %v93
  %v299 = vunpack.c.l.b16 %v94
  %v300 = vunpack.c.h.b16 %v94
  %v301 = vunpack.c.l.b16 %v95
  %v302 = vunpack.c.l.b16 %v96
  %v303 = vunpack.c.h.b16 %v96
  %v304 = vunpack.c.l.b16 %v97
  %v305 = vunpack.c.h.b16 %v97
  %v306 = vunpack.c.l.b16 %v98
  %v307 = vpack.c.b16 %v232, %v227
  %v308 = vpack.c.b16 %v233, %v228
  %v309 = vpack.c.b16 %v234, %v229
  %v310 = vpack.c.b16 %v235, %v230
  %v311 = vpack.c.b16 %v236, %v231
  %v312 = vpack.c.b16 %v242, %v237
  %v313 = vpack.c.b16 %v243, %v238
  %v314 = vpack.c.b16 %v244, %v239
  %v315 = vpack.c.b16 %v245, %v240
  %v316 = vpack.c.b16 %v246, %v241
  %v317 = vpack.c.b16 %v252, %v247
  %v318 = vpack.c.b16 %v253, %v248
  %v319 = vpack.c.b16 %v254, %v249
  %v320 = vpack.c.b16 %v255, %v250
  %v321 = vpack.c.b16 %v256, %v251
  %v322 = vpack.c.b16 %v262, %v257
  %v323 = vpack.c.b16 %v263, %v258
  %v324 = vpack.c.b16 %v264, %v259
  %v325 = vpack.c.b16 %v265, %v260
  %v326 = vpack.c.b16 %v266, %v261
  %v327 = vpack.c.b16 %v272, %v267
  %v328 = vpack.c.b16 %v273, %v268
  %v329 = vpack.c.b16 %v274, %v269
  %v330 = vpack.c.b16 %v275, %v270
  %v331 = vpack.c.b16 %v276, %v271
  %v332 = vpack.c.b16 %v282, %v277
  %v333 = vpack.c.b16 %v283, %v278
  %v334 = vpack.c.b16 %v284, %v279
  %v335 = vpack.c.b16 %v285, %v280
  %v336 = vpack.c.b16 %v286, %v281
  %v337 = vpack.c.b16 %v292, %v287
  %v338 = vpack.c.b16 %v293, %v288
  %v339 = vpack.c.b16 %v294, %v289
  %v340 = vpack.c.b16 %v295, %v290
  %v341 = vpack.c.b16 %v296, %v291
  %v342 = vpack.c.b16 %v302, %v297
  %v343 = vpack.c.b16 %v303, %v298
  %v344 = vpack.c.b16 %v304, %v299
  %v345 = vpack.c.b16 %v305, %v300
  %v346 = vpack.c.b16 %v306, %v301
  %v467 = vunpack.c.l.b16 %v99
  %v468 = vunpack.c.l.b16 %v100
  %v469 = vunpack.c.l.b16 %v101
  %v470 = vunpack.c.l.b16 %v102
  %v471 = vunpack.c.l.b16 %v103
  %v472 = vunpack.c.l.b16 %v104
  %v473 = vunpack.c.l.b16 %v105
  %v474 = vunpack.c.l.b16 %v106
  %v475 = vunpack.c.l.b16 %v107
  %v476 = vunpack.c.l.b16 %v108
  %v477 = vunpack.c.l.b16 %v109
  %v478 = vunpack.c.l.b16 %v110
  %v479 = vunpack.c.l.b16 %v111
  %v480 = vunpack.c.l.b16 %v112
  %v481 = vunpack.c.l.b16 %v113
  %v482 = vunpack.c.l.b16 %v114
  %v483 = vunpack.c.l.b16 %v115
  %v484 = vunpack.c.l.b16 %v116
  %v485 = vunpack.c.l.b16 %v117
  %v486 = vunpack.c.l.b16 %v118
  %v487 = vunpack.c.l.b16 %v119
  %v488 = vunpack.c.l.b16 %v120
  %v489 = vunpack.c.l.b16 %v121
  %v490 = vunpack.c.l.b16 %v122
  %v491 = vunpack.c.l.b16 %v123
  %v492 = vunpack.c.l.b16 %v124
  %v493 = vunpack.c.l.b16 %v125
  %v494 = vunpack.c.l.b16 %v126
  %v495 = vunpack.c.l.b16 %v127
  %v496 = vunpack.c.l.b16 %v128
  %v497 = vunpack.c.l.b16 %v129
  %v498 = vunpack.c.l.b16 %v130
  %v499 = vunpack.c.l.b16 %v131
  %v500 = vunpack.c.l.b16 %v132
  %v501 = vunpack.c.l.b16 %v133
  %v502 = vunpack.c.l.b16 %v134
  %v503 = vunpack.c.l.b16 %v135
  %v504 = vunpack.c.l.b16 %v136
  %v505 = vunpack.c.l.b16 %v137
  %v506 = vunpack.c.l.b16 %v138
  %v507 = vunpack.c.l.b16 %v139
  %v508 = vunpack.c.l.b16 %v140
  %v509 = vunpack.c.l.b16 %v141
  %v510 = vunpack.c.l.b16 %v142
  %v511 = vunpack.c.l.b16 %v143
  %v512 = vunpack.c.l.b16 %v144
  %v513 = vunpack.c.l.b16 %v145
  %v514 = vunpack.c.l.b16 %v146
  %v515 = vunpack.c.l.b16 %v147
  %v516 = vunpack.c.l.b16 %v148
  %v517 = vunpack.c.l.b16 %v149
  %v518 = vunpack.c.l.b16 %v150
  %v519 = vunpack.c.l.b16 %v151
  %v520 = vunpack.c.l.b16 %v152
  %v521 = vunpack.c.l.b16 %v153
  %v522 = vunpack.c.l.b16 %v154
  %v523 = vunpack.c.l.b16 %v155
  %v524 = vunpack.c.l.b16 %v156
  %v525 = vunpack.c.l.b16 %v157
  %v526 = vunpack.c.l.b16 %v158
  %v527 = vunpack.c.l.b16 %v159
  %v528 = vunpack.c.l.b16 %v160
  %v529 = vunpack.c.l.b16 %v161
  %v530 = vunpack.c.l.b16 %v162
  %v531 = vunpack.c.l.b16 %v163
  %v532 = vunpack.c.l.b16 %v164
  %v533 = vunpack.c.l.b16 %v165
  %v534 = vunpack.c.l.b16 %v166
  %v535 = vunpack.c.l.b16 %v167
  %v536 = vunpack.c.l.b16 %v168
  %v537 = vunpack.c.l.b16 %v169
  %v538 = vunpack.c.l.b16 %v170
  %v539 = vunpack.c.l.b16 %v171
  %v540 = vunpack.c.l.b16 %v172
  %v541 = vunpack.c.l.b16 %v173
  %v542 = vunpack.c.l.b16 %v174
  %v543 = vunpack.c.l.b16 %v175
  %v544 = vunpack.c.l.b16 %v176
  %v545 = vunpack.c.l.b16 %v177
  %v546 = vunpack.c.l.b16 %v178
  %v547 = vpack.c.b16 %v468, %v467
  %v548 = vpack.c.b16 %v470, %v469
  %v549 = vpack.c.b16 %v472, %v471
  %v550 = vpack.c.b16 %v474, %v473
  %v551 = vpack.c.b16 %v476, %v475
  %v552 = vpack.c.b16 %v478, %v477
  %v553 = vpack.c.b16 %v480, %v479
  %v554 = vpack.c.b16 %v482, %v481
  %v555 = vpack.c.b16 %v484, %v483
  %v556 = vpack.c.b16 %v486, %v485
  %v557 = vpack.c.b16 %v488, %v487
  %v558 = vpack.c.b16 %v490, %v489
  %v559 = vpack.c.b16 %v492, %v491
  %v560 = vpack.c.b16 %v494, %v493
  %v561 = vpack.c.b16 %v496, %v495
  %v562 = vpack.c.b16 %v498, %v497
  %v563 = vpack.c.b16 %v500, %v499
  %v564 = vpack.c.b16 %v502, %v501
  %v565 = vpack.c.b16 %v504, %v503
  %v566 = vpack.c.b16 %v506, %v505
  %v567 = vpack.c.b16 %v508, %v507
  %v568 = vpack.c.b16 %v510, %v509
  %v569 = vpack.c.b16 %v512, %v511
  %v570 = vpack.c.b16 %v514, %v513
  %v571 = vpack.c.b16 %v516, %v515
  %v572 = vpack.c.b16 %v518, %v517
  %v573 = vpack.c.b16 %v520, %v519
  %v574 = vpack.c.b16 %v522, %v521
  %v575 = vpack.c.b16 %v524, %v523
  %v576 = vpack.c.b16 %v526, %v525
  %v577 = vpack.c.b16 %v528, %v527
  %v578 = vpack.c.b16 %v530, %v529
  %v579 = vpack.c.b16 %v532, %v531
  %v580 = vpack.c.b16 %v534, %v533
  %v581 = vpack.c.b16 %v536, %v535
  %v582 = vpack.c.b16 %v538, %v537
  %v583 = vpack.c.b16 %v540, %v539
  %v584 = vpack.c.b16 %v542, %v541
  %v585 = vpack.c.b16 %v544, %v543
  %v586 = vpack.c.b16 %v546, %v545
  %627 = vmatprep.subr.bf16.mxu0 0
  %628 = vmatpush1.bf16.msra.mxu0 %v547
  %629 = vmatprep.subr.bf16.mxu0 0
  %630 = vmatpush1.bf16.msra.mxu0 %v548
  %631 = vmatprep.subr.bf16.mxu0 0
  %632 = vmatpush1.bf16.msra.mxu0 %v549
  %633 = vmatprep.subr.bf16.mxu0 0
  %634 = vmatpush1.bf16.msra.mxu0 %v550
  %635 = vmatprep.subr.bf16.mxu0 0
  %636 = vmatpush1.bf16.msra.mxu0 %v551
  %637 = vmatprep.subr.bf16.mxu0 0
  %638 = vmatpush1.bf16.msra.mxu0 %v552
  %639 = vmatprep.subr.bf16.mxu0 0
  %640 = vmatpush1.bf16.msra.mxu0 %v553
  %641 = vmatprep.subr.bf16.mxu0 0
  %642 = vmatpush1.bf16.msra.mxu0 %v554
  %643 = vmatprep.subr.bf16.mxu0 0
  %644 = vmatpush1.bf16.msra.mxu0 %v555
  %645 = vmatprep.subr.bf16.mxu0 0
  %646 = vmatpush1.bf16.msra.mxu0 %v556
  %647 = vmatprep.subr.bf16.mxu0 0
  %648 = vmatpush1.bf16.msra.mxu0 %v557
  %649 = vmatprep.subr.bf16.mxu0 0
  %650 = vmatpush1.bf16.msra.mxu0 %v558
  %651 = vmatprep.subr.bf16.mxu0 0
  %652 = vmatpush1.bf16.msra.mxu0 %v559
  %653 = vmatprep.subr.bf16.mxu0 0
  %654 = vmatpush1.bf16.msra.mxu0 %v560
  %655 = vmatprep.subr.bf16.mxu0 0
  %656 = vmatpush1.bf16.msra.mxu0 %v561
  %657 = vmatprep.subr.bf16.mxu0 0
  %658 = vmatpush1.bf16.msra.mxu0 %v562
  %659 = vmatprep.mubr.bf16.mxu0 %v308
  %660 = vmatmul.mubr.bf16.gmra.mrb[0].mxu0 %v307
  %v661 = vpop.f32.mrb[0].mxu0
  %v662 = vadd.f32 0.0, %v661
  %v663 = vpop.f32.mrb[0].mxu0
  %v664 = vpop.f32.mrb[0].mxu0
  %v665 = vadd.f32 0.0, %v664
  %v666 = vpop.f32.mrb[0].mxu0
  %667 = vmatprep.mubr.bf16.mxu0 %v313
  %668 = vmatmul.mubr.bf16.gmra.mrb[0].mxu0 %v312
  %v669 = vpop.f32.mrb[0].mxu0
  %v670 = vadd.f32 0.0, %v669
  %v671 = vpop.f32.mrb[0].mxu0
  %v672 = vpop.f32.mrb[0].mxu0
  %v673 = vadd.f32 0.0, %v672
  %v674 = vpop.f32.mrb[0].mxu0
  %675 = vmatprep.mubr.bf16.mxu0 %v318
  %676 = vmatmul.mubr.bf16.gmra.mrb[0].mxu0 %v317
  %v677 = vpop.f32.mrb[0].mxu0
  %v678 = vadd.f32 0.0, %v677
  %v679 = vpop.f32.mrb[0].mxu0
  %v680 = vpop.f32.mrb[0].mxu0
  %v681 = vadd.f32 0.0, %v680
  %v682 = vpop.f32.mrb[0].mxu0
  %683 = vmatprep.mubr.bf16.mxu0 %v323
  %684 = vmatmul.mubr.bf16.gmra.mrb[0].mxu0 %v322
  %v685 = vpop.f32.mrb[0].mxu0
  %v686 = vadd.f32 0.0, %v685
  %v687 = vpop.f32.mrb[0].mxu0
  %v688 = vpop.f32.mrb[0].mxu0
  %v689 = vadd.f32 0.0, %v688
  %v690 = vpop.f32.mrb[0].mxu0
  %691 = vmatprep.mubr.bf16.mxu0 %v328
  %692 = vmatmul.mubr.bf16.gmra.mrb[0].mxu0 %v327
  %v693 = vpop.f32.mrb[0].mxu0
  %v694 = vadd.f32 0.0, %v693
  %v695 = vpop.f32.mrb[0].mxu0
  %v696 = vpop.f32.mrb[0].mxu0
  %v697 = vadd.f32 0.0, %v696
  %v698 = vpop.f32.mrb[0].mxu0
  %699 = vmatprep.mubr.bf16.mxu0 %v333
  %700 = vmatmul.mubr.bf16.gmra.mrb[0].mxu0 %v332
  %v701 = vpop.f32.mrb[0].mxu0
  %v702 = vadd.f32 0.0, %v701
  %v703 = vpop.f32.mrb[0].mxu0
  %v704 = vpop.f32.mrb[0].mxu0
  %v705 = vadd.f32 0.0, %v704
  %v706 = vpop.f32.mrb[0].mxu0
  %707 = vmatprep.mubr.bf16.mxu0 %v338
  %708 = vmatmul.mubr.bf16.gmra.mrb[0].mxu0 %v337
  %v709 = vpop.f32.mrb[0].mxu0
  %v710 = vadd.f32 0.0, %v709
  %v711 = vpop.f32.mrb[0].mxu0
  %v712 = vpop.f32.mrb[0].mxu0
  %v713 = vadd.f32 0.0, %v712
  %v714 = vpop.f32.mrb[0].mxu0
  %715 = vmatprep.mubr.bf16.mxu0 %v343
  %716 = vmatmul.mubr.bf16.gmra.mrb[0].mxu0 %v342
  %v717 = vpop.f32.mrb[0].mxu0
  %v718 = vadd.f32 0.0, %v717
  %v719 = vpop.f32.mrb[0].mxu0
  %v720 = vpop.f32.mrb[0].mxu0
  %v721 = vadd.f32 0.0, %v720
  %v722 = vpop.f32.mrb[0].mxu0
  %723 = vdwg.mxu0
  %724 = vmatprep.subr.bf16.mxu0 0
  %725 = vmatpush1.bf16.msra.mxu0 %v563
  %726 = vmatprep.subr.bf16.mxu0 0
  %727 = vmatpush1.bf16.msra.mxu0 %v564
  %728 = vmatprep.subr.bf16.mxu0 0
  %729 = vmatpush1.bf16.msra.mxu0 %v565
  %730 = vmatprep.subr.bf16.mxu0 0
  %731 = vmatpush1.bf16.msra.mxu0 %v566
  %732 = vmatprep.subr.bf16.mxu0 0
  %733 = vmatpush1.bf16.msra.mxu0 %v567
  %734 = vmatprep.subr.bf16.mxu0 0
  %735 = vmatpush1.bf16.msra.mxu0 %v568
  %736 = vmatprep.subr.bf16.mxu0 0
  %737 = vmatpush1.bf16.msra.mxu0 %v569
  %738 = vmatprep.subr.bf16.mxu0 0
  %739 = vmatpush1.bf16.msra.mxu0 %v570
  %740 = vmatprep.subr.bf16.mxu0 0
  %741 = vmatpush1.bf16.msra.mxu0 %v571
  %742 = vmatprep.subr.bf16.mxu0 0
  %743 = vmatpush1.bf16.msra.mxu0 %v572
  %744 = vmatprep.subr.bf16.mxu0 0
  %745 = vmatpush1.bf16.msra.mxu0 %v573
  %746 = vmatprep.subr.bf16.mxu0 0
  %747 = vmatpush1.bf16.msra.mxu0 %v574
  %748 = vmatprep.subr.bf16.mxu0 0
  %749 = vmatpush1.bf16.msra.mxu0 %v575
  %750 = vmatprep.subr.bf16.mxu0 0
  %751 = vmatpush1.bf16.msra.mxu0 %v576
  %752 = vmatprep.subr.bf16.mxu0 0
  %753 = vmatpush1.bf16.msra.mxu0 %v577
  %754 = vmatprep.subr.bf16.mxu0 0
  %755 = vmatpush1.bf16.msra.mxu0 %v578
  %756 = vmatprep.mubr.bf16.mxu0 %v310
  %757 = vmatmul.mubr.bf16.gmra.mrb[0].mxu0 %v309
  %v758 = vpop.f32.mrb[0].mxu0
  %v759 = vadd.f32 %v662, %v758
  %v760 = vpop.f32.mrb[0].mxu0
  %v761 = vpop.f32.mrb[0].mxu0
  %v762 = vadd.f32 %v665, %v761
  %v763 = vpop.f32.mrb[0].mxu0
  %764 = vmatprep.mubr.bf16.mxu0 %v315
  %765 = vmatmul.mubr.bf16.gmra.mrb[0].mxu0 %v314
  %v766 = vpop.f32.mrb[0].mxu0
  %v767 = vadd.f32 %v670, %v766
  %v768 = vpop.f32.mrb[0].mxu0
  %v769 = vpop.f32.mrb[0].mxu0
  %v770 = vadd.f32 %v673, %v769
  %v771 = vpop.f32.mrb[0].mxu0
  %772 = vmatprep.mubr.bf16.mxu0 %v320
  %773 = vmatmul.mubr.bf16.gmra.mrb[0].mxu0 %v319
  %v774 = vpop.f32.mrb[0].mxu0
  %v775 = vadd.f32 %v678, %v774
  %v776 = vpop.f32.mrb[0].mxu0
  %v777 = vpop.f32.mrb[0].mxu0
  %v778 = vadd.f32 %v681, %v777
  %v779 = vpop.f32.mrb[0].mxu0
  %780 = vmatprep.mubr.bf16.mxu0 %v325
  %781 = vmatmul.mubr.bf16.gmra.mrb[0].mxu0 %v324
  %v782 = vpop.f32.mrb[0].mxu0
  %v783 = vadd.f32 %v686, %v782
  %v784 = vpop.f32.mrb[0].mxu0
  %v785 = vpop.f32.mrb[0].mxu0
  %v786 = vadd.f32 %v689, %v785
  %v787 = vpop.f32.mrb[0].mxu0
  %788 = vmatprep.mubr.bf16.mxu0 %v330
  %789 = vmatmul.mubr.bf16.gmra.mrb[0].mxu0 %v329
  %v790 = vpop.f32.mrb[0].mxu0
  %v791 = vadd.f32 %v694, %v790
  %v792 = vpop.f32.mrb[0].mxu0
  %v793 = vpop.f32.mrb[0].mxu0
  %v794 = vadd.f32 %v697, %v793
  %v795 = vpop.f32.mrb[0].mxu0
  %796 = vmatprep.mubr.bf16.mxu0 %v335
  %797 = vmatmul.mubr.bf16.gmra.mrb[0].mxu0 %v334
  %v798 = vpop.f32.mrb[0].mxu0
  %v799 = vadd.f32 %v702, %v798
  %v800 = vpop.f32.mrb[0].mxu0
  %v801 = vpop.f32.mrb[0].mxu0
  %v802 = vadd.f32 %v705, %v801
  %v803 = vpop.f32.mrb[0].mxu0
  %804 = vmatprep.mubr.bf16.mxu0 %v340
  %805 = vmatmul.mubr.bf16.gmra.mrb[0].mxu0 %v339
  %v806 = vpop.f32.mrb[0].mxu0
  %v807 = vadd.f32 %v710, %v806
  %v808 = vpop.f32.mrb[0].mxu0
  %v809 = vpop.f32.mrb[0].mxu0
  %v810 = vadd.f32 %v713, %v809
  %v811 = vpop.f32.mrb[0].mxu0
  %812 = vmatprep.mubr.bf16.mxu0 %v345
  %813 = vmatmul.mubr.bf16.gmra.mrb[0].mxu0 %v344
  %v814 = vpop.f32.mrb[0].mxu0
  %v815 = vadd.f32 %v718, %v814
  %v816 = vpop.f32.mrb[0].mxu0
  %v817 = vpop.f32.mrb[0].mxu0
  %v818 = vadd.f32 %v721, %v817
  %v819 = vpop.f32.mrb[0].mxu0
  %820 = vdwg.mxu0
  %821 = vmatprep.subr.bf16.mxu0 0
  %822 = vmatpush1.bf16.msra.mxu0 %v579
  %823 = vmatprep.subr.bf16.mxu0 0
  %824 = vmatpush1.bf16.msra.mxu0 %v580
  %825 = vmatprep.subr.bf16.mxu0 0
  %826 = vmatpush1.bf16.msra.mxu0 %v581
  %827 = vmatprep.subr.bf16.mxu0 0
  %828 = vmatpush1.bf16.msra.mxu0 %v582
  %829 = vmatprep.subr.bf16.mxu0 0
  %830 = vmatpush1.bf16.msra.mxu0 %v583
  %831 = vmatprep.subr.bf16.mxu0 0
  %832 = vmatpush1.bf16.msra.mxu0 %v584
  %833 = vmatprep.subr.bf16.mxu0 0
  %834 = vmatpush1.bf16.msra.mxu0 %v585
  %835 = vmatprep.subr.bf16.mxu0 0
  %836 = vmatpush1.bf16.msra.mxu0 %v586
  %837 = vmatprep.subr.bf16.mxu0 0
  %838 = vmatpush1.bf16.msra.mxu0 0
  %839 = vmatprep.subr.bf16.mxu0 0
  %840 = vmatpush1.bf16.msra.mxu0 0
  %841 = vmatprep.subr.bf16.mxu0 0
  %842 = vmatpush1.bf16.msra.mxu0 0
  %843 = vmatprep.subr.bf16.mxu0 0
  %844 = vmatpush1.bf16.msra.mxu0 0
  %845 = vmatprep.subr.bf16.mxu0 0
  %846 = vmatpush1.bf16.msra.mxu0 0
  %847 = vmatprep.subr.bf16.mxu0 0
  %848 = vmatpush1.bf16.msra.mxu0 0
  %849 = vmatprep.subr.bf16.mxu0 0
  %850 = vmatpush1.bf16.msra.mxu0 0
  %851 = vmatprep.subr.bf16.mxu0 0
  %852 = vmatpush1.bf16.msra.mxu0 0
  %853 = vmatprep.mubr.bf16.mxu0 0
  %854 = vmatmul.mubr.bf16.gmra.mrb[0].mxu0 %v311
  %v855 = vpop.f32.mrb[0].mxu0
  %v856 = vadd.f32 %v759, %v855
  %v857 = vpop.f32.mrb[0].mxu0
  %v858 = vpop.f32.mrb[0].mxu0
  %v859 = vadd.f32 %v762, %v858
  %v860 = vpop.f32.mrb[0].mxu0
  %861 = vmatprep.mubr.bf16.mxu0 0
  %862 = vmatmul.mubr.bf16.gmra.mrb[0].mxu0 %v316
  %v863 = vpop.f32.mrb[0].mxu0
  %v864 = vadd.f32 %v767, %v863
  %v865 = vpop.f32.mrb[0].mxu0
  %v866 = vpop.f32.mrb[0].mxu0
  %v867 = vadd.f32 %v770, %v866
  %v868 = vpop.f32.mrb[0].mxu0
  %869 = vmatprep.mubr.bf16.mxu0 0
  %870 = vmatmul.mubr.bf16.gmra.mrb[0].mxu0 %v321
  %v871 = vpop.f32.mrb[0].mxu0
  %v872 = vadd.f32 %v775, %v871
  %v873 = vpop.f32.mrb[0].mxu0
  %v874 = vpop.f32.mrb[0].mxu0
  %v875 = vadd.f32 %v778, %v874
  %v876 = vpop.f32.mrb[0].mxu0
  %877 = vmatprep.mubr.bf16.mxu0 0
  %878 = vmatmul.mubr.bf16.gmra.mrb[0].mxu0 %v326
  %v879 = vpop.f32.mrb[0].mxu0
  %v880 = vadd.f32 %v783, %v879
  %v881 = vpop.f32.mrb[0].mxu0
  %v882 = vpop.f32.mrb[0].mxu0
  %v883 = vadd.f32 %v786, %v882
  %v884 = vpop.f32.mrb[0].mxu0
  %885 = vmatprep.mubr.bf16.mxu0 0
  %886 = vmatmul.mubr.bf16.gmra.mrb[0].mxu0 %v331
  %v887 = vpop.f32.mrb[0].mxu0
  %v888 = vadd.f32 %v791, %v887
  %v889 = vpop.f32.mrb[0].mxu0
  %v890 = vpop.f32.mrb[0].mxu0
  %v891 = vadd.f32 %v794, %v890
  %v892 = vpop.f32.mrb[0].mxu0
  %893 = vmatprep.mubr.bf16.mxu0 0
  %894 = vmatmul.mubr.bf16.gmra.mrb[0].mxu0 %v336
  %v895 = vpop.f32.mrb[0].mxu0
  %v896 = vadd.f32 %v799, %v895
  %v897 = vpop.f32.mrb[0].mxu0
  %v898 = vpop.f32.mrb[0].mxu0
  %v899 = vadd.f32 %v802, %v898
  %v900 = vpop.f32.mrb[0].mxu0
  %901 = vmatprep.mubr.bf16.mxu0 0
  %902 = vmatmul.mubr.bf16.gmra.mrb[0].mxu0 %v341
  %v903 = vpop.f32.mrb[0].mxu0
  %v904 = vadd.f32 %v807, %v903
  %v905 = vpop.f32.mrb[0].mxu0
  %v906 = vpop.f32.mrb[0].mxu0
  %v907 = vadd.f32 %v810, %v906
  %v908 = vpop.f32.mrb[0].mxu0
  %909 = vmatprep.mubr.bf16.mxu0 0
  %910 = vmatmul.mubr.bf16.gmra.mrb[0].mxu0 %v346
  %v911 = vpop.f32.mrb[0].mxu0
  %v912 = vadd.f32 %v815, %v911
  %v913 = vpop.f32.mrb[0].mxu0
  %v914 = vpop.f32.mrb[0].mxu0
  %v915 = vadd.f32 %v818, %v914
  %v916 = vpop.f32.mrb[0].mxu0
  %917 = vdwg.mxu0
  %v918 = vadd.f32 %v35, %v856
  %v919 = vadd.f32 %v36, %v859
  %v920 = vadd.f32 %v37, %v864
  %v921 = vadd.f32 %v38, %v867
  %v922 = vadd.f32 %v39, %v872
  %v923 = vadd.f32 %v40, %v875
  %v924 = vadd.f32 %v41, %v880
  %v925 = vadd.f32 %v42, %v883
  %v926 = vadd.f32 %v43, %v888
  %v927 = vadd.f32 %v44, %v891
  %v928 = vadd.f32 %v45, %v896
  %v929 = vadd.f32 %v46, %v899
  %v930 = vadd.f32 %v47, %v904
  %v931 = vadd.f32 %v48, %v907
  %v932 = vadd.f32 %v49, %v912
  %v933 = vadd.f32 %v50, %v915
  %934 = vst [vmem:[#allocation2] sm:$0xff] %v918
  %935 = vst [vmem:[#allocation2 + $0x8] sm:$0xff] %v919
  %936 = vst [vmem:[#allocation2 + $0x10] sm:$0xff] %v920
  %937 = vst [vmem:[#allocation2 + $0x18] sm:$0xff] %v921
  %938 = vst [vmem:[#allocation2 + $0x20] sm:$0xff] %v922
  %939 = vst [vmem:[#allocation2 + $0x28] sm:$0xff] %v923
  %940 = vst [vmem:[#allocation2 + $0x30] sm:$0xff] %v924
  %941 = vst [vmem:[#allocation2 + $0x38] sm:$0xff] %v925
  %942 = vst [vmem:[#allocation2 + $0x40] sm:$0xff] %v926
  %943 = vst [vmem:[#allocation2 + $0x48] sm:$0xff] %v927
  %944 = vst [vmem:[#allocation2 + $0x50] sm:$0xff] %v928
  %945 = vst [vmem:[#allocation2 + $0x58] sm:$0xff] %v929
  %946 = vst [vmem:[#allocation2 + $0x60] sm:$0xff] %v930
  %947 = vst [vmem:[#allocation2 + $0x68] sm:$0xff] %v931
  %948 = vst [vmem:[#allocation2 + $0x70] sm:$0xff] %v932
  %949 = vst [vmem:[#allocation2 + $0x78] sm:$0xff] %v933
  // Predicated region
  $region18: #{_lambda_.11} parent=0 // pred_check
    %p950 = pneg %p15
  $region19: #{_lambda_.11} parent=0 // pred_check_branch
    %952 = sbr.rel (%p950) target = $region21
  $region20: #{_lambda_.11} parent=0 // pred_region
    %v953 = vld [vmem:[#allocation2] sm:$0xff]
    %v954 = vld [vmem:[#allocation2 + $0x8] sm:$0xff]
    %v955 = vld [vmem:[#allocation2 + $0x10] sm:$0xff]
    %v956 = vld [vmem:[#allocation2 + $0x18] sm:$0xff]
    %v957 = vld [vmem:[#allocation2 + $0x20] sm:$0xff]
    %v958 = vld [vmem:[#allocation2 + $0x28] sm:$0xff]
    %v959 = vld [vmem:[#allocation2 + $0x30] sm:$0xff]
    %v960 = vld [vmem:[#allocation2 + $0x38] sm:$0xff]
    %v961 = vld [vmem:[#allocation2 + $0x40] sm:$0xff]
    %v962 = vld [vmem:[#allocation2 + $0x48] sm:$0xff]
    %v963 = vld [vmem:[#allocation2 + $0x50] sm:$0xff]
    %v964 = vld [vmem:[#allocation2 + $0x58] sm:$0xff]
    %v965 = vld [vmem:[#allocation2 + $0x60] sm:$0xff]
    %v966 = vld [vmem:[#allocation2 + $0x68] sm:$0xff]
    %v967 = vld [vmem:[#allocation2 + $0x70] sm:$0xff]
    %v968 = vld [vmem:[#allocation2 + $0x78] sm:$0xff]
    %v969 = vld [vmem:[%s2] sm:$0x1]
    %v971 = vlaneseq
    %v972 = vshrl.u32 %v971, 7
    %v973 = vsub.s32 0, %v972
    %v974 = vrot.slane %v969, %v973
    %v976 = vadd.f32 %v953, %v974
    %v977 = vadd.f32 %v954, %v974
    %v978 = vadd.f32 %v955, %v974
    %v979 = vadd.f32 %v956, %v974
    %v980 = vadd.f32 %v957, %v974
    %v981 = vadd.f32 %v958, %v974
    %v982 = vadd.f32 %v959, %v974
    %v983 = vadd.f32 %v960, %v974
    %v984 = vadd.f32 %v961, %v974
    %v985 = vadd.f32 %v962, %v974
    %v986 = vadd.f32 %v963, %v974
    %v987 = vadd.f32 %v964, %v974
    %v988 = vadd.f32 %v965, %v974
    %v989 = vadd.f32 %v966, %v974
    %v990 = vadd.f32 %v967, %v974
    %v991 = vadd.f32 %v968, %v974
    %v992 = vmax.f32 %v976, 0.0
    %v993 = vmax.f32 %v977, 0.0
    %v994 = vmax.f32 %v978, 0.0
    %v995 = vmax.f32 %v979, 0.0
    %v996 = vmax.f32 %v980, 0.0
    %v997 = vmax.f32 %v981, 0.0
    %v998 = vmax.f32 %v982, 0.0
    %v999 = vmax.f32 %v983, 0.0
    %v1000 = vmax.f32 %v984, 0.0
    %v1001 = vmax.f32 %v985, 0.0
    %v1002 = vmax.f32 %v986, 0.0
    %v1003 = vmax.f32 %v987, 0.0
    %v1004 = vmax.f32 %v988, 0.0
    %v1005 = vmax.f32 %v989, 0.0
    %v1006 = vmax.f32 %v990, 0.0
    %v1007 = vmax.f32 %v991, 0.0
    %1008 = vst [vmem:[%s3] sm:$0xff] %v992
    %1009 = vst [vmem:[%s3 + $0x8] sm:$0xff] %v993
    %1010 = vst [vmem:[%s3 + $0x10] sm:$0xff] %v994
    %1011 = vst [vmem:[%s3 + $0x18] sm:$0xff] %v995
    %1012 = vst [vmem:[%s3 + $0x20] sm:$0xff] %v996
    %1013 = vst [vmem:[%s3 + $0x28] sm:$0xff] %v997
    %1014 = vst [vmem:[%s3 + $0x30] sm:$0xff] %v998
    %1015 = vst [vmem:[%s3 + $0x38] sm:$0xff] %v999
    %1016 = vst [vmem:[%s3 + $0x40] sm:$0xff] %v1000
    %1017 = vst [vmem:[%s3 + $0x48] sm:$0xff] %v1001
    %1018 = vst [vmem:[%s3 + $0x50] sm:$0xff] %v1002
    %1019 = vst [vmem:[%s3 + $0x58] sm:$0xff] %v1003
    %1020 = vst [vmem:[%s3 + $0x60] sm:$0xff] %v1004
    %1021 = vst [vmem:[%s3 + $0x68] sm:$0xff] %v1005
    %1022 = vst [vmem:[%s3 + $0x70] sm:$0xff] %v1006
    %1023 = vst [vmem:[%s3 + $0x78] sm:$0xff] %v1007
  $region21: #{_lambda_.11} parent=0 // pred_fallthru
    _
  // Predicated region
  $region22: #{_lambda_.11} parent=0 // pred_check
    _
  $region23: #{_lambda_.11} parent=0 // pred_check_branch
    %1025 = sbr.rel (0) target = $region25
  $region24: #{_lambda_.11} parent=0 // pred_region
    _
  $region25: #{_lambda_.11} parent=0 // pred_fallthru
    _
  // Predicated region
  $region26: #{_lambda_.11} parent=0 // pred_check
    _
  $region27: #{_lambda_.11} parent=0 // pred_check_branch
    %1027 = sbr.rel (0) target = $region29
  $region28: #{_lambda_.11} parent=0 // pred_region
    _
  $region29: #{_lambda_.11} parent=0 // pred_fallthru
    _

// kernel: _lambda_.13
$region0: #{_lambda_.13}
  #allocation0 [shape = 'u32[]', space=smem, size = 0x4, offset = 0x4, fixed_abs, tag = 'smem constant byte address 0x4 - core index']
  #allocation1 [shape = 'u32[144,128]{1,0:T(1,128)}', space=vmem, size = 0x12000, scoped, tag = 'internal scratch']
  #allocation2 [shape = 'f32[32,128]{1,0:T(8,128)}', space=vmem, size = 0x4000, scoped, tag = 'scratch operand']
  %s0 = inlined_call_operand.vmem [shape: bf16[32,640], index: 0, kind: input, shape index: {}]
  %s1 = inlined_call_operand.vmem [shape: bf16[640,128], index: 1, kind: input, shape index: {}]
  %s2 = inlined_call_operand.vmem [shape: f32[1,128], index: 2, kind: input, shape index: {}]
  %s3 = inlined_call_operand.vmem [shape: f32[32,128], index: 3, kind: output, shape index: {}]
  %s4 = sld [smem:[#allocation0]]
  $region30: #{_lambda_.13} parent=0
    _
  %s6 = ssub.s32 1, %s4
  %s7 = scalar_select 0, %s6, %s4
  // Predicated region
  $region2: #{_lambda_.13} parent=0 // pred_check
    _
  $region3: #{_lambda_.13} parent=0 // pred_check_branch
    %9 = sbr.rel (0) target = $region5
  $region4: #{_lambda_.13} parent=0 // pred_region
    _
  $region5: #{_lambda_.13} parent=0 // pred_fallthru
    _
  // Predicated region
  $region6: #{_lambda_.13} parent=0 // pred_check
    _
  $region7: #{_lambda_.13} parent=0 // pred_check_branch
    %11 = sbr.rel (0) target = $region9
  $region8: #{_lambda_.13} parent=0 // pred_region
    _
  $region9: #{_lambda_.13} parent=0 // pred_fallthru
    _
  // Predicated region
  $region10: #{_lambda_.13} parent=0 // pred_check
    _
  $region11: #{_lambda_.13} parent=0 // pred_check_branch
    %13 = sbr.rel (0) target = $region13
  $region12: #{_lambda_.13} parent=0 // pred_region
    _
  $region13: #{_lambda_.13} parent=0 // pred_fallthru
    _
  %p15 = scmp.eq.s32.totalorder 0, 0
  // Predicated region
  $region14: #{_lambda_.13} parent=0 // pred_check
    %p16 = pneg %p15
  $region15: #{_lambda_.13} parent=0 // pred_check_branch
    %18 = sbr.rel (%p16) target = $region17
  $region16: #{_lambda_.13} parent=0 // pred_region
    %19 = vst [vmem:[#allocation2] sm:$0xff] 0.0
    %20 = vst [vmem:[#allocation2 + $0x8] sm:$0xff] 0.0
    %21 = vst [vmem:[#allocation2 + $0x10] sm:$0xff] 0.0
    %22 = vst [vmem:[#allocation2 + $0x18] sm:$0xff] 0.0
  $region17: #{_lambda_.13} parent=0 // pred_fallthru
    _
  %v23 = vld [vmem:[#allocation2] sm:$0xff]
  %v24 = vld [vmem:[#allocation2 + $0x8] sm:$0xff]
  %v25 = vld [vmem:[#allocation2 + $0x10] sm:$0xff]
  %v26 = vld [vmem:[#allocation2 + $0x18] sm:$0xff]
  %v27 = vld [vmem:[%s0] sm:$0xff]
  %v28 = vld [vmem:[%s0 + $0x8] sm:$0xff]
  %v29 = vld [vmem:[%s0 + $0x10] sm:$0xf]
  %v30 = vld [vmem:[%s0 + $0x14] sm:$0xff]
  %v31 = vld [vmem:[%s0 + $0x1c] sm:$0xff]
  %v32 = vld [vmem:[%s0 + $0x24] sm:$0xf]
  %v33 = vld [vmem:[%s0 + $0x28] sm:$0xff]
  %v34 = vld [vmem:[%s0 + $0x30] sm:$0xff]
  %v35 = vld [vmem:[%s0 + $0x38] sm:$0xf]
  %v36 = vld [vmem:[%s0 + $0x3c] sm:$0xff]
  %v37 = vld [vmem:[%s0 + $0x44] sm:$0xff]
  %v38 = vld [vmem:[%s0 + $0x4c] sm:$0xf]
  %v39 = vld [vmem:[%s1] sm:$0xf]
  %v40 = vld [vmem:[%s1 + $0x4] sm:$0xf]
  %v41 = vld [vmem:[%s1 + $0x8] sm:$0xf]
  %v42 = vld [vmem:[%s1 + $0xc] sm:$0xf]
  %v43 = vld [vmem:[%s1 + $0x10] sm:$0xf]
  %v44 = vld [vmem:[%s1 + $0x14] sm:$0xf]
  %v45 = vld [vmem:[%s1 + $0x18] sm:$0xf]
  %v46 = vld [vmem:[%s1 + $0x1c] sm:$0xf]
  %v47 = vld [vmem:[%s1 + $0x20] sm:$0xf]
  %v48 = vld [vmem:[%s1 + $0x24] sm:$0xf]
  %v49 = vld [vmem:[%s1 + $0x28] sm:$0xf]
  %v50 = vld [vmem:[%s1 + $0x2c] sm:$0xf]
  %v51 = vld [vmem:[%s1 + $0x30] sm:$0xf]
  %v52 = vld [vmem:[%s1 + $0x34] sm:$0xf]
  %v53 = vld [vmem:[%s1 + $0x38] sm:$0xf]
  %v54 = vld [vmem:[%s1 + $0x3c] sm:$0xf]
  %v55 = vld [vmem:[%s1 + $0x40] sm:$0xf]
  %v56 = vld [vmem:[%s1 + $0x44] sm:$0xf]
  %v57 = vld [vmem:[%s1 + $0x48] sm:$0xf]
  %v58 = vld [vmem:[%s1 + $0x4c] sm:$0xf]
  %v59 = vld [vmem:[%s1 + $0x50] sm:$0xf]
  %v60 = vld [vmem:[%s1 + $0x54] sm:$0xf]
  %v61 = vld [vmem:[%s1 + $0x58] sm:$0xf]
  %v62 = vld [vmem:[%s1 + $0x5c] sm:$0xf]
  %v63 = vld [vmem:[%s1 + $0x60] sm:$0xf]
  %v64 = vld [vmem:[%s1 + $0x64] sm:$0xf]
  %v65 = vld [vmem:[%s1 + $0x68] sm:$0xf]
  %v66 = vld [vmem:[%s1 + $0x6c] sm:$0xf]
  %v67 = vld [vmem:[%s1 + $0x70] sm:$0xf]
  %v68 = vld [vmem:[%s1 + $0x74] sm:$0xf]
  %v69 = vld [vmem:[%s1 + $0x78] sm:$0xf]
  %v70 = vld [vmem:[%s1 + $0x7c] sm:$0xf]
  %v71 = vld [vmem:[%s1 + $0x80] sm:$0xf]
  %v72 = vld [vmem:[%s1 + $0x84] sm:$0xf]
  %v73 = vld [vmem:[%s1 + $0x88] sm:$0xf]
  %v74 = vld [vmem:[%s1 + $0x8c] sm:$0xf]
  %v75 = vld [vmem:[%s1 + $0x90] sm:$0xf]
  %v76 = vld [vmem:[%s1 + $0x94] sm:$0xf]
  %v77 = vld [vmem:[%s1 + $0x98] sm:$0xf]
  %v78 = vld [vmem:[%s1 + $0x9c] sm:$0xf]
  %v79 = vld [vmem:[%s1 + $0xa0] sm:$0xf]
  %v80 = vld [vmem:[%s1 + $0xa4] sm:$0xf]
  %v81 = vld [vmem:[%s1 + $0xa8] sm:$0xf]
  %v82 = vld [vmem:[%s1 + $0xac] sm:$0xf]
  %v83 = vld [vmem:[%s1 + $0xb0] sm:$0xf]
  %v84 = vld [vmem:[%s1 + $0xb4] sm:$0xf]
  %v85 = vld [vmem:[%s1 + $0xb8] sm:$0xf]
  %v86 = vld [vmem:[%s1 + $0xbc] sm:$0xf]
  %v87 = vld [vmem:[%s1 + $0xc0] sm:$0xf]
  %v88 = vld [vmem:[%s1 + $0xc4] sm:$0xf]
  %v89 = vld [vmem:[%s1 + $0xc8] sm:$0xf]
  %v90 = vld [vmem:[%s1 + $0xcc] sm:$0xf]
  %v91 = vld [vmem:[%s1 + $0xd0] sm:$0xf]
  %v92 = vld [vmem:[%s1 + $0xd4] sm:$0xf]
  %v93 = vld [vmem:[%s1 + $0xd8] sm:$0xf]
  %v94 = vld [vmem:[%s1 + $0xdc] sm:$0xf]
  %v95 = vld [vmem:[%s1 + $0xe0] sm:$0xf]
  %v96 = vld [vmem:[%s1 + $0xe4] sm:$0xf]
  %v97 = vld [vmem:[%s1 + $0xe8] sm:$0xf]
  %v98 = vld [vmem:[%s1 + $0xec] sm:$0xf]
  %v99 = vld [vmem:[%s1 + $0xf0] sm:$0xf]
  %v100 = vld [vmem:[%s1 + $0xf4] sm:$0xf]
  %v101 = vld [vmem:[%s1 + $0xf8] sm:$0xf]
  %v102 = vld [vmem:[%s1 + $0xfc] sm:$0xf]
  %v103 = vld [vmem:[%s1 + $0x100] sm:$0xf]
  %v104 = vld [vmem:[%s1 + $0x104] sm:$0xf]
  %v105 = vld [vmem:[%s1 + $0x108] sm:$0xf]
  %v106 = vld [vmem:[%s1 + $0x10c] sm:$0xf]
  %v107 = vld [vmem:[%s1 + $0x110] sm:$0xf]
  %v108 = vld [vmem:[%s1 + $0x114] sm:$0xf]
  %v109 = vld [vmem:[%s1 + $0x118] sm:$0xf]
  %v110 = vld [vmem:[%s1 + $0x11c] sm:$0xf]
  %v111 = vld [vmem:[%s1 + $0x120] sm:$0xf]
  %v112 = vld [vmem:[%s1 + $0x124] sm:$0xf]
  %v113 = vld [vmem:[%s1 + $0x128] sm:$0xf]
  %v114 = vld [vmem:[%s1 + $0x12c] sm:$0xf]
  %v115 = vld [vmem:[%s1 + $0x130] sm:$0xf]
  %v116 = vld [vmem:[%s1 + $0x134] sm:$0xf]
  %v117 = vld [vmem:[%s1 + $0x138] sm:$0xf]
  %v118 = vld [vmem:[%s1 + $0x13c] sm:$0xf]
  %v131 = vunpack.c.l.b16 %v27
  %v132 = vunpack.c.h.b16 %v27
  %v133 = vunpack.c.l.b16 %v28
  %v134 = vunpack.c.h.b16 %v28
  %v135 = vunpack.c.l.b16 %v29
  %v136 = vunpack.c.l.b16 %v30
  %v137 = vunpack.c.h.b16 %v30
  %v138 = vunpack.c.l.b16 %v31
  %v139 = vunpack.c.h.b16 %v31
  %v140 = vunpack.c.l.b16 %v32
  %v141 = vunpack.c.l.b16 %v33
  %v142 = vunpack.c.h.b16 %v33
  %v143 = vunpack.c.l.b16 %v34
  %v144 = vunpack.c.h.b16 %v34
  %v145 = vunpack.c.l.b16 %v35
  %v146 = vunpack.c.l.b16 %v36
  %v147 = vunpack.c.h.b16 %v36
  %v148 = vunpack.c.l.b16 %v37
  %v149 = vunpack.c.h.b16 %v37
  %v150 = vunpack.c.l.b16 %v38
  %v151 = vpack.c.b16 %v136, %v131
  %v152 = vpack.c.b16 %v137, %v132
  %v153 = vpack.c.b16 %v138, %v133
  %v154 = vpack.c.b16 %v139, %v134
  %v155 = vpack.c.b16 %v140, %v135
  %v156 = vpack.c.b16 %v146, %v141
  %v157 = vpack.c.b16 %v147, %v142
  %v158 = vpack.c.b16 %v148, %v143
  %v159 = vpack.c.b16 %v149, %v144
  %v160 = vpack.c.b16 %v150, %v145
  %v251 = vunpack.c.l.b16 %v39
  %v252 = vunpack.c.l.b16 %v40
  %v253 = vunpack.c.l.b16 %v41
  %v254 = vunpack.c.l.b16 %v42
  %v255 = vunpack.c.l.b16 %v43
  %v256 = vunpack.c.l.b16 %v44
  %v257 = vunpack.c.l.b16 %v45
  %v258 = vunpack.c.l.b16 %v46
  %v259 = vunpack.c.l.b16 %v47
  %v260 = vunpack.c.l.b16 %v48
  %v261 = vunpack.c.l.b16 %v49
  %v262 = vunpack.c.l.b16 %v50
  %v263 = vunpack.c.l.b16 %v51
  %v264 = vunpack.c.l.b16 %v52
  %v265 = vunpack.c.l.b16 %v53
  %v266 = vunpack.c.l.b16 %v54
  %v267 = vunpack.c.l.b16 %v55
  %v268 = vunpack.c.l.b16 %v56
  %v269 = vunpack.c.l.b16 %v57
  %v270 = vunpack.c.l.b16 %v58
  %v271 = vunpack.c.l.b16 %v59
  %v272 = vunpack.c.l.b16 %v60
  %v273 = vunpack.c.l.b16 %v61
  %v274 = vunpack.c.l.b16 %v62
  %v275 = vunpack.c.l.b16 %v63
  %v276 = vunpack.c.l.b16 %v64
  %v277 = vunpack.c.l.b16 %v65
  %v278 = vunpack.c.l.b16 %v66
  %v279 = vunpack.c.l.b16 %v67
  %v280 = vunpack.c.l.b16 %v68
  %v281 = vunpack.c.l.b16 %v69
  %v282 = vunpack.c.l.b16 %v70
  %v283 = vunpack.c.l.b16 %v71
  %v284 = vunpack.c.l.b16 %v72
  %v285 = vunpack.c.l.b16 %v73
  %v286 = vunpack.c.l.b16 %v74
  %v287 = vunpack.c.l.b16 %v75
  %v288 = vunpack.c.l.b16 %v76
  %v289 = vunpack.c.l.b16 %v77
  %v290 = vunpack.c.l.b16 %v78
  %v291 = vunpack.c.l.b16 %v79
  %v292 = vunpack.c.l.b16 %v80
  %v293 = vunpack.c.l.b16 %v81
  %v294 = vunpack.c.l.b16 %v82
  %v295 = vunpack.c.l.b16 %v83
  %v296 = vunpack.c.l.b16 %v84
  %v297 = vunpack.c.l.b16 %v85
  %v298 = vunpack.c.l.b16 %v86
  %v299 = vunpack.c.l.b16 %v87
  %v300 = vunpack.c.l.b16 %v88
  %v301 = vunpack.c.l.b16 %v89
  %v302 = vunpack.c.l.b16 %v90
  %v303 = vunpack.c.l.b16 %v91
  %v304 = vunpack.c.l.b16 %v92
  %v305 = vunpack.c.l.b16 %v93
  %v306 = vunpack.c.l.b16 %v94
  %v307 = vunpack.c.l.b16 %v95
  %v308 = vunpack.c.l.b16 %v96
  %v309 = vunpack.c.l.b16 %v97
  %v310 = vunpack.c.l.b16 %v98
  %v311 = vunpack.c.l.b16 %v99
  %v312 = vunpack.c.l.b16 %v100
  %v313 = vunpack.c.l.b16 %v101
  %v314 = vunpack.c.l.b16 %v102
  %v315 = vunpack.c.l.b16 %v103
  %v316 = vunpack.c.l.b16 %v104
  %v317 = vunpack.c.l.b16 %v105
  %v318 = vunpack.c.l.b16 %v106
  %v319 = vunpack.c.l.b16 %v107
  %v320 = vunpack.c.l.b16 %v108
  %v321 = vunpack.c.l.b16 %v109
  %v322 = vunpack.c.l.b16 %v110
  %v323 = vunpack.c.l.b16 %v111
  %v324 = vunpack.c.l.b16 %v112
  %v325 = vunpack.c.l.b16 %v113
  %v326 = vunpack.c.l.b16 %v114
  %v327 = vunpack.c.l.b16 %v115
  %v328 = vunpack.c.l.b16 %v116
  %v329 = vunpack.c.l.b16 %v117
  %v330 = vunpack.c.l.b16 %v118
  %v331 = vpack.c.b16 %v252, %v251
  %v332 = vpack.c.b16 %v254, %v253
  %v333 = vpack.c.b16 %v256, %v255
  %v334 = vpack.c.b16 %v258, %v257
  %v335 = vpack.c.b16 %v260, %v259
  %v336 = vpack.c.b16 %v262, %v261
  %v337 = vpack.c.b16 %v264, %v263
  %v338 = vpack.c.b16 %v266, %v265
  %v339 = vpack.c.b16 %v268, %v267
  %v340 = vpack.c.b16 %v270, %v269
  %v341 = vpack.c.b16 %v272, %v271
  %v342 = vpack.c.b16 %v274, %v273
  %v343 = vpack.c.b16 %v276, %v275
  %v344 = vpack.c.b16 %v278, %v277
  %v345 = vpack.c.b16 %v280, %v279
  %v346 = vpack.c.b16 %v282, %v281
  %v347 = vpack.c.b16 %v284, %v283
  %v348 = vpack.c.b16 %v286, %v285
  %v349 = vpack.c.b16 %v288, %v287
  %v350 = vpack.c.b16 %v290, %v289
  %v351 = vpack.c.b16 %v292, %v291
  %v352 = vpack.c.b16 %v294, %v293
  %v353 = vpack.c.b16 %v296, %v295
  %v354 = vpack.c.b16 %v298, %v297
  %v355 = vpack.c.b16 %v300, %v299
  %v356 = vpack.c.b16 %v302, %v301
  %v357 = vpack.c.b16 %v304, %v303
  %v358 = vpack.c.b16 %v306, %v305
  %v359 = vpack.c.b16 %v308, %v307
  %v360 = vpack.c.b16 %v310, %v309
  %v361 = vpack.c.b16 %v312, %v311
  %v362 = vpack.c.b16 %v314, %v313
  %v363 = vpack.c.b16 %v316, %v315
  %v364 = vpack.c.b16 %v318, %v317
  %v365 = vpack.c.b16 %v320, %v319
  %v366 = vpack.c.b16 %v322, %v321
  %v367 = vpack.c.b16 %v324, %v323
  %v368 = vpack.c.b16 %v326, %v325
  %v369 = vpack.c.b16 %v328, %v327
  %v370 = vpack.c.b16 %v330, %v329
  %411 = vmatprep.subr.bf16.mxu0 0
  %412 = vmatpush1.bf16.msra.mxu0 %v331
  %413 = vmatprep.subr.bf16.mxu0 0
  %414 = vmatpush1.bf16.msra.mxu0 %v332
  %415 = vmatprep.subr.bf16.mxu0 0
  %416 = vmatpush1.bf16.msra.mxu0 %v333
  %417 = vmatprep.subr.bf16.mxu0 0
  %418 = vmatpush1.bf16.msra.mxu0 %v334
  %419 = vmatprep.subr.bf16.mxu0 0
  %420 = vmatpush1.bf16.msra.mxu0 %v335
  %421 = vmatprep.subr.bf16.mxu0 0
  %422 = vmatpush1.bf16.msra.mxu0 %v336
  %423 = vmatprep.subr.bf16.mxu0 0
  %424 = vmatpush1.bf16.msra.mxu0 %v337
  %425 = vmatprep.subr.bf16.mxu0 0
  %426 = vmatpush1.bf16.msra.mxu0 %v338
  %427 = vmatprep.subr.bf16.mxu0 0
  %428 = vmatpush1.bf16.msra.mxu0 %v339
  %429 = vmatprep.subr.bf16.mxu0 0
  %430 = vmatpush1.bf16.msra.mxu0 %v340
  %431 = vmatprep.subr.bf16.mxu0 0
  %432 = vmatpush1.bf16.msra.mxu0 %v341
  %433 = vmatprep.subr.bf16.mxu0 0
  %434 = vmatpush1.bf16.msra.mxu0 %v342
  %435 = vmatprep.subr.bf16.mxu0 0
  %436 = vmatpush1.bf16.msra.mxu0 %v343
  %437 = vmatprep.subr.bf16.mxu0 0
  %438 = vmatpush1.bf16.msra.mxu0 %v344
  %439 = vmatprep.subr.bf16.mxu0 0
  %440 = vmatpush1.bf16.msra.mxu0 %v345
  %441 = vmatprep.subr.bf16.mxu0 0
  %442 = vmatpush1.bf16.msra.mxu0 %v346
  %443 = vmatprep.mubr.bf16.mxu0 %v152
  %444 = vmatmul.mubr.bf16.gmra.mrb[0].mxu0 %v151
  %v445 = vpop.f32.mrb[0].mxu0
  %v446 = vadd.f32 0.0, %v445
  %v447 = vpop.f32.mrb[0].mxu0
  %v448 = vpop.f32.mrb[0].mxu0
  %v449 = vadd.f32 0.0, %v448
  %v450 = vpop.f32.mrb[0].mxu0
  %451 = vmatprep.mubr.bf16.mxu0 %v157
  %452 = vmatmul.mubr.bf16.gmra.mrb[0].mxu0 %v156
  %v453 = vpop.f32.mrb[0].mxu0
  %v454 = vadd.f32 0.0, %v453
  %v455 = vpop.f32.mrb[0].mxu0
  %v456 = vpop.f32.mrb[0].mxu0
  %v457 = vadd.f32 0.0, %v456
  %v458 = vpop.f32.mrb[0].mxu0
  %459 = vdwg.mxu0
  %460 = vmatprep.subr.bf16.mxu0 0
  %461 = vmatpush1.bf16.msra.mxu0 %v347
  %462 = vmatprep.subr.bf16.mxu0 0
  %463 = vmatpush1.bf16.msra.mxu0 %v348
  %464 = vmatprep.subr.bf16.mxu0 0
  %465 = vmatpush1.bf16.msra.mxu0 %v349
  %466 = vmatprep.subr.bf16.mxu0 0
  %467 = vmatpush1.bf16.msra.mxu0 %v350
  %468 = vmatprep.subr.bf16.mxu0 0
  %469 = vmatpush1.bf16.msra.mxu0 %v351
  %470 = vmatprep.subr.bf16.mxu0 0
  %471 = vmatpush1.bf16.msra.mxu0 %v352
  %472 = vmatprep.subr.bf16.mxu0 0
  %473 = vmatpush1.bf16.msra.mxu0 %v353
  %474 = vmatprep.subr.bf16.mxu0 0
  %475 = vmatpush1.bf16.msra.mxu0 %v354
  %476 = vmatprep.subr.bf16.mxu0 0
  %477 = vmatpush1.bf16.msra.mxu0 %v355
  %478 = vmatprep.subr.bf16.mxu0 0
  %479 = vmatpush1.bf16.msra.mxu0 %v356
  %480 = vmatprep.subr.bf16.mxu0 0
  %481 = vmatpush1.bf16.msra.mxu0 %v357
  %482 = vmatprep.subr.bf16.mxu0 0
  %483 = vmatpush1.bf16.msra.mxu0 %v358
  %484 = vmatprep.subr.bf16.mxu0 0
  %485 = vmatpush1.bf16.msra.mxu0 %v359
  %486 = vmatprep.subr.bf16.mxu0 0
  %487 = vmatpush1.bf16.msra.mxu0 %v360
  %488 = vmatprep.subr.bf16.mxu0 0
  %489 = vmatpush1.bf16.msra.mxu0 %v361
  %490 = vmatprep.subr.bf16.mxu0 0
  %491 = vmatpush1.bf16.msra.mxu0 %v362
  %492 = vmatprep.mubr.bf16.mxu0 %v154
  %493 = vmatmul.mubr.bf16.gmra.mrb[0].mxu0 %v153
  %v494 = vpop.f32.mrb[0].mxu0
  %v495 = vadd.f32 %v446, %v494
  %v496 = vpop.f32.mrb[0].mxu0
  %v497 = vpop.f32.mrb[0].mxu0
  %v498 = vadd.f32 %v449, %v497
  %v499 = vpop.f32.mrb[0].mxu0
  %500 = vmatprep.mubr.bf16.mxu0 %v159
  %501 = vmatmul.mubr.bf16.gmra.mrb[0].mxu0 %v158
  %v502 = vpop.f32.mrb[0].mxu0
  %v503 = vadd.f32 %v454, %v502
  %v504 = vpop.f32.mrb[0].mxu0
  %v505 = vpop.f32.mrb[0].mxu0
  %v506 = vadd.f32 %v457, %v505
  %v507 = vpop.f32.mrb[0].mxu0
  %508 = vdwg.mxu0
  %509 = vmatprep.subr.bf16.mxu0 0
  %510 = vmatpush1.bf16.msra.mxu0 %v363
  %511 = vmatprep.subr.bf16.mxu0 0
  %512 = vmatpush1.bf16.msra.mxu0 %v364
  %513 = vmatprep.subr.bf16.mxu0 0
  %514 = vmatpush1.bf16.msra.mxu0 %v365
  %515 = vmatprep.subr.bf16.mxu0 0
  %516 = vmatpush1.bf16.msra.mxu0 %v366
  %517 = vmatprep.subr.bf16.mxu0 0
  %518 = vmatpush1.bf16.msra.mxu0 %v367
  %519 = vmatprep.subr.bf16.mxu0 0
  %520 = vmatpush1.bf16.msra.mxu0 %v368
  %521 = vmatprep.subr.bf16.mxu0 0
  %522 = vmatpush1.bf16.msra.mxu0 %v369
  %523 = vmatprep.subr.bf16.mxu0 0
  %524 = vmatpush1.bf16.msra.mxu0 %v370
  %525 = vmatprep.subr.bf16.mxu0 0
  %526 = vmatpush1.bf16.msra.mxu0 0
  %527 = vmatprep.subr.bf16.mxu0 0
  %528 = vmatpush1.bf16.msra.mxu0 0
  %529 = vmatprep.subr.bf16.mxu0 0
  %530 = vmatpush1.bf16.msra.mxu0 0
  %531 = vmatprep.subr.bf16.mxu0 0
  %532 = vmatpush1.bf16.msra.mxu0 0
  %533 = vmatprep.subr.bf16.mxu0 0
  %534 = vmatpush1.bf16.msra.mxu0 0
  %535 = vmatprep.subr.bf16.mxu0 0
  %536 = vmatpush1.bf16.msra.mxu0 0
  %537 = vmatprep.subr.bf16.mxu0 0
  %538 = vmatpush1.bf16.msra.mxu0 0
  %539 = vmatprep.subr.bf16.mxu0 0
  %540 = vmatpush1.bf16.msra.mxu0 0
  %541 = vmatprep.mubr.bf16.mxu0 0
  %542 = vmatmul.mubr.bf16.gmra.mrb[0].mxu0 %v155
  %v543 = vpop.f32.mrb[0].mxu0
  %v544 = vadd.f32 %v495, %v543
  %v545 = vpop.f32.mrb[0].mxu0
  %v546 = vpop.f32.mrb[0].mxu0
  %v547 = vadd.f32 %v498, %v546
  %v548 = vpop.f32.mrb[0].mxu0
  %549 = vmatprep.mubr.bf16.mxu0 0
  %550 = vmatmul.mubr.bf16.gmra.mrb[0].mxu0 %v160
  %v551 = vpop.f32.mrb[0].mxu0
  %v552 = vadd.f32 %v503, %v551
  %v553 = vpop.f32.mrb[0].mxu0
  %v554 = vpop.f32.mrb[0].mxu0
  %v555 = vadd.f32 %v506, %v554
  %v556 = vpop.f32.mrb[0].mxu0
  %557 = vdwg.mxu0
  %v558 = vadd.f32 %v23, %v544
  %v559 = vadd.f32 %v24, %v547
  %v560 = vadd.f32 %v25, %v552
  %v561 = vadd.f32 %v26, %v555
  %562 = vst [vmem:[#allocation2] sm:$0xff] %v558
  %563 = vst [vmem:[#allocation2 + $0x8] sm:$0xff] %v559
  %564 = vst [vmem:[#allocation2 + $0x10] sm:$0xff] %v560
  %565 = vst [vmem:[#allocation2 + $0x18] sm:$0xff] %v561
  // Predicated region
  $region18: #{_lambda_.13} parent=0 // pred_check
    %p566 = pneg %p15
  $region19: #{_lambda_.13} parent=0 // pred_check_branch
    %568 = sbr.rel (%p566) target = $region21
  $region20: #{_lambda_.13} parent=0 // pred_region
    %v569 = vld [vmem:[#allocation2] sm:$0xff]
    %v570 = vld [vmem:[#allocation2 + $0x8] sm:$0xff]
    %v571 = vld [vmem:[#allocation2 + $0x10] sm:$0xff]
    %v572 = vld [vmem:[#allocation2 + $0x18] sm:$0xff]
    %v573 = vld [vmem:[%s2] sm:$0x1]
    %v575 = vlaneseq
    %v576 = vshrl.u32 %v575, 7
    %v577 = vsub.s32 0, %v576
    %v578 = vrot.slane %v573, %v577
    %v580 = vadd.f32 %v569, %v578
    %v581 = vadd.f32 %v570, %v578
    %v582 = vadd.f32 %v571, %v578
    %v583 = vadd.f32 %v572, %v578
    %v584 = vmax.f32 %v580, 0.0
    %v585 = vmax.f32 %v581, 0.0
    %v586 = vmax.f32 %v582, 0.0
    %v587 = vmax.f32 %v583, 0.0
    %588 = vst [vmem:[%s3] sm:$0xff] %v584
    %589 = vst [vmem:[%s3 + $0x8] sm:$0xff] %v585
    %590 = vst [vmem:[%s3 + $0x10] sm:$0xff] %v586
    %591 = vst [vmem:[%s3 + $0x18] sm:$0xff] %v587
  $region21: #{_lambda_.13} parent=0 // pred_fallthru
    _
  // Predicated region
  $region22: #{_lambda_.13} parent=0 // pred_check
    _
  $region23: #{_lambda_.13} parent=0 // pred_check_branch
    %593 = sbr.rel (0) target = $region25
  $region24: #{_lambda_.13} parent=0 // pred_region
    _
  $region25: #{_lambda_.13} parent=0 // pred_fallthru
    _
  // Predicated region
  $region26: #{_lambda_.13} parent=0 // pred_check
    _
  $region27: #{_lambda_.13} parent=0 // pred_check_branch
    %595 = sbr.rel (0) target = $region29
  $region28: #{_lambda_.13} parent=0 // pred_region
    _
  $region29: #{_lambda_.13} parent=0 // pred_fallthru
    _

// kernel: _lambda_.15
$region0: #{_lambda_.15}
  #allocation0 [shape = 'u32[]', space=smem, size = 0x4, offset = 0x4, fixed_abs, tag = 'smem constant byte address 0x4 - core index']
  #allocation1 [shape = 'u32[144,128]{1,0:T(1,128)}', space=vmem, size = 0x12000, scoped, tag = 'internal scratch']
  #allocation2 [shape = 'f32[8,128]{1,0:T(8,128)}', space=vmem, size = 0x1000, scoped, tag = 'scratch operand']
  %s0 = inlined_call_operand.vmem [shape: bf16[8,640], index: 0, kind: input, shape index: {}]
  %s1 = inlined_call_operand.vmem [shape: bf16[640,128], index: 1, kind: input, shape index: {}]
  %s2 = inlined_call_operand.vmem [shape: f32[1,128], index: 2, kind: input, shape index: {}]
  %s3 = inlined_call_operand.vmem [shape: f32[8,128], index: 3, kind: output, shape index: {}]
  %s4 = sld [smem:[#allocation0]]
  $region30: #{_lambda_.15} parent=0
    _
  %s6 = ssub.s32 1, %s4
  %s7 = scalar_select 0, %s6, %s4
  // Predicated region
  $region2: #{_lambda_.15} parent=0 // pred_check
    _
  $region3: #{_lambda_.15} parent=0 // pred_check_branch
    %9 = sbr.rel (0) target = $region5
  $region4: #{_lambda_.15} parent=0 // pred_region
    _
  $region5: #{_lambda_.15} parent=0 // pred_fallthru
    _
  // Predicated region
  $region6: #{_lambda_.15} parent=0 // pred_check
    _
  $region7: #{_lambda_.15} parent=0 // pred_check_branch
    %11 = sbr.rel (0) target = $region9
  $region8: #{_lambda_.15} parent=0 // pred_region
    _
  $region9: #{_lambda_.15} parent=0 // pred_fallthru
    _
  // Predicated region
  $region10: #{_lambda_.15} parent=0 // pred_check
    _
  $region11: #{_lambda_.15} parent=0 // pred_check_branch
    %13 = sbr.rel (0) target = $region13
  $region12: #{_lambda_.15} parent=0 // pred_region
    _
  $region13: #{_lambda_.15} parent=0 // pred_fallthru
    _
  %p15 = scmp.eq.s32.totalorder 0, 0
  // Predicated region
  $region14: #{_lambda_.15} parent=0 // pred_check
    %p16 = pneg %p15
  $region15: #{_lambda_.15} parent=0 // pred_check_branch
    %18 = sbr.rel (%p16) target = $region17
  $region16: #{_lambda_.15} parent=0 // pred_region
    %19 = vst [vmem:[#allocation2] sm:$0xff] 0.0
  $region17: #{_lambda_.15} parent=0 // pred_fallthru
    _
  %v20 = vld [vmem:[#allocation2] sm:$0xff]
  %v21 = vld [vmem:[%s0] sm:$0xff]
  %v22 = vld [vmem:[%s0 + $0x8] sm:$0xff]
  %v23 = vld [vmem:[%s0 + $0x10] sm:$0xf]
  %v24 = vld [vmem:[%s1] sm:$0xf]
  %v25 = vld [vmem:[%s1 + $0x4] sm:$0xf]
  %v26 = vld [vmem:[%s1 + $0x8] sm:$0xf]
  %v27 = vld [vmem:[%s1 + $0xc] sm:$0xf]
  %v28 = vld [vmem:[%s1 + $0x10] sm:$0xf]
  %v29 = vld [vmem:[%s1 + $0x14] sm:$0xf]
  %v30 = vld [vmem:[%s1 + $0x18] sm:$0xf]
  %v31 = vld [vmem:[%s1 + $0x1c] sm:$0xf]
  %v32 = vld [vmem:[%s1 + $0x20] sm:$0xf]
  %v33 = vld [vmem:[%s1 + $0x24] sm:$0xf]
  %v34 = vld [vmem:[%s1 + $0x28] sm:$0xf]
  %v35 = vld [vmem:[%s1 + $0x2c] sm:$0xf]
  %v36 = vld [vmem:[%s1 + $0x30] sm:$0xf]
  %v37 = vld [vmem:[%s1 + $0x34] sm:$0xf]
  %v38 = vld [vmem:[%s1 + $0x38] sm:$0xf]
  %v39 = vld [vmem:[%s1 + $0x3c] sm:$0xf]
  %v40 = vld [vmem:[%s1 + $0x40] sm:$0xf]
  %v41 = vld [vmem:[%s1 + $0x44] sm:$0xf]
  %v42 = vld [vmem:[%s1 + $0x48] sm:$0xf]
  %v43 = vld [vmem:[%s1 + $0x4c] sm:$0xf]
  %v44 = vld [vmem:[%s1 + $0x50] sm:$0xf]
  %v45 = vld [vmem:[%s1 + $0x54] sm:$0xf]
  %v46 = vld [vmem:[%s1 + $0x58] sm:$0xf]
  %v47 = vld [vmem:[%s1 + $0x5c] sm:$0xf]
  %v48 = vld [vmem:[%s1 + $0x60] sm:$0xf]
  %v49 = vld [vmem:[%s1 + $0x64] sm:$0xf]
  %v50 = vld [vmem:[%s1 + $0x68] sm:$0xf]
  %v51 = vld [vmem:[%s1 + $0x6c] sm:$0xf]
  %v52 = vld [vmem:[%s1 + $0x70] sm:$0xf]
  %v53 = vld [vmem:[%s1 + $0x74] sm:$0xf]
  %v54 = vld [vmem:[%s1 + $0x78] sm:$0xf]
  %v55 = vld [vmem:[%s1 + $0x7c] sm:$0xf]
  %v56 = vld [vmem:[%s1 + $0x80] sm:$0xf]
  %v57 = vld [vmem:[%s1 + $0x84] sm:$0xf]
  %v58 = vld [vmem:[%s1 + $0x88] sm:$0xf]
  %v59 = vld [vmem:[%s1 + $0x8c] sm:$0xf]
  %v60 = vld [vmem:[%s1 + $0x90] sm:$0xf]
  %v61 = vld [vmem:[%s1 + $0x94] sm:$0xf]
  %v62 = vld [vmem:[%s1 + $0x98] sm:$0xf]
  %v63 = vld [vmem:[%s1 + $0x9c] sm:$0xf]
  %v64 = vld [vmem:[%s1 + $0xa0] sm:$0xf]
  %v65 = vld [vmem:[%s1 + $0xa4] sm:$0xf]
  %v66 = vld [vmem:[%s1 + $0xa8] sm:$0xf]
  %v67 = vld [vmem:[%s1 + $0xac] sm:$0xf]
  %v68 = vld [vmem:[%s1 + $0xb0] sm:$0xf]
  %v69 = vld [vmem:[%s1 + $0xb4] sm:$0xf]
  %v70 = vld [vmem:[%s1 + $0xb8] sm:$0xf]
  %v71 = vld [vmem:[%s1 + $0xbc] sm:$0xf]
  %v72 = vld [vmem:[%s1 + $0xc0] sm:$0xf]
  %v73 = vld [vmem:[%s1 + $0xc4] sm:$0xf]
  %v74 = vld [vmem:[%s1 + $0xc8] sm:$0xf]
  %v75 = vld [vmem:[%s1 + $0xcc] sm:$0xf]
  %v76 = vld [vmem:[%s1 + $0xd0] sm:$0xf]
  %v77 = vld [vmem:[%s1 + $0xd4] sm:$0xf]
  %v78 = vld [vmem:[%s1 + $0xd8] sm:$0xf]
  %v79 = vld [vmem:[%s1 + $0xdc] sm:$0xf]
  %v80 = vld [vmem:[%s1 + $0xe0] sm:$0xf]
  %v81 = vld [vmem:[%s1 + $0xe4] sm:$0xf]
  %v82 = vld [vmem:[%s1 + $0xe8] sm:$0xf]
  %v83 = vld [vmem:[%s1 + $0xec] sm:$0xf]
  %v84 = vld [vmem:[%s1 + $0xf0] sm:$0xf]
  %v85 = vld [vmem:[%s1 + $0xf4] sm:$0xf]
  %v86 = vld [vmem:[%s1 + $0xf8] sm:$0xf]
  %v87 = vld [vmem:[%s1 + $0xfc] sm:$0xf]
  %v88 = vld [vmem:[%s1 + $0x100] sm:$0xf]
  %v89 = vld [vmem:[%s1 + $0x104] sm:$0xf]
  %v90 = vld [vmem:[%s1 + $0x108] sm:$0xf]
  %v91 = vld [vmem:[%s1 + $0x10c] sm:$0xf]
  %v92 = vld [vmem:[%s1 + $0x110] sm:$0xf]
  %v93 = vld [vmem:[%s1 + $0x114] sm:$0xf]
  %v94 = vld [vmem:[%s1 + $0x118] sm:$0xf]
  %v95 = vld [vmem:[%s1 + $0x11c] sm:$0xf]
  %v96 = vld [vmem:[%s1 + $0x120] sm:$0xf]
  %v97 = vld [vmem:[%s1 + $0x124] sm:$0xf]
  %v98 = vld [vmem:[%s1 + $0x128] sm:$0xf]
  %v99 = vld [vmem:[%s1 + $0x12c] sm:$0xf]
  %v100 = vld [vmem:[%s1 + $0x130] sm:$0xf]
  %v101 = vld [vmem:[%s1 + $0x134] sm:$0xf]
  %v102 = vld [vmem:[%s1 + $0x138] sm:$0xf]
  %v103 = vld [vmem:[%s1 + $0x13c] sm:$0xf]
  %v107 = vunpack.c.l.b16 %v21
  %v108 = vunpack.c.h.b16 %v21
  %v109 = vunpack.c.l.b16 %v22
  %v110 = vunpack.c.h.b16 %v22
  %v111 = vunpack.c.l.b16 %v23
  %v112 = vpack.c.b16 %v107, %v107
  %v113 = vpack.c.b16 %v108, %v108
  %v114 = vpack.c.b16 %v109, %v109
  %v115 = vpack.c.b16 %v110, %v110
  %v116 = vpack.c.b16 %v111, %v111
  %v202 = vunpack.c.l.b16 %v24
  %v203 = vunpack.c.l.b16 %v25
  %v204 = vunpack.c.l.b16 %v26
  %v205 = vunpack.c.l.b16 %v27
  %v206 = vunpack.c.l.b16 %v28
  %v207 = vunpack.c.l.b16 %v29
  %v208 = vunpack.c.l.b16 %v30
  %v209 = vunpack.c.l.b16 %v31
  %v210 = vunpack.c.l.b16 %v32
  %v211 = vunpack.c.l.b16 %v33
  %v212 = vunpack.c.l.b16 %v34
  %v213 = vunpack.c.l.b16 %v35
  %v214 = vunpack.c.l.b16 %v36
  %v215 = vunpack.c.l.b16 %v37
  %v216 = vunpack.c.l.b16 %v38
  %v217 = vunpack.c.l.b16 %v39
  %v218 = vunpack.c.l.b16 %v40
  %v219 = vunpack.c.l.b16 %v41
  %v220 = vunpack.c.l.b16 %v42
  %v221 = vunpack.c.l.b16 %v43
  %v222 = vunpack.c.l.b16 %v44
  %v223 = vunpack.c.l.b16 %v45
  %v224 = vunpack.c.l.b16 %v46
  %v225 = vunpack.c.l.b16 %v47
  %v226 = vunpack.c.l.b16 %v48
  %v227 = vunpack.c.l.b16 %v49
  %v228 = vunpack.c.l.b16 %v50
  %v229 = vunpack.c.l.b16 %v51
  %v230 = vunpack.c.l.b16 %v52
  %v231 = vunpack.c.l.b16 %v53
  %v232 = vunpack.c.l.b16 %v54
  %v233 = vunpack.c.l.b16 %v55
  %v234 = vunpack.c.l.b16 %v56
  %v235 = vunpack.c.l.b16 %v57
  %v236 = vunpack.c.l.b16 %v58
  %v237 = vunpack.c.l.b16 %v59
  %v238 = vunpack.c.l.b16 %v60
  %v239 = vunpack.c.l.b16 %v61
  %v240 = vunpack.c.l.b16 %v62
  %v241 = vunpack.c.l.b16 %v63
  %v242 = vunpack.c.l.b16 %v64
  %v243 = vunpack.c.l.b16 %v65
  %v244 = vunpack.c.l.b16 %v66
  %v245 = vunpack.c.l.b16 %v67
  %v246 = vunpack.c.l.b16 %v68
  %v247 = vunpack.c.l.b16 %v69
  %v248 = vunpack.c.l.b16 %v70
  %v249 = vunpack.c.l.b16 %v71
  %v250 = vunpack.c.l.b16 %v72
  %v251 = vunpack.c.l.b16 %v73
  %v252 = vunpack.c.l.b16 %v74
  %v253 = vunpack.c.l.b16 %v75
  %v254 = vunpack.c.l.b16 %v76
  %v255 = vunpack.c.l.b16 %v77
  %v256 = vunpack.c.l.b16 %v78
  %v257 = vunpack.c.l.b16 %v79
  %v258 = vunpack.c.l.b16 %v80
  %v259 = vunpack.c.l.b16 %v81
  %v260 = vunpack.c.l.b16 %v82
  %v261 = vunpack.c.l.b16 %v83
  %v262 = vunpack.c.l.b16 %v84
  %v263 = vunpack.c.l.b16 %v85
  %v264 = vunpack.c.l.b16 %v86
  %v265 = vunpack.c.l.b16 %v87
  %v266 = vunpack.c.l.b16 %v88
  %v267 = vunpack.c.l.b16 %v89
  %v268 = vunpack.c.l.b16 %v90
  %v269 = vunpack.c.l.b16 %v91
  %v270 = vunpack.c.l.b16 %v92
  %v271 = vunpack.c.l.b16 %v93
  %v272 = vunpack.c.l.b16 %v94
  %v273 = vunpack.c.l.b16 %v95
  %v274 = vunpack.c.l.b16 %v96
  %v275 = vunpack.c.l.b16 %v97
  %v276 = vunpack.c.l.b16 %v98
  %v277 = vunpack.c.l.b16 %v99
  %v278 = vunpack.c.l.b16 %v100
  %v279 = vunpack.c.l.b16 %v101
  %v280 = vunpack.c.l.b16 %v102
  %v281 = vunpack.c.l.b16 %v103
  %v282 = vpack.c.b16 %v203, %v202
  %v283 = vpack.c.b16 %v205, %v204
  %v284 = vpack.c.b16 %v207, %v206
  %v285 = vpack.c.b16 %v209, %v208
  %v286 = vpack.c.b16 %v211, %v210
  %v287 = vpack.c.b16 %v213, %v212
  %v288 = vpack.c.b16 %v215, %v214
  %v289 = vpack.c.b16 %v217, %v216
  %v290 = vpack.c.b16 %v219, %v218
  %v291 = vpack.c.b16 %v221, %v220
  %v292 = vpack.c.b16 %v223, %v222
  %v293 = vpack.c.b16 %v225, %v224
  %v294 = vpack.c.b16 %v227, %v226
  %v295 = vpack.c.b16 %v229, %v228
  %v296 = vpack.c.b16 %v231, %v230
  %v297 = vpack.c.b16 %v233, %v232
  %v298 = vpack.c.b16 %v235, %v234
  %v299 = vpack.c.b16 %v237, %v236
  %v300 = vpack.c.b16 %v239, %v238
  %v301 = vpack.c.b16 %v241, %v240
  %v302 = vpack.c.b16 %v243, %v242
  %v303 = vpack.c.b16 %v245, %v244
  %v304 = vpack.c.b16 %v247, %v246
  %v305 = vpack.c.b16 %v249, %v248
  %v306 = vpack.c.b16 %v251, %v250
  %v307 = vpack.c.b16 %v253, %v252
  %v308 = vpack.c.b16 %v255, %v254
  %v309 = vpack.c.b16 %v257, %v256
  %v310 = vpack.c.b16 %v259, %v258
  %v311 = vpack.c.b16 %v261, %v260
  %v312 = vpack.c.b16 %v263, %v262
  %v313 = vpack.c.b16 %v265, %v264
  %v314 = vpack.c.b16 %v267, %v266
  %v315 = vpack.c.b16 %v269, %v268
  %v316 = vpack.c.b16 %v271, %v270
  %v317 = vpack.c.b16 %v273, %v272
  %v318 = vpack.c.b16 %v275, %v274
  %v319 = vpack.c.b16 %v277, %v276
  %v320 = vpack.c.b16 %v279, %v278
  %v321 = vpack.c.b16 %v281, %v280
  %362 = vmatprep.subr.bf16.mxu0 0
  %363 = vmatpush1.bf16.msra.mxu0 %v282
  %364 = vmatprep.subr.bf16.mxu0 0
  %365 = vmatpush1.bf16.msra.mxu0 %v283
  %366 = vmatprep.subr.bf16.mxu0 0
  %367 = vmatpush1.bf16.msra.mxu0 %v284
  %368 = vmatprep.subr.bf16.mxu0 0
  %369 = vmatpush1.bf16.msra.mxu0 %v285
  %370 = vmatprep.subr.bf16.mxu0 0
  %371 = vmatpush1.bf16.msra.mxu0 %v286
  %372 = vmatprep.subr.bf16.mxu0 0
  %373 = vmatpush1.bf16.msra.mxu0 %v287
  %374 = vmatprep.subr.bf16.mxu0 0
  %375 = vmatpush1.bf16.msra.mxu0 %v288
  %376 = vmatprep.subr.bf16.mxu0 0
  %377 = vmatpush1.bf16.msra.mxu0 %v289
  %378 = vmatprep.subr.bf16.mxu0 0
  %379 = vmatpush1.bf16.msra.mxu0 %v290
  %380 = vmatprep.subr.bf16.mxu0 0
  %381 = vmatpush1.bf16.msra.mxu0 %v291
  %382 = vmatprep.subr.bf16.mxu0 0
  %383 = vmatpush1.bf16.msra.mxu0 %v292
  %384 = vmatprep.subr.bf16.mxu0 0
  %385 = vmatpush1.bf16.msra.mxu0 %v293
  %386 = vmatprep.subr.bf16.mxu0 0
  %387 = vmatpush1.bf16.msra.mxu0 %v294
  %388 = vmatprep.subr.bf16.mxu0 0
  %389 = vmatpush1.bf16.msra.mxu0 %v295
  %390 = vmatprep.subr.bf16.mxu0 0
  %391 = vmatpush1.bf16.msra.mxu0 %v296
  %392 = vmatprep.subr.bf16.mxu0 0
  %393 = vmatpush1.bf16.msra.mxu0 %v297
  %394 = vmatprep.mubr.bf16.mxu0 %v113
  %395 = vmatmul.mubr.bf16.gmra.mrb[0].mxu0 %v112
  %v396 = vpop.f32.mrb[0].mxu0
  %v397 = vadd.f32 0.0, %v396
  %v398 = vpop.f32.mrb[0].mxu0
  %v399 = vpop.f32.mrb[0].mxu0
  %v400 = vpop.f32.mrb[0].mxu0
  %401 = vdwg.mxu0
  %402 = vmatprep.subr.bf16.mxu0 0
  %403 = vmatpush1.bf16.msra.mxu0 %v298
  %404 = vmatprep.subr.bf16.mxu0 0
  %405 = vmatpush1.bf16.msra.mxu0 %v299
  %406 = vmatprep.subr.bf16.mxu0 0
  %407 = vmatpush1.bf16.msra.mxu0 %v300
  %408 = vmatprep.subr.bf16.mxu0 0
  %409 = vmatpush1.bf16.msra.mxu0 %v301
  %410 = vmatprep.subr.bf16.mxu0 0
  %411 = vmatpush1.bf16.msra.mxu0 %v302
  %412 = vmatprep.subr.bf16.mxu0 0
  %413 = vmatpush1.bf16.msra.mxu0 %v303
  %414 = vmatprep.subr.bf16.mxu0 0
  %415 = vmatpush1.bf16.msra.mxu0 %v304
  %416 = vmatprep.subr.bf16.mxu0 0
  %417 = vmatpush1.bf16.msra.mxu0 %v305
  %418 = vmatprep.subr.bf16.mxu0 0
  %419 = vmatpush1.bf16.msra.mxu0 %v306
  %420 = vmatprep.subr.bf16.mxu0 0
  %421 = vmatpush1.bf16.msra.mxu0 %v307
  %422 = vmatprep.subr.bf16.mxu0 0
  %423 = vmatpush1.bf16.msra.mxu0 %v308
  %424 = vmatprep.subr.bf16.mxu0 0
  %425 = vmatpush1.bf16.msra.mxu0 %v309
  %426 = vmatprep.subr.bf16.mxu0 0
  %427 = vmatpush1.bf16.msra.mxu0 %v310
  %428 = vmatprep.subr.bf16.mxu0 0
  %429 = vmatpush1.bf16.msra.mxu0 %v311
  %430 = vmatprep.subr.bf16.mxu0 0
  %431 = vmatpush1.bf16.msra.mxu0 %v312
  %432 = vmatprep.subr.bf16.mxu0 0
  %433 = vmatpush1.bf16.msra.mxu0 %v313
  %434 = vmatprep.mubr.bf16.mxu0 %v115
  %435 = vmatmul.mubr.bf16.gmra.mrb[0].mxu0 %v114
  %v436 = vpop.f32.mrb[0].mxu0
  %v437 = vadd.f32 %v397, %v436
  %v438 = vpop.f32.mrb[0].mxu0
  %v439 = vpop.f32.mrb[0].mxu0
  %v440 = vpop.f32.mrb[0].mxu0
  %441 = vdwg.mxu0
  %442 = vmatprep.subr.bf16.mxu0 0
  %443 = vmatpush1.bf16.msra.mxu0 %v314
  %444 = vmatprep.subr.bf16.mxu0 0
  %445 = vmatpush1.bf16.msra.mxu0 %v315
  %446 = vmatprep.subr.bf16.mxu0 0
  %447 = vmatpush1.bf16.msra.mxu0 %v316
  %448 = vmatprep.subr.bf16.mxu0 0
  %449 = vmatpush1.bf16.msra.mxu0 %v317
  %450 = vmatprep.subr.bf16.mxu0 0
  %451 = vmatpush1.bf16.msra.mxu0 %v318
  %452 = vmatprep.subr.bf16.mxu0 0
  %453 = vmatpush1.bf16.msra.mxu0 %v319
  %454 = vmatprep.subr.bf16.mxu0 0
  %455 = vmatpush1.bf16.msra.mxu0 %v320
  %456 = vmatprep.subr.bf16.mxu0 0
  %457 = vmatpush1.bf16.msra.mxu0 %v321
  %458 = vmatprep.subr.bf16.mxu0 0
  %459 = vmatpush1.bf16.msra.mxu0 0
  %460 = vmatprep.subr.bf16.mxu0 0
  %461 = vmatpush1.bf16.msra.mxu0 0
  %462 = vmatprep.subr.bf16.mxu0 0
  %463 = vmatpush1.bf16.msra.mxu0 0
  %464 = vmatprep.subr.bf16.mxu0 0
  %465 = vmatpush1.bf16.msra.mxu0 0
  %466 = vmatprep.subr.bf16.mxu0 0
  %467 = vmatpush1.bf16.msra.mxu0 0
  %468 = vmatprep.subr.bf16.mxu0 0
  %469 = vmatpush1.bf16.msra.mxu0 0
  %470 = vmatprep.subr.bf16.mxu0 0
  %471 = vmatpush1.bf16.msra.mxu0 0
  %472 = vmatprep.subr.bf16.mxu0 0
  %473 = vmatpush1.bf16.msra.mxu0 0
  %474 = vmatprep.mubr.bf16.mxu0 0
  %475 = vmatmul.mubr.bf16.gmra.mrb[0].mxu0 %v116
  %v476 = vpop.f32.mrb[0].mxu0
  %v477 = vadd.f32 %v437, %v476
  %v478 = vpop.f32.mrb[0].mxu0
  %v479 = vpop.f32.mrb[0].mxu0
  %v480 = vpop.f32.mrb[0].mxu0
  %481 = vdwg.mxu0
  %v482 = vadd.f32 %v20, %v477
  %483 = vst [vmem:[#allocation2] sm:$0xff] %v482
  // Predicated region
  $region18: #{_lambda_.15} parent=0 // pred_check
    %p484 = pneg %p15
  $region19: #{_lambda_.15} parent=0 // pred_check_branch
    %486 = sbr.rel (%p484) target = $region21
  $region20: #{_lambda_.15} parent=0 // pred_region
    %v487 = vld [vmem:[#allocation2] sm:$0xff]
    %v488 = vld [vmem:[%s2] sm:$0x1]
    %v490 = vlaneseq
    %v491 = vshrl.u32 %v490, 7
    %v492 = vsub.s32 0, %v491
    %v493 = vrot.slane %v488, %v492
    %v495 = vadd.f32 %v487, %v493
    %v496 = vmax.f32 %v495, 0.0
    %497 = vst [vmem:[%s3] sm:$0xff] %v496
  $region21: #{_lambda_.15} parent=0 // pred_fallthru
    _
  // Predicated region
  $region22: #{_lambda_.15} parent=0 // pred_check
    _
  $region23: #{_lambda_.15} parent=0 // pred_check_branch
    %499 = sbr.rel (0) target = $region25
  $region24: #{_lambda_.15} parent=0 // pred_region
    _
  $region25: #{_lambda_.15} parent=0 // pred_fallthru
    _
  // Predicated region
  $region26: #{_lambda_.15} parent=0 // pred_check
    _
  $region27: #{_lambda_.15} parent=0 // pred_check_branch
    %501 = sbr.rel (0) target = $region29
  $region28: #{_lambda_.15} parent=0 // pred_region
    _
  $region29: #{_lambda_.15} parent=0 // pred_fallthru
    _

// kernel: _lambda_.17
$region0: #{_lambda_.17}
  #allocation0 [shape = 'u32[]', space=smem, size = 0x4, offset = 0x4, fixed_abs, tag = 'smem constant byte address 0x4 - core index']
  #allocation1 [shape = 'u32[144,128]{1,0:T(1,128)}', space=vmem, size = 0x12000, scoped, tag = 'internal scratch']
  #allocation2 [shape = 'f32[32,128]{1,0:T(8,128)}', space=vmem, size = 0x4000, scoped, tag = 'scratch operand']
  %s0 = inlined_call_operand.vmem [shape: bf16[32,1024], index: 0, kind: input, shape index: {}]
  %s1 = inlined_call_operand.vmem [shape: bf16[1024,128], index: 1, kind: input, shape index: {}]
  %s2 = inlined_call_operand.vmem [shape: f32[1,128], index: 2, kind: input, shape index: {}]
  %s3 = inlined_call_operand.vmem [shape: f32[32,128], index: 3, kind: output, shape index: {}]
  %s4 = sld [smem:[#allocation0]]
  $region30: #{_lambda_.17} parent=0
    _
  %s6 = ssub.s32 1, %s4
  %s7 = scalar_select 0, %s6, %s4
  // Predicated region
  $region2: #{_lambda_.17} parent=0 // pred_check
    _
  $region3: #{_lambda_.17} parent=0 // pred_check_branch
    %9 = sbr.rel (0) target = $region5
  $region4: #{_lambda_.17} parent=0 // pred_region
    _
  $region5: #{_lambda_.17} parent=0 // pred_fallthru
    _
  // Predicated region
  $region6: #{_lambda_.17} parent=0 // pred_check
    _
  $region7: #{_lambda_.17} parent=0 // pred_check_branch
    %11 = sbr.rel (0) target = $region9
  $region8: #{_lambda_.17} parent=0 // pred_region
    _
  $region9: #{_lambda_.17} parent=0 // pred_fallthru
    _
  // Predicated region
  $region10: #{_lambda_.17} parent=0 // pred_check
    _
  $region11: #{_lambda_.17} parent=0 // pred_check_branch
    %13 = sbr.rel (0) target = $region13
  $region12: #{_lambda_.17} parent=0 // pred_region
    _
  $region13: #{_lambda_.17} parent=0 // pred_fallthru
    _
  %p15 = scmp.eq.s32.totalorder 0, 0
  // Predicated region
  $region14: #{_lambda_.17} parent=0 // pred_check
    %p16 = pneg %p15
  $region15: #{_lambda_.17} parent=0 // pred_check_branch
    %18 = sbr.rel (%p16) target = $region17
  $region16: #{_lambda_.17} parent=0 // pred_region
    %19 = vst [vmem:[#allocation2] sm:$0xff] 0.0
    %20 = vst [vmem:[#allocation2 + $0x8] sm:$0xff] 0.0
    %21 = vst [vmem:[#allocation2 + $0x10] sm:$0xff] 0.0
    %22 = vst [vmem:[#allocation2 + $0x18] sm:$0xff] 0.0
  $region17: #{_lambda_.17} parent=0 // pred_fallthru
    _
  %v23 = vld [vmem:[#allocation2] sm:$0xff]
  %v24 = vld [vmem:[#allocation2 + $0x8] sm:$0xff]
  %v25 = vld [vmem:[#allocation2 + $0x10] sm:$0xff]
  %v26 = vld [vmem:[#allocation2 + $0x18] sm:$0xff]
  %v27 = vld [vmem:[%s0] sm:$0xff]
  %v28 = vld [vmem:[%s0 + $0x8] sm:$0xff]
  %v29 = vld [vmem:[%s0 + $0x10] sm:$0xff]
  %v30 = vld [vmem:[%s0 + $0x18] sm:$0xff]
  %v31 = vld [vmem:[%s0 + $0x20] sm:$0xff]
  %v32 = vld [vmem:[%s0 + $0x28] sm:$0xff]
  %v33 = vld [vmem:[%s0 + $0x30] sm:$0xff]
  %v34 = vld [vmem:[%s0 + $0x38] sm:$0xff]
  %v35 = vld [vmem:[%s0 + $0x40] sm:$0xff]
  %v36 = vld [vmem:[%s0 + $0x48] sm:$0xff]
  %v37 = vld [vmem:[%s0 + $0x50] sm:$0xff]
  %v38 = vld [vmem:[%s0 + $0x58] sm:$0xff]
  %v39 = vld [vmem:[%s0 + $0x60] sm:$0xff]
  %v40 = vld [vmem:[%s0 + $0x68] sm:$0xff]
  %v41 = vld [vmem:[%s0 + $0x70] sm:$0xff]
  %v42 = vld [vmem:[%s0 + $0x78] sm:$0xff]
  %v43 = vld [vmem:[%s1] sm:$0xf]
  %v44 = vld [vmem:[%s1 + $0x4] sm:$0xf]
  %v45 = vld [vmem:[%s1 + $0x8] sm:$0xf]
  %v46 = vld [vmem:[%s1 + $0xc] sm:$0xf]
  %v47 = vld [vmem:[%s1 + $0x10] sm:$0xf]
  %v48 = vld [vmem:[%s1 + $0x14] sm:$0xf]
  %v49 = vld [vmem:[%s1 + $0x18] sm:$0xf]
  %v50 = vld [vmem:[%s1 + $0x1c] sm:$0xf]
  %v51 = vld [vmem:[%s1 + $0x20] sm:$0xf]
  %v52 = vld [vmem:[%s1 + $0x24] sm:$0xf]
  %v53 = vld [vmem:[%s1 + $0x28] sm:$0xf]
  %v54 = vld [vmem:[%s1 + $0x2c] sm:$0xf]
  %v55 = vld [vmem:[%s1 + $0x30] sm:$0xf]
  %v56 = vld [vmem:[%s1 + $0x34] sm:$0xf]
  %v57 = vld [vmem:[%s1 + $0x38] sm:$0xf]
  %v58 = vld [vmem:[%s1 + $0x3c] sm:$0xf]
  %v59 = vld [vmem:[%s1 + $0x40] sm:$0xf]
  %v60 = vld [vmem:[%s1 + $0x44] sm:$0xf]
  %v61 = vld [vmem:[%s1 + $0x48] sm:$0xf]
  %v62 = vld [vmem:[%s1 + $0x4c] sm:$0xf]
  %v63 = vld [vmem:[%s1 + $0x50] sm:$0xf]
  %v64 = vld [vmem:[%s1 + $0x54] sm:$0xf]
  %v65 = vld [vmem:[%s1 + $0x58] sm:$0xf]
  %v66 = vld [vmem:[%s1 + $0x5c] sm:$0xf]
  %v67 = vld [vmem:[%s1 + $0x60] sm:$0xf]
  %v68 = vld [vmem:[%s1 + $0x64] sm:$0xf]
  %v69 = vld [vmem:[%s1 + $0x68] sm:$0xf]
  %v70 = vld [vmem:[%s1 + $0x6c] sm:$0xf]
  %v71 = vld [vmem:[%s1 + $0x70] sm:$0xf]
  %v72 = vld [vmem:[%s1 + $0x74] sm:$0xf]
  %v73 = vld [vmem:[%s1 + $0x78] sm:$0xf]
  %v74 = vld [vmem:[%s1 + $0x7c] sm:$0xf]
  %v75 = vld [vmem:[%s1 + $0x80] sm:$0xf]
  %v76 = vld [vmem:[%s1 + $0x84] sm:$0xf]
  %v77 = vld [vmem:[%s1 + $0x88] sm:$0xf]
  %v78 = vld [vmem:[%s1 + $0x8c] sm:$0xf]
  %v79 = vld [vmem:[%s1 + $0x90] sm:$0xf]
  %v80 = vld [vmem:[%s1 + $0x94] sm:$0xf]
  %v81 = vld [vmem:[%s1 + $0x98] sm:$0xf]
  %v82 = vld [vmem:[%s1 + $0x9c] sm:$0xf]
  %v83 = vld [vmem:[%s1 + $0xa0] sm:$0xf]
  %v84 = vld [vmem:[%s1 + $0xa4] sm:$0xf]
  %v85 = vld [vmem:[%s1 + $0xa8] sm:$0xf]
  %v86 = vld [vmem:[%s1 + $0xac] sm:$0xf]
  %v87 = vld [vmem:[%s1 + $0xb0] sm:$0xf]
  %v88 = vld [vmem:[%s1 + $0xb4] sm:$0xf]
  %v89 = vld [vmem:[%s1 + $0xb8] sm:$0xf]
  %v90 = vld [vmem:[%s1 + $0xbc] sm:$0xf]
  %v91 = vld [vmem:[%s1 + $0xc0] sm:$0xf]
  %v92 = vld [vmem:[%s1 + $0xc4] sm:$0xf]
  %v93 = vld [vmem:[%s1 + $0xc8] sm:$0xf]
  %v94 = vld [vmem:[%s1 + $0xcc] sm:$0xf]
  %v95 = vld [vmem:[%s1 + $0xd0] sm:$0xf]
  %v96 = vld [vmem:[%s1 + $0xd4] sm:$0xf]
  %v97 = vld [vmem:[%s1 + $0xd8] sm:$0xf]
  %v98 = vld [vmem:[%s1 + $0xdc] sm:$0xf]
  %v99 = vld [vmem:[%s1 + $0xe0] sm:$0xf]
  %v100 = vld [vmem:[%s1 + $0xe4] sm:$0xf]
  %v101 = vld [vmem:[%s1 + $0xe8] sm:$0xf]
  %v102 = vld [vmem:[%s1 + $0xec] sm:$0xf]
  %v103 = vld [vmem:[%s1 + $0xf0] sm:$0xf]
  %v104 = vld [vmem:[%s1 + $0xf4] sm:$0xf]
  %v105 = vld [vmem:[%s1 + $0xf8] sm:$0xf]
  %v106 = vld [vmem:[%s1 + $0xfc] sm:$0xf]
  %v107 = vld [vmem:[%s1 + $0x100] sm:$0xf]
  %v108 = vld [vmem:[%s1 + $0x104] sm:$0xf]
  %v109 = vld [vmem:[%s1 + $0x108] sm:$0xf]
  %v110 = vld [vmem:[%s1 + $0x10c] sm:$0xf]
  %v111 = vld [vmem:[%s1 + $0x110] sm:$0xf]
  %v112 = vld [vmem:[%s1 + $0x114] sm:$0xf]
  %v113 = vld [vmem:[%s1 + $0x118] sm:$0xf]
  %v114 = vld [vmem:[%s1 + $0x11c] sm:$0xf]
  %v115 = vld [vmem:[%s1 + $0x120] sm:$0xf]
  %v116 = vld [vmem:[%s1 + $0x124] sm:$0xf]
  %v117 = vld [vmem:[%s1 + $0x128] sm:$0xf]
  %v118 = vld [vmem:[%s1 + $0x12c] sm:$0xf]
  %v119 = vld [vmem:[%s1 + $0x130] sm:$0xf]
  %v120 = vld [vmem:[%s1 + $0x134] sm:$0xf]
  %v121 = vld [vmem:[%s1 + $0x138] sm:$0xf]
  %v122 = vld [vmem:[%s1 + $0x13c] sm:$0xf]
  %v123 = vld [vmem:[%s1 + $0x140] sm:$0xf]
  %v124 = vld [vmem:[%s1 + $0x144] sm:$0xf]
  %v125 = vld [vmem:[%s1 + $0x148] sm:$0xf]
  %v126 = vld [vmem:[%s1 + $0x14c] sm:$0xf]
  %v127 = vld [vmem:[%s1 + $0x150] sm:$0xf]
  %v128 = vld [vmem:[%s1 + $0x154] sm:$0xf]
  %v129 = vld [vmem:[%s1 + $0x158] sm:$0xf]
  %v130 = vld [vmem:[%s1 + $0x15c] sm:$0xf]
  %v131 = vld [vmem:[%s1 + $0x160] sm:$0xf]
  %v132 = vld [vmem:[%s1 + $0x164] sm:$0xf]
  %v133 = vld [vmem:[%s1 + $0x168] sm:$0xf]
  %v134 = vld [vmem:[%s1 + $0x16c] sm:$0xf]
  %v135 = vld [vmem:[%s1 + $0x170] sm:$0xf]
  %v136 = vld [vmem:[%s1 + $0x174] sm:$0xf]
  %v137 = vld [vmem:[%s1 + $0x178] sm:$0xf]
  %v138 = vld [vmem:[%s1 + $0x17c] sm:$0xf]
  %v139 = vld [vmem:[%s1 + $0x180] sm:$0xf]
  %v140 = vld [vmem:[%s1 + $0x184] sm:$0xf]
  %v141 = vld [vmem:[%s1 + $0x188] sm:$0xf]
  %v142 = vld [vmem:[%s1 + $0x18c] sm:$0xf]
  %v143 = vld [vmem:[%s1 + $0x190] sm:$0xf]
  %v144 = vld [vmem:[%s1 + $0x194] sm:$0xf]
  %v145 = vld [vmem:[%s1 + $0x198] sm:$0xf]
  %v146 = vld [vmem:[%s1 + $0x19c] sm:$0xf]
  %v147 = vld [vmem:[%s1 + $0x1a0] sm:$0xf]
  %v148 = vld [vmem:[%s1 + $0x1a4] sm:$0xf]
  %v149 = vld [vmem:[%s1 + $0x1a8] sm:$0xf]
  %v150 = vld [vmem:[%s1 + $0x1ac] sm:$0xf]
  %v151 = vld [vmem:[%s1 + $0x1b0] sm:$0xf]
  %v152 = vld [vmem:[%s1 + $0x1b4] sm:$0xf]
  %v153 = vld [vmem:[%s1 + $0x1b8] sm:$0xf]
  %v154 = vld [vmem:[%s1 + $0x1bc] sm:$0xf]
  %v155 = vld [vmem:[%s1 + $0x1c0] sm:$0xf]
  %v156 = vld [vmem:[%s1 + $0x1c4] sm:$0xf]
  %v157 = vld [vmem:[%s1 + $0x1c8] sm:$0xf]
  %v158 = vld [vmem:[%s1 + $0x1cc] sm:$0xf]
  %v159 = vld [vmem:[%s1 + $0x1d0] sm:$0xf]
  %v160 = vld [vmem:[%s1 + $0x1d4] sm:$0xf]
  %v161 = vld [vmem:[%s1 + $0x1d8] sm:$0xf]
  %v162 = vld [vmem:[%s1 + $0x1dc] sm:$0xf]
  %v163 = vld [vmem:[%s1 + $0x1e0] sm:$0xf]
  %v164 = vld [vmem:[%s1 + $0x1e4] sm:$0xf]
  %v165 = vld [vmem:[%s1 + $0x1e8] sm:$0xf]
  %v166 = vld [vmem:[%s1 + $0x1ec] sm:$0xf]
  %v167 = vld [vmem:[%s1 + $0x1f0] sm:$0xf]
  %v168 = vld [vmem:[%s1 + $0x1f4] sm:$0xf]
  %v169 = vld [vmem:[%s1 + $0x1f8] sm:$0xf]
  %v170 = vld [vmem:[%s1 + $0x1fc] sm:$0xf]
  %v187 = vunpack.c.l.b16 %v27
  %v188 = vunpack.c.h.b16 %v27
  %v189 = vunpack.c.l.b16 %v28
  %v190 = vunpack.c.h.b16 %v28
  %v191 = vunpack.c.l.b16 %v29
  %v192 = vunpack.c.h.b16 %v29
  %v193 = vunpack.c.l.b16 %v30
  %v194 = vunpack.c.h.b16 %v30
  %v195 = vunpack.c.l.b16 %v31
  %v196 = vunpack.c.h.b16 %v31
  %v197 = vunpack.c.l.b16 %v32
  %v198 = vunpack.c.h.b16 %v32
  %v199 = vunpack.c.l.b16 %v33
  %v200 = vunpack.c.h.b16 %v33
  %v201 = vunpack.c.l.b16 %v34
  %v202 = vunpack.c.h.b16 %v34
  %v203 = vunpack.c.l.b16 %v35
  %v204 = vunpack.c.h.b16 %v35
  %v205 = vunpack.c.l.b16 %v36
  %v206 = vunpack.c.h.b16 %v36
  %v207 = vunpack.c.l.b16 %v37
  %v208 = vunpack.c.h.b16 %v37
  %v209 = vunpack.c.l.b16 %v38
  %v210 = vunpack.c.h.b16 %v38
  %v211 = vunpack.c.l.b16 %v39
  %v212 = vunpack.c.h.b16 %v39
  %v213 = vunpack.c.l.b16 %v40
  %v214 = vunpack.c.h.b16 %v40
  %v215 = vunpack.c.l.b16 %v41
  %v216 = vunpack.c.h.b16 %v41
  %v217 = vunpack.c.l.b16 %v42
  %v218 = vunpack.c.h.b16 %v42
  %v219 = vpack.c.b16 %v195, %v187
  %v220 = vpack.c.b16 %v196, %v188
  %v221 = vpack.c.b16 %v197, %v189
  %v222 = vpack.c.b16 %v198, %v190
  %v223 = vpack.c.b16 %v199, %v191
  %v224 = vpack.c.b16 %v200, %v192
  %v225 = vpack.c.b16 %v201, %v193
  %v226 = vpack.c.b16 %v202, %v194
  %v227 = vpack.c.b16 %v211, %v203
  %v228 = vpack.c.b16 %v212, %v204
  %v229 = vpack.c.b16 %v213, %v205
  %v230 = vpack.c.b16 %v214, %v206
  %v231 = vpack.c.b16 %v215, %v207
  %v232 = vpack.c.b16 %v216, %v208
  %v233 = vpack.c.b16 %v217, %v209
  %v234 = vpack.c.b16 %v218, %v210
  %v379 = vunpack.c.l.b16 %v43
  %v380 = vunpack.c.l.b16 %v44
  %v381 = vunpack.c.l.b16 %v45
  %v382 = vunpack.c.l.b16 %v46
  %v383 = vunpack.c.l.b16 %v47
  %v384 = vunpack.c.l.b16 %v48
  %v385 = vunpack.c.l.b16 %v49
  %v386 = vunpack.c.l.b16 %v50
  %v387 = vunpack.c.l.b16 %v51
  %v388 = vunpack.c.l.b16 %v52
  %v389 = vunpack.c.l.b16 %v53
  %v390 = vunpack.c.l.b16 %v54
  %v391 = vunpack.c.l.b16 %v55
  %v392 = vunpack.c.l.b16 %v56
  %v393 = vunpack.c.l.b16 %v57
  %v394 = vunpack.c.l.b16 %v58
  %v395 = vunpack.c.l.b16 %v59
  %v396 = vunpack.c.l.b16 %v60
  %v397 = vunpack.c.l.b16 %v61
  %v398 = vunpack.c.l.b16 %v62
  %v399 = vunpack.c.l.b16 %v63
  %v400 = vunpack.c.l.b16 %v64
  %v401 = vunpack.c.l.b16 %v65
  %v402 = vunpack.c.l.b16 %v66
  %v403 = vunpack.c.l.b16 %v67
  %v404 = vunpack.c.l.b16 %v68
  %v405 = vunpack.c.l.b16 %v69
  %v406 = vunpack.c.l.b16 %v70
  %v407 = vunpack.c.l.b16 %v71
  %v408 = vunpack.c.l.b16 %v72
  %v409 = vunpack.c.l.b16 %v73
  %v410 = vunpack.c.l.b16 %v74
  %v411 = vunpack.c.l.b16 %v75
  %v412 = vunpack.c.l.b16 %v76
  %v413 = vunpack.c.l.b16 %v77
  %v414 = vunpack.c.l.b16 %v78
  %v415 = vunpack.c.l.b16 %v79
  %v416 = vunpack.c.l.b16 %v80
  %v417 = vunpack.c.l.b16 %v81
  %v418 = vunpack.c.l.b16 %v82
  %v419 = vunpack.c.l.b16 %v83
  %v420 = vunpack.c.l.b16 %v84
  %v421 = vunpack.c.l.b16 %v85
  %v422 = vunpack.c.l.b16 %v86
  %v423 = vunpack.c.l.b16 %v87
  %v424 = vunpack.c.l.b16 %v88
  %v425 = vunpack.c.l.b16 %v89
  %v426 = vunpack.c.l.b16 %v90
  %v427 = vunpack.c.l.b16 %v91
  %v428 = vunpack.c.l.b16 %v92
  %v429 = vunpack.c.l.b16 %v93
  %v430 = vunpack.c.l.b16 %v94
  %v431 = vunpack.c.l.b16 %v95
  %v432 = vunpack.c.l.b16 %v96
  %v433 = vunpack.c.l.b16 %v97
  %v434 = vunpack.c.l.b16 %v98
  %v435 = vunpack.c.l.b16 %v99
  %v436 = vunpack.c.l.b16 %v100
  %v437 = vunpack.c.l.b16 %v101
  %v438 = vunpack.c.l.b16 %v102
  %v439 = vunpack.c.l.b16 %v103
  %v440 = vunpack.c.l.b16 %v104
  %v441 = vunpack.c.l.b16 %v105
  %v442 = vunpack.c.l.b16 %v106
  %v443 = vunpack.c.l.b16 %v107
  %v444 = vunpack.c.l.b16 %v108
  %v445 = vunpack.c.l.b16 %v109
  %v446 = vunpack.c.l.b16 %v110
  %v447 = vunpack.c.l.b16 %v111
  %v448 = vunpack.c.l.b16 %v112
  %v449 = vunpack.c.l.b16 %v113
  %v450 = vunpack.c.l.b16 %v114
  %v451 = vunpack.c.l.b16 %v115
  %v452 = vunpack.c.l.b16 %v116
  %v453 = vunpack.c.l.b16 %v117
  %v454 = vunpack.c.l.b16 %v118
  %v455 = vunpack.c.l.b16 %v119
  %v456 = vunpack.c.l.b16 %v120
  %v457 = vunpack.c.l.b16 %v121
  %v458 = vunpack.c.l.b16 %v122
  %v459 = vunpack.c.l.b16 %v123
  %v460 = vunpack.c.l.b16 %v124
  %v461 = vunpack.c.l.b16 %v125
  %v462 = vunpack.c.l.b16 %v126
  %v463 = vunpack.c.l.b16 %v127
  %v464 = vunpack.c.l.b16 %v128
  %v465 = vunpack.c.l.b16 %v129
  %v466 = vunpack.c.l.b16 %v130
  %v467 = vunpack.c.l.b16 %v131
  %v468 = vunpack.c.l.b16 %v132
  %v469 = vunpack.c.l.b16 %v133
  %v470 = vunpack.c.l.b16 %v134
  %v471 = vunpack.c.l.b16 %v135
  %v472 = vunpack.c.l.b16 %v136
  %v473 = vunpack.c.l.b16 %v137
  %v474 = vunpack.c.l.b16 %v138
  %v475 = vunpack.c.l.b16 %v139
  %v476 = vunpack.c.l.b16 %v140
  %v477 = vunpack.c.l.b16 %v141
  %v478 = vunpack.c.l.b16 %v142
  %v479 = vunpack.c.l.b16 %v143
  %v480 = vunpack.c.l.b16 %v144
  %v481 = vunpack.c.l.b16 %v145
  %v482 = vunpack.c.l.b16 %v146
  %v483 = vunpack.c.l.b16 %v147
  %v484 = vunpack.c.l.b16 %v148
  %v485 = vunpack.c.l.b16 %v149
  %v486 = vunpack.c.l.b16 %v150
  %v487 = vunpack.c.l.b16 %v151
  %v488 = vunpack.c.l.b16 %v152
  %v489 = vunpack.c.l.b16 %v153
  %v490 = vunpack.c.l.b16 %v154
  %v491 = vunpack.c.l.b16 %v155
  %v492 = vunpack.c.l.b16 %v156
  %v493 = vunpack.c.l.b16 %v157
  %v494 = vunpack.c.l.b16 %v158
  %v495 = vunpack.c.l.b16 %v159
  %v496 = vunpack.c.l.b16 %v160
  %v497 = vunpack.c.l.b16 %v161
  %v498 = vunpack.c.l.b16 %v162
  %v499 = vunpack.c.l.b16 %v163
  %v500 = vunpack.c.l.b16 %v164
  %v501 = vunpack.c.l.b16 %v165
  %v502 = vunpack.c.l.b16 %v166
  %v503 = vunpack.c.l.b16 %v167
  %v504 = vunpack.c.l.b16 %v168
  %v505 = vunpack.c.l.b16 %v169
  %v506 = vunpack.c.l.b16 %v170
  %v507 = vpack.c.b16 %v380, %v379
  %v508 = vpack.c.b16 %v382, %v381
  %v509 = vpack.c.b16 %v384, %v383
  %v510 = vpack.c.b16 %v386, %v385
  %v511 = vpack.c.b16 %v388, %v387
  %v512 = vpack.c.b16 %v390, %v389
  %v513 = vpack.c.b16 %v392, %v391
  %v514 = vpack.c.b16 %v394, %v393
  %v515 = vpack.c.b16 %v396, %v395
  %v516 = vpack.c.b16 %v398, %v397
  %v517 = vpack.c.b16 %v400, %v399
  %v518 = vpack.c.b16 %v402, %v401
  %v519 = vpack.c.b16 %v404, %v403
  %v520 = vpack.c.b16 %v406, %v405
  %v521 = vpack.c.b16 %v408, %v407
  %v522 = vpack.c.b16 %v410, %v409
  %v523 = vpack.c.b16 %v412, %v411
  %v524 = vpack.c.b16 %v414, %v413
  %v525 = vpack.c.b16 %v416, %v415
  %v526 = vpack.c.b16 %v418, %v417
  %v527 = vpack.c.b16 %v420, %v419
  %v528 = vpack.c.b16 %v422, %v421
  %v529 = vpack.c.b16 %v424, %v423
  %v530 = vpack.c.b16 %v426, %v425
  %v531 = vpack.c.b16 %v428, %v427
  %v532 = vpack.c.b16 %v430, %v429
  %v533 = vpack.c.b16 %v432, %v431
  %v534 = vpack.c.b16 %v434, %v433
  %v535 = vpack.c.b16 %v436, %v435
  %v536 = vpack.c.b16 %v438, %v437
  %v537 = vpack.c.b16 %v440, %v439
  %v538 = vpack.c.b16 %v442, %v441
  %v539 = vpack.c.b16 %v444, %v443
  %v540 = vpack.c.b16 %v446, %v445
  %v541 = vpack.c.b16 %v448, %v447
  %v542 = vpack.c.b16 %v450, %v449
  %v543 = vpack.c.b16 %v452, %v451
  %v544 = vpack.c.b16 %v454, %v453
  %v545 = vpack.c.b16 %v456, %v455
  %v546 = vpack.c.b16 %v458, %v457
  %v547 = vpack.c.b16 %v460, %v459
  %v548 = vpack.c.b16 %v462, %v461
  %v549 = vpack.c.b16 %v464, %v463
  %v550 = vpack.c.b16 %v466, %v465
  %v551 = vpack.c.b16 %v468, %v467
  %v552 = vpack.c.b16 %v470, %v469
  %v553 = vpack.c.b16 %v472, %v471
  %v554 = vpack.c.b16 %v474, %v473
  %v555 = vpack.c.b16 %v476, %v475
  %v556 = vpack.c.b16 %v478, %v477
  %v557 = vpack.c.b16 %v480, %v479
  %v558 = vpack.c.b16 %v482, %v481
  %v559 = vpack.c.b16 %v484, %v483
  %v560 = vpack.c.b16 %v486, %v485
  %v561 = vpack.c.b16 %v488, %v487
  %v562 = vpack.c.b16 %v490, %v489
  %v563 = vpack.c.b16 %v492, %v491
  %v564 = vpack.c.b16 %v494, %v493
  %v565 = vpack.c.b16 %v496, %v495
  %v566 = vpack.c.b16 %v498, %v497
  %v567 = vpack.c.b16 %v500, %v499
  %v568 = vpack.c.b16 %v502, %v501
  %v569 = vpack.c.b16 %v504, %v503
  %v570 = vpack.c.b16 %v506, %v505
  %635 = vmatprep.subr.bf16.mxu0 0
  %636 = vmatpush1.bf16.msra.mxu0 %v507
  %637 = vmatprep.subr.bf16.mxu0 0
  %638 = vmatpush1.bf16.msra.mxu0 %v508
  %639 = vmatprep.subr.bf16.mxu0 0
  %640 = vmatpush1.bf16.msra.mxu0 %v509
  %641 = vmatprep.subr.bf16.mxu0 0
  %642 = vmatpush1.bf16.msra.mxu0 %v510
  %643 = vmatprep.subr.bf16.mxu0 0
  %644 = vmatpush1.bf16.msra.mxu0 %v511
  %645 = vmatprep.subr.bf16.mxu0 0
  %646 = vmatpush1.bf16.msra.mxu0 %v512
  %647 = vmatprep.subr.bf16.mxu0 0
  %648 = vmatpush1.bf16.msra.mxu0 %v513
  %649 = vmatprep.subr.bf16.mxu0 0
  %650 = vmatpush1.bf16.msra.mxu0 %v514
  %651 = vmatprep.subr.bf16.mxu0 0
  %652 = vmatpush1.bf16.msra.mxu0 %v515
  %653 = vmatprep.subr.bf16.mxu0 0
  %654 = vmatpush1.bf16.msra.mxu0 %v516
  %655 = vmatprep.subr.bf16.mxu0 0
  %656 = vmatpush1.bf16.msra.mxu0 %v517
  %657 = vmatprep.subr.bf16.mxu0 0
  %658 = vmatpush1.bf16.msra.mxu0 %v518
  %659 = vmatprep.subr.bf16.mxu0 0
  %660 = vmatpush1.bf16.msra.mxu0 %v519
  %661 = vmatprep.subr.bf16.mxu0 0
  %662 = vmatpush1.bf16.msra.mxu0 %v520
  %663 = vmatprep.subr.bf16.mxu0 0
  %664 = vmatpush1.bf16.msra.mxu0 %v521
  %665 = vmatprep.subr.bf16.mxu0 0
  %666 = vmatpush1.bf16.msra.mxu0 %v522
  %667 = vmatprep.mubr.bf16.mxu0 %v220
  %668 = vmatmul.mubr.bf16.gmra.mrb[0].mxu0 %v219
  %v669 = vpop.f32.mrb[0].mxu0
  %v670 = vadd.f32 0.0, %v669
  %v671 = vpop.f32.mrb[0].mxu0
  %v672 = vpop.f32.mrb[0].mxu0
  %v673 = vadd.f32 0.0, %v672
  %v674 = vpop.f32.mrb[0].mxu0
  %675 = vmatprep.mubr.bf16.mxu0 %v228
  %676 = vmatmul.mubr.bf16.gmra.mrb[0].mxu0 %v227
  %v677 = vpop.f32.mrb[0].mxu0
  %v678 = vadd.f32 0.0, %v677
  %v679 = vpop.f32.mrb[0].mxu0
  %v680 = vpop.f32.mrb[0].mxu0
  %v681 = vadd.f32 0.0, %v680
  %v682 = vpop.f32.mrb[0].mxu0
  %683 = vdwg.mxu0
  %684 = vmatprep.subr.bf16.mxu0 0
  %685 = vmatpush1.bf16.msra.mxu0 %v523
  %686 = vmatprep.subr.bf16.mxu0 0
  %687 = vmatpush1.bf16.msra.mxu0 %v524
  %688 = vmatprep.subr.bf16.mxu0 0
  %689 = vmatpush1.bf16.msra.mxu0 %v525
  %690 = vmatprep.subr.bf16.mxu0 0
  %691 = vmatpush1.bf16.msra.mxu0 %v526
  %692 = vmatprep.subr.bf16.mxu0 0
  %693 = vmatpush1.bf16.msra.mxu0 %v527
  %694 = vmatprep.subr.bf16.mxu0 0
  %695 = vmatpush1.bf16.msra.mxu0 %v528
  %696 = vmatprep.subr.bf16.mxu0 0
  %697 = vmatpush1.bf16.msra.mxu0 %v529
  %698 = vmatprep.subr.bf16.mxu0 0
  %699 = vmatpush1.bf16.msra.mxu0 %v530
  %700 = vmatprep.subr.bf16.mxu0 0
  %701 = vmatpush1.bf16.msra.mxu0 %v531
  %702 = vmatprep.subr.bf16.mxu0 0
  %703 = vmatpush1.bf16.msra.mxu0 %v532
  %704 = vmatprep.subr.bf16.mxu0 0
  %705 = vmatpush1.bf16.msra.mxu0 %v533
  %706 = vmatprep.subr.bf16.mxu0 0
  %707 = vmatpush1.bf16.msra.mxu0 %v534
  %708 = vmatprep.subr.bf16.mxu0 0
  %709 = vmatpush1.bf16.msra.mxu0 %v535
  %710 = vmatprep.subr.bf16.mxu0 0
  %711 = vmatpush1.bf16.msra.mxu0 %v536
  %712 = vmatprep.subr.bf16.mxu0 0
  %713 = vmatpush1.bf16.msra.mxu0 %v537
  %714 = vmatprep.subr.bf16.mxu0 0
  %715 = vmatpush1.bf16.msra.mxu0 %v538
  %716 = vmatprep.mubr.bf16.mxu0 %v222
  %717 = vmatmul.mubr.bf16.gmra.mrb[0].mxu0 %v221
  %v718 = vpop.f32.mrb[0].mxu0
  %v719 = vadd.f32 %v670, %v718
  %v720 = vpop.f32.mrb[0].mxu0
  %v721 = vpop.f32.mrb[0].mxu0
  %v722 = vadd.f32 %v673, %v721
  %v723 = vpop.f32.mrb[0].mxu0
  %724 = vmatprep.mubr.bf16.mxu0 %v230
  %725 = vmatmul.mubr.bf16.gmra.mrb[0].mxu0 %v229
  %v726 = vpop.f32.mrb[0].mxu0
  %v727 = vadd.f32 %v678, %v726
  %v728 = vpop.f32.mrb[0].mxu0
  %v729 = vpop.f32.mrb[0].mxu0
  %v730 = vadd.f32 %v681, %v729
  %v731 = vpop.f32.mrb[0].mxu0
  %732 = vdwg.mxu0
  %733 = vmatprep.subr.bf16.mxu0 0
  %734 = vmatpush1.bf16.msra.mxu0 %v539
  %735 = vmatprep.subr.bf16.mxu0 0
  %736 = vmatpush1.bf16.msra.mxu0 %v540
  %737 = vmatprep.subr.bf16.mxu0 0
  %738 = vmatpush1.bf16.msra.mxu0 %v541
  %739 = vmatprep.subr.bf16.mxu0 0
  %740 = vmatpush1.bf16.msra.mxu0 %v542
  %741 = vmatprep.subr.bf16.mxu0 0
  %742 = vmatpush1.bf16.msra.mxu0 %v543
  %743 = vmatprep.subr.bf16.mxu0 0
  %744 = vmatpush1.bf16.msra.mxu0 %v544
  %745 = vmatprep.subr.bf16.mxu0 0
  %746 = vmatpush1.bf16.msra.mxu0 %v545
  %747 = vmatprep.subr.bf16.mxu0 0
  %748 = vmatpush1.bf16.msra.mxu0 %v546
  %749 = vmatprep.subr.bf16.mxu0 0
  %750 = vmatpush1.bf16.msra.mxu0 %v547
  %751 = vmatprep.subr.bf16.mxu0 0
  %752 = vmatpush1.bf16.msra.mxu0 %v548
  %753 = vmatprep.subr.bf16.mxu0 0
  %754 = vmatpush1.bf16.msra.mxu0 %v549
  %755 = vmatprep.subr.bf16.mxu0 0
  %756 = vmatpush1.bf16.msra.mxu0 %v550
  %757 = vmatprep.subr.bf16.mxu0 0
  %758 = vmatpush1.bf16.msra.mxu0 %v551
  %759 = vmatprep.subr.bf16.mxu0 0
  %760 = vmatpush1.bf16.msra.mxu0 %v552
  %761 = vmatprep.subr.bf16.mxu0 0
  %762 = vmatpush1.bf16.msra.mxu0 %v553
  %763 = vmatprep.subr.bf16.mxu0 0
  %764 = vmatpush1.bf16.msra.mxu0 %v554
  %765 = vmatprep.mubr.bf16.mxu0 %v224
  %766 = vmatmul.mubr.bf16.gmra.mrb[0].mxu0 %v223
  %v767 = vpop.f32.mrb[0].mxu0
  %v768 = vadd.f32 %v719, %v767
  %v769 = vpop.f32.mrb[0].mxu0
  %v770 = vpop.f32.mrb[0].mxu0
  %v771 = vadd.f32 %v722, %v770
  %v772 = vpop.f32.mrb[0].mxu0
  %773 = vmatprep.mubr.bf16.mxu0 %v232
  %774 = vmatmul.mubr.bf16.gmra.mrb[0].mxu0 %v231
  %v775 = vpop.f32.mrb[0].mxu0
  %v776 = vadd.f32 %v727, %v775
  %v777 = vpop.f32.mrb[0].mxu0
  %v778 = vpop.f32.mrb[0].mxu0
  %v779 = vadd.f32 %v730, %v778
  %v780 = vpop.f32.mrb[0].mxu0
  %781 = vdwg.mxu0
  %782 = vmatprep.subr.bf16.mxu0 0
  %783 = vmatpush1.bf16.msra.mxu0 %v555
  %784 = vmatprep.subr.bf16.mxu0 0
  %785 = vmatpush1.bf16.msra.mxu0 %v556
  %786 = vmatprep.subr.bf16.mxu0 0
  %787 = vmatpush1.bf16.msra.mxu0 %v557
  %788 = vmatprep.subr.bf16.mxu0 0
  %789 = vmatpush1.bf16.msra.mxu0 %v558
  %790 = vmatprep.subr.bf16.mxu0 0
  %791 = vmatpush1.bf16.msra.mxu0 %v559
  %792 = vmatprep.subr.bf16.mxu0 0
  %793 = vmatpush1.bf16.msra.mxu0 %v560
  %794 = vmatprep.subr.bf16.mxu0 0
  %795 = vmatpush1.bf16.msra.mxu0 %v561
  %796 = vmatprep.subr.bf16.mxu0 0
  %797 = vmatpush1.bf16.msra.mxu0 %v562
  %798 = vmatprep.subr.bf16.mxu0 0
  %799 = vmatpush1.bf16.msra.mxu0 %v563
  %800 = vmatprep.subr.bf16.mxu0 0
  %801 = vmatpush1.bf16.msra.mxu0 %v564
  %802 = vmatprep.subr.bf16.mxu0 0
  %803 = vmatpush1.bf16.msra.mxu0 %v565
  %804 = vmatprep.subr.bf16.mxu0 0
  %805 = vmatpush1.bf16.msra.mxu0 %v566
  %806 = vmatprep.subr.bf16.mxu0 0
  %807 = vmatpush1.bf16.msra.mxu0 %v567
  %808 = vmatprep.subr.bf16.mxu0 0
  %809 = vmatpush1.bf16.msra.mxu0 %v568
  %810 = vmatprep.subr.bf16.mxu0 0
  %811 = vmatpush1.bf16.msra.mxu0 %v569
  %812 = vmatprep.subr.bf16.mxu0 0
  %813 = vmatpush1.bf16.msra.mxu0 %v570
  %814 = vmatprep.mubr.bf16.mxu0 %v226
  %815 = vmatmul.mubr.bf16.gmra.mrb[0].mxu0 %v225
  %v816 = vpop.f32.mrb[0].mxu0
  %v817 = vadd.f32 %v768, %v816
  %v818 = vpop.f32.mrb[0].mxu0
  %v819 = vpop.f32.mrb[0].mxu0
  %v820 = vadd.f32 %v771, %v819
  %v821 = vpop.f32.mrb[0].mxu0
  %822 = vmatprep.mubr.bf16.mxu0 %v234
  %823 = vmatmul.mubr.bf16.gmra.mrb[0].mxu0 %v233
  %v824 = vpop.f32.mrb[0].mxu0
  %v825 = vadd.f32 %v776, %v824
  %v826 = vpop.f32.mrb[0].mxu0
  %v827 = vpop.f32.mrb[0].mxu0
  %v828 = vadd.f32 %v779, %v827
  %v829 = vpop.f32.mrb[0].mxu0
  %830 = vdwg.mxu0
  %v831 = vadd.f32 %v23, %v817
  %v832 = vadd.f32 %v24, %v820
  %v833 = vadd.f32 %v25, %v825
  %v834 = vadd.f32 %v26, %v828
  %835 = vst [vmem:[#allocation2] sm:$0xff] %v831
  %836 = vst [vmem:[#allocation2 + $0x8] sm:$0xff] %v832
  %837 = vst [vmem:[#allocation2 + $0x10] sm:$0xff] %v833
  %838 = vst [vmem:[#allocation2 + $0x18] sm:$0xff] %v834
  // Predicated region
  $region18: #{_lambda_.17} parent=0 // pred_check
    %p839 = pneg %p15
  $region19: #{_lambda_.17} parent=0 // pred_check_branch
    %841 = sbr.rel (%p839) target = $region21
  $region20: #{_lambda_.17} parent=0 // pred_region
    %v842 = vld [vmem:[#allocation2] sm:$0xff]
    %v843 = vld [vmem:[#allocation2 + $0x8] sm:$0xff]
    %v844 = vld [vmem:[#allocation2 + $0x10] sm:$0xff]
    %v845 = vld [vmem:[#allocation2 + $0x18] sm:$0xff]
    %v846 = vld [vmem:[%s2] sm:$0x1]
    %v848 = vlaneseq
    %v849 = vshrl.u32 %v848, 7
    %v850 = vsub.s32 0, %v849
    %v851 = vrot.slane %v846, %v850
    %v853 = vadd.f32 %v842, %v851
    %v854 = vadd.f32 %v843, %v851
    %v855 = vadd.f32 %v844, %v851
    %v856 = vadd.f32 %v845, %v851
    %v857 = vmax.f32 %v853, 0.0
    %v858 = vmax.f32 %v854, 0.0
    %v859 = vmax.f32 %v855, 0.0
    %v860 = vmax.f32 %v856, 0.0
    %861 = vst [vmem:[%s3] sm:$0xff] %v857
    %862 = vst [vmem:[%s3 + $0x8] sm:$0xff] %v858
    %863 = vst [vmem:[%s3 + $0x10] sm:$0xff] %v859
    %864 = vst [vmem:[%s3 + $0x18] sm:$0xff] %v860
  $region21: #{_lambda_.17} parent=0 // pred_fallthru
    _
  // Predicated region
  $region22: #{_lambda_.17} parent=0 // pred_check
    _
  $region23: #{_lambda_.17} parent=0 // pred_check_branch
    %866 = sbr.rel (0) target = $region25
  $region24: #{_lambda_.17} parent=0 // pred_region
    _
  $region25: #{_lambda_.17} parent=0 // pred_fallthru
    _
  // Predicated region
  $region26: #{_lambda_.17} parent=0 // pred_check
    _
  $region27: #{_lambda_.17} parent=0 // pred_check_branch
    %868 = sbr.rel (0) target = $region29
  $region28: #{_lambda_.17} parent=0 // pred_region
    _
  $region29: #{_lambda_.17} parent=0 // pred_fallthru
    _

// kernel: _lambda_.18
$region0: #{_lambda_.18}
  #allocation0 [shape = 'u32[]', space=smem, size = 0x4, offset = 0x4, fixed_abs, tag = 'smem constant byte address 0x4 - core index']
  #allocation1 [shape = 'u32[144,128]{1,0:T(1,128)}', space=vmem, size = 0x12000, scoped, tag = 'internal scratch']
  #allocation2 [shape = 'f32[32,128]{1,0:T(8,128)}', space=vmem, size = 0x4000, scoped, tag = 'scratch operand']
  %s0 = inlined_call_operand.vmem [shape: bf16[32,1152], index: 0, kind: input, shape index: {}]
  %s1 = inlined_call_operand.vmem [shape: bf16[1152,128], index: 1, kind: input, shape index: {}]
  %s2 = inlined_call_operand.vmem [shape: f32[1,128], index: 2, kind: input, shape index: {}]
  %s3 = inlined_call_operand.vmem [shape: f32[32,128], index: 3, kind: output, shape index: {}]
  %s4 = sld [smem:[#allocation0]]
  $region79: #{_lambda_.18} parent=0
    _
  %s6 = ssub.s32 1, %s4
  %s7 = scalar_select 0, %s6, %s4
  $region1: #{_lambda_.18} parent=0
    #allocation3 [shape = 'u8[49152]{0}', space=vmem, size = 0xc000, scoped, tag = 'input window, operand 0']
    loop: start=0, step=1, limit=5
    $region2: #{_lambda_.18} parent=1 // loop_pre_header
      _
    $region3: #{_lambda_.18} parent=1 // loop_header
      %s9 = sphi 0, %s13
      %p10 = scmp.ge.s32.totalorder %s9, 5
      %s16 = sphi 0, %s35
      %s17 = sphi 0, %s31
      %s18 = sphi 0, %s27
      %s19 = sphi 0, %s16
      %s20 = sphi 0, %s17
      %s21 = sphi 0, %s18
      %s22 = sphi 0, %s19
      %s23 = sphi 0, %s20
      %s24 = sphi 0, %s21
      %s40 = sphi 0, %s42
      %s43 = sphi 0, %s40
      %s44 = sphi 0, %s43
      %s60 = sphi 0, %s44
      %s68 = sphi 0, %s70
      %s71 = sphi 0, %s68
      %s72 = sphi 0, %s71
      %s88 = sphi 0, %s72
      %s94 = sphi 0, %s96
      %s97 = sphi 0, %s94
      %s98 = sphi 0, %s97
      %s114 = sphi 0, %s98
      %s122 = sphi 0, %s124
      %s125 = sphi 0, %s122
      %s126 = sphi 0, %s125
      %s142 = sphi 0, %s126
    $region4: #{_lambda_.18} parent=1 // loop_header_branch
      %12 = sbr.rel (%p10) target = $region8
    $region5: #{_lambda_.18} parent=1 // loop_body
      %s14 = ssub.s32 %s9, 1
      %s15 = ssub.s32 %s9, 2
      %s25 = sadd.s32 1, %s18
      %p26 = scmp.ge.s32.totalorder %s25, 3
      %s27 = scalar_select %p26, 0, %s25
      %s28 = sadd.s32 1, %s17
      %s29 = scalar_select %p26, %s28, %s17
      %p30 = scmp.ge.s32.totalorder %s29, 1
      %s31 = scalar_select %p30, 0, %s29
      %s32 = sadd.s32 1, %s16
      %s33 = scalar_select %p30, %s32, %s16
      %p34 = scmp.ge.s32.totalorder %s33, 1
      %s35 = scalar_select %p34, 0, %s33
      %s36 = ssub.s32 %s16, %s35
      %s37 = ssub.s32 %s18, %s27
      %s38 = sor.u32 %s36, %s37
      %p39 = scmp.eq.s32.totalorder %s38, 0
      %s41 = sadd.s32 %s40, 1
      %s42 = scalar_select %p39, %s40, %s41
      %p45 = pneg %p39
      %p46 = scmp.eq.s32.totalorder %s9, 2
      %p47 = por %p45, %p46
      %p48 = scmp.ne.s32.totalorder %s40, %s43
      %p49 = scmp.eq.s32.totalorder %s9, 0
      %p50 = por %p48, %p49
      %p51 = scmp.ne.s32.totalorder %s40, %s43
      %p52 = scmp.eq.s32.totalorder %s14, 2
      %p53 = por %p51, %p52
      %p54 = scmp.ne.s32.totalorder %s43, %s44
      %p55 = scmp.eq.s32.totalorder %s14, 0
      %p56 = por %p54, %p55
      %p57 = scmp.ne.s32.totalorder %s43, %s44
      %p58 = scmp.eq.s32.totalorder %s15, 2
      %p59 = por %p57, %p58
      %p61 = scmp.ne.s32.totalorder %s44, %s60
      %p62 = scmp.eq.s32.totalorder %s15, 0
      %p63 = por %p61, %p62
      %s64 = ssub.s32 %s18, %s27
      %s65 = ssub.s32 %s17, %s31
      %s66 = sor.u32 %s64, %s65
      %p67 = scmp.eq.s32.totalorder %s66, 0
      %s69 = sadd.s32 %s68, 1
      %s70 = scalar_select %p67, %s68, %s69
      %p73 = pneg %p67
      %p74 = scmp.eq.s32.totalorder %s9, 2
      %p75 = por %p73, %p74
      %p76 = scmp.ne.s32.totalorder %s68, %s71
      %p77 = scmp.eq.s32.totalorder %s9, 0
      %p78 = por %p76, %p77
      %p79 = scmp.ne.s32.totalorder %s68, %s71
      %p80 = scmp.eq.s32.totalorder %s14, 2
      %p81 = por %p79, %p80
      %p82 = scmp.ne.s32.totalorder %s71, %s72
      %p83 = scmp.eq.s32.totalorder %s14, 0
      %p84 = por %p82, %p83
      %p85 = scmp.ne.s32.totalorder %s71, %s72
      %p86 = scmp.eq.s32.totalorder %s15, 2
      %p87 = por %p85, %p86
      %p89 = scmp.ne.s32.totalorder %s72, %s88
      %p90 = scmp.eq.s32.totalorder %s15, 0
      %p91 = por %p89, %p90
      %s92 = ssub.s32 %s17, %s31
      %p93 = scmp.eq.s32.totalorder %s92, 0
      %s95 = sadd.s32 %s94, 1
      %s96 = scalar_select %p93, %s94, %s95
      %p99 = pneg %p93
      %p100 = scmp.eq.s32.totalorder %s9, 2
      %p101 = por %p99, %p100
      %p102 = scmp.ne.s32.totalorder %s94, %s97
      %p103 = scmp.eq.s32.totalorder %s9, 0
      %p104 = por %p102, %p103
      %p105 = scmp.ne.s32.totalorder %s94, %s97
      %p106 = scmp.eq.s32.totalorder %s14, 2
      %p107 = por %p105, %p106
      %p108 = scmp.ne.s32.totalorder %s97, %s98
      %p109 = scmp.eq.s32.totalorder %s14, 0
      %p110 = por %p108, %p109
      %p111 = scmp.ne.s32.totalorder %s97, %s98
      %p112 = scmp.eq.s32.totalorder %s15, 2
      %p113 = por %p111, %p112
      %p115 = scmp.ne.s32.totalorder %s98, %s114
      %p116 = scmp.eq.s32.totalorder %s15, 0
      %p117 = por %p115, %p116
      %s118 = ssub.s32 %s16, %s35
      %s119 = ssub.s32 %s17, %s31
      %s120 = sor.u32 %s118, %s119
      %p121 = scmp.eq.s32.totalorder %s120, 0
      %s123 = sadd.s32 %s122, 1
      %s124 = scalar_select %p121, %s122, %s123
      %p127 = pneg %p121
      %p128 = scmp.eq.s32.totalorder %s9, 2
      %p129 = por %p127, %p128
      %p130 = scmp.ne.s32.totalorder %s122, %s125
      %p131 = scmp.eq.s32.totalorder %s9, 0
      %p132 = por %p130, %p131
      %p133 = scmp.ne.s32.totalorder %s122, %s125
      %p134 = scmp.eq.s32.totalorder %s14, 2
      %p135 = por %p133, %p134
      %p136 = scmp.ne.s32.totalorder %s125, %s126
      %p137 = scmp.eq.s32.totalorder %s14, 0
      %p138 = por %p136, %p137
      %p139 = scmp.ne.s32.totalorder %s125, %s126
      %p140 = scmp.eq.s32.totalorder %s15, 2
      %p141 = por %p139, %p140
      %p143 = scmp.ne.s32.totalorder %s126, %s142
      %p144 = scmp.eq.s32.totalorder %s15, 0
      %p145 = por %p143, %p144
      %p146 = scmp.le.s32.totalorder 1, %s9
      %p147 = scmp.lt.s32.totalorder %s9, 4
      %p148 = pnand %p146, %p147
      %p149 = pneg %p148
      // Predicated region
      $region9: #{_lambda_.18} parent=5 // pred_check
        _
      $region10: #{_lambda_.18} parent=5 // pred_check_branch
        %151 = sbr.rel (%p148) target = $region12
      $region11: #{_lambda_.18} parent=5 // pred_region
        %s152 = ssub.s32 %s9, 1
        // Predicated region
        $region13: #{_lambda_.18} parent=11 // pred_check
          %p153 = pneg %p110
        $region14: #{_lambda_.18} parent=11 // pred_check_branch
          %155 = sbr.rel (%p153) target = $region16
        $region15: #{_lambda_.18} parent=11 // pred_region
          %p156 = scmp.lt.s32.totalorder %s20, 0
          %s157 = scalar_select %p156, %s20, 0
          %s158 = scalar_lea.vmem %s2, %s157
        $region16: #{_lambda_.18} parent=11 // pred_fallthru
          _
      $region12: #{_lambda_.18} parent=5 // pred_fallthru
        _
      %p159 = scmp.lt.s32.totalorder %s9, 3
      // Predicated region
      $region17: #{_lambda_.18} parent=5 // pred_check
        %p160 = pneg %p159
      $region18: #{_lambda_.18} parent=5 // pred_check_branch
        %162 = sbr.rel (%p160) target = $region20
      $region19: #{_lambda_.18} parent=5 // pred_region
        // Predicated region
        $region21: #{_lambda_.18} parent=19 // pred_check
          %p163 = pneg %p50
        $region22: #{_lambda_.18} parent=19 // pred_check_branch
          %165 = sbr.rel (%p163) target = $region24
        $region23: #{_lambda_.18} parent=19 // pred_region
          %s166 = sand.u32 %s40, 1
          %s167 = sand.u32 %s40, 1
          %s168 = smul.addr %s167, 48
          %s169 = scalar_lea.vmem [#allocation3], %s168
          %s170 = smul.u32 4, %s16
          %s171 = smul.u32 3, %s18
          %s172 = smul.addr %s170, 9
          %s173 = sadd.s32 %s171, %s172
          %s174 = smul.addr %s173, 4
          %s175 = scalar_lea.vmem %s0, %s174
          // Predicated region
          $region25: #{_lambda_.18} parent=23 // pred_check
            _
          $region26: #{_lambda_.18} parent=23 // pred_check_branch
            %177 = sbr.rel (0) target = $region28
          $region27: #{_lambda_.18} parent=23 // pred_region
            // Predicated region
            $region29: #{_lambda_.18} parent=27 // pred_check
              _
            $region30: #{_lambda_.18} parent=27 // pred_check_branch
              %179 = sbr.rel (0) target = $region32
            $region31: #{_lambda_.18} parent=27 // pred_region
              %s180 = scalar_lea.vmem %s175, 8
              %s181 = scalar_lea.vmem %s169, 8 [#allocation3]
              loop: start=0, step=1, limit=1
              $region33: #{_lambda_.18} parent=31 // loop_pre_header
                _
              $region34: #{_lambda_.18} parent=31 // loop_header
                %s183 = sphi 0, %s187
                %p184 = scmp.ge.s32.totalorder %s183, 1
                %s188 = sphi %s175, %s175
                %s189 = sphi %s169, %s169
              $region35: #{_lambda_.18} parent=31 // loop_header_branch
                %186 = sbr.rel (%p184) target = $region39
              $region36: #{_lambda_.18} parent=31 // loop_body
                %v190 = vld [vmem:[%s188] sm:$0xff]
                %191 = vst [vmem:[%s189] sm:$0xff] %v190
                %v192 = vld [vmem:[%s188 + $0x24] sm:$0xff]
                %193 = vst [vmem:[%s189 + $0xc] sm:$0xff] %v192
                %v194 = vld [vmem:[%s188 + $0x48] sm:$0xff]
                %195 = vst [vmem:[%s189 + $0x18] sm:$0xff] %v194
                %v196 = vld [vmem:[%s188 + $0x6c] sm:$0xff]
                %197 = vst [vmem:[%s189 + $0x24] sm:$0xff] %v196
              $region37: #{_lambda_.18} parent=31 // loop_footer
                %s187 = sadd.s32 1, %s183
              $region38: #{_lambda_.18} parent=31 // loop_footer_branch
                %182 = sbr.rel target = $region34
              $region39: #{_lambda_.18} parent=31 // loop_exit
                _
              loop: start=0, step=1, limit=1
              $region40: #{_lambda_.18} parent=31 // loop_pre_header
                _
              $region41: #{_lambda_.18} parent=31 // loop_header
                %s200 = sphi 0, %s204
                %p201 = scmp.ge.s32.totalorder %s200, 1
                %s205 = sphi %s180, %s180
                %s206 = sphi %s181, %s181
              $region42: #{_lambda_.18} parent=31 // loop_header_branch
                %203 = sbr.rel (%p201) target = $region46
              $region43: #{_lambda_.18} parent=31 // loop_body
                %v207 = vld [vmem:[%s205] sm:$0xf]
                %208 = vst [vmem:[%s206] sm:$0xf] %v207
                %v209 = vld [vmem:[%s205 + $0x24] sm:$0xf]
                %210 = vst [vmem:[%s206 + $0xc] sm:$0xf] %v209
                %v211 = vld [vmem:[%s205 + $0x48] sm:$0xf]
                %212 = vst [vmem:[%s206 + $0x18] sm:$0xf] %v211
                %v213 = vld [vmem:[%s205 + $0x6c] sm:$0xf]
                %214 = vst [vmem:[%s206 + $0x24] sm:$0xf] %v213
              $region44: #{_lambda_.18} parent=31 // loop_footer
                %s204 = sadd.s32 1, %s200
              $region45: #{_lambda_.18} parent=31 // loop_footer_branch
                %199 = sbr.rel target = $region41
              $region46: #{_lambda_.18} parent=31 // loop_exit
                _
            $region32: #{_lambda_.18} parent=27 // pred_fallthru
              _
          $region28: #{_lambda_.18} parent=23 // pred_fallthru
            _
          %215 = vnop
        $region24: #{_lambda_.18} parent=19 // pred_fallthru
          _
        // Predicated region
        $region47: #{_lambda_.18} parent=19 // pred_check
          %p216 = pneg %p78
        $region48: #{_lambda_.18} parent=19 // pred_check_branch
          %218 = sbr.rel (%p216) target = $region50
        $region49: #{_lambda_.18} parent=19 // pred_region
          %s219 = smul.u32 48, %s18
          %p220 = scmp.lt.s32.totalorder %s219, 143
          %s221 = scalar_select %p220, %s219, 143
          %p222 = scmp.lt.s32.totalorder %s17, 0
          %s223 = scalar_select %p222, %s17, 0
          %s224 = sadd.s32 %s223, %s221
          %s225 = smul.addr %s224, 4
          %s226 = scalar_lea.vmem %s1, %s225
          %s227 = smul.u32 48, %s18
        $region50: #{_lambda_.18} parent=19 // pred_fallthru
          _
      $region20: #{_lambda_.18} parent=5 // pred_fallthru
        _
      %p228 = scmp.le.s32.totalorder 1, %s9
      %p229 = scmp.lt.s32.totalorder %s9, 4
      %p230 = pnand %p228, %p229
      %p231 = pneg %p230
      // Predicated region
      $region51: #{_lambda_.18} parent=5 // pred_check
        _
      $region52: #{_lambda_.18} parent=5 // pred_check_branch
        %233 = sbr.rel (%p230) target = $region54
      $region53: #{_lambda_.18} parent=5 // pred_region
        %s234 = ssub.s32 %s9, 1
        %s235 = sand.u32 %s43, 1
        %s236 = sand.u32 %s43, 1
        %s237 = smul.addr %s236, 48
        %s238 = scalar_lea.vmem [#allocation3], %s237
        // Predicated region
        $region55: #{_lambda_.18} parent=53 // pred_check
          %p239 = pneg %p56
        $region56: #{_lambda_.18} parent=53 // pred_check_branch
          %241 = sbr.rel (%p239) target = $region58
        $region57: #{_lambda_.18} parent=53 // pred_region
          _
        $region58: #{_lambda_.18} parent=53 // pred_fallthru
          _
        %s242 = sand.u32 %s43, 1
        %s243 = sand.u32 %s43, 1
        %s244 = smul.addr %s243, 48
        %s245 = scalar_lea.vmem [#allocation3], %s244
        %p246 = pneg %p56
        %p247 = pneg %p53
        %s248 = smul.u32 48, %s21
        %p249 = scmp.lt.s32.totalorder %s248, 143
        %s250 = scalar_select %p249, %s248, 143
        %p251 = scmp.lt.s32.totalorder %s20, 0
        %s252 = scalar_select %p251, %s20, 0
        %s253 = sadd.s32 %s252, %s250
        %s254 = smul.addr %s253, 4
        %s255 = scalar_lea.vmem %s1, %s254
        %p256 = pneg %p84
        %p257 = pneg %p81
        %p258 = scmp.lt.s32.totalorder %s20, 0
        %s259 = scalar_select %p258, %s20, 0
        %s260 = scalar_lea.vmem %s2, %s259
        %p261 = pneg %p110
        %p262 = pneg %p107
        %p263 = pneg %p138
        %p264 = pneg %p135
        %s265 = smul.u32 4, %s19
        %p266 = scmp.lt.s32.totalorder %s265, 3
        %s267 = scalar_select %p266, %s265, 3
        %p268 = scmp.lt.s32.totalorder %s20, 0
        %s269 = scalar_select %p268, %s20, 0
        %s270 = sadd.s32 %s269, %s267
        %s271 = smul.addr %s270, 8
        %s272 = scalar_lea.vmem %s3, %s271
        %s273 = smul.u32 4, %s19
        %s274 = smul.u32 3, %s21
        %s275 = smul.u32 48, %s21
        %p276 = scmp.lt.s32.totalorder %s275, 143
        %s277 = scalar_select %p276, %s275, 143
        %p278 = scmp.lt.s32.totalorder %s20, 0
        %s279 = scalar_select %p278, %s20, 0
        %s280 = sadd.s32 %s279, %s277
        %s281 = smul.addr %s280, 4
        %s282 = scalar_lea.vmem %s1, %s281
        %s283 = smul.u32 48, %s21
        %p284 = scmp.lt.s32.totalorder %s20, 0
        %s285 = scalar_select %p284, %s20, 0
        %s286 = scalar_lea.vmem %s2, %s285
        %s287 = smul.u32 4, %s19
        %p288 = scmp.lt.s32.totalorder %s287, 3
        %s289 = scalar_select %p288, %s287, 3
        %p290 = scmp.lt.s32.totalorder %s20, 0
        %s291 = scalar_select %p290, %s20, 0
        %s292 = sadd.s32 %s291, %s289
        %s293 = smul.addr %s292, 8
        %s294 = scalar_lea.vmem %s3, %s293
        %s295 = smul.u32 4, %s19
        %p297 = scmp.eq.s32.totalorder %s21, 0
        // Predicated region
        $region59: #{_lambda_.18} parent=53 // pred_check
          %p298 = pneg %p297
        $region60: #{_lambda_.18} parent=53 // pred_check_branch
          %300 = sbr.rel (%p298) target = $region62
        $region61: #{_lambda_.18} parent=53 // pred_region
          %301 = vst [vmem:[#allocation2] sm:$0xff] 0.0
          %302 = vst [vmem:[#allocation2 + $0x8] sm:$0xff] 0.0
          %303 = vst [vmem:[#allocation2 + $0x10] sm:$0xff] 0.0
          %304 = vst [vmem:[#allocation2 + $0x18] sm:$0xff] 0.0
        $region62: #{_lambda_.18} parent=53 // pred_fallthru
          _
        %v305 = vld [vmem:[#allocation2] sm:$0xff]
        %v306 = vld [vmem:[#allocation2 + $0x8] sm:$0xff]
        %v307 = vld [vmem:[#allocation2 + $0x10] sm:$0xff]
        %v308 = vld [vmem:[#allocation2 + $0x18] sm:$0xff]
        %v309 = vld [vmem:[%s238] sm:$0xff]
        %v310 = vld [vmem:[%s238 + $0x8] sm:$0xf]
        %v311 = vld [vmem:[%s238 + $0xc] sm:$0xff]
        %v312 = vld [vmem:[%s238 + $0x14] sm:$0xf]
        %v313 = vld [vmem:[%s238 + $0x18] sm:$0xff]
        %v314 = vld [vmem:[%s238 + $0x20] sm:$0xf]
        %v315 = vld [vmem:[%s238 + $0x24] sm:$0xff]
        %v316 = vld [vmem:[%s238 + $0x2c] sm:$0xf]
        %v317 = vld [vmem:[%s282] sm:$0xf]
        %v318 = vld [vmem:[%s282 + $0x4] sm:$0xf]
        %v319 = vld [vmem:[%s282 + $0x8] sm:$0xf]
        %v320 = vld [vmem:[%s282 + $0xc] sm:$0xf]
        %v321 = vld [vmem:[%s282 + $0x10] sm:$0xf]
        %v322 = vld [vmem:[%s282 + $0x14] sm:$0xf]
        %v323 = vld [vmem:[%s282 + $0x18] sm:$0xf]
        %v324 = vld [vmem:[%s282 + $0x1c] sm:$0xf]
        %v325 = vld [vmem:[%s282 + $0x20] sm:$0xf]
        %v326 = vld [vmem:[%s282 + $0x24] sm:$0xf]
        %v327 = vld [vmem:[%s282 + $0x28] sm:$0xf]
        %v328 = vld [vmem:[%s282 + $0x2c] sm:$0xf]
        %v329 = vld [vmem:[%s282 + $0x30] sm:$0xf]
        %v330 = vld [vmem:[%s282 + $0x34] sm:$0xf]
        %v331 = vld [vmem:[%s282 + $0x38] sm:$0xf]
        %v332 = vld [vmem:[%s282 + $0x3c] sm:$0xf]
        %v333 = vld [vmem:[%s282 + $0x40] sm:$0xf]
        %v334 = vld [vmem:[%s282 + $0x44] sm:$0xf]
        %v335 = vld [vmem:[%s282 + $0x48] sm:$0xf]
        %v336 = vld [vmem:[%s282 + $0x4c] sm:$0xf]
        %v337 = vld [vmem:[%s282 + $0x50] sm:$0xf]
        %v338 = vld [vmem:[%s282 + $0x54] sm:$0xf]
        %v339 = vld [vmem:[%s282 + $0x58] sm:$0xf]
        %v340 = vld [vmem:[%s282 + $0x5c] sm:$0xf]
        %v341 = vld [vmem:[%s282 + $0x60] sm:$0xf]
        %v342 = vld [vmem:[%s282 + $0x64] sm:$0xf]
        %v343 = vld [vmem:[%s282 + $0x68] sm:$0xf]
        %v344 = vld [vmem:[%s282 + $0x6c] sm:$0xf]
        %v345 = vld [vmem:[%s282 + $0x70] sm:$0xf]
        %v346 = vld [vmem:[%s282 + $0x74] sm:$0xf]
        %v347 = vld [vmem:[%s282 + $0x78] sm:$0xf]
        %v348 = vld [vmem:[%s282 + $0x7c] sm:$0xf]
        %v349 = vld [vmem:[%s282 + $0x80] sm:$0xf]
        %v350 = vld [vmem:[%s282 + $0x84] sm:$0xf]
        %v351 = vld [vmem:[%s282 + $0x88] sm:$0xf]
        %v352 = vld [vmem:[%s282 + $0x8c] sm:$0xf]
        %v353 = vld [vmem:[%s282 + $0x90] sm:$0xf]
        %v354 = vld [vmem:[%s282 + $0x94] sm:$0xf]
        %v355 = vld [vmem:[%s282 + $0x98] sm:$0xf]
        %v356 = vld [vmem:[%s282 + $0x9c] sm:$0xf]
        %v357 = vld [vmem:[%s282 + $0xa0] sm:$0xf]
        %v358 = vld [vmem:[%s282 + $0xa4] sm:$0xf]
        %v359 = vld [vmem:[%s282 + $0xa8] sm:$0xf]
        %v360 = vld [vmem:[%s282 + $0xac] sm:$0xf]
        %v361 = vld [vmem:[%s282 + $0xb0] sm:$0xf]
        %v362 = vld [vmem:[%s282 + $0xb4] sm:$0xf]
        %v363 = vld [vmem:[%s282 + $0xb8] sm:$0xf]
        %v364 = vld [vmem:[%s282 + $0xbc] sm:$0xf]
        %v373 = vunpack.c.l.b16 %v309
        %v374 = vunpack.c.h.b16 %v309
        %v375 = vunpack.c.l.b16 %v310
        %v376 = vunpack.c.l.b16 %v311
        %v377 = vunpack.c.h.b16 %v311
        %v378 = vunpack.c.l.b16 %v312
        %v379 = vunpack.c.l.b16 %v313
        %v380 = vunpack.c.h.b16 %v313
        %v381 = vunpack.c.l.b16 %v314
        %v382 = vunpack.c.l.b16 %v315
        %v383 = vunpack.c.h.b16 %v315
        %v384 = vunpack.c.l.b16 %v316
        %v385 = vpack.c.b16 %v376, %v373
        %v386 = vpack.c.b16 %v377, %v374
        %v387 = vpack.c.b16 %v378, %v375
        %v388 = vpack.c.b16 %v382, %v379
        %v389 = vpack.c.b16 %v383, %v380
        %v390 = vpack.c.b16 %v384, %v381
        %v445 = vunpack.c.l.b16 %v317
        %v446 = vunpack.c.l.b16 %v318
        %v447 = vunpack.c.l.b16 %v319
        %v448 = vunpack.c.l.b16 %v320
        %v449 = vunpack.c.l.b16 %v321
        %v450 = vunpack.c.l.b16 %v322
        %v451 = vunpack.c.l.b16 %v323
        %v452 = vunpack.c.l.b16 %v324
        %v453 = vunpack.c.l.b16 %v325
        %v454 = vunpack.c.l.b16 %v326
        %v455 = vunpack.c.l.b16 %v327
        %v456 = vunpack.c.l.b16 %v328
        %v457 = vunpack.c.l.b16 %v329
        %v458 = vunpack.c.l.b16 %v330
        %v459 = vunpack.c.l.b16 %v331
        %v460 = vunpack.c.l.b16 %v332
        %v461 = vunpack.c.l.b16 %v333
        %v462 = vunpack.c.l.b16 %v334
        %v463 = vunpack.c.l.b16 %v335
        %v464 = vunpack.c.l.b16 %v336
        %v465 = vunpack.c.l.b16 %v337
        %v466 = vunpack.c.l.b16 %v338
        %v467 = vunpack.c.l.b16 %v339
        %v468 = vunpack.c.l.b16 %v340
        %v469 = vunpack.c.l.b16 %v341
        %v470 = vunpack.c.l.b16 %v342
        %v471 = vunpack.c.l.b16 %v343
        %v472 = vunpack.c.l.b16 %v344
        %v473 = vunpack.c.l.b16 %v345
        %v474 = vunpack.c.l.b16 %v346
        %v475 = vunpack.c.l.b16 %v347
        %v476 = vunpack.c.l.b16 %v348
        %v477 = vunpack.c.l.b16 %v349
        %v478 = vunpack.c.l.b16 %v350
        %v479 = vunpack.c.l.b16 %v351
        %v480 = vunpack.c.l.b16 %v352
        %v481 = vunpack.c.l.b16 %v353
        %v482 = vunpack.c.l.b16 %v354
        %v483 = vunpack.c.l.b16 %v355
        %v484 = vunpack.c.l.b16 %v356
        %v485 = vunpack.c.l.b16 %v357
        %v486 = vunpack.c.l.b16 %v358
        %v487 = vunpack.c.l.b16 %v359
        %v488 = vunpack.c.l.b16 %v360
        %v489 = vunpack.c.l.b16 %v361
        %v490 = vunpack.c.l.b16 %v362
        %v491 = vunpack.c.l.b16 %v363
        %v492 = vunpack.c.l.b16 %v364
        %v493 = vpack.c.b16 %v446, %v445
        %v494 = vpack.c.b16 %v448, %v447
        %v495 = vpack.c.b16 %v450, %v449
        %v496 = vpack.c.b16 %v452, %v451
        %v497 = vpack.c.b16 %v454, %v453
        %v498 = vpack.c.b16 %v456, %v455
        %v499 = vpack.c.b16 %v458, %v457
        %v500 = vpack.c.b16 %v460, %v459
        %v501 = vpack.c.b16 %v462, %v461
        %v502 = vpack.c.b16 %v464, %v463
        %v503 = vpack.c.b16 %v466, %v465
        %v504 = vpack.c.b16 %v468, %v467
        %v505 = vpack.c.b16 %v470, %v469
        %v506 = vpack.c.b16 %v472, %v471
        %v507 = vpack.c.b16 %v474, %v473
        %v508 = vpack.c.b16 %v476, %v475
        %v509 = vpack.c.b16 %v478, %v477
        %v510 = vpack.c.b16 %v480, %v479
        %v511 = vpack.c.b16 %v482, %v481
        %v512 = vpack.c.b16 %v484, %v483
        %v513 = vpack.c.b16 %v486, %v485
        %v514 = vpack.c.b16 %v488, %v487
        %v515 = vpack.c.b16 %v490, %v489
        %v516 = vpack.c.b16 %v492, %v491
        %541 = vmatprep.subr.bf16.mxu0 0
        %542 = vmatpush1.bf16.msra.mxu0 %v493
        %543 = vmatprep.subr.bf16.mxu0 0
        %544 = vmatpush1.bf16.msra.mxu0 %v494
        %545 = vmatprep.subr.bf16.mxu0 0
        %546 = vmatpush1.bf16.msra.mxu0 %v495
        %547 = vmatprep.subr.bf16.mxu0 0
        %548 = vmatpush1.bf16.msra.mxu0 %v496
        %549 = vmatprep.subr.bf16.mxu0 0
        %550 = vmatpush1.bf16.msra.mxu0 %v497
        %551 = vmatprep.subr.bf16.mxu0 0
        %552 = vmatpush1.bf16.msra.mxu0 %v498
        %553 = vmatprep.subr.bf16.mxu0 0
        %554 = vmatpush1.bf16.msra.mxu0 %v499
        %555 = vmatprep.subr.bf16.mxu0 0
        %556 = vmatpush1.bf16.msra.mxu0 %v500
        %557 = vmatprep.subr.bf16.mxu0 0
        %558 = vmatpush1.bf16.msra.mxu0 %v501
        %559 = vmatprep.subr.bf16.mxu0 0
        %560 = vmatpush1.bf16.msra.mxu0 %v502
        %561 = vmatprep.subr.bf16.mxu0 0
        %562 = vmatpush1.bf16.msra.mxu0 %v503
        %563 = vmatprep.subr.bf16.mxu0 0
        %564 = vmatpush1.bf16.msra.mxu0 %v504
        %565 = vmatprep.subr.bf16.mxu0 0
        %566 = vmatpush1.bf16.msra.mxu0 %v505
        %567 = vmatprep.subr.bf16.mxu0 0
        %568 = vmatpush1.bf16.msra.mxu0 %v506
        %569 = vmatprep.subr.bf16.mxu0 0
        %570 = vmatpush1.bf16.msra.mxu0 %v507
        %571 = vmatprep.subr.bf16.mxu0 0
        %572 = vmatpush1.bf16.msra.mxu0 %v508
        %573 = vmatprep.mubr.bf16.mxu0 %v386
        %574 = vmatmul.mubr.bf16.gmra.mrb[0].mxu0 %v385
        %v575 = vpop.f32.mrb[0].mxu0
        %v576 = vadd.f32 0.0, %v575
        %v577 = vpop.f32.mrb[0].mxu0
        %v578 = vpop.f32.mrb[0].mxu0
        %v579 = vadd.f32 0.0, %v578
        %v580 = vpop.f32.mrb[0].mxu0
        %581 = vmatprep.mubr.bf16.mxu0 %v389
        %582 = vmatmul.mubr.bf16.gmra.mrb[0].mxu0 %v388
        %v583 = vpop.f32.mrb[0].mxu0
        %v584 = vadd.f32 0.0, %v583
        %v585 = vpop.f32.mrb[0].mxu0
        %v586 = vpop.f32.mrb[0].mxu0
        %v587 = vadd.f32 0.0, %v586
        %v588 = vpop.f32.mrb[0].mxu0
        %589 = vdwg.mxu0
        %590 = vmatprep.subr.bf16.mxu0 0
        %591 = vmatpush1.bf16.msra.mxu0 %v509
        %592 = vmatprep.subr.bf16.mxu0 0
        %593 = vmatpush1.bf16.msra.mxu0 %v510
        %594 = vmatprep.subr.bf16.mxu0 0
        %595 = vmatpush1.bf16.msra.mxu0 %v511
        %596 = vmatprep.subr.bf16.mxu0 0
        %597 = vmatpush1.bf16.msra.mxu0 %v512
        %598 = vmatprep.subr.bf16.mxu0 0
        %599 = vmatpush1.bf16.msra.mxu0 %v513
        %600 = vmatprep.subr.bf16.mxu0 0
        %601 = vmatpush1.bf16.msra.mxu0 %v514
        %602 = vmatprep.subr.bf16.mxu0 0
        %603 = vmatpush1.bf16.msra.mxu0 %v515
        %604 = vmatprep.subr.bf16.mxu0 0
        %605 = vmatpush1.bf16.msra.mxu0 %v516
        %606 = vmatprep.subr.bf16.mxu0 0
        %607 = vmatpush1.bf16.msra.mxu0 0
        %608 = vmatprep.subr.bf16.mxu0 0
        %609 = vmatpush1.bf16.msra.mxu0 0
        %610 = vmatprep.subr.bf16.mxu0 0
        %611 = vmatpush1.bf16.msra.mxu0 0
        %612 = vmatprep.subr.bf16.mxu0 0
        %613 = vmatpush1.bf16.msra.mxu0 0
        %614 = vmatprep.subr.bf16.mxu0 0
        %615 = vmatpush1.bf16.msra.mxu0 0
        %616 = vmatprep.subr.bf16.mxu0 0
        %617 = vmatpush1.bf16.msra.mxu0 0
        %618 = vmatprep.subr.bf16.mxu0 0
        %619 = vmatpush1.bf16.msra.mxu0 0
        %620 = vmatprep.subr.bf16.mxu0 0
        %621 = vmatpush1.bf16.msra.mxu0 0
        %622 = vmatprep.mubr.bf16.mxu0 0
        %623 = vmatmul.mubr.bf16.gmra.mrb[0].mxu0 %v387
        %v624 = vpop.f32.mrb[0].mxu0
        %v625 = vadd.f32 %v576, %v624
        %v626 = vpop.f32.mrb[0].mxu0
        %v627 = vpop.f32.mrb[0].mxu0
        %v628 = vadd.f32 %v579, %v627
        %v629 = vpop.f32.mrb[0].mxu0
        %630 = vmatprep.mubr.bf16.mxu0 0
        %631 = vmatmul.mubr.bf16.gmra.mrb[0].mxu0 %v390
        %v632 = vpop.f32.mrb[0].mxu0
        %v633 = vadd.f32 %v584, %v632
        %v634 = vpop.f32.mrb[0].mxu0
        %v635 = vpop.f32.mrb[0].mxu0
        %v636 = vadd.f32 %v587, %v635
        %v637 = vpop.f32.mrb[0].mxu0
        %638 = vdwg.mxu0
        %v639 = vadd.f32 %v305, %v625
        %v640 = vadd.f32 %v306, %v628
        %v641 = vadd.f32 %v307, %v633
        %v642 = vadd.f32 %v308, %v636
        %643 = vst [vmem:[#allocation2] sm:$0xff] %v639
        %644 = vst [vmem:[#allocation2 + $0x8] sm:$0xff] %v640
        %645 = vst [vmem:[#allocation2 + $0x10] sm:$0xff] %v641
        %646 = vst [vmem:[#allocation2 + $0x18] sm:$0xff] %v642
        %p647 = scmp.eq.s32.totalorder %s21, 2
        // Predicated region
        $region63: #{_lambda_.18} parent=53 // pred_check
          %p648 = pneg %p647
        $region64: #{_lambda_.18} parent=53 // pred_check_branch
          %650 = sbr.rel (%p648) target = $region66
        $region65: #{_lambda_.18} parent=53 // pred_region
          %v651 = vld [vmem:[#allocation2] sm:$0xff]
          %v652 = vld [vmem:[#allocation2 + $0x8] sm:$0xff]
          %v653 = vld [vmem:[#allocation2 + $0x10] sm:$0xff]
          %v654 = vld [vmem:[#allocation2 + $0x18] sm:$0xff]
          %v655 = vld [vmem:[%s286] sm:$0x1]
          %v657 = vlaneseq
          %v658 = vshrl.u32 %v657, 7
          %v659 = vsub.s32 0, %v658
          %v660 = vrot.slane %v655, %v659
          %v662 = vadd.f32 %v651, %v660
          %v663 = vadd.f32 %v652, %v660
          %v664 = vadd.f32 %v653, %v660
          %v665 = vadd.f32 %v654, %v660
          %v666 = vmax.f32 %v662, 0.0
          %v667 = vmax.f32 %v663, 0.0
          %v668 = vmax.f32 %v664, 0.0
          %v669 = vmax.f32 %v665, 0.0
          %670 = vst [vmem:[%s294] sm:$0xff] %v666
          %671 = vst [vmem:[%s294 + $0x8] sm:$0xff] %v667
          %672 = vst [vmem:[%s294 + $0x10] sm:$0xff] %v668
          %673 = vst [vmem:[%s294 + $0x18] sm:$0xff] %v669
        $region66: #{_lambda_.18} parent=53 // pred_fallthru
          _
        %s674 = smul.u32 4, %s19
        %p675 = scmp.lt.s32.totalorder %s674, 3
        %s676 = scalar_select %p675, %s674, 3
        %p677 = scmp.lt.s32.totalorder %s20, 0
        %s678 = scalar_select %p677, %s20, 0
        %s679 = sadd.s32 %s678, %s676
        %s680 = smul.addr %s679, 8
        %s681 = scalar_lea.vmem %s3, %s680
        // Predicated region
        $region67: #{_lambda_.18} parent=53 // pred_check
          %p682 = pneg %p135
        $region68: #{_lambda_.18} parent=53 // pred_check_branch
          %684 = sbr.rel (%p682) target = $region70
        $region69: #{_lambda_.18} parent=53 // pred_region
          %s685 = smul.u32 4, %s19
        $region70: #{_lambda_.18} parent=53 // pred_fallthru
          _
        // Predicated region
        $region71: #{_lambda_.18} parent=53 // pred_check
          %p686 = pneg %p135
        $region72: #{_lambda_.18} parent=53 // pred_check_branch
          %688 = sbr.rel (%p686) target = $region74
        $region73: #{_lambda_.18} parent=53 // pred_region
          %s689 = smul.u32 4, %s19
          %p690 = scmp.lt.s32.totalorder %s689, 3
          %s691 = scalar_select %p690, %s689, 3
          %p692 = scmp.lt.s32.totalorder %s20, 0
          %s693 = scalar_select %p692, %s20, 0
          %s694 = sadd.s32 %s693, %s691
          %s695 = smul.addr %s694, 8
          %s696 = scalar_lea.vmem %s3, %s695
        $region74: #{_lambda_.18} parent=53 // pred_fallthru
          _
      $region54: #{_lambda_.18} parent=5 // pred_fallthru
        _
      %p697 = scmp.le.s32.totalorder 2, %s9
      // Predicated region
      $region75: #{_lambda_.18} parent=5 // pred_check
        %p698 = pneg %p697
      $region76: #{_lambda_.18} parent=5 // pred_check_branch
        %700 = sbr.rel (%p698) target = $region78
      $region77: #{_lambda_.18} parent=5 // pred_region
        %s701 = ssub.s32 %s9, 2
      $region78: #{_lambda_.18} parent=5 // pred_fallthru
        _
    $region6: #{_lambda_.18} parent=1 // loop_footer
      %s13 = sadd.s32 1, %s9
    $region7: #{_lambda_.18} parent=1 // loop_footer_branch
      %8 = sbr.rel target = $region3
    $region8: #{_lambda_.18} parent=1 // loop_exit
      _

// kernel: _lambda_.19
$region0: #{_lambda_.19}
  #allocation0 [shape = 'u32[]', space=smem, size = 0x4, offset = 0x4, fixed_abs, tag = 'smem constant byte address 0x4 - core index']
  #allocation1 [shape = 'u32[144,128]{1,0:T(1,128)}', space=vmem, size = 0x12000, scoped, tag = 'internal scratch']
  #allocation2 [shape = 'f32[128,128]{1,0:T(8,128)}', space=vmem, size = 0x10000, scoped, tag = 'scratch operand']
  %s0 = inlined_call_operand.vmem [shape: bf16[128,1024], index: 0, kind: input, shape index: {}]
  %s1 = inlined_call_operand.vmem [shape: bf16[1024,128], index: 1, kind: input, shape index: {}]
  %s2 = inlined_call_operand.vmem [shape: f32[1,128], index: 2, kind: input, shape index: {}]
  %s3 = inlined_call_operand.vmem [shape: f32[128,128], index: 3, kind: output, shape index: {}]
  %s4 = sld [smem:[#allocation0]]
  $region30: #{_lambda_.19} parent=0
    _
  %s6 = ssub.s32 1, %s4
  %s7 = scalar_select 0, %s6, %s4
  // Predicated region
  $region2: #{_lambda_.19} parent=0 // pred_check
    _
  $region3: #{_lambda_.19} parent=0 // pred_check_branch
    %9 = sbr.rel (0) target = $region5
  $region4: #{_lambda_.19} parent=0 // pred_region
    _
  $region5: #{_lambda_.19} parent=0 // pred_fallthru
    _
  // Predicated region
  $region6: #{_lambda_.19} parent=0 // pred_check
    _
  $region7: #{_lambda_.19} parent=0 // pred_check_branch
    %11 = sbr.rel (0) target = $region9
  $region8: #{_lambda_.19} parent=0 // pred_region
    _
  $region9: #{_lambda_.19} parent=0 // pred_fallthru
    _
  // Predicated region
  $region10: #{_lambda_.19} parent=0 // pred_check
    _
  $region11: #{_lambda_.19} parent=0 // pred_check_branch
    %13 = sbr.rel (0) target = $region13
  $region12: #{_lambda_.19} parent=0 // pred_region
    _
  $region13: #{_lambda_.19} parent=0 // pred_fallthru
    _
  %p15 = scmp.eq.s32.totalorder 0, 0
  // Predicated region
  $region14: #{_lambda_.19} parent=0 // pred_check
    %p16 = pneg %p15
  $region15: #{_lambda_.19} parent=0 // pred_check_branch
    %18 = sbr.rel (%p16) target = $region17
  $region16: #{_lambda_.19} parent=0 // pred_region
    %19 = vst [vmem:[#allocation2] sm:$0xff] 0.0
    %20 = vst [vmem:[#allocation2 + $0x8] sm:$0xff] 0.0
    %21 = vst [vmem:[#allocation2 + $0x10] sm:$0xff] 0.0
    %22 = vst [vmem:[#allocation2 + $0x18] sm:$0xff] 0.0
    %23 = vst [vmem:[#allocation2 + $0x20] sm:$0xff] 0.0
    %24 = vst [vmem:[#allocation2 + $0x28] sm:$0xff] 0.0
    %25 = vst [vmem:[#allocation2 + $0x30] sm:$0xff] 0.0
    %26 = vst [vmem:[#allocation2 + $0x38] sm:$0xff] 0.0
    %27 = vst [vmem:[#allocation2 + $0x40] sm:$0xff] 0.0
    %28 = vst [vmem:[#allocation2 + $0x48] sm:$0xff] 0.0
    %29 = vst [vmem:[#allocation2 + $0x50] sm:$0xff] 0.0
    %30 = vst [vmem:[#allocation2 + $0x58] sm:$0xff] 0.0
    %31 = vst [vmem:[#allocation2 + $0x60] sm:$0xff] 0.0
    %32 = vst [vmem:[#allocation2 + $0x68] sm:$0xff] 0.0
    %33 = vst [vmem:[#allocation2 + $0x70] sm:$0xff] 0.0
    %34 = vst [vmem:[#allocation2 + $0x78] sm:$0xff] 0.0
  $region17: #{_lambda_.19} parent=0 // pred_fallthru
    _
  %v35 = vld [vmem:[#allocation2] sm:$0xff]
  %v36 = vld [vmem:[#allocation2 + $0x8] sm:$0xff]
  %v37 = vld [vmem:[#allocation2 + $0x10] sm:$0xff]
  %v38 = vld [vmem:[#allocation2 + $0x18] sm:$0xff]
  %v39 = vld [vmem:[#allocation2 + $0x20] sm:$0xff]
  %v40 = vld [vmem:[#allocation2 + $0x28] sm:$0xff]
  %v41 = vld [vmem:[#allocation2 + $0x30] sm:$0xff]
  %v42 = vld [vmem:[#allocation2 + $0x38] sm:$0xff]
  %v43 = vld [vmem:[#allocation2 + $0x40] sm:$0xff]
  %v44 = vld [vmem:[#allocation2 + $0x48] sm:$0xff]
  %v45 = vld [vmem:[#allocation2 + $0x50] sm:$0xff]
  %v46 = vld [vmem:[#allocation2 + $0x58] sm:$0xff]
  %v47 = vld [vmem:[#allocation2 + $0x60] sm:$0xff]
  %v48 = vld [vmem:[#allocation2 + $0x68] sm:$0xff]
  %v49 = vld [vmem:[#allocation2 + $0x70] sm:$0xff]
  %v50 = vld [vmem:[#allocation2 + $0x78] sm:$0xff]
  %v51 = vld [vmem:[%s0] sm:$0xff]
  %v52 = vld [vmem:[%s0 + $0x8] sm:$0xff]
  %v53 = vld [vmem:[%s0 + $0x10] sm:$0xff]
  %v54 = vld [vmem:[%s0 + $0x18] sm:$0xff]
  %v55 = vld [vmem:[%s0 + $0x20] sm:$0xff]
  %v56 = vld [vmem:[%s0 + $0x28] sm:$0xff]
  %v57 = vld [vmem:[%s0 + $0x30] sm:$0xff]
  %v58 = vld [vmem:[%s0 + $0x38] sm:$0xff]
  %v59 = vld [vmem:[%s0 + $0x40] sm:$0xff]
  %v60 = vld [vmem:[%s0 + $0x48] sm:$0xff]
  %v61 = vld [vmem:[%s0 + $0x50] sm:$0xff]
  %v62 = vld [vmem:[%s0 + $0x58] sm:$0xff]
  %v63 = vld [vmem:[%s0 + $0x60] sm:$0xff]
  %v64 = vld [vmem:[%s0 + $0x68] sm:$0xff]
  %v65 = vld [vmem:[%s0 + $0x70] sm:$0xff]
  %v66 = vld [vmem:[%s0 + $0x78] sm:$0xff]
  %v67 = vld [vmem:[%s0 + $0x80] sm:$0xff]
  %v68 = vld [vmem:[%s0 + $0x88] sm:$0xff]
  %v69 = vld [vmem:[%s0 + $0x90] sm:$0xff]
  %v70 = vld [vmem:[%s0 + $0x98] sm:$0xff]
  %v71 = vld [vmem:[%s0 + $0xa0] sm:$0xff]
  %v72 = vld [vmem:[%s0 + $0xa8] sm:$0xff]
  %v73 = vld [vmem:[%s0 + $0xb0] sm:$0xff]
  %v74 = vld [vmem:[%s0 + $0xb8] sm:$0xff]
  %v75 = vld [vmem:[%s0 + $0xc0] sm:$0xff]
  %v76 = vld [vmem:[%s0 + $0xc8] sm:$0xff]
  %v77 = vld [vmem:[%s0 + $0xd0] sm:$0xff]
  %v78 = vld [vmem:[%s0 + $0xd8] sm:$0xff]
  %v79 = vld [vmem:[%s0 + $0xe0] sm:$0xff]
  %v80 = vld [vmem:[%s0 + $0xe8] sm:$0xff]
  %v81 = vld [vmem:[%s0 + $0xf0] sm:$0xff]
  %v82 = vld [vmem:[%s0 + $0xf8] sm:$0xff]
  %v83 = vld [vmem:[%s0 + $0x100] sm:$0xff]
  %v84 = vld [vmem:[%s0 + $0x108] sm:$0xff]
  %v85 = vld [vmem:[%s0 + $0x110] sm:$0xff]
  %v86 = vld [vmem:[%s0 + $0x118] sm:$0xff]
  %v87 = vld [vmem:[%s0 + $0x120] sm:$0xff]
  %v88 = vld [vmem:[%s0 + $0x128] sm:$0xff]
  %v89 = vld [vmem:[%s0 + $0x130] sm:$0xff]
  %v90 = vld [vmem:[%s0 + $0x138] sm:$0xff]
  %v91 = vld [vmem:[%s0 + $0x140] sm:$0xff]
  %v92 = vld [vmem:[%s0 + $0x148] sm:$0xff]
  %v93 = vld [vmem:[%s0 + $0x150] sm:$0xff]
  %v94 = vld [vmem:[%s0 + $0x158] sm:$0xff]
  %v95 = vld [vmem:[%s0 + $0x160] sm:$0xff]
  %v96 = vld [vmem:[%s0 + $0x168] sm:$0xff]
  %v97 = vld [vmem:[%s0 + $0x170] sm:$0xff]
  %v98 = vld [vmem:[%s0 + $0x178] sm:$0xff]
  %v99 = vld [vmem:[%s0 + $0x180] sm:$0xff]
  %v100 = vld [vmem:[%s0 + $0x188] sm:$0xff]
  %v101 = vld [vmem:[%s0 + $0x190] sm:$0xff]
  %v102 = vld [vmem:[%s0 + $0x198] sm:$0xff]
  %v103 = vld [vmem:[%s0 + $0x1a0] sm:$0xff]
  %v104 = vld [vmem:[%s0 + $0x1a8] sm:$0xff]
  %v105 = vld [vmem:[%s0 + $0x1b0] sm:$0xff]
  %v106 = vld [vmem:[%s0 + $0x1b8] sm:$0xff]
  %v107 = vld [vmem:[%s0 + $0x1c0] sm:$0xff]
  %v108 = vld [vmem:[%s0 + $0x1c8] sm:$0xff]
  %v109 = vld [vmem:[%s0 + $0x1d0] sm:$0xff]
  %v110 = vld [vmem:[%s0 + $0x1d8] sm:$0xff]
  %v111 = vld [vmem:[%s0 + $0x1e0] sm:$0xff]
  %v112 = vld [vmem:[%s0 + $0x1e8] sm:$0xff]
  %v113 = vld [vmem:[%s0 + $0x1f0] sm:$0xff]
  %v114 = vld [vmem:[%s0 + $0x1f8] sm:$0xff]
  %v115 = vld [vmem:[%s1] sm:$0xf]
  %v116 = vld [vmem:[%s1 + $0x4] sm:$0xf]
  %v117 = vld [vmem:[%s1 + $0x8] sm:$0xf]
  %v118 = vld [vmem:[%s1 + $0xc] sm:$0xf]
  %v119 = vld [vmem:[%s1 + $0x10] sm:$0xf]
  %v120 = vld [vmem:[%s1 + $0x14] sm:$0xf]
  %v121 = vld [vmem:[%s1 + $0x18] sm:$0xf]
  %v122 = vld [vmem:[%s1 + $0x1c] sm:$0xf]
  %v123 = vld [vmem:[%s1 + $0x20] sm:$0xf]
  %v124 = vld [vmem:[%s1 + $0x24] sm:$0xf]
  %v125 = vld [vmem:[%s1 + $0x28] sm:$0xf]
  %v126 = vld [vmem:[%s1 + $0x2c] sm:$0xf]
  %v127 = vld [vmem:[%s1 + $0x30] sm:$0xf]
  %v128 = vld [vmem:[%s1 + $0x34] sm:$0xf]
  %v129 = vld [vmem:[%s1 + $0x38] sm:$0xf]
  %v130 = vld [vmem:[%s1 + $0x3c] sm:$0xf]
  %v131 = vld [vmem:[%s1 + $0x40] sm:$0xf]
  %v132 = vld [vmem:[%s1 + $0x44] sm:$0xf]
  %v133 = vld [vmem:[%s1 + $0x48] sm:$0xf]
  %v134 = vld [vmem:[%s1 + $0x4c] sm:$0xf]
  %v135 = vld [vmem:[%s1 + $0x50] sm:$0xf]
  %v136 = vld [vmem:[%s1 + $0x54] sm:$0xf]
  %v137 = vld [vmem:[%s1 + $0x58] sm:$0xf]
  %v138 = vld [vmem:[%s1 + $0x5c] sm:$0xf]
  %v139 = vld [vmem:[%s1 + $0x60] sm:$0xf]
  %v140 = vld [vmem:[%s1 + $0x64] sm:$0xf]
  %v141 = vld [vmem:[%s1 + $0x68] sm:$0xf]
  %v142 = vld [vmem:[%s1 + $0x6c] sm:$0xf]
  %v143 = vld [vmem:[%s1 + $0x70] sm:$0xf]
  %v144 = vld [vmem:[%s1 + $0x74] sm:$0xf]
  %v145 = vld [vmem:[%s1 + $0x78] sm:$0xf]
  %v146 = vld [vmem:[%s1 + $0x7c] sm:$0xf]
  %v147 = vld [vmem:[%s1 + $0x80] sm:$0xf]
  %v148 = vld [vmem:[%s1 + $0x84] sm:$0xf]
  %v149 = vld [vmem:[%s1 + $0x88] sm:$0xf]
  %v150 = vld [vmem:[%s1 + $0x8c] sm:$0xf]
  %v151 = vld [vmem:[%s1 + $0x90] sm:$0xf]
  %v152 = vld [vmem:[%s1 + $0x94] sm:$0xf]
  %v153 = vld [vmem:[%s1 + $0x98] sm:$0xf]
  %v154 = vld [vmem:[%s1 + $0x9c] sm:$0xf]
  %v155 = vld [vmem:[%s1 + $0xa0] sm:$0xf]
  %v156 = vld [vmem:[%s1 + $0xa4] sm:$0xf]
  %v157 = vld [vmem:[%s1 + $0xa8] sm:$0xf]
  %v158 = vld [vmem:[%s1 + $0xac] sm:$0xf]
  %v159 = vld [vmem:[%s1 + $0xb0] sm:$0xf]
  %v160 = vld [vmem:[%s1 + $0xb4] sm:$0xf]
  %v161 = vld [vmem:[%s1 + $0xb8] sm:$0xf]
  %v162 = vld [vmem:[%s1 + $0xbc] sm:$0xf]
  %v163 = vld [vmem:[%s1 + $0xc0] sm:$0xf]
  %v164 = vld [vmem:[%s1 + $0xc4] sm:$0xf]
  %v165 = vld [vmem:[%s1 + $0xc8] sm:$0xf]
  %v166 = vld [vmem:[%s1 + $0xcc] sm:$0xf]
  %v167 = vld [vmem:[%s1 + $0xd0] sm:$0xf]
  %v168 = vld [vmem:[%s1 + $0xd4] sm:$0xf]
  %v169 = vld [vmem:[%s1 + $0xd8] sm:$0xf]
  %v170 = vld [vmem:[%s1 + $0xdc] sm:$0xf]
  %v171 = vld [vmem:[%s1 + $0xe0] sm:$0xf]
  %v172 = vld [vmem:[%s1 + $0xe4] sm:$0xf]
  %v173 = vld [vmem:[%s1 + $0xe8] sm:$0xf]
  %v174 = vld [vmem:[%s1 + $0xec] sm:$0xf]
  %v175 = vld [vmem:[%s1 + $0xf0] sm:$0xf]
  %v176 = vld [vmem:[%s1 + $0xf4] sm:$0xf]
  %v177 = vld [vmem:[%s1 + $0xf8] sm:$0xf]
  %v178 = vld [vmem:[%s1 + $0xfc] sm:$0xf]
  %v179 = vld [vmem:[%s1 + $0x100] sm:$0xf]
  %v180 = vld [vmem:[%s1 + $0x104] sm:$0xf]
  %v181 = vld [vmem:[%s1 + $0x108] sm:$0xf]
  %v182 = vld [vmem:[%s1 + $0x10c] sm:$0xf]
  %v183 = vld [vmem:[%s1 + $0x110] sm:$0xf]
  %v184 = vld [vmem:[%s1 + $0x114] sm:$0xf]
  %v185 = vld [vmem:[%s1 + $0x118] sm:$0xf]
  %v186 = vld [vmem:[%s1 + $0x11c] sm:$0xf]
  %v187 = vld [vmem:[%s1 + $0x120] sm:$0xf]
  %v188 = vld [vmem:[%s1 + $0x124] sm:$0xf]
  %v189 = vld [vmem:[%s1 + $0x128] sm:$0xf]
  %v190 = vld [vmem:[%s1 + $0x12c] sm:$0xf]
  %v191 = vld [vmem:[%s1 + $0x130] sm:$0xf]
  %v192 = vld [vmem:[%s1 + $0x134] sm:$0xf]
  %v193 = vld [vmem:[%s1 + $0x138] sm:$0xf]
  %v194 = vld [vmem:[%s1 + $0x13c] sm:$0xf]
  %v195 = vld [vmem:[%s1 + $0x140] sm:$0xf]
  %v196 = vld [vmem:[%s1 + $0x144] sm:$0xf]
  %v197 = vld [vmem:[%s1 + $0x148] sm:$0xf]
  %v198 = vld [vmem:[%s1 + $0x14c] sm:$0xf]
  %v199 = vld [vmem:[%s1 + $0x150] sm:$0xf]
  %v200 = vld [vmem:[%s1 + $0x154] sm:$0xf]
  %v201 = vld [vmem:[%s1 + $0x158] sm:$0xf]
  %v202 = vld [vmem:[%s1 + $0x15c] sm:$0xf]
  %v203 = vld [vmem:[%s1 + $0x160] sm:$0xf]
  %v204 = vld [vmem:[%s1 + $0x164] sm:$0xf]
  %v205 = vld [vmem:[%s1 + $0x168] sm:$0xf]
  %v206 = vld [vmem:[%s1 + $0x16c] sm:$0xf]
  %v207 = vld [vmem:[%s1 + $0x170] sm:$0xf]
  %v208 = vld [vmem:[%s1 + $0x174] sm:$0xf]
  %v209 = vld [vmem:[%s1 + $0x178] sm:$0xf]
  %v210 = vld [vmem:[%s1 + $0x17c] sm:$0xf]
  %v211 = vld [vmem:[%s1 + $0x180] sm:$0xf]
  %v212 = vld [vmem:[%s1 + $0x184] sm:$0xf]
  %v213 = vld [vmem:[%s1 + $0x188] sm:$0xf]
  %v214 = vld [vmem:[%s1 + $0x18c] sm:$0xf]
  %v215 = vld [vmem:[%s1 + $0x190] sm:$0xf]
  %v216 = vld [vmem:[%s1 + $0x194] sm:$0xf]
  %v217 = vld [vmem:[%s1 + $0x198] sm:$0xf]
  %v218 = vld [vmem:[%s1 + $0x19c] sm:$0xf]
  %v219 = vld [vmem:[%s1 + $0x1a0] sm:$0xf]
  %v220 = vld [vmem:[%s1 + $0x1a4] sm:$0xf]
  %v221 = vld [vmem:[%s1 + $0x1a8] sm:$0xf]
  %v222 = vld [vmem:[%s1 + $0x1ac] sm:$0xf]
  %v223 = vld [vmem:[%s1 + $0x1b0] sm:$0xf]
  %v224 = vld [vmem:[%s1 + $0x1b4] sm:$0xf]
  %v225 = vld [vmem:[%s1 + $0x1b8] sm:$0xf]
  %v226 = vld [vmem:[%s1 + $0x1bc] sm:$0xf]
  %v227 = vld [vmem:[%s1 + $0x1c0] sm:$0xf]
  %v228 = vld [vmem:[%s1 + $0x1c4] sm:$0xf]
  %v229 = vld [vmem:[%s1 + $0x1c8] sm:$0xf]
  %v230 = vld [vmem:[%s1 + $0x1cc] sm:$0xf]
  %v231 = vld [vmem:[%s1 + $0x1d0] sm:$0xf]
  %v232 = vld [vmem:[%s1 + $0x1d4] sm:$0xf]
  %v233 = vld [vmem:[%s1 + $0x1d8] sm:$0xf]
  %v234 = vld [vmem:[%s1 + $0x1dc] sm:$0xf]
  %v235 = vld [vmem:[%s1 + $0x1e0] sm:$0xf]
  %v236 = vld [vmem:[%s1 + $0x1e4] sm:$0xf]
  %v237 = vld [vmem:[%s1 + $0x1e8] sm:$0xf]
  %v238 = vld [vmem:[%s1 + $0x1ec] sm:$0xf]
  %v239 = vld [vmem:[%s1 + $0x1f0] sm:$0xf]
  %v240 = vld [vmem:[%s1 + $0x1f4] sm:$0xf]
  %v241 = vld [vmem:[%s1 + $0x1f8] sm:$0xf]
  %v242 = vld [vmem:[%s1 + $0x1fc] sm:$0xf]
  %v307 = vunpack.c.l.b16 %v51
  %v308 = vunpack.c.h.b16 %v51
  %v309 = vunpack.c.l.b16 %v52
  %v310 = vunpack.c.h.b16 %v52
  %v311 = vunpack.c.l.b16 %v53
  %v312 = vunpack.c.h.b16 %v53
  %v313 = vunpack.c.l.b16 %v54
  %v314 = vunpack.c.h.b16 %v54
  %v315 = vunpack.c.l.b16 %v55
  %v316 = vunpack.c.h.b16 %v55
  %v317 = vunpack.c.l.b16 %v56
  %v318 = vunpack.c.h.b16 %v56
  %v319 = vunpack.c.l.b16 %v57
  %v320 = vunpack.c.h.b16 %v57
  %v321 = vunpack.c.l.b16 %v58
  %v322 = vunpack.c.h.b16 %v58
  %v323 = vunpack.c.l.b16 %v59
  %v324 = vunpack.c.h.b16 %v59
  %v325 = vunpack.c.l.b16 %v60
  %v326 = vunpack.c.h.b16 %v60
  %v327 = vunpack.c.l.b16 %v61
  %v328 = vunpack.c.h.b16 %v61
  %v329 = vunpack.c.l.b16 %v62
  %v330 = vunpack.c.h.b16 %v62
  %v331 = vunpack.c.l.b16 %v63
  %v332 = vunpack.c.h.b16 %v63
  %v333 = vunpack.c.l.b16 %v64
  %v334 = vunpack.c.h.b16 %v64
  %v335 = vunpack.c.l.b16 %v65
  %v336 = vunpack.c.h.b16 %v65
  %v337 = vunpack.c.l.b16 %v66
  %v338 = vunpack.c.h.b16 %v66
  %v339 = vunpack.c.l.b16 %v67
  %v340 = vunpack.c.h.b16 %v67
  %v341 = vunpack.c.l.b16 %v68
  %v342 = vunpack.c.h.b16 %v68
  %v343 = vunpack.c.l.b16 %v69
  %v344 = vunpack.c.h.b16 %v69
  %v345 = vunpack.c.l.b16 %v70
  %v346 = vunpack.c.h.b16 %v70
  %v347 = vunpack.c.l.b16 %v71
  %v348 = vunpack.c.h.b16 %v71
  %v349 = vunpack.c.l.b16 %v72
  %v350 = vunpack.c.h.b16 %v72
  %v351 = vunpack.c.l.b16 %v73
  %v352 = vunpack.c.h.b16 %v73
  %v353 = vunpack.c.l.b16 %v74
  %v354 = vunpack.c.h.b16 %v74
  %v355 = vunpack.c.l.b16 %v75
  %v356 = vunpack.c.h.b16 %v75
  %v357 = vunpack.c.l.b16 %v76
  %v358 = vunpack.c.h.b16 %v76
  %v359 = vunpack.c.l.b16 %v77
  %v360 = vunpack.c.h.b16 %v77
  %v361 = vunpack.c.l.b16 %v78
  %v362 = vunpack.c.h.b16 %v78
  %v363 = vunpack.c.l.b16 %v79
  %v364 = vunpack.c.h.b16 %v79
  %v365 = vunpack.c.l.b16 %v80
  %v366 = vunpack.c.h.b16 %v80
  %v367 = vunpack.c.l.b16 %v81
  %v368 = vunpack.c.h.b16 %v81
  %v369 = vunpack.c.l.b16 %v82
  %v370 = vunpack.c.h.b16 %v82
  %v371 = vunpack.c.l.b16 %v83
  %v372 = vunpack.c.h.b16 %v83
  %v373 = vunpack.c.l.b16 %v84
  %v374 = vunpack.c.h.b16 %v84
  %v375 = vunpack.c.l.b16 %v85
  %v376 = vunpack.c.h.b16 %v85
  %v377 = vunpack.c.l.b16 %v86
  %v378 = vunpack.c.h.b16 %v86
  %v379 = vunpack.c.l.b16 %v87
  %v380 = vunpack.c.h.b16 %v87
  %v381 = vunpack.c.l.b16 %v88
  %v382 = vunpack.c.h.b16 %v88
  %v383 = vunpack.c.l.b16 %v89
  %v384 = vunpack.c.h.b16 %v89
  %v385 = vunpack.c.l.b16 %v90
  %v386 = vunpack.c.h.b16 %v90
  %v387 = vunpack.c.l.b16 %v91
  %v388 = vunpack.c.h.b16 %v91
  %v389 = vunpack.c.l.b16 %v92
  %v390 = vunpack.c.h.b16 %v92
  %v391 = vunpack.c.l.b16 %v93
  %v392 = vunpack.c.h.b16 %v93
  %v393 = vunpack.c.l.b16 %v94
  %v394 = vunpack.c.h.b16 %v94
  %v395 = vunpack.c.l.b16 %v95
  %v396 = vunpack.c.h.b16 %v95
  %v397 = vunpack.c.l.b16 %v96
  %v398 = vunpack.c.h.b16 %v96
  %v399 = vunpack.c.l.b16 %v97
  %v400 = vunpack.c.h.b16 %v97
  %v401 = vunpack.c.l.b16 %v98
  %v402 = vunpack.c.h.b16 %v98
  %v403 = vunpack.c.l.b16 %v99
  %v404 = vunpack.c.h.b16 %v99
  %v405 = vunpack.c.l.b16 %v100
  %v406 = vunpack.c.h.b16 %v100
  %v407 = vunpack.c.l.b16 %v101
  %v408 = vunpack.c.h.b16 %v101
  %v409 = vunpack.c.l.b16 %v102
  %v410 = vunpack.c.h.b16 %v102
  %v411 = vunpack.c.l.b16 %v103
  %v412 = vunpack.c.h.b16 %v103
  %v413 = vunpack.c.l.b16 %v104
  %v414 = vunpack.c.h.b16 %v104
  %v415 = vunpack.c.l.b16 %v105
  %v416 = vunpack.c.h.b16 %v105
  %v417 = vunpack.c.l.b16 %v106
  %v418 = vunpack.c.h.b16 %v106
  %v419 = vunpack.c.l.b16 %v107
  %v420 = vunpack.c.h.b16 %v107
  %v421 = vunpack.c.l.b16 %v108
  %v422 = vunpack.c.h.b16 %v108
  %v423 = vunpack.c.l.b16 %v109
  %v424 = vunpack.c.h.b16 %v109
  %v425 = vunpack.c.l.b16 %v110
  %v426 = vunpack.c.h.b16 %v110
  %v427 = vunpack.c.l.b16 %v111
  %v428 = vunpack.c.h.b16 %v111
  %v429 = vunpack.c.l.b16 %v112
  %v430 = vunpack.c.h.b16 %v112
  %v431 = vunpack.c.l.b16 %v113
  %v432 = vunpack.c.h.b16 %v113
  %v433 = vunpack.c.l.b16 %v114
  %v434 = vunpack.c.h.b16 %v114
  %v435 = vpack.c.b16 %v315, %v307
  %v436 = vpack.c.b16 %v316, %v308
  %v437 = vpack.c.b16 %v317, %v309
  %v438 = vpack.c.b16 %v318, %v310
  %v439 = vpack.c.b16 %v319, %v311
  %v440 = vpack.c.b16 %v320, %v312
  %v441 = vpack.c.b16 %v321, %v313
  %v442 = vpack.c.b16 %v322, %v314
  %v443 = vpack.c.b16 %v331, %v323
  %v444 = vpack.c.b16 %v332, %v324
  %v445 = vpack.c.b16 %v333, %v325
  %v446 = vpack.c.b16 %v334, %v326
  %v447 = vpack.c.b16 %v335, %v327
  %v448 = vpack.c.b16 %v336, %v328
  %v449 = vpack.c.b16 %v337, %v329
  %v450 = vpack.c.b16 %v338, %v330
  %v451 = vpack.c.b16 %v347, %v339
  %v452 = vpack.c.b16 %v348, %v340
  %v453 = vpack.c.b16 %v349, %v341
  %v454 = vpack.c.b16 %v350, %v342
  %v455 = vpack.c.b16 %v351, %v343
  %v456 = vpack.c.b16 %v352, %v344
  %v457 = vpack.c.b16 %v353, %v345
  %v458 = vpack.c.b16 %v354, %v346
  %v459 = vpack.c.b16 %v363, %v355
  %v460 = vpack.c.b16 %v364, %v356
  %v461 = vpack.c.b16 %v365, %v357
  %v462 = vpack.c.b16 %v366, %v358
  %v463 = vpack.c.b16 %v367, %v359
  %v464 = vpack.c.b16 %v368, %v360
  %v465 = vpack.c.b16 %v369, %v361
  %v466 = vpack.c.b16 %v370, %v362
  %v467 = vpack.c.b16 %v379, %v371
  %v468 = vpack.c.b16 %v380, %v372
  %v469 = vpack.c.b16 %v381, %v373
  %v470 = vpack.c.b16 %v382, %v374
  %v471 = vpack.c.b16 %v383, %v375
  %v472 = vpack.c.b16 %v384, %v376
  %v473 = vpack.c.b16 %v385, %v377
  %v474 = vpack.c.b16 %v386, %v378
  %v475 = vpack.c.b16 %v395, %v387
  %v476 = vpack.c.b16 %v396, %v388
  %v477 = vpack.c.b16 %v397, %v389
  %v478 = vpack.c.b16 %v398, %v390
  %v479 = vpack.c.b16 %v399, %v391
  %v480 = vpack.c.b16 %v400, %v392
  %v481 = vpack.c.b16 %v401, %v393
  %v482 = vpack.c.b16 %v402, %v394
  %v483 = vpack.c.b16 %v411, %v403
  %v484 = vpack.c.b16 %v412, %v404
  %v485 = vpack.c.b16 %v413, %v405
  %v486 = vpack.c.b16 %v414, %v406
  %v487 = vpack.c.b16 %v415, %v407
  %v488 = vpack.c.b16 %v416, %v408
  %v489 = vpack.c.b16 %v417, %v409
  %v490 = vpack.c.b16 %v418, %v410
  %v491 = vpack.c.b16 %v427, %v419
  %v492 = vpack.c.b16 %v428, %v420
  %v493 = vpack.c.b16 %v429, %v421
  %v494 = vpack.c.b16 %v430, %v422
  %v495 = vpack.c.b16 %v431, %v423
  %v496 = vpack.c.b16 %v432, %v424
  %v497 = vpack.c.b16 %v433, %v425
  %v498 = vpack.c.b16 %v434, %v426
  %v691 = vunpack.c.l.b16 %v115
  %v692 = vunpack.c.l.b16 %v116
  %v693 = vunpack.c.l.b16 %v117
  %v694 = vunpack.c.l.b16 %v118
  %v695 = vunpack.c.l.b16 %v119
  %v696 = vunpack.c.l.b16 %v120
  %v697 = vunpack.c.l.b16 %v121
  %v698 = vunpack.c.l.b16 %v122
  %v699 = vunpack.c.l.b16 %v123
  %v700 = vunpack.c.l.b16 %v124
  %v701 = vunpack.c.l.b16 %v125
  %v702 = vunpack.c.l.b16 %v126
  %v703 = vunpack.c.l.b16 %v127
  %v704 = vunpack.c.l.b16 %v128
  %v705 = vunpack.c.l.b16 %v129
  %v706 = vunpack.c.l.b16 %v130
  %v707 = vunpack.c.l.b16 %v131
  %v708 = vunpack.c.l.b16 %v132
  %v709 = vunpack.c.l.b16 %v133
  %v710 = vunpack.c.l.b16 %v134
  %v711 = vunpack.c.l.b16 %v135
  %v712 = vunpack.c.l.b16 %v136
  %v713 = vunpack.c.l.b16 %v137
  %v714 = vunpack.c.l.b16 %v138
  %v715 = vunpack.c.l.b16 %v139
  %v716 = vunpack.c.l.b16 %v140
  %v717 = vunpack.c.l.b16 %v141
  %v718 = vunpack.c.l.b16 %v142
  %v719 = vunpack.c.l.b16 %v143
  %v720 = vunpack.c.l.b16 %v144
  %v721 = vunpack.c.l.b16 %v145
  %v722 = vunpack.c.l.b16 %v146
  %v723 = vunpack.c.l.b16 %v147
  %v724 = vunpack.c.l.b16 %v148
  %v725 = vunpack.c.l.b16 %v149
  %v726 = vunpack.c.l.b16 %v150
  %v727 = vunpack.c.l.b16 %v151
  %v728 = vunpack.c.l.b16 %v152
  %v729 = vunpack.c.l.b16 %v153
  %v730 = vunpack.c.l.b16 %v154
  %v731 = vunpack.c.l.b16 %v155
  %v732 = vunpack.c.l.b16 %v156
  %v733 = vunpack.c.l.b16 %v157
  %v734 = vunpack.c.l.b16 %v158
  %v735 = vunpack.c.l.b16 %v159
  %v736 = vunpack.c.l.b16 %v160
  %v737 = vunpack.c.l.b16 %v161
  %v738 = vunpack.c.l.b16 %v162
  %v739 = vunpack.c.l.b16 %v163
  %v740 = vunpack.c.l.b16 %v164
  %v741 = vunpack.c.l.b16 %v165
  %v742 = vunpack.c.l.b16 %v166
  %v743 = vunpack.c.l.b16 %v167
  %v744 = vunpack.c.l.b16 %v168
  %v745 = vunpack.c.l.b16 %v169
  %v746 = vunpack.c.l.b16 %v170
  %v747 = vunpack.c.l.b16 %v171
  %v748 = vunpack.c.l.b16 %v172
  %v749 = vunpack.c.l.b16 %v173
  %v750 = vunpack.c.l.b16 %v174
  %v751 = vunpack.c.l.b16 %v175
  %v752 = vunpack.c.l.b16 %v176
  %v753 = vunpack.c.l.b16 %v177
  %v754 = vunpack.c.l.b16 %v178
  %v755 = vunpack.c.l.b16 %v179
  %v756 = vunpack.c.l.b16 %v180
  %v757 = vunpack.c.l.b16 %v181
  %v758 = vunpack.c.l.b16 %v182
  %v759 = vunpack.c.l.b16 %v183
  %v760 = vunpack.c.l.b16 %v184
  %v761 = vunpack.c.l.b16 %v185
  %v762 = vunpack.c.l.b16 %v186
  %v763 = vunpack.c.l.b16 %v187
  %v764 = vunpack.c.l.b16 %v188
  %v765 = vunpack.c.l.b16 %v189
  %v766 = vunpack.c.l.b16 %v190
  %v767 = vunpack.c.l.b16 %v191
  %v768 = vunpack.c.l.b16 %v192
  %v769 = vunpack.c.l.b16 %v193
  %v770 = vunpack.c.l.b16 %v194
  %v771 = vunpack.c.l.b16 %v195
  %v772 = vunpack.c.l.b16 %v196
  %v773 = vunpack.c.l.b16 %v197
  %v774 = vunpack.c.l.b16 %v198
  %v775 = vunpack.c.l.b16 %v199
  %v776 = vunpack.c.l.b16 %v200
  %v777 = vunpack.c.l.b16 %v201
  %v778 = vunpack.c.l.b16 %v202
  %v779 = vunpack.c.l.b16 %v203
  %v780 = vunpack.c.l.b16 %v204
  %v781 = vunpack.c.l.b16 %v205
  %v782 = vunpack.c.l.b16 %v206
  %v783 = vunpack.c.l.b16 %v207
  %v784 = vunpack.c.l.b16 %v208
  %v785 = vunpack.c.l.b16 %v209
  %v786 = vunpack.c.l.b16 %v210
  %v787 = vunpack.c.l.b16 %v211
  %v788 = vunpack.c.l.b16 %v212
  %v789 = vunpack.c.l.b16 %v213
  %v790 = vunpack.c.l.b16 %v214
  %v791 = vunpack.c.l.b16 %v215
  %v792 = vunpack.c.l.b16 %v216
  %v793 = vunpack.c.l.b16 %v217
  %v794 = vunpack.c.l.b16 %v218
  %v795 = vunpack.c.l.b16 %v219
  %v796 = vunpack.c.l.b16 %v220
  %v797 = vunpack.c.l.b16 %v221
  %v798 = vunpack.c.l.b16 %v222
  %v799 = vunpack.c.l.b16 %v223
  %v800 = vunpack.c.l.b16 %v224
  %v801 = vunpack.c.l.b16 %v225
  %v802 = vunpack.c.l.b16 %v226
  %v803 = vunpack.c.l.b16 %v227
  %v804 = vunpack.c.l.b16 %v228
  %v805 = vunpack.c.l.b16 %v229
  %v806 = vunpack.c.l.b16 %v230
  %v807 = vunpack.c.l.b16 %v231
  %v808 = vunpack.c.l.b16 %v232
  %v809 = vunpack.c.l.b16 %v233
  %v810 = vunpack.c.l.b16 %v234
  %v811 = vunpack.c.l.b16 %v235
  %v812 = vunpack.c.l.b16 %v236
  %v813 = vunpack.c.l.b16 %v237
  %v814 = vunpack.c.l.b16 %v238
  %v815 = vunpack.c.l.b16 %v239
  %v816 = vunpack.c.l.b16 %v240
  %v817 = vunpack.c.l.b16 %v241
  %v818 = vunpack.c.l.b16 %v242
  %v819 = vpack.c.b16 %v692, %v691
  %v820 = vpack.c.b16 %v694, %v693
  %v821 = vpack.c.b16 %v696, %v695
  %v822 = vpack.c.b16 %v698, %v697
  %v823 = vpack.c.b16 %v700, %v699
  %v824 = vpack.c.b16 %v702, %v701
  %v825 = vpack.c.b16 %v704, %v703
  %v826 = vpack.c.b16 %v706, %v705
  %v827 = vpack.c.b16 %v708, %v707
  %v828 = vpack.c.b16 %v710, %v709
  %v829 = vpack.c.b16 %v712, %v711
  %v830 = vpack.c.b16 %v714, %v713
  %v831 = vpack.c.b16 %v716, %v715
  %v832 = vpack.c.b16 %v718, %v717
  %v833 = vpack.c.b16 %v720, %v719
  %v834 = vpack.c.b16 %v722, %v721
  %v835 = vpack.c.b16 %v724, %v723
  %v836 = vpack.c.b16 %v726, %v725
  %v837 = vpack.c.b16 %v728, %v727
  %v838 = vpack.c.b16 %v730, %v729
  %v839 = vpack.c.b16 %v732, %v731
  %v840 = vpack.c.b16 %v734, %v733
  %v841 = vpack.c.b16 %v736, %v735
  %v842 = vpack.c.b16 %v738, %v737
  %v843 = vpack.c.b16 %v740, %v739
  %v844 = vpack.c.b16 %v742, %v741
  %v845 = vpack.c.b16 %v744, %v743
  %v846 = vpack.c.b16 %v746, %v745
  %v847 = vpack.c.b16 %v748, %v747
  %v848 = vpack.c.b16 %v750, %v749
  %v849 = vpack.c.b16 %v752, %v751
  %v850 = vpack.c.b16 %v754, %v753
  %v851 = vpack.c.b16 %v756, %v755
  %v852 = vpack.c.b16 %v758, %v757
  %v853 = vpack.c.b16 %v760, %v759
  %v854 = vpack.c.b16 %v762, %v761
  %v855 = vpack.c.b16 %v764, %v763
  %v856 = vpack.c.b16 %v766, %v765
  %v857 = vpack.c.b16 %v768, %v767
  %v858 = vpack.c.b16 %v770, %v769
  %v859 = vpack.c.b16 %v772, %v771
  %v860 = vpack.c.b16 %v774, %v773
  %v861 = vpack.c.b16 %v776, %v775
  %v862 = vpack.c.b16 %v778, %v777
  %v863 = vpack.c.b16 %v780, %v779
  %v864 = vpack.c.b16 %v782, %v781
  %v865 = vpack.c.b16 %v784, %v783
  %v866 = vpack.c.b16 %v786, %v785
  %v867 = vpack.c.b16 %v788, %v787
  %v868 = vpack.c.b16 %v790, %v789
  %v869 = vpack.c.b16 %v792, %v791
  %v870 = vpack.c.b16 %v794, %v793
  %v871 = vpack.c.b16 %v796, %v795
  %v872 = vpack.c.b16 %v798, %v797
  %v873 = vpack.c.b16 %v800, %v799
  %v874 = vpack.c.b16 %v802, %v801
  %v875 = vpack.c.b16 %v804, %v803
  %v876 = vpack.c.b16 %v806, %v805
  %v877 = vpack.c.b16 %v808, %v807
  %v878 = vpack.c.b16 %v810, %v809
  %v879 = vpack.c.b16 %v812, %v811
  %v880 = vpack.c.b16 %v814, %v813
  %v881 = vpack.c.b16 %v816, %v815
  %v882 = vpack.c.b16 %v818, %v817
  %947 = vmatprep.subr.bf16.mxu0 0
  %948 = vmatpush1.bf16.msra.mxu0 %v819
  %949 = vmatprep.subr.bf16.mxu0 0
  %950 = vmatpush1.bf16.msra.mxu0 %v820
  %951 = vmatprep.subr.bf16.mxu0 0
  %952 = vmatpush1.bf16.msra.mxu0 %v821
  %953 = vmatprep.subr.bf16.mxu0 0
  %954 = vmatpush1.bf16.msra.mxu0 %v822
  %955 = vmatprep.subr.bf16.mxu0 0
  %956 = vmatpush1.bf16.msra.mxu0 %v823
  %957 = vmatprep.subr.bf16.mxu0 0
  %958 = vmatpush1.bf16.msra.mxu0 %v824
  %959 = vmatprep.subr.bf16.mxu0 0
  %960 = vmatpush1.bf16.msra.mxu0 %v825
  %961 = vmatprep.subr.bf16.mxu0 0
  %962 = vmatpush1.bf16.msra.mxu0 %v826
  %963 = vmatprep.subr.bf16.mxu0 0
  %964 = vmatpush1.bf16.msra.mxu0 %v827
  %965 = vmatprep.subr.bf16.mxu0 0
  %966 = vmatpush1.bf16.msra.mxu0 %v828
  %967 = vmatprep.subr.bf16.mxu0 0
  %968 = vmatpush1.bf16.msra.mxu0 %v829
  %969 = vmatprep.subr.bf16.mxu0 0
  %970 = vmatpush1.bf16.msra.mxu0 %v830
  %971 = vmatprep.subr.bf16.mxu0 0
  %972 = vmatpush1.bf16.msra.mxu0 %v831
  %973 = vmatprep.subr.bf16.mxu0 0
  %974 = vmatpush1.bf16.msra.mxu0 %v832
  %975 = vmatprep.subr.bf16.mxu0 0
  %976 = vmatpush1.bf16.msra.mxu0 %v833
  %977 = vmatprep.subr.bf16.mxu0 0
  %978 = vmatpush1.bf16.msra.mxu0 %v834
  %979 = vmatprep.mubr.bf16.mxu0 %v436
  %980 = vmatmul.mubr.bf16.gmra.mrb[0].mxu0 %v435
  %v981 = vpop.f32.mrb[0].mxu0
  %v982 = vadd.f32 0.0, %v981
  %v983 = vpop.f32.mrb[0].mxu0
  %v984 = vpop.f32.mrb[0].mxu0
  %v985 = vadd.f32 0.0, %v984
  %v986 = vpop.f32.mrb[0].mxu0
  %987 = vmatprep.mubr.bf16.mxu0 %v444
  %988 = vmatmul.mubr.bf16.gmra.mrb[0].mxu0 %v443
  %v989 = vpop.f32.mrb[0].mxu0
  %v990 = vadd.f32 0.0, %v989
  %v991 = vpop.f32.mrb[0].mxu0
  %v992 = vpop.f32.mrb[0].mxu0
  %v993 = vadd.f32 0.0, %v992
  %v994 = vpop.f32.mrb[0].mxu0
  %995 = vmatprep.mubr.bf16.mxu0 %v452
  %996 = vmatmul.mubr.bf16.gmra.mrb[0].mxu0 %v451
  %v997 = vpop.f32.mrb[0].mxu0
  %v998 = vadd.f32 0.0, %v997
  %v999 = vpop.f32.mrb[0].mxu0
  %v1000 = vpop.f32.mrb[0].mxu0
  %v1001 = vadd.f32 0.0, %v1000
  %v1002 = vpop.f32.mrb[0].mxu0
  %1003 = vmatprep.mubr.bf16.mxu0 %v460
  %1004 = vmatmul.mubr.bf16.gmra.mrb[0].mxu0 %v459
  %v1005 = vpop.f32.mrb[0].mxu0
  %v1006 = vadd.f32 0.0, %v1005
  %v1007 = vpop.f32.mrb[0].mxu0
  %v1008 = vpop.f32.mrb[0].mxu0
  %v1009 = vadd.f32 0.0, %v1008
  %v1010 = vpop.f32.mrb[0].mxu0
  %1011 = vmatprep.mubr.bf16.mxu0 %v468
  %1012 = vmatmul.mubr.bf16.gmra.mrb[0].mxu0 %v467
  %v1013 = vpop.f32.mrb[0].mxu0
  %v1014 = vadd.f32 0.0, %v1013
  %v1015 = vpop.f32.mrb[0].mxu0
  %v1016 = vpop.f32.mrb[0].mxu0
  %v1017 = vadd.f32 0.0, %v1016
  %v1018 = vpop.f32.mrb[0].mxu0
  %1019 = vmatprep.mubr.bf16.mxu0 %v476
  %1020 = vmatmul.mubr.bf16.gmra.mrb[0].mxu0 %v475
  %v1021 = vpop.f32.mrb[0].mxu0
  %v1022 = vadd.f32 0.0, %v1021
  %v1023 = vpop.f32.mrb[0].mxu0
  %v1024 = vpop.f32.mrb[0].mxu0
  %v1025 = vadd.f32 0.0, %v1024
  %v1026 = vpop.f32.mrb[0].mxu0
  %1027 = vmatprep.mubr.bf16.mxu0 %v484
  %1028 = vmatmul.mubr.bf16.gmra.mrb[0].mxu0 %v483
  %v1029 = vpop.f32.mrb[0].mxu0
  %v1030 = vadd.f32 0.0, %v1029
  %v1031 = vpop.f32.mrb[0].mxu0
  %v1032 = vpop.f32.mrb[0].mxu0
  %v1033 = vadd.f32 0.0, %v1032
  %v1034 = vpop.f32.mrb[0].mxu0
  %1035 = vmatprep.mubr.bf16.mxu0 %v492
  %1036 = vmatmul.mubr.bf16.gmra.mrb[0].mxu0 %v491
  %v1037 = vpop.f32.mrb[0].mxu0
  %v1038 = vadd.f32 0.0, %v1037
  %v1039 = vpop.f32.mrb[0].mxu0
  %v1040 = vpop.f32.mrb[0].mxu0
  %v1041 = vadd.f32 0.0, %v1040
  %v1042 = vpop.f32.mrb[0].mxu0
  %1043 = vdwg.mxu0
  %1044 = vmatprep.subr.bf16.mxu0 0
  %1045 = vmatpush1.bf16.msra.mxu0 %v835
  %1046 = vmatprep.subr.bf16.mxu0 0
  %1047 = vmatpush1.bf16.msra.mxu0 %v836
  %1048 = vmatprep.subr.bf16.mxu0 0
  %1049 = vmatpush1.bf16.msra.mxu0 %v837
  %1050 = vmatprep.subr.bf16.mxu0 0
  %1051 = vmatpush1.bf16.msra.mxu0 %v838
  %1052 = vmatprep.subr.bf16.mxu0 0
  %1053 = vmatpush1.bf16.msra.mxu0 %v839
  %1054 = vmatprep.subr.bf16.mxu0 0
  %1055 = vmatpush1.bf16.msra.mxu0 %v840
  %1056 = vmatprep.subr.bf16.mxu0 0
  %1057 = vmatpush1.bf16.msra.mxu0 %v841
  %1058 = vmatprep.subr.bf16.mxu0 0
  %1059 = vmatpush1.bf16.msra.mxu0 %v842
  %1060 = vmatprep.subr.bf16.mxu0 0
  %1061 = vmatpush1.bf16.msra.mxu0 %v843
  %1062 = vmatprep.subr.bf16.mxu0 0
  %1063 = vmatpush1.bf16.msra.mxu0 %v844
  %1064 = vmatprep.subr.bf16.mxu0 0
  %1065 = vmatpush1.bf16.msra.mxu0 %v845
  %1066 = vmatprep.subr.bf16.mxu0 0
  %1067 = vmatpush1.bf16.msra.mxu0 %v846
  %1068 = vmatprep.subr.bf16.mxu0 0
  %1069 = vmatpush1.bf16.msra.mxu0 %v847
  %1070 = vmatprep.subr.bf16.mxu0 0
  %1071 = vmatpush1.bf16.msra.mxu0 %v848
  %1072 = vmatprep.subr.bf16.mxu0 0
  %1073 = vmatpush1.bf16.msra.mxu0 %v849
  %1074 = vmatprep.subr.bf16.mxu0 0
  %1075 = vmatpush1.bf16.msra.mxu0 %v850
  %1076 = vmatprep.mubr.bf16.mxu0 %v438
  %1077 = vmatmul.mubr.bf16.gmra.mrb[0].mxu0 %v437
  %v1078 = vpop.f32.mrb[0].mxu0
  %v1079 = vadd.f32 %v982, %v1078
  %v1080 = vpop.f32.mrb[0].mxu0
  %v1081 = vpop.f32.mrb[0].mxu0
  %v1082 = vadd.f32 %v985, %v1081
  %v1083 = vpop.f32.mrb[0].mxu0
  %1084 = vmatprep.mubr.bf16.mxu0 %v446
  %1085 = vmatmul.mubr.bf16.gmra.mrb[0].mxu0 %v445
  %v1086 = vpop.f32.mrb[0].mxu0
  %v1087 = vadd.f32 %v990, %v1086
  %v1088 = vpop.f32.mrb[0].mxu0
  %v1089 = vpop.f32.mrb[0].mxu0
  %v1090 = vadd.f32 %v993, %v1089
  %v1091 = vpop.f32.mrb[0].mxu0
  %1092 = vmatprep.mubr.bf16.mxu0 %v454
  %1093 = vmatmul.mubr.bf16.gmra.mrb[0].mxu0 %v453
  %v1094 = vpop.f32.mrb[0].mxu0
  %v1095 = vadd.f32 %v998, %v1094
  %v1096 = vpop.f32.mrb[0].mxu0
  %v1097 = vpop.f32.mrb[0].mxu0
  %v1098 = vadd.f32 %v1001, %v1097
  %v1099 = vpop.f32.mrb[0].mxu0
  %1100 = vmatprep.mubr.bf16.mxu0 %v462
  %1101 = vmatmul.mubr.bf16.gmra.mrb[0].mxu0 %v461
  %v1102 = vpop.f32.mrb[0].mxu0
  %v1103 = vadd.f32 %v1006, %v1102
  %v1104 = vpop.f32.mrb[0].mxu0
  %v1105 = vpop.f32.mrb[0].mxu0
  %v1106 = vadd.f32 %v1009, %v1105
  %v1107 = vpop.f32.mrb[0].mxu0
  %1108 = vmatprep.mubr.bf16.mxu0 %v470
  %1109 = vmatmul.mubr.bf16.gmra.mrb[0].mxu0 %v469
  %v1110 = vpop.f32.mrb[0].mxu0
  %v1111 = vadd.f32 %v1014, %v1110
  %v1112 = vpop.f32.mrb[0].mxu0
  %v1113 = vpop.f32.mrb[0].mxu0
  %v1114 = vadd.f32 %v1017, %v1113
  %v1115 = vpop.f32.mrb[0].mxu0
  %1116 = vmatprep.mubr.bf16.mxu0 %v478
  %1117 = vmatmul.mubr.bf16.gmra.mrb[0].mxu0 %v477
  %v1118 = vpop.f32.mrb[0].mxu0
  %v1119 = vadd.f32 %v1022, %v1118
  %v1120 = vpop.f32.mrb[0].mxu0
  %v1121 = vpop.f32.mrb[0].mxu0
  %v1122 = vadd.f32 %v1025, %v1121
  %v1123 = vpop.f32.mrb[0].mxu0
  %1124 = vmatprep.mubr.bf16.mxu0 %v486
  %1125 = vmatmul.mubr.bf16.gmra.mrb[0].mxu0 %v485
  %v1126 = vpop.f32.mrb[0].mxu0
  %v1127 = vadd.f32 %v1030, %v1126
  %v1128 = vpop.f32.mrb[0].mxu0
  %v1129 = vpop.f32.mrb[0].mxu0
  %v1130 = vadd.f32 %v1033, %v1129
  %v1131 = vpop.f32.mrb[0].mxu0
  %1132 = vmatprep.mubr.bf16.mxu0 %v494
  %1133 = vmatmul.mubr.bf16.gmra.mrb[0].mxu0 %v493
  %v1134 = vpop.f32.mrb[0].mxu0
  %v1135 = vadd.f32 %v1038, %v1134
  %v1136 = vpop.f32.mrb[0].mxu0
  %v1137 = vpop.f32.mrb[0].mxu0
  %v1138 = vadd.f32 %v1041, %v1137
  %v1139 = vpop.f32.mrb[0].mxu0
  %1140 = vdwg.mxu0
  %1141 = vmatprep.subr.bf16.mxu0 0
  %1142 = vmatpush1.bf16.msra.mxu0 %v851
  %1143 = vmatprep.subr.bf16.mxu0 0
  %1144 = vmatpush1.bf16.msra.mxu0 %v852
  %1145 = vmatprep.subr.bf16.mxu0 0
  %1146 = vmatpush1.bf16.msra.mxu0 %v853
  %1147 = vmatprep.subr.bf16.mxu0 0
  %1148 = vmatpush1.bf16.msra.mxu0 %v854
  %1149 = vmatprep.subr.bf16.mxu0 0
  %1150 = vmatpush1.bf16.msra.mxu0 %v855
  %1151 = vmatprep.subr.bf16.mxu0 0
  %1152 = vmatpush1.bf16.msra.mxu0 %v856
  %1153 = vmatprep.subr.bf16.mxu0 0
  %1154 = vmatpush1.bf16.msra.mxu0 %v857
  %1155 = vmatprep.subr.bf16.mxu0 0
  %1156 = vmatpush1.bf16.msra.mxu0 %v858
  %1157 = vmatprep.subr.bf16.mxu0 0
  %1158 = vmatpush1.bf16.msra.mxu0 %v859
  %1159 = vmatprep.subr.bf16.mxu0 0
  %1160 = vmatpush1.bf16.msra.mxu0 %v860
  %1161 = vmatprep.subr.bf16.mxu0 0
  %1162 = vmatpush1.bf16.msra.mxu0 %v861
  %1163 = vmatprep.subr.bf16.mxu0 0
  %1164 = vmatpush1.bf16.msra.mxu0 %v862
  %1165 = vmatprep.subr.bf16.mxu0 0
  %1166 = vmatpush1.bf16.msra.mxu0 %v863
  %1167 = vmatprep.subr.bf16.mxu0 0
  %1168 = vmatpush1.bf16.msra.mxu0 %v864
  %1169 = vmatprep.subr.bf16.mxu0 0
  %1170 = vmatpush1.bf16.msra.mxu0 %v865
  %1171 = vmatprep.subr.bf16.mxu0 0
  %1172 = vmatpush1.bf16.msra.mxu0 %v866
  %1173 = vmatprep.mubr.bf16.mxu0 %v440
  %1174 = vmatmul.mubr.bf16.gmra.mrb[0].mxu0 %v439
  %v1175 = vpop.f32.mrb[0].mxu0
  %v1176 = vadd.f32 %v1079, %v1175
  %v1177 = vpop.f32.mrb[0].mxu0
  %v1178 = vpop.f32.mrb[0].mxu0
  %v1179 = vadd.f32 %v1082, %v1178
  %v1180 = vpop.f32.mrb[0].mxu0
  %1181 = vmatprep.mubr.bf16.mxu0 %v448
  %1182 = vmatmul.mubr.bf16.gmra.mrb[0].mxu0 %v447
  %v1183 = vpop.f32.mrb[0].mxu0
  %v1184 = vadd.f32 %v1087, %v1183
  %v1185 = vpop.f32.mrb[0].mxu0
  %v1186 = vpop.f32.mrb[0].mxu0
  %v1187 = vadd.f32 %v1090, %v1186
  %v1188 = vpop.f32.mrb[0].mxu0
  %1189 = vmatprep.mubr.bf16.mxu0 %v456
  %1190 = vmatmul.mubr.bf16.gmra.mrb[0].mxu0 %v455
  %v1191 = vpop.f32.mrb[0].mxu0
  %v1192 = vadd.f32 %v1095, %v1191
  %v1193 = vpop.f32.mrb[0].mxu0
  %v1194 = vpop.f32.mrb[0].mxu0
  %v1195 = vadd.f32 %v1098, %v1194
  %v1196 = vpop.f32.mrb[0].mxu0
  %1197 = vmatprep.mubr.bf16.mxu0 %v464
  %1198 = vmatmul.mubr.bf16.gmra.mrb[0].mxu0 %v463
  %v1199 = vpop.f32.mrb[0].mxu0
  %v1200 = vadd.f32 %v1103, %v1199
  %v1201 = vpop.f32.mrb[0].mxu0
  %v1202 = vpop.f32.mrb[0].mxu0
  %v1203 = vadd.f32 %v1106, %v1202
  %v1204 = vpop.f32.mrb[0].mxu0
  %1205 = vmatprep.mubr.bf16.mxu0 %v472
  %1206 = vmatmul.mubr.bf16.gmra.mrb[0].mxu0 %v471
  %v1207 = vpop.f32.mrb[0].mxu0
  %v1208 = vadd.f32 %v1111, %v1207
  %v1209 = vpop.f32.mrb[0].mxu0
  %v1210 = vpop.f32.mrb[0].mxu0
  %v1211 = vadd.f32 %v1114, %v1210
  %v1212 = vpop.f32.mrb[0].mxu0
  %1213 = vmatprep.mubr.bf16.mxu0 %v480
  %1214 = vmatmul.mubr.bf16.gmra.mrb[0].mxu0 %v479
  %v1215 = vpop.f32.mrb[0].mxu0
  %v1216 = vadd.f32 %v1119, %v1215
  %v1217 = vpop.f32.mrb[0].mxu0
  %v1218 = vpop.f32.mrb[0].mxu0
  %v1219 = vadd.f32 %v1122, %v1218
  %v1220 = vpop.f32.mrb[0].mxu0
  %1221 = vmatprep.mubr.bf16.mxu0 %v488
  %1222 = vmatmul.mubr.bf16.gmra.mrb[0].mxu0 %v487
  %v1223 = vpop.f32.mrb[0].mxu0
  %v1224 = vadd.f32 %v1127, %v1223
  %v1225 = vpop.f32.mrb[0].mxu0
  %v1226 = vpop.f32.mrb[0].mxu0
  %v1227 = vadd.f32 %v1130, %v1226
  %v1228 = vpop.f32.mrb[0].mxu0
  %1229 = vmatprep.mubr.bf16.mxu0 %v496
  %1230 = vmatmul.mubr.bf16.gmra.mrb[0].mxu0 %v495
  %v1231 = vpop.f32.mrb[0].mxu0
  %v1232 = vadd.f32 %v1135, %v1231
  %v1233 = vpop.f32.mrb[0].mxu0
  %v1234 = vpop.f32.mrb[0].mxu0
  %v1235 = vadd.f32 %v1138, %v1234
  %v1236 = vpop.f32.mrb[0].mxu0
  %1237 = vdwg.mxu0
  %1238 = vmatprep.subr.bf16.mxu0 0
  %1239 = vmatpush1.bf16.msra.mxu0 %v867
  %1240 = vmatprep.subr.bf16.mxu0 0
  %1241 = vmatpush1.bf16.msra.mxu0 %v868
  %1242 = vmatprep.subr.bf16.mxu0 0
  %1243 = vmatpush1.bf16.msra.mxu0 %v869
  %1244 = vmatprep.subr.bf16.mxu0 0
  %1245 = vmatpush1.bf16.msra.mxu0 %v870
  %1246 = vmatprep.subr.bf16.mxu0 0
  %1247 = vmatpush1.bf16.msra.mxu0 %v871
  %1248 = vmatprep.subr.bf16.mxu0 0
  %1249 = vmatpush1.bf16.msra.mxu0 %v872
  %1250 = vmatprep.subr.bf16.mxu0 0
  %1251 = vmatpush1.bf16.msra.mxu0 %v873
  %1252 = vmatprep.subr.bf16.mxu0 0
  %1253 = vmatpush1.bf16.msra.mxu0 %v874
  %1254 = vmatprep.subr.bf16.mxu0 0
  %1255 = vmatpush1.bf16.msra.mxu0 %v875
  %1256 = vmatprep.subr.bf16.mxu0 0
  %1257 = vmatpush1.bf16.msra.mxu0 %v876
  %1258 = vmatprep.subr.bf16.mxu0 0
  %1259 = vmatpush1.bf16.msra.mxu0 %v877
  %1260 = vmatprep.subr.bf16.mxu0 0
  %1261 = vmatpush1.bf16.msra.mxu0 %v878
  %1262 = vmatprep.subr.bf16.mxu0 0
  %1263 = vmatpush1.bf16.msra.mxu0 %v879
  %1264 = vmatprep.subr.bf16.mxu0 0
  %1265 = vmatpush1.bf16.msra.mxu0 %v880
  %1266 = vmatprep.subr.bf16.mxu0 0
  %1267 = vmatpush1.bf16.msra.mxu0 %v881
  %1268 = vmatprep.subr.bf16.mxu0 0
  %1269 = vmatpush1.bf16.msra.mxu0 %v882
  %1270 = vmatprep.mubr.bf16.mxu0 %v442
  %1271 = vmatmul.mubr.bf16.gmra.mrb[0].mxu0 %v441
  %v1272 = vpop.f32.mrb[0].mxu0
  %v1273 = vadd.f32 %v1176, %v1272
  %v1274 = vpop.f32.mrb[0].mxu0
  %v1275 = vpop.f32.mrb[0].mxu0
  %v1276 = vadd.f32 %v1179, %v1275
  %v1277 = vpop.f32.mrb[0].mxu0
  %1278 = vmatprep.mubr.bf16.mxu0 %v450
  %1279 = vmatmul.mubr.bf16.gmra.mrb[0].mxu0 %v449
  %v1280 = vpop.f32.mrb[0].mxu0
  %v1281 = vadd.f32 %v1184, %v1280
  %v1282 = vpop.f32.mrb[0].mxu0
  %v1283 = vpop.f32.mrb[0].mxu0
  %v1284 = vadd.f32 %v1187, %v1283
  %v1285 = vpop.f32.mrb[0].mxu0
  %1286 = vmatprep.mubr.bf16.mxu0 %v458
  %1287 = vmatmul.mubr.bf16.gmra.mrb[0].mxu0 %v457
  %v1288 = vpop.f32.mrb[0].mxu0
  %v1289 = vadd.f32 %v1192, %v1288
  %v1290 = vpop.f32.mrb[0].mxu0
  %v1291 = vpop.f32.mrb[0].mxu0
  %v1292 = vadd.f32 %v1195, %v1291
  %v1293 = vpop.f32.mrb[0].mxu0
  %1294 = vmatprep.mubr.bf16.mxu0 %v466
  %1295 = vmatmul.mubr.bf16.gmra.mrb[0].mxu0 %v465
  %v1296 = vpop.f32.mrb[0].mxu0
  %v1297 = vadd.f32 %v1200, %v1296
  %v1298 = vpop.f32.mrb[0].mxu0
  %v1299 = vpop.f32.mrb[0].mxu0
  %v1300 = vadd.f32 %v1203, %v1299
  %v1301 = vpop.f32.mrb[0].mxu0
  %1302 = vmatprep.mubr.bf16.mxu0 %v474
  %1303 = vmatmul.mubr.bf16.gmra.mrb[0].mxu0 %v473
  %v1304 = vpop.f32.mrb[0].mxu0
  %v1305 = vadd.f32 %v1208, %v1304
  %v1306 = vpop.f32.mrb[0].mxu0
  %v1307 = vpop.f32.mrb[0].mxu0
  %v1308 = vadd.f32 %v1211, %v1307
  %v1309 = vpop.f32.mrb[0].mxu0
  %1310 = vmatprep.mubr.bf16.mxu0 %v482
  %1311 = vmatmul.mubr.bf16.gmra.mrb[0].mxu0 %v481
  %v1312 = vpop.f32.mrb[0].mxu0
  %v1313 = vadd.f32 %v1216, %v1312
  %v1314 = vpop.f32.mrb[0].mxu0
  %v1315 = vpop.f32.mrb[0].mxu0
  %v1316 = vadd.f32 %v1219, %v1315
  %v1317 = vpop.f32.mrb[0].mxu0
  %1318 = vmatprep.mubr.bf16.mxu0 %v490
  %1319 = vmatmul.mubr.bf16.gmra.mrb[0].mxu0 %v489
  %v1320 = vpop.f32.mrb[0].mxu0
  %v1321 = vadd.f32 %v1224, %v1320
  %v1322 = vpop.f32.mrb[0].mxu0
  %v1323 = vpop.f32.mrb[0].mxu0
  %v1324 = vadd.f32 %v1227, %v1323
  %v1325 = vpop.f32.mrb[0].mxu0
  %1326 = vmatprep.mubr.bf16.mxu0 %v498
  %1327 = vmatmul.mubr.bf16.gmra.mrb[0].mxu0 %v497
  %v1328 = vpop.f32.mrb[0].mxu0
  %v1329 = vadd.f32 %v1232, %v1328
  %v1330 = vpop.f32.mrb[0].mxu0
  %v1331 = vpop.f32.mrb[0].mxu0
  %v1332 = vadd.f32 %v1235, %v1331
  %v1333 = vpop.f32.mrb[0].mxu0
  %1334 = vdwg.mxu0
  %v1335 = vadd.f32 %v35, %v1273
  %v1336 = vadd.f32 %v36, %v1276
  %v1337 = vadd.f32 %v37, %v1281
  %v1338 = vadd.f32 %v38, %v1284
  %v1339 = vadd.f32 %v39, %v1289
  %v1340 = vadd.f32 %v40, %v1292
  %v1341 = vadd.f32 %v41, %v1297
  %v1342 = vadd.f32 %v42, %v1300
  %v1343 = vadd.f32 %v43, %v1305
  %v1344 = vadd.f32 %v44, %v1308
  %v1345 = vadd.f32 %v45, %v1313
  %v1346 = vadd.f32 %v46, %v1316
  %v1347 = vadd.f32 %v47, %v1321
  %v1348 = vadd.f32 %v48, %v1324
  %v1349 = vadd.f32 %v49, %v1329
  %v1350 = vadd.f32 %v50, %v1332
  %1351 = vst [vmem:[#allocation2] sm:$0xff] %v1335
  %1352 = vst [vmem:[#allocation2 + $0x8] sm:$0xff] %v1336
  %1353 = vst [vmem:[#allocation2 + $0x10] sm:$0xff] %v1337
  %1354 = vst [vmem:[#allocation2 + $0x18] sm:$0xff] %v1338
  %1355 = vst [vmem:[#allocation2 + $0x20] sm:$0xff] %v1339
  %1356 = vst [vmem:[#allocation2 + $0x28] sm:$0xff] %v1340
  %1357 = vst [vmem:[#allocation2 + $0x30] sm:$0xff] %v1341
  %1358 = vst [vmem:[#allocation2 + $0x38] sm:$0xff] %v1342
  %1359 = vst [vmem:[#allocation2 + $0x40] sm:$0xff] %v1343
  %1360 = vst [vmem:[#allocation2 + $0x48] sm:$0xff] %v1344
  %1361 = vst [vmem:[#allocation2 + $0x50] sm:$0xff] %v1345
  %1362 = vst [vmem:[#allocation2 + $0x58] sm:$0xff] %v1346
  %1363 = vst [vmem:[#allocation2 + $0x60] sm:$0xff] %v1347
  %1364 = vst [vmem:[#allocation2 + $0x68] sm:$0xff] %v1348
  %1365 = vst [vmem:[#allocation2 + $0x70] sm:$0xff] %v1349
  %1366 = vst [vmem:[#allocation2 + $0x78] sm:$0xff] %v1350
  // Predicated region
  $region18: #{_lambda_.19} parent=0 // pred_check
    %p1367 = pneg %p15
  $region19: #{_lambda_.19} parent=0 // pred_check_branch
    %1369 = sbr.rel (%p1367) target = $region21
  $region20: #{_lambda_.19} parent=0 // pred_region
    %v1370 = vld [vmem:[#allocation2] sm:$0xff]
    %v1371 = vld [vmem:[#allocation2 + $0x8] sm:$0xff]
    %v1372 = vld [vmem:[#allocation2 + $0x10] sm:$0xff]
    %v1373 = vld [vmem:[#allocation2 + $0x18] sm:$0xff]
    %v1374 = vld [vmem:[#allocation2 + $0x20] sm:$0xff]
    %v1375 = vld [vmem:[#allocation2 + $0x28] sm:$0xff]
    %v1376 = vld [vmem:[#allocation2 + $0x30] sm:$0xff]
    %v1377 = vld [vmem:[#allocation2 + $0x38] sm:$0xff]
    %v1378 = vld [vmem:[#allocation2 + $0x40] sm:$0xff]
    %v1379 = vld [vmem:[#allocation2 + $0x48] sm:$0xff]
    %v1380 = vld [vmem:[#allocation2 + $0x50] sm:$0xff]
    %v1381 = vld [vmem:[#allocation2 + $0x58] sm:$0xff]
    %v1382 = vld [vmem:[#allocation2 + $0x60] sm:$0xff]
    %v1383 = vld [vmem:[#allocation2 + $0x68] sm:$0xff]
    %v1384 = vld [vmem:[#allocation2 + $0x70] sm:$0xff]
    %v1385 = vld [vmem:[#allocation2 + $0x78] sm:$0xff]
    %v1386 = vld [vmem:[%s2] sm:$0x1]
    %v1388 = vlaneseq
    %v1389 = vshrl.u32 %v1388, 7
    %v1390 = vsub.s32 0, %v1389
    %v1391 = vrot.slane %v1386, %v1390
    %v1393 = vadd.f32 %v1370, %v1391
    %v1394 = vadd.f32 %v1371, %v1391
    %v1395 = vadd.f32 %v1372, %v1391
    %v1396 = vadd.f32 %v1373, %v1391
    %v1397 = vadd.f32 %v1374, %v1391
    %v1398 = vadd.f32 %v1375, %v1391
    %v1399 = vadd.f32 %v1376, %v1391
    %v1400 = vadd.f32 %v1377, %v1391
    %v1401 = vadd.f32 %v1378, %v1391
    %v1402 = vadd.f32 %v1379, %v1391
    %v1403 = vadd.f32 %v1380, %v1391
    %v1404 = vadd.f32 %v1381, %v1391
    %v1405 = vadd.f32 %v1382, %v1391
    %v1406 = vadd.f32 %v1383, %v1391
    %v1407 = vadd.f32 %v1384, %v1391
    %v1408 = vadd.f32 %v1385, %v1391
    %v1409 = vmax.f32 %v1393, 0.0
    %v1410 = vmax.f32 %v1394, 0.0
    %v1411 = vmax.f32 %v1395, 0.0
    %v1412 = vmax.f32 %v1396, 0.0
    %v1413 = vmax.f32 %v1397, 0.0
    %v1414 = vmax.f32 %v1398, 0.0
    %v1415 = vmax.f32 %v1399, 0.0
    %v1416 = vmax.f32 %v1400, 0.0
    %v1417 = vmax.f32 %v1401, 0.0
    %v1418 = vmax.f32 %v1402, 0.0
    %v1419 = vmax.f32 %v1403, 0.0
    %v1420 = vmax.f32 %v1404, 0.0
    %v1421 = vmax.f32 %v1405, 0.0
    %v1422 = vmax.f32 %v1406, 0.0
    %v1423 = vmax.f32 %v1407, 0.0
    %v1424 = vmax.f32 %v1408, 0.0
    %1425 = vst [vmem:[%s3] sm:$0xff] %v1409
    %1426 = vst [vmem:[%s3 + $0x8] sm:$0xff] %v1410
    %1427 = vst [vmem:[%s3 + $0x10] sm:$0xff] %v1411
    %1428 = vst [vmem:[%s3 + $0x18] sm:$0xff] %v1412
    %1429 = vst [vmem:[%s3 + $0x20] sm:$0xff] %v1413
    %1430 = vst [vmem:[%s3 + $0x28] sm:$0xff] %v1414
    %1431 = vst [vmem:[%s3 + $0x30] sm:$0xff] %v1415
    %1432 = vst [vmem:[%s3 + $0x38] sm:$0xff] %v1416
    %1433 = vst [vmem:[%s3 + $0x40] sm:$0xff] %v1417
    %1434 = vst [vmem:[%s3 + $0x48] sm:$0xff] %v1418
    %1435 = vst [vmem:[%s3 + $0x50] sm:$0xff] %v1419
    %1436 = vst [vmem:[%s3 + $0x58] sm:$0xff] %v1420
    %1437 = vst [vmem:[%s3 + $0x60] sm:$0xff] %v1421
    %1438 = vst [vmem:[%s3 + $0x68] sm:$0xff] %v1422
    %1439 = vst [vmem:[%s3 + $0x70] sm:$0xff] %v1423
    %1440 = vst [vmem:[%s3 + $0x78] sm:$0xff] %v1424
  $region21: #{_lambda_.19} parent=0 // pred_fallthru
    _
  // Predicated region
  $region22: #{_lambda_.19} parent=0 // pred_check
    _
  $region23: #{_lambda_.19} parent=0 // pred_check_branch
    %1442 = sbr.rel (0) target = $region25
  $region24: #{_lambda_.19} parent=0 // pred_region
    _
  $region25: #{_lambda_.19} parent=0 // pred_fallthru
    _
  // Predicated region
  $region26: #{_lambda_.19} parent=0 // pred_check
    _
  $region27: #{_lambda_.19} parent=0 // pred_check_branch
    %1444 = sbr.rel (0) target = $region29
  $region28: #{_lambda_.19} parent=0 // pred_region
    _
  $region29: #{_lambda_.19} parent=0 // pred_fallthru
    _

// kernel: _lambda_.20
$region0: #{_lambda_.20}
  #allocation0 [shape = 'u32[]', space=smem, size = 0x4, offset = 0x4, fixed_abs, tag = 'smem constant byte address 0x4 - core index']
  #allocation1 [shape = 'u32[144,128]{1,0:T(1,128)}', space=vmem, size = 0x12000, scoped, tag = 'internal scratch']
  #allocation2 [shape = 'f32[128,128]{1,0:T(8,128)}', space=vmem, size = 0x10000, scoped, tag = 'scratch operand']
  %s0 = inlined_call_operand.vmem [shape: bf16[128,1152], index: 0, kind: input, shape index: {}]
  %s1 = inlined_call_operand.vmem [shape: bf16[1152,128], index: 1, kind: input, shape index: {}]
  %s2 = inlined_call_operand.vmem [shape: f32[1,128], index: 2, kind: input, shape index: {}]
  %s3 = inlined_call_operand.vmem [shape: f32[128,128], index: 3, kind: output, shape index: {}]
  %s4 = sld [smem:[#allocation0]]
  $region79: #{_lambda_.20} parent=0
    _
  %s6 = ssub.s32 1, %s4
  %s7 = scalar_select 0, %s6, %s4
  $region1: #{_lambda_.20} parent=0
    #allocation3 [shape = 'u8[196608]{0}', space=vmem, size = 0x30000, scoped, tag = 'input window, operand 0']
    loop: start=0, step=1, limit=5
    $region2: #{_lambda_.20} parent=1 // loop_pre_header
      _
    $region3: #{_lambda_.20} parent=1 // loop_header
      %s9 = sphi 0, %s13
      %p10 = scmp.ge.s32.totalorder %s9, 5
      %s16 = sphi 0, %s35
      %s17 = sphi 0, %s31
      %s18 = sphi 0, %s27
      %s19 = sphi 0, %s16
      %s20 = sphi 0, %s17
      %s21 = sphi 0, %s18
      %s22 = sphi 0, %s19
      %s23 = sphi 0, %s20
      %s24 = sphi 0, %s21
      %s40 = sphi 0, %s42
      %s43 = sphi 0, %s40
      %s44 = sphi 0, %s43
      %s60 = sphi 0, %s44
      %s68 = sphi 0, %s70
      %s71 = sphi 0, %s68
      %s72 = sphi 0, %s71
      %s88 = sphi 0, %s72
      %s94 = sphi 0, %s96
      %s97 = sphi 0, %s94
      %s98 = sphi 0, %s97
      %s114 = sphi 0, %s98
      %s122 = sphi 0, %s124
      %s125 = sphi 0, %s122
      %s126 = sphi 0, %s125
      %s142 = sphi 0, %s126
    $region4: #{_lambda_.20} parent=1 // loop_header_branch
      %12 = sbr.rel (%p10) target = $region8
    $region5: #{_lambda_.20} parent=1 // loop_body
      %s14 = ssub.s32 %s9, 1
      %s15 = ssub.s32 %s9, 2
      %s25 = sadd.s32 1, %s18
      %p26 = scmp.ge.s32.totalorder %s25, 3
      %s27 = scalar_select %p26, 0, %s25
      %s28 = sadd.s32 1, %s17
      %s29 = scalar_select %p26, %s28, %s17
      %p30 = scmp.ge.s32.totalorder %s29, 1
      %s31 = scalar_select %p30, 0, %s29
      %s32 = sadd.s32 1, %s16
      %s33 = scalar_select %p30, %s32, %s16
      %p34 = scmp.ge.s32.totalorder %s33, 1
      %s35 = scalar_select %p34, 0, %s33
      %s36 = ssub.s32 %s16, %s35
      %s37 = ssub.s32 %s18, %s27
      %s38 = sor.u32 %s36, %s37
      %p39 = scmp.eq.s32.totalorder %s38, 0
      %s41 = sadd.s32 %s40, 1
      %s42 = scalar_select %p39, %s40, %s41
      %p45 = pneg %p39
      %p46 = scmp.eq.s32.totalorder %s9, 2
      %p47 = por %p45, %p46
      %p48 = scmp.ne.s32.totalorder %s40, %s43
      %p49 = scmp.eq.s32.totalorder %s9, 0
      %p50 = por %p48, %p49
      %p51 = scmp.ne.s32.totalorder %s40, %s43
      %p52 = scmp.eq.s32.totalorder %s14, 2
      %p53 = por %p51, %p52
      %p54 = scmp.ne.s32.totalorder %s43, %s44
      %p55 = scmp.eq.s32.totalorder %s14, 0
      %p56 = por %p54, %p55
      %p57 = scmp.ne.s32.totalorder %s43, %s44
      %p58 = scmp.eq.s32.totalorder %s15, 2
      %p59 = por %p57, %p58
      %p61 = scmp.ne.s32.totalorder %s44, %s60
      %p62 = scmp.eq.s32.totalorder %s15, 0
      %p63 = por %p61, %p62
      %s64 = ssub.s32 %s18, %s27
      %s65 = ssub.s32 %s17, %s31
      %s66 = sor.u32 %s64, %s65
      %p67 = scmp.eq.s32.totalorder %s66, 0
      %s69 = sadd.s32 %s68, 1
      %s70 = scalar_select %p67, %s68, %s69
      %p73 = pneg %p67
      %p74 = scmp.eq.s32.totalorder %s9, 2
      %p75 = por %p73, %p74
      %p76 = scmp.ne.s32.totalorder %s68, %s71
      %p77 = scmp.eq.s32.totalorder %s9, 0
      %p78 = por %p76, %p77
      %p79 = scmp.ne.s32.totalorder %s68, %s71
      %p80 = scmp.eq.s32.totalorder %s14, 2
      %p81 = por %p79, %p80
      %p82 = scmp.ne.s32.totalorder %s71, %s72
      %p83 = scmp.eq.s32.totalorder %s14, 0
      %p84 = por %p82, %p83
      %p85 = scmp.ne.s32.totalorder %s71, %s72
      %p86 = scmp.eq.s32.totalorder %s15, 2
      %p87 = por %p85, %p86
      %p89 = scmp.ne.s32.totalorder %s72, %s88
      %p90 = scmp.eq.s32.totalorder %s15, 0
      %p91 = por %p89, %p90
      %s92 = ssub.s32 %s17, %s31
      %p93 = scmp.eq.s32.totalorder %s92, 0
      %s95 = sadd.s32 %s94, 1
      %s96 = scalar_select %p93, %s94, %s95
      %p99 = pneg %p93
      %p100 = scmp.eq.s32.totalorder %s9, 2
      %p101 = por %p99, %p100
      %p102 = scmp.ne.s32.totalorder %s94, %s97
      %p103 = scmp.eq.s32.totalorder %s9, 0
      %p104 = por %p102, %p103
      %p105 = scmp.ne.s32.totalorder %s94, %s97
      %p106 = scmp.eq.s32.totalorder %s14, 2
      %p107 = por %p105, %p106
      %p108 = scmp.ne.s32.totalorder %s97, %s98
      %p109 = scmp.eq.s32.totalorder %s14, 0
      %p110 = por %p108, %p109
      %p111 = scmp.ne.s32.totalorder %s97, %s98
      %p112 = scmp.eq.s32.totalorder %s15, 2
      %p113 = por %p111, %p112
      %p115 = scmp.ne.s32.totalorder %s98, %s114
      %p116 = scmp.eq.s32.totalorder %s15, 0
      %p117 = por %p115, %p116
      %s118 = ssub.s32 %s16, %s35
      %s119 = ssub.s32 %s17, %s31
      %s120 = sor.u32 %s118, %s119
      %p121 = scmp.eq.s32.totalorder %s120, 0
      %s123 = sadd.s32 %s122, 1
      %s124 = scalar_select %p121, %s122, %s123
      %p127 = pneg %p121
      %p128 = scmp.eq.s32.totalorder %s9, 2
      %p129 = por %p127, %p128
      %p130 = scmp.ne.s32.totalorder %s122, %s125
      %p131 = scmp.eq.s32.totalorder %s9, 0
      %p132 = por %p130, %p131
      %p133 = scmp.ne.s32.totalorder %s122, %s125
      %p134 = scmp.eq.s32.totalorder %s14, 2
      %p135 = por %p133, %p134
      %p136 = scmp.ne.s32.totalorder %s125, %s126
      %p137 = scmp.eq.s32.totalorder %s14, 0
      %p138 = por %p136, %p137
      %p139 = scmp.ne.s32.totalorder %s125, %s126
      %p140 = scmp.eq.s32.totalorder %s15, 2
      %p141 = por %p139, %p140
      %p143 = scmp.ne.s32.totalorder %s126, %s142
      %p144 = scmp.eq.s32.totalorder %s15, 0
      %p145 = por %p143, %p144
      %p146 = scmp.le.s32.totalorder 1, %s9
      %p147 = scmp.lt.s32.totalorder %s9, 4
      %p148 = pnand %p146, %p147
      %p149 = pneg %p148
      // Predicated region
      $region9: #{_lambda_.20} parent=5 // pred_check
        _
      $region10: #{_lambda_.20} parent=5 // pred_check_branch
        %151 = sbr.rel (%p148) target = $region12
      $region11: #{_lambda_.20} parent=5 // pred_region
        %s152 = ssub.s32 %s9, 1
        // Predicated region
        $region13: #{_lambda_.20} parent=11 // pred_check
          %p153 = pneg %p110
        $region14: #{_lambda_.20} parent=11 // pred_check_branch
          %155 = sbr.rel (%p153) target = $region16
        $region15: #{_lambda_.20} parent=11 // pred_region
          %p156 = scmp.lt.s32.totalorder %s20, 0
          %s157 = scalar_select %p156, %s20, 0
          %s158 = scalar_lea.vmem %s2, %s157
        $region16: #{_lambda_.20} parent=11 // pred_fallthru
          _
      $region12: #{_lambda_.20} parent=5 // pred_fallthru
        _
      %p159 = scmp.lt.s32.totalorder %s9, 3
      // Predicated region
      $region17: #{_lambda_.20} parent=5 // pred_check
        %p160 = pneg %p159
      $region18: #{_lambda_.20} parent=5 // pred_check_branch
        %162 = sbr.rel (%p160) target = $region20
      $region19: #{_lambda_.20} parent=5 // pred_region
        // Predicated region
        $region21: #{_lambda_.20} parent=19 // pred_check
          %p163 = pneg %p50
        $region22: #{_lambda_.20} parent=19 // pred_check_branch
          %165 = sbr.rel (%p163) target = $region24
        $region23: #{_lambda_.20} parent=19 // pred_region
          %s166 = sand.u32 %s40, 1
          %s167 = sand.u32 %s40, 1
          %s168 = smul.addr %s167, 192
          %s169 = scalar_lea.vmem [#allocation3], %s168
          %s170 = smul.u32 16, %s16
          %s171 = smul.u32 3, %s18
          %s172 = smul.addr %s170, 9
          %s173 = sadd.s32 %s171, %s172
          %s174 = smul.addr %s173, 4
          %s175 = scalar_lea.vmem %s0, %s174
          // Predicated region
          $region25: #{_lambda_.20} parent=23 // pred_check
            _
          $region26: #{_lambda_.20} parent=23 // pred_check_branch
            %177 = sbr.rel (0) target = $region28
          $region27: #{_lambda_.20} parent=23 // pred_region
            // Predicated region
            $region29: #{_lambda_.20} parent=27 // pred_check
              _
            $region30: #{_lambda_.20} parent=27 // pred_check_branch
              %179 = sbr.rel (0) target = $region32
            $region31: #{_lambda_.20} parent=27 // pred_region
              %s180 = scalar_lea.vmem %s175, 8
              %s181 = scalar_lea.vmem %s169, 8 [#allocation3]
              loop: start=0, step=1, limit=1
              $region33: #{_lambda_.20} parent=31 // loop_pre_header
                _
              $region34: #{_lambda_.20} parent=31 // loop_header
                %s183 = sphi 0, %s187
                %p184 = scmp.ge.s32.totalorder %s183, 1
                %s188 = sphi %s175, %s175
                %s189 = sphi %s169, %s169
              $region35: #{_lambda_.20} parent=31 // loop_header_branch
                %186 = sbr.rel (%p184) target = $region39
              $region36: #{_lambda_.20} parent=31 // loop_body
                %v190 = vld [vmem:[%s188] sm:$0xff]
                %191 = vst [vmem:[%s189] sm:$0xff] %v190
                %v192 = vld [vmem:[%s188 + $0x24] sm:$0xff]
                %193 = vst [vmem:[%s189 + $0xc] sm:$0xff] %v192
                %v194 = vld [vmem:[%s188 + $0x48] sm:$0xff]
                %195 = vst [vmem:[%s189 + $0x18] sm:$0xff] %v194
                %v196 = vld [vmem:[%s188 + $0x6c] sm:$0xff]
                %197 = vst [vmem:[%s189 + $0x24] sm:$0xff] %v196
                %v198 = vld [vmem:[%s188 + $0x90] sm:$0xff]
                %199 = vst [vmem:[%s189 + $0x30] sm:$0xff] %v198
                %v200 = vld [vmem:[%s188 + $0xb4] sm:$0xff]
                %201 = vst [vmem:[%s189 + $0x3c] sm:$0xff] %v200
                %v202 = vld [vmem:[%s188 + $0xd8] sm:$0xff]
                %203 = vst [vmem:[%s189 + $0x48] sm:$0xff] %v202
                %v204 = vld [vmem:[%s188 + $0xfc] sm:$0xff]
                %205 = vst [vmem:[%s189 + $0x54] sm:$0xff] %v204
                %v206 = vld [vmem:[%s188 + $0x120] sm:$0xff]
                %207 = vst [vmem:[%s189 + $0x60] sm:$0xff] %v206
                %v208 = vld [vmem:[%s188 + $0x144] sm:$0xff]
                %209 = vst [vmem:[%s189 + $0x6c] sm:$0xff] %v208
                %v210 = vld [vmem:[%s188 + $0x168] sm:$0xff]
                %211 = vst [vmem:[%s189 + $0x78] sm:$0xff] %v210
                %v212 = vld [vmem:[%s188 + $0x18c] sm:$0xff]
                %213 = vst [vmem:[%s189 + $0x84] sm:$0xff] %v212
                %v214 = vld [vmem:[%s188 + $0x1b0] sm:$0xff]
                %215 = vst [vmem:[%s189 + $0x90] sm:$0xff] %v214
                %v216 = vld [vmem:[%s188 + $0x1d4] sm:$0xff]
                %217 = vst [vmem:[%s189 + $0x9c] sm:$0xff] %v216
                %v218 = vld [vmem:[%s188 + $0x1f8] sm:$0xff]
                %219 = vst [vmem:[%s189 + $0xa8] sm:$0xff] %v218
                %v220 = vld [vmem:[%s188 + $0x21c] sm:$0xff]
                %221 = vst [vmem:[%s189 + $0xb4] sm:$0xff] %v220
              $region37: #{_lambda_.20} parent=31 // loop_footer
                %s187 = sadd.s32 1, %s183
              $region38: #{_lambda_.20} parent=31 // loop_footer_branch
                %182 = sbr.rel target = $region34
              $region39: #{_lambda_.20} parent=31 // loop_exit
                _
              loop: start=0, step=1, limit=1
              $region40: #{_lambda_.20} parent=31 // loop_pre_header
                _
              $region41: #{_lambda_.20} parent=31 // loop_header
                %s224 = sphi 0, %s228
                %p225 = scmp.ge.s32.totalorder %s224, 1
                %s229 = sphi %s180, %s180
                %s230 = sphi %s181, %s181
              $region42: #{_lambda_.20} parent=31 // loop_header_branch
                %227 = sbr.rel (%p225) target = $region46
              $region43: #{_lambda_.20} parent=31 // loop_body
                %v231 = vld [vmem:[%s229] sm:$0xf]
                %232 = vst [vmem:[%s230] sm:$0xf] %v231
                %v233 = vld [vmem:[%s229 + $0x24] sm:$0xf]
                %234 = vst [vmem:[%s230 + $0xc] sm:$0xf] %v233
                %v235 = vld [vmem:[%s229 + $0x48] sm:$0xf]
                %236 = vst [vmem:[%s230 + $0x18] sm:$0xf] %v235
                %v237 = vld [vmem:[%s229 + $0x6c] sm:$0xf]
                %238 = vst [vmem:[%s230 + $0x24] sm:$0xf] %v237
                %v239 = vld [vmem:[%s229 + $0x90] sm:$0xf]
                %240 = vst [vmem:[%s230 + $0x30] sm:$0xf] %v239
                %v241 = vld [vmem:[%s229 + $0xb4] sm:$0xf]
                %242 = vst [vmem:[%s230 + $0x3c] sm:$0xf] %v241
                %v243 = vld [vmem:[%s229 + $0xd8] sm:$0xf]
                %244 = vst [vmem:[%s230 + $0x48] sm:$0xf] %v243
                %v245 = vld [vmem:[%s229 + $0xfc] sm:$0xf]
                %246 = vst [vmem:[%s230 + $0x54] sm:$0xf] %v245
                %v247 = vld [vmem:[%s229 + $0x120] sm:$0xf]
                %248 = vst [vmem:[%s230 + $0x60] sm:$0xf] %v247
                %v249 = vld [vmem:[%s229 + $0x144] sm:$0xf]
                %250 = vst [vmem:[%s230 + $0x6c] sm:$0xf] %v249
                %v251 = vld [vmem:[%s229 + $0x168] sm:$0xf]
                %252 = vst [vmem:[%s230 + $0x78] sm:$0xf] %v251
                %v253 = vld [vmem:[%s229 + $0x18c] sm:$0xf]
                %254 = vst [vmem:[%s230 + $0x84] sm:$0xf] %v253
                %v255 = vld [vmem:[%s229 + $0x1b0] sm:$0xf]
                %256 = vst [vmem:[%s230 + $0x90] sm:$0xf] %v255
                %v257 = vld [vmem:[%s229 + $0x1d4] sm:$0xf]
                %258 = vst [vmem:[%s230 + $0x9c] sm:$0xf] %v257
                %v259 = vld [vmem:[%s229 + $0x1f8] sm:$0xf]
                %260 = vst [vmem:[%s230 + $0xa8] sm:$0xf] %v259
                %v261 = vld [vmem:[%s229 + $0x21c] sm:$0xf]
                %262 = vst [vmem:[%s230 + $0xb4] sm:$0xf] %v261
              $region44: #{_lambda_.20} parent=31 // loop_footer
                %s228 = sadd.s32 1, %s224
              $region45: #{_lambda_.20} parent=31 // loop_footer_branch
                %223 = sbr.rel target = $region41
              $region46: #{_lambda_.20} parent=31 // loop_exit
                _
            $region32: #{_lambda_.20} parent=27 // pred_fallthru
              _
          $region28: #{_lambda_.20} parent=23 // pred_fallthru
            _
          %263 = vnop
        $region24: #{_lambda_.20} parent=19 // pred_fallthru
          _
        // Predicated region
        $region47: #{_lambda_.20} parent=19 // pred_check
          %p264 = pneg %p78
        $region48: #{_lambda_.20} parent=19 // pred_check_branch
          %266 = sbr.rel (%p264) target = $region50
        $region49: #{_lambda_.20} parent=19 // pred_region
          %s267 = smul.u32 48, %s18
          %p268 = scmp.lt.s32.totalorder %s267, 143
          %s269 = scalar_select %p268, %s267, 143
          %p270 = scmp.lt.s32.totalorder %s17, 0
          %s271 = scalar_select %p270, %s17, 0
          %s272 = sadd.s32 %s271, %s269
          %s273 = smul.addr %s272, 4
          %s274 = scalar_lea.vmem %s1, %s273
          %s275 = smul.u32 48, %s18
        $region50: #{_lambda_.20} parent=19 // pred_fallthru
          _
      $region20: #{_lambda_.20} parent=5 // pred_fallthru
        _
      %p276 = scmp.le.s32.totalorder 1, %s9
      %p277 = scmp.lt.s32.totalorder %s9, 4
      %p278 = pnand %p276, %p277
      %p279 = pneg %p278
      // Predicated region
      $region51: #{_lambda_.20} parent=5 // pred_check
        _
      $region52: #{_lambda_.20} parent=5 // pred_check_branch
        %281 = sbr.rel (%p278) target = $region54
      $region53: #{_lambda_.20} parent=5 // pred_region
        %s282 = ssub.s32 %s9, 1
        %s283 = sand.u32 %s43, 1
        %s284 = sand.u32 %s43, 1
        %s285 = smul.addr %s284, 192
        %s286 = scalar_lea.vmem [#allocation3], %s285
        // Predicated region
        $region55: #{_lambda_.20} parent=53 // pred_check
          %p287 = pneg %p56
        $region56: #{_lambda_.20} parent=53 // pred_check_branch
          %289 = sbr.rel (%p287) target = $region58
        $region57: #{_lambda_.20} parent=53 // pred_region
          _
        $region58: #{_lambda_.20} parent=53 // pred_fallthru
          _
        %s290 = sand.u32 %s43, 1
        %s291 = sand.u32 %s43, 1
        %s292 = smul.addr %s291, 192
        %s293 = scalar_lea.vmem [#allocation3], %s292
        %p294 = pneg %p56
        %p295 = pneg %p53
        %s296 = smul.u32 48, %s21
        %p297 = scmp.lt.s32.totalorder %s296, 143
        %s298 = scalar_select %p297, %s296, 143
        %p299 = scmp.lt.s32.totalorder %s20, 0
        %s300 = scalar_select %p299, %s20, 0
        %s301 = sadd.s32 %s300, %s298
        %s302 = smul.addr %s301, 4
        %s303 = scalar_lea.vmem %s1, %s302
        %p304 = pneg %p84
        %p305 = pneg %p81
        %p306 = scmp.lt.s32.totalorder %s20, 0
        %s307 = scalar_select %p306, %s20, 0
        %s308 = scalar_lea.vmem %s2, %s307
        %p309 = pneg %p110
        %p310 = pneg %p107
        %p311 = pneg %p138
        %p312 = pneg %p135
        %s313 = smul.u32 16, %s19
        %p314 = scmp.lt.s32.totalorder %s313, 15
        %s315 = scalar_select %p314, %s313, 15
        %p316 = scmp.lt.s32.totalorder %s20, 0
        %s317 = scalar_select %p316, %s20, 0
        %s318 = sadd.s32 %s317, %s315
        %s319 = smul.addr %s318, 8
        %s320 = scalar_lea.vmem %s3, %s319
        %s321 = smul.u32 16, %s19
        %s322 = smul.u32 3, %s21
        %s323 = smul.u32 48, %s21
        %p324 = scmp.lt.s32.totalorder %s323, 143
        %s325 = scalar_select %p324, %s323, 143
        %p326 = scmp.lt.s32.totalorder %s20, 0
        %s327 = scalar_select %p326, %s20, 0
        %s328 = sadd.s32 %s327, %s325
        %s329 = smul.addr %s328, 4
        %s330 = scalar_lea.vmem %s1, %s329
        %s331 = smul.u32 48, %s21
        %p332 = scmp.lt.s32.totalorder %s20, 0
        %s333 = scalar_select %p332, %s20, 0
        %s334 = scalar_lea.vmem %s2, %s333
        %s335 = smul.u32 16, %s19
        %p336 = scmp.lt.s32.totalorder %s335, 15
        %s337 = scalar_select %p336, %s335, 15
        %p338 = scmp.lt.s32.totalorder %s20, 0
        %s339 = scalar_select %p338, %s20, 0
        %s340 = sadd.s32 %s339, %s337
        %s341 = smul.addr %s340, 8
        %s342 = scalar_lea.vmem %s3, %s341
        %s343 = smul.u32 16, %s19
        %p345 = scmp.eq.s32.totalorder %s21, 0
        // Predicated region
        $region59: #{_lambda_.20} parent=53 // pred_check
          %p346 = pneg %p345
        $region60: #{_lambda_.20} parent=53 // pred_check_branch
          %348 = sbr.rel (%p346) target = $region62
        $region61: #{_lambda_.20} parent=53 // pred_region
          %349 = vst [vmem:[#allocation2] sm:$0xff] 0.0
          %350 = vst [vmem:[#allocation2 + $0x8] sm:$0xff] 0.0
          %351 = vst [vmem:[#allocation2 + $0x10] sm:$0xff] 0.0
          %352 = vst [vmem:[#allocation2 + $0x18] sm:$0xff] 0.0
          %353 = vst [vmem:[#allocation2 + $0x20] sm:$0xff] 0.0
          %354 = vst [vmem:[#allocation2 + $0x28] sm:$0xff] 0.0
          %355 = vst [vmem:[#allocation2 + $0x30] sm:$0xff] 0.0
          %356 = vst [vmem:[#allocation2 + $0x38] sm:$0xff] 0.0
          %357 = vst [vmem:[#allocation2 + $0x40] sm:$0xff] 0.0
          %358 = vst [vmem:[#allocation2 + $0x48] sm:$0xff] 0.0
          %359 = vst [vmem:[#allocation2 + $0x50] sm:$0xff] 0.0
          %360 = vst [vmem:[#allocation2 + $0x58] sm:$0xff] 0.0
          %361 = vst [vmem:[#allocation2 + $0x60] sm:$0xff] 0.0
          %362 = vst [vmem:[#allocation2 + $0x68] sm:$0xff] 0.0
          %363 = vst [vmem:[#allocation2 + $0x70] sm:$0xff] 0.0
          %364 = vst [vmem:[#allocation2 + $0x78] sm:$0xff] 0.0
        $region62: #{_lambda_.20} parent=53 // pred_fallthru
          _
        %v365 = vld [vmem:[#allocation2] sm:$0xff]
        %v366 = vld [vmem:[#allocation2 + $0x8] sm:$0xff]
        %v367 = vld [vmem:[#allocation2 + $0x10] sm:$0xff]
        %v368 = vld [vmem:[#allocation2 + $0x18] sm:$0xff]
        %v369 = vld [vmem:[#allocation2 + $0x20] sm:$0xff]
        %v370 = vld [vmem:[#allocation2 + $0x28] sm:$0xff]
        %v371 = vld [vmem:[#allocation2 + $0x30] sm:$0xff]
        %v372 = vld [vmem:[#allocation2 + $0x38] sm:$0xff]
        %v373 = vld [vmem:[#allocation2 + $0x40] sm:$0xff]
        %v374 = vld [vmem:[#allocation2 + $0x48] sm:$0xff]
        %v375 = vld [vmem:[#allocation2 + $0x50] sm:$0xff]
        %v376 = vld [vmem:[#allocation2 + $0x58] sm:$0xff]
        %v377 = vld [vmem:[#allocation2 + $0x60] sm:$0xff]
        %v378 = vld [vmem:[#allocation2 + $0x68] sm:$0xff]
        %v379 = vld [vmem:[#allocation2 + $0x70] sm:$0xff]
        %v380 = vld [vmem:[#allocation2 + $0x78] sm:$0xff]
        %v381 = vld [vmem:[%s286] sm:$0xff]
        %v382 = vld [vmem:[%s286 + $0x8] sm:$0xf]
        %v383 = vld [vmem:[%s286 + $0xc] sm:$0xff]
        %v384 = vld [vmem:[%s286 + $0x14] sm:$0xf]
        %v385 = vld [vmem:[%s286 + $0x18] sm:$0xff]
        %v386 = vld [vmem:[%s286 + $0x20] sm:$0xf]
        %v387 = vld [vmem:[%s286 + $0x24] sm:$0xff]
        %v388 = vld [vmem:[%s286 + $0x2c] sm:$0xf]
        %v389 = vld [vmem:[%s286 + $0x30] sm:$0xff]
        %v390 = vld [vmem:[%s286 + $0x38] sm:$0xf]
        %v391 = vld [vmem:[%s286 + $0x3c] sm:$0xff]
        %v392 = vld [vmem:[%s286 + $0x44] sm:$0xf]
        %v393 = vld [vmem:[%s286 + $0x48] sm:$0xff]
        %v394 = vld [vmem:[%s286 + $0x50] sm:$0xf]
        %v395 = vld [vmem:[%s286 + $0x54] sm:$0xff]
        %v396 = vld [vmem:[%s286 + $0x5c] sm:$0xf]
        %v397 = vld [vmem:[%s286 + $0x60] sm:$0xff]
        %v398 = vld [vmem:[%s286 + $0x68] sm:$0xf]
        %v399 = vld [vmem:[%s286 + $0x6c] sm:$0xff]
        %v400 = vld [vmem:[%s286 + $0x74] sm:$0xf]
        %v401 = vld [vmem:[%s286 + $0x78] sm:$0xff]
        %v402 = vld [vmem:[%s286 + $0x80] sm:$0xf]
        %v403 = vld [vmem:[%s286 + $0x84] sm:$0xff]
        %v404 = vld [vmem:[%s286 + $0x8c] sm:$0xf]
        %v405 = vld [vmem:[%s286 + $0x90] sm:$0xff]
        %v406 = vld [vmem:[%s286 + $0x98] sm:$0xf]
        %v407 = vld [vmem:[%s286 + $0x9c] sm:$0xff]
        %v408 = vld [vmem:[%s286 + $0xa4] sm:$0xf]
        %v409 = vld [vmem:[%s286 + $0xa8] sm:$0xff]
        %v410 = vld [vmem:[%s286 + $0xb0] sm:$0xf]
        %v411 = vld [vmem:[%s286 + $0xb4] sm:$0xff]
        %v412 = vld [vmem:[%s286 + $0xbc] sm:$0xf]
        %v413 = vld [vmem:[%s330] sm:$0xf]
        %v414 = vld [vmem:[%s330 + $0x4] sm:$0xf]
        %v415 = vld [vmem:[%s330 + $0x8] sm:$0xf]
        %v416 = vld [vmem:[%s330 + $0xc] sm:$0xf]
        %v417 = vld [vmem:[%s330 + $0x10] sm:$0xf]
        %v418 = vld [vmem:[%s330 + $0x14] sm:$0xf]
        %v419 = vld [vmem:[%s330 + $0x18] sm:$0xf]
        %v420 = vld [vmem:[%s330 + $0x1c] sm:$0xf]
        %v421 = vld [vmem:[%s330 + $0x20] sm:$0xf]
        %v422 = vld [vmem:[%s330 + $0x24] sm:$0xf]
        %v423 = vld [vmem:[%s330 + $0x28] sm:$0xf]
        %v424 = vld [vmem:[%s330 + $0x2c] sm:$0xf]
        %v425 = vld [vmem:[%s330 + $0x30] sm:$0xf]
        %v426 = vld [vmem:[%s330 + $0x34] sm:$0xf]
        %v427 = vld [vmem:[%s330 + $0x38] sm:$0xf]
        %v428 = vld [vmem:[%s330 + $0x3c] sm:$0xf]
        %v429 = vld [vmem:[%s330 + $0x40] sm:$0xf]
        %v430 = vld [vmem:[%s330 + $0x44] sm:$0xf]
        %v431 = vld [vmem:[%s330 + $0x48] sm:$0xf]
        %v432 = vld [vmem:[%s330 + $0x4c] sm:$0xf]
        %v433 = vld [vmem:[%s330 + $0x50] sm:$0xf]
        %v434 = vld [vmem:[%s330 + $0x54] sm:$0xf]
        %v435 = vld [vmem:[%s330 + $0x58] sm:$0xf]
        %v436 = vld [vmem:[%s330 + $0x5c] sm:$0xf]
        %v437 = vld [vmem:[%s330 + $0x60] sm:$0xf]
        %v438 = vld [vmem:[%s330 + $0x64] sm:$0xf]
        %v439 = vld [vmem:[%s330 + $0x68] sm:$0xf]
        %v440 = vld [vmem:[%s330 + $0x6c] sm:$0xf]
        %v441 = vld [vmem:[%s330 + $0x70] sm:$0xf]
        %v442 = vld [vmem:[%s330 + $0x74] sm:$0xf]
        %v443 = vld [vmem:[%s330 + $0x78] sm:$0xf]
        %v444 = vld [vmem:[%s330 + $0x7c] sm:$0xf]
        %v445 = vld [vmem:[%s330 + $0x80] sm:$0xf]
        %v446 = vld [vmem:[%s330 + $0x84] sm:$0xf]
        %v447 = vld [vmem:[%s330 + $0x88] sm:$0xf]
        %v448 = vld [vmem:[%s330 + $0x8c] sm:$0xf]
        %v449 = vld [vmem:[%s330 + $0x90] sm:$0xf]
        %v450 = vld [vmem:[%s330 + $0x94] sm:$0xf]
        %v451 = vld [vmem:[%s330 + $0x98] sm:$0xf]
        %v452 = vld [vmem:[%s330 + $0x9c] sm:$0xf]
        %v453 = vld [vmem:[%s330 + $0xa0] sm:$0xf]
        %v454 = vld [vmem:[%s330 + $0xa4] sm:$0xf]
        %v455 = vld [vmem:[%s330 + $0xa8] sm:$0xf]
        %v456 = vld [vmem:[%s330 + $0xac] sm:$0xf]
        %v457 = vld [vmem:[%s330 + $0xb0] sm:$0xf]
        %v458 = vld [vmem:[%s330 + $0xb4] sm:$0xf]
        %v459 = vld [vmem:[%s330 + $0xb8] sm:$0xf]
        %v460 = vld [vmem:[%s330 + $0xbc] sm:$0xf]
        %v493 = vunpack.c.l.b16 %v381
        %v494 = vunpack.c.h.b16 %v381
        %v495 = vunpack.c.l.b16 %v382
        %v496 = vunpack.c.l.b16 %v383
        %v497 = vunpack.c.h.b16 %v383
        %v498 = vunpack.c.l.b16 %v384
        %v499 = vunpack.c.l.b16 %v385
        %v500 = vunpack.c.h.b16 %v385
        %v501 = vunpack.c.l.b16 %v386
        %v502 = vunpack.c.l.b16 %v387
        %v503 = vunpack.c.h.b16 %v387
        %v504 = vunpack.c.l.b16 %v388
        %v505 = vunpack.c.l.b16 %v389
        %v506 = vunpack.c.h.b16 %v389
        %v507 = vunpack.c.l.b16 %v390
        %v508 = vunpack.c.l.b16 %v391
        %v509 = vunpack.c.h.b16 %v391
        %v510 = vunpack.c.l.b16 %v392
        %v511 = vunpack.c.l.b16 %v393
        %v512 = vunpack.c.h.b16 %v393
        %v513 = vunpack.c.l.b16 %v394
        %v514 = vunpack.c.l.b16 %v395
        %v515 = vunpack.c.h.b16 %v395
        %v516 = vunpack.c.l.b16 %v396
        %v517 = vunpack.c.l.b16 %v397
        %v518 = vunpack.c.h.b16 %v397
        %v519 = vunpack.c.l.b16 %v398
        %v520 = vunpack.c.l.b16 %v399
        %v521 = vunpack.c.h.b16 %v399
        %v522 = vunpack.c.l.b16 %v400
        %v523 = vunpack.c.l.b16 %v401
        %v524 = vunpack.c.h.b16 %v401
        %v525 = vunpack.c.l.b16 %v402
        %v526 = vunpack.c.l.b16 %v403
        %v527 = vunpack.c.h.b16 %v403
        %v528 = vunpack.c.l.b16 %v404
        %v529 = vunpack.c.l.b16 %v405
        %v530 = vunpack.c.h.b16 %v405
        %v531 = vunpack.c.l.b16 %v406
        %v532 = vunpack.c.l.b16 %v407
        %v533 = vunpack.c.h.b16 %v407
        %v534 = vunpack.c.l.b16 %v408
        %v535 = vunpack.c.l.b16 %v409
        %v536 = vunpack.c.h.b16 %v409
        %v537 = vunpack.c.l.b16 %v410
        %v538 = vunpack.c.l.b16 %v411
        %v539 = vunpack.c.h.b16 %v411
        %v540 = vunpack.c.l.b16 %v412
        %v541 = vpack.c.b16 %v496, %v493
        %v542 = vpack.c.b16 %v497, %v494
        %v543 = vpack.c.b16 %v498, %v495
        %v544 = vpack.c.b16 %v502, %v499
        %v545 = vpack.c.b16 %v503, %v500
        %v546 = vpack.c.b16 %v504, %v501
        %v547 = vpack.c.b16 %v508, %v505
        %v548 = vpack.c.b16 %v509, %v506
        %v549 = vpack.c.b16 %v510, %v507
        %v550 = vpack.c.b16 %v514, %v511
        %v551 = vpack.c.b16 %v515, %v512
        %v552 = vpack.c.b16 %v516, %v513
        %v553 = vpack.c.b16 %v520, %v517
        %v554 = vpack.c.b16 %v521, %v518
        %v555 = vpack.c.b16 %v522, %v519
        %v556 = vpack.c.b16 %v526, %v523
        %v557 = vpack.c.b16 %v527, %v524
        %v558 = vpack.c.b16 %v528, %v525
        %v559 = vpack.c.b16 %v532, %v529
        %v560 = vpack.c.b16 %v533, %v530
        %v561 = vpack.c.b16 %v534, %v531
        %v562 = vpack.c.b16 %v538, %v535
        %v563 = vpack.c.b16 %v539, %v536
        %v564 = vpack.c.b16 %v540, %v537
        %v637 = vunpack.c.l.b16 %v413
        %v638 = vunpack.c.l.b16 %v414
        %v639 = vunpack.c.l.b16 %v415
        %v640 = vunpack.c.l.b16 %v416
        %v641 = vunpack.c.l.b16 %v417
        %v642 = vunpack.c.l.b16 %v418
        %v643 = vunpack.c.l.b16 %v419
        %v644 = vunpack.c.l.b16 %v420
        %v645 = vunpack.c.l.b16 %v421
        %v646 = vunpack.c.l.b16 %v422
        %v647 = vunpack.c.l.b16 %v423
        %v648 = vunpack.c.l.b16 %v424
        %v649 = vunpack.c.l.b16 %v425
        %v650 = vunpack.c.l.b16 %v426
        %v651 = vunpack.c.l.b16 %v427
        %v652 = vunpack.c.l.b16 %v428
        %v653 = vunpack.c.l.b16 %v429
        %v654 = vunpack.c.l.b16 %v430
        %v655 = vunpack.c.l.b16 %v431
        %v656 = vunpack.c.l.b16 %v432
        %v657 = vunpack.c.l.b16 %v433
        %v658 = vunpack.c.l.b16 %v434
        %v659 = vunpack.c.l.b16 %v435
        %v660 = vunpack.c.l.b16 %v436
        %v661 = vunpack.c.l.b16 %v437
        %v662 = vunpack.c.l.b16 %v438
        %v663 = vunpack.c.l.b16 %v439
        %v664 = vunpack.c.l.b16 %v440
        %v665 = vunpack.c.l.b16 %v441
        %v666 = vunpack.c.l.b16 %v442
        %v667 = vunpack.c.l.b16 %v443
        %v668 = vunpack.c.l.b16 %v444
        %v669 = vunpack.c.l.b16 %v445
        %v670 = vunpack.c.l.b16 %v446
        %v671 = vunpack.c.l.b16 %v447
        %v672 = vunpack.c.l.b16 %v448
        %v673 = vunpack.c.l.b16 %v449
        %v674 = vunpack.c.l.b16 %v450
        %v675 = vunpack.c.l.b16 %v451
        %v676 = vunpack.c.l.b16 %v452
        %v677 = vunpack.c.l.b16 %v453
        %v678 = vunpack.c.l.b16 %v454
        %v679 = vunpack.c.l.b16 %v455
        %v680 = vunpack.c.l.b16 %v456
        %v681 = vunpack.c.l.b16 %v457
        %v682 = vunpack.c.l.b16 %v458
        %v683 = vunpack.c.l.b16 %v459
        %v684 = vunpack.c.l.b16 %v460
        %v685 = vpack.c.b16 %v638, %v637
        %v686 = vpack.c.b16 %v640, %v639
        %v687 = vpack.c.b16 %v642, %v641
        %v688 = vpack.c.b16 %v644, %v643
        %v689 = vpack.c.b16 %v646, %v645
        %v690 = vpack.c.b16 %v648, %v647
        %v691 = vpack.c.b16 %v650, %v649
        %v692 = vpack.c.b16 %v652, %v651
        %v693 = vpack.c.b16 %v654, %v653
        %v694 = vpack.c.b16 %v656, %v655
        %v695 = vpack.c.b16 %v658, %v657
        %v696 = vpack.c.b16 %v660, %v659
        %v697 = vpack.c.b16 %v662, %v661
        %v698 = vpack.c.b16 %v664, %v663
        %v699 = vpack.c.b16 %v666, %v665
        %v700 = vpack.c.b16 %v668, %v667
        %v701 = vpack.c.b16 %v670, %v669
        %v702 = vpack.c.b16 %v672, %v671
        %v703 = vpack.c.b16 %v674, %v673
        %v704 = vpack.c.b16 %v676, %v675
        %v705 = vpack.c.b16 %v678, %v677
        %v706 = vpack.c.b16 %v680, %v679
        %v707 = vpack.c.b16 %v682, %v681
        %v708 = vpack.c.b16 %v684, %v683
        %733 = vmatprep.subr.bf16.mxu0 0
        %734 = vmatpush1.bf16.msra.mxu0 %v685
        %735 = vmatprep.subr.bf16.mxu0 0
        %736 = vmatpush1.bf16.msra.mxu0 %v686
        %737 = vmatprep.subr.bf16.mxu0 0
        %738 = vmatpush1.bf16.msra.mxu0 %v687
        %739 = vmatprep.subr.bf16.mxu0 0
        %740 = vmatpush1.bf16.msra.mxu0 %v688
        %741 = vmatprep.subr.bf16.mxu0 0
        %742 = vmatpush1.bf16.msra.mxu0 %v689
        %743 = vmatprep.subr.bf16.mxu0 0
        %744 = vmatpush1.bf16.msra.mxu0 %v690
        %745 = vmatprep.subr.bf16.mxu0 0
        %746 = vmatpush1.bf16.msra.mxu0 %v691
        %747 = vmatprep.subr.bf16.mxu0 0
        %748 = vmatpush1.bf16.msra.mxu0 %v692
        %749 = vmatprep.subr.bf16.mxu0 0
        %750 = vmatpush1.bf16.msra.mxu0 %v693
        %751 = vmatprep.subr.bf16.mxu0 0
        %752 = vmatpush1.bf16.msra.mxu0 %v694
        %753 = vmatprep.subr.bf16.mxu0 0
        %754 = vmatpush1.bf16.msra.mxu0 %v695
        %755 = vmatprep.subr.bf16.mxu0 0
        %756 = vmatpush1.bf16.msra.mxu0 %v696
        %757 = vmatprep.subr.bf16.mxu0 0
        %758 = vmatpush1.bf16.msra.mxu0 %v697
        %759 = vmatprep.subr.bf16.mxu0 0
        %760 = vmatpush1.bf16.msra.mxu0 %v698
        %761 = vmatprep.subr.bf16.mxu0 0
        %762 = vmatpush1.bf16.msra.mxu0 %v699
        %763 = vmatprep.subr.bf16.mxu0 0
        %764 = vmatpush1.bf16.msra.mxu0 %v700
        %765 = vmatprep.mubr.bf16.mxu0 %v542
        %766 = vmatmul.mubr.bf16.gmra.mrb[0].mxu0 %v541
        %v767 = vpop.f32.mrb[0].mxu0
        %v768 = vadd.f32 0.0, %v767
        %v769 = vpop.f32.mrb[0].mxu0
        %v770 = vpop.f32.mrb[0].mxu0
        %v771 = vadd.f32 0.0, %v770
        %v772 = vpop.f32.mrb[0].mxu0
        %773 = vmatprep.mubr.bf16.mxu0 %v545
        %774 = vmatmul.mubr.bf16.gmra.mrb[0].mxu0 %v544
        %v775 = vpop.f32.mrb[0].mxu0
        %v776 = vadd.f32 0.0, %v775
        %v777 = vpop.f32.mrb[0].mxu0
        %v778 = vpop.f32.mrb[0].mxu0
        %v779 = vadd.f32 0.0, %v778
        %v780 = vpop.f32.mrb[0].mxu0
        %781 = vmatprep.mubr.bf16.mxu0 %v548
        %782 = vmatmul.mubr.bf16.gmra.mrb[0].mxu0 %v547
        %v783 = vpop.f32.mrb[0].mxu0
        %v784 = vadd.f32 0.0, %v783
        %v785 = vpop.f32.mrb[0].mxu0
        %v786 = vpop.f32.mrb[0].mxu0
        %v787 = vadd.f32 0.0, %v786
        %v788 = vpop.f32.mrb[0].mxu0
        %789 = vmatprep.mubr.bf16.mxu0 %v551
        %790 = vmatmul.mubr.bf16.gmra.mrb[0].mxu0 %v550
        %v791 = vpop.f32.mrb[0].mxu0
        %v792 = vadd.f32 0.0, %v791
        %v793 = vpop.f32.mrb[0].mxu0
        %v794 = vpop.f32.mrb[0].mxu0
        %v795 = vadd.f32 0.0, %v794
        %v796 = vpop.f32.mrb[0].mxu0
        %797 = vmatprep.mubr.bf16.mxu0 %v554
        %798 = vmatmul.mubr.bf16.gmra.mrb[0].mxu0 %v553
        %v799 = vpop.f32.mrb[0].mxu0
        %v800 = vadd.f32 0.0, %v799
        %v801 = vpop.f32.mrb[0].mxu0
        %v802 = vpop.f32.mrb[0].mxu0
        %v803 = vadd.f32 0.0, %v802
        %v804 = vpop.f32.mrb[0].mxu0
        %805 = vmatprep.mubr.bf16.mxu0 %v557
        %806 = vmatmul.mubr.bf16.gmra.mrb[0].mxu0 %v556
        %v807 = vpop.f32.mrb[0].mxu0
        %v808 = vadd.f32 0.0, %v807
        %v809 = vpop.f32.mrb[0].mxu0
        %v810 = vpop.f32.mrb[0].mxu0
        %v811 = vadd.f32 0.0, %v810
        %v812 = vpop.f32.mrb[0].mxu0
        %813 = vmatprep.mubr.bf16.mxu0 %v560
        %814 = vmatmul.mubr.bf16.gmra.mrb[0].mxu0 %v559
        %v815 = vpop.f32.mrb[0].mxu0
        %v816 = vadd.f32 0.0, %v815
        %v817 = vpop.f32.mrb[0].mxu0
        %v818 = vpop.f32.mrb[0].mxu0
        %v819 = vadd.f32 0.0, %v818
        %v820 = vpop.f32.mrb[0].mxu0
        %821 = vmatprep.mubr.bf16.mxu0 %v563
        %822 = vmatmul.mubr.bf16.gmra.mrb[0].mxu0 %v562
        %v823 = vpop.f32.mrb[0].mxu0
        %v824 = vadd.f32 0.0, %v823
        %v825 = vpop.f32.mrb[0].mxu0
        %v826 = vpop.f32.mrb[0].mxu0
        %v827 = vadd.f32 0.0, %v826
        %v828 = vpop.f32.mrb[0].mxu0
        %829 = vdwg.mxu0
        %830 = vmatprep.subr.bf16.mxu0 0
        %831 = vmatpush1.bf16.msra.mxu0 %v701
        %832 = vmatprep.subr.bf16.mxu0 0
        %833 = vmatpush1.bf16.msra.mxu0 %v702
        %834 = vmatprep.subr.bf16.mxu0 0
        %835 = vmatpush1.bf16.msra.mxu0 %v703
        %836 = vmatprep.subr.bf16.mxu0 0
        %837 = vmatpush1.bf16.msra.mxu0 %v704
        %838 = vmatprep.subr.bf16.mxu0 0
        %839 = vmatpush1.bf16.msra.mxu0 %v705
        %840 = vmatprep.subr.bf16.mxu0 0
        %841 = vmatpush1.bf16.msra.mxu0 %v706
        %842 = vmatprep.subr.bf16.mxu0 0
        %843 = vmatpush1.bf16.msra.mxu0 %v707
        %844 = vmatprep.subr.bf16.mxu0 0
        %845 = vmatpush1.bf16.msra.mxu0 %v708
        %846 = vmatprep.subr.bf16.mxu0 0
        %847 = vmatpush1.bf16.msra.mxu0 0
        %848 = vmatprep.subr.bf16.mxu0 0
        %849 = vmatpush1.bf16.msra.mxu0 0
        %850 = vmatprep.subr.bf16.mxu0 0
        %851 = vmatpush1.bf16.msra.mxu0 0
        %852 = vmatprep.subr.bf16.mxu0 0
        %853 = vmatpush1.bf16.msra.mxu0 0
        %854 = vmatprep.subr.bf16.mxu0 0
        %855 = vmatpush1.bf16.msra.mxu0 0
        %856 = vmatprep.subr.bf16.mxu0 0
        %857 = vmatpush1.bf16.msra.mxu0 0
        %858 = vmatprep.subr.bf16.mxu0 0
        %859 = vmatpush1.bf16.msra.mxu0 0
        %860 = vmatprep.subr.bf16.mxu0 0
        %861 = vmatpush1.bf16.msra.mxu0 0
        %862 = vmatprep.mubr.bf16.mxu0 0
        %863 = vmatmul.mubr.bf16.gmra.mrb[0].mxu0 %v543
        %v864 = vpop.f32.mrb[0].mxu0
        %v865 = vadd.f32 %v768, %v864
        %v866 = vpop.f32.mrb[0].mxu0
        %v867 = vpop.f32.mrb[0].mxu0
        %v868 = vadd.f32 %v771, %v867
        %v869 = vpop.f32.mrb[0].mxu0
        %870 = vmatprep.mubr.bf16.mxu0 0
        %871 = vmatmul.mubr.bf16.gmra.mrb[0].mxu0 %v546
        %v872 = vpop.f32.mrb[0].mxu0
        %v873 = vadd.f32 %v776, %v872
        %v874 = vpop.f32.mrb[0].mxu0
        %v875 = vpop.f32.mrb[0].mxu0
        %v876 = vadd.f32 %v779, %v875
        %v877 = vpop.f32.mrb[0].mxu0
        %878 = vmatprep.mubr.bf16.mxu0 0
        %879 = vmatmul.mubr.bf16.gmra.mrb[0].mxu0 %v549
        %v880 = vpop.f32.mrb[0].mxu0
        %v881 = vadd.f32 %v784, %v880
        %v882 = vpop.f32.mrb[0].mxu0
        %v883 = vpop.f32.mrb[0].mxu0
        %v884 = vadd.f32 %v787, %v883
        %v885 = vpop.f32.mrb[0].mxu0
        %886 = vmatprep.mubr.bf16.mxu0 0
        %887 = vmatmul.mubr.bf16.gmra.mrb[0].mxu0 %v552
        %v888 = vpop.f32.mrb[0].mxu0
        %v889 = vadd.f32 %v792, %v888
        %v890 = vpop.f32.mrb[0].mxu0
        %v891 = vpop.f32.mrb[0].mxu0
        %v892 = vadd.f32 %v795, %v891
        %v893 = vpop.f32.mrb[0].mxu0
        %894 = vmatprep.mubr.bf16.mxu0 0
        %895 = vmatmul.mubr.bf16.gmra.mrb[0].mxu0 %v555
        %v896 = vpop.f32.mrb[0].mxu0
        %v897 = vadd.f32 %v800, %v896
        %v898 = vpop.f32.mrb[0].mxu0
        %v899 = vpop.f32.mrb[0].mxu0
        %v900 = vadd.f32 %v803, %v899
        %v901 = vpop.f32.mrb[0].mxu0
        %902 = vmatprep.mubr.bf16.mxu0 0
        %903 = vmatmul.mubr.bf16.gmra.mrb[0].mxu0 %v558
        %v904 = vpop.f32.mrb[0].mxu0
        %v905 = vadd.f32 %v808, %v904
        %v906 = vpop.f32.mrb[0].mxu0
        %v907 = vpop.f32.mrb[0].mxu0
        %v908 = vadd.f32 %v811, %v907
        %v909 = vpop.f32.mrb[0].mxu0
        %910 = vmatprep.mubr.bf16.mxu0 0
        %911 = vmatmul.mubr.bf16.gmra.mrb[0].mxu0 %v561
        %v912 = vpop.f32.mrb[0].mxu0
        %v913 = vadd.f32 %v816, %v912
        %v914 = vpop.f32.mrb[0].mxu0
        %v915 = vpop.f32.mrb[0].mxu0
        %v916 = vadd.f32 %v819, %v915
        %v917 = vpop.f32.mrb[0].mxu0
        %918 = vmatprep.mubr.bf16.mxu0 0
        %919 = vmatmul.mubr.bf16.gmra.mrb[0].mxu0 %v564
        %v920 = vpop.f32.mrb[0].mxu0
        %v921 = vadd.f32 %v824, %v920
        %v922 = vpop.f32.mrb[0].mxu0
        %v923 = vpop.f32.mrb[0].mxu0
        %v924 = vadd.f32 %v827, %v923
        %v925 = vpop.f32.mrb[0].mxu0
        %926 = vdwg.mxu0
        %v927 = vadd.f32 %v365, %v865
        %v928 = vadd.f32 %v366, %v868
        %v929 = vadd.f32 %v367, %v873
        %v930 = vadd.f32 %v368, %v876
        %v931 = vadd.f32 %v369, %v881
        %v932 = vadd.f32 %v370, %v884
        %v933 = vadd.f32 %v371, %v889
        %v934 = vadd.f32 %v372, %v892
        %v935 = vadd.f32 %v373, %v897
        %v936 = vadd.f32 %v374, %v900
        %v937 = vadd.f32 %v375, %v905
        %v938 = vadd.f32 %v376, %v908
        %v939 = vadd.f32 %v377, %v913
        %v940 = vadd.f32 %v378, %v916
        %v941 = vadd.f32 %v379, %v921
        %v942 = vadd.f32 %v380, %v924
        %943 = vst [vmem:[#allocation2] sm:$0xff] %v927
        %944 = vst [vmem:[#allocation2 + $0x8] sm:$0xff] %v928
        %945 = vst [vmem:[#allocation2 + $0x10] sm:$0xff] %v929
        %946 = vst [vmem:[#allocation2 + $0x18] sm:$0xff] %v930
        %947 = vst [vmem:[#allocation2 + $0x20] sm:$0xff] %v931
        %948 = vst [vmem:[#allocation2 + $0x28] sm:$0xff] %v932
        %949 = vst [vmem:[#allocation2 + $0x30] sm:$0xff] %v933
        %950 = vst [vmem:[#allocation2 + $0x38] sm:$0xff] %v934
        %951 = vst [vmem:[#allocation2 + $0x40] sm:$0xff] %v935
        %952 = vst [vmem:[#allocation2 + $0x48] sm:$0xff] %v936
        %953 = vst [vmem:[#allocation2 + $0x50] sm:$0xff] %v937
        %954 = vst [vmem:[#allocation2 + $0x58] sm:$0xff] %v938
        %955 = vst [vmem:[#allocation2 + $0x60] sm:$0xff] %v939
        %956 = vst [vmem:[#allocation2 + $0x68] sm:$0xff] %v940
        %957 = vst [vmem:[#allocation2 + $0x70] sm:$0xff] %v941
        %958 = vst [vmem:[#allocation2 + $0x78] sm:$0xff] %v942
        %p959 = scmp.eq.s32.totalorder %s21, 2
        // Predicated region
        $region63: #{_lambda_.20} parent=53 // pred_check
          %p960 = pneg %p959
        $region64: #{_lambda_.20} parent=53 // pred_check_branch
          %962 = sbr.rel (%p960) target = $region66
        $region65: #{_lambda_.20} parent=53 // pred_region
          %v963 = vld [vmem:[#allocation2] sm:$0xff]
          %v964 = vld [vmem:[#allocation2 + $0x8] sm:$0xff]
          %v965 = vld [vmem:[#allocation2 + $0x10] sm:$0xff]
          %v966 = vld [vmem:[#allocation2 + $0x18] sm:$0xff]
          %v967 = vld [vmem:[#allocation2 + $0x20] sm:$0xff]
          %v968 = vld [vmem:[#allocation2 + $0x28] sm:$0xff]
          %v969 = vld [vmem:[#allocation2 + $0x30] sm:$0xff]
          %v970 = vld [vmem:[#allocation2 + $0x38] sm:$0xff]
          %v971 = vld [vmem:[#allocation2 + $0x40] sm:$0xff]
          %v972 = vld [vmem:[#allocation2 + $0x48] sm:$0xff]
          %v973 = vld [vmem:[#allocation2 + $0x50] sm:$0xff]
          %v974 = vld [vmem:[#allocation2 + $0x58] sm:$0xff]
          %v975 = vld [vmem:[#allocation2 + $0x60] sm:$0xff]
          %v976 = vld [vmem:[#allocation2 + $0x68] sm:$0xff]
          %v977 = vld [vmem:[#allocation2 + $0x70] sm:$0xff]
          %v978 = vld [vmem:[#allocation2 + $0x78] sm:$0xff]
          %v979 = vld [vmem:[%s334] sm:$0x1]
          %v981 = vlaneseq
          %v982 = vshrl.u32 %v981, 7
          %v983 = vsub.s32 0, %v982
          %v984 = vrot.slane %v979, %v983
          %v986 = vadd.f32 %v963, %v984
          %v987 = vadd.f32 %v964, %v984
          %v988 = vadd.f32 %v965, %v984
          %v989 = vadd.f32 %v966, %v984
          %v990 = vadd.f32 %v967, %v984
          %v991 = vadd.f32 %v968, %v984
          %v992 = vadd.f32 %v969, %v984
          %v993 = vadd.f32 %v970, %v984
          %v994 = vadd.f32 %v971, %v984
          %v995 = vadd.f32 %v972, %v984
          %v996 = vadd.f32 %v973, %v984
          %v997 = vadd.f32 %v974, %v984
          %v998 = vadd.f32 %v975, %v984
          %v999 = vadd.f32 %v976, %v984
          %v1000 = vadd.f32 %v977, %v984
          %v1001 = vadd.f32 %v978, %v984
          %v1002 = vmax.f32 %v986, 0.0
          %v1003 = vmax.f32 %v987, 0.0
          %v1004 = vmax.f32 %v988, 0.0
          %v1005 = vmax.f32 %v989, 0.0
          %v1006 = vmax.f32 %v990, 0.0
          %v1007 = vmax.f32 %v991, 0.0
          %v1008 = vmax.f32 %v992, 0.0
          %v1009 = vmax.f32 %v993, 0.0
          %v1010 = vmax.f32 %v994, 0.0
          %v1011 = vmax.f32 %v995, 0.0
          %v1012 = vmax.f32 %v996, 0.0
          %v1013 = vmax.f32 %v997, 0.0
          %v1014 = vmax.f32 %v998, 0.0
          %v1015 = vmax.f32 %v999, 0.0
          %v1016 = vmax.f32 %v1000, 0.0
          %v1017 = vmax.f32 %v1001, 0.0
          %1018 = vst [vmem:[%s342] sm:$0xff] %v1002
          %1019 = vst [vmem:[%s342 + $0x8] sm:$0xff] %v1003
          %1020 = vst [vmem:[%s342 + $0x10] sm:$0xff] %v1004
          %1021 = vst [vmem:[%s342 + $0x18] sm:$0xff] %v1005
          %1022 = vst [vmem:[%s342 + $0x20] sm:$0xff] %v1006
          %1023 = vst [vmem:[%s342 + $0x28] sm:$0xff] %v1007
          %1024 = vst [vmem:[%s342 + $0x30] sm:$0xff] %v1008
          %1025 = vst [vmem:[%s342 + $0x38] sm:$0xff] %v1009
          %1026 = vst [vmem:[%s342 + $0x40] sm:$0xff] %v1010
          %1027 = vst [vmem:[%s342 + $0x48] sm:$0xff] %v1011
          %1028 = vst [vmem:[%s342 + $0x50] sm:$0xff] %v1012
          %1029 = vst [vmem:[%s342 + $0x58] sm:$0xff] %v1013
          %1030 = vst [vmem:[%s342 + $0x60] sm:$0xff] %v1014
          %1031 = vst [vmem:[%s342 + $0x68] sm:$0xff] %v1015
          %1032 = vst [vmem:[%s342 + $0x70] sm:$0xff] %v1016
          %1033 = vst [vmem:[%s342 + $0x78] sm:$0xff] %v1017
        $region66: #{_lambda_.20} parent=53 // pred_fallthru
          _
        %s1034 = smul.u32 16, %s19
        %p1035 = scmp.lt.s32.totalorder %s1034, 15
        %s1036 = scalar_select %p1035, %s1034, 15
        %p1037 = scmp.lt.s32.totalorder %s20, 0
        %s1038 = scalar_select %p1037, %s20, 0
        %s1039 = sadd.s32 %s1038, %s1036
        %s1040 = smul.addr %s1039, 8
        %s1041 = scalar_lea.vmem %s3, %s1040
        // Predicated region
        $region67: #{_lambda_.20} parent=53 // pred_check
          %p1042 = pneg %p135
        $region68: #{_lambda_.20} parent=53 // pred_check_branch
          %1044 = sbr.rel (%p1042) target = $region70
        $region69: #{_lambda_.20} parent=53 // pred_region
          %s1045 = smul.u32 16, %s19
        $region70: #{_lambda_.20} parent=53 // pred_fallthru
          _
        // Predicated region
        $region71: #{_lambda_.20} parent=53 // pred_check
          %p1046 = pneg %p135
        $region72: #{_lambda_.20} parent=53 // pred_check_branch
          %1048 = sbr.rel (%p1046) target = $region74
        $region73: #{_lambda_.20} parent=53 // pred_region
          %s1049 = smul.u32 16, %s19
          %p1050 = scmp.lt.s32.totalorder %s1049, 15
          %s1051 = scalar_select %p1050, %s1049, 15
          %p1052 = scmp.lt.s32.totalorder %s20, 0
          %s1053 = scalar_select %p1052, %s20, 0
          %s1054 = sadd.s32 %s1053, %s1051
          %s1055 = smul.addr %s1054, 8
          %s1056 = scalar_lea.vmem %s3, %s1055
        $region74: #{_lambda_.20} parent=53 // pred_fallthru
          _
      $region54: #{_lambda_.20} parent=5 // pred_fallthru
        _
      %p1057 = scmp.le.s32.totalorder 2, %s9
      // Predicated region
      $region75: #{_lambda_.20} parent=5 // pred_check
        %p1058 = pneg %p1057
      $region76: #{_lambda_.20} parent=5 // pred_check_branch
        %1060 = sbr.rel (%p1058) target = $region78
      $region77: #{_lambda_.20} parent=5 // pred_region
        %s1061 = ssub.s32 %s9, 2
      $region78: #{_lambda_.20} parent=5 // pred_fallthru
        _
    $region6: #{_lambda_.20} parent=1 // loop_footer
      %s13 = sadd.s32 1, %s9
    $region7: #{_lambda_.20} parent=1 // loop_footer_branch
      %8 = sbr.rel target = $region3
    $region8: #{_lambda_.20} parent=1 // loop_exit
      _

// kernel: _lambda_.21
$region0: #{_lambda_.21}
  #allocation0 [shape = 'u32[]', space=smem, size = 0x4, offset = 0x4, fixed_abs, tag = 'smem constant byte address 0x4 - core index']
  #allocation1 [shape = 'u32[144,128]{1,0:T(1,128)}', space=vmem, size = 0x12000, scoped, tag = 'internal scratch']
  #allocation2 [shape = 'f32[256,128]{1,0:T(8,128)}', space=vmem, size = 0x20000, scoped, tag = 'scratch operand']
  %s0 = inlined_call_operand.vmem [shape: bf16[512,1024], index: 0, kind: input, shape index: {}]
  %s1 = inlined_call_operand.vmem [shape: bf16[1024,128], index: 1, kind: input, shape index: {}]
  %s2 = inlined_call_operand.vmem [shape: f32[1,128], index: 2, kind: input, shape index: {}]
  %s3 = inlined_call_operand.hbm [shape: f32[512,128], index: 3, kind: output, shape index: {}]
  %s4 = sld [smem:[#allocation0]]
  $region53: #{_lambda_.21} parent=0
    _
  %s6 = ssub.s32 1, %s4
  %s7 = scalar_select 0, %s6, %s4
  $region1: #{_lambda_.21} parent=0
    #allocation3 [shape = 'u8[262144]{0}', space=vmem, size = 0x40000, scoped, tag = 'output window, operand 0']
    #allocation4 [shape = 's32[2]{0}', space=sflag, size = 0x8, scoped, tag = 'scoped memory for _lambda_.21']
    %8 = vsyncpa [#allocation4], 0
    %s9 = scalar_lea.sflag [#allocation4], 1
    %10 = vsyncpa %s9, 0
    loop: start=0, step=1, limit=4
    $region2: #{_lambda_.21} parent=1 // loop_pre_header
      _
    $region3: #{_lambda_.21} parent=1 // loop_header
      %s12 = sphi 0, %s16
      %p13 = scmp.ge.s32.totalorder %s12, 4
      %s19 = sphi 0, %s38
      %s20 = sphi 0, %s34
      %s21 = sphi 0, %s30
      %s22 = sphi 0, %s19
      %s23 = sphi 0, %s20
      %s24 = sphi 0, %s21
      %s25 = sphi 0, %s22
      %s26 = sphi 0, %s23
      %s27 = sphi 0, %s24
      %s43 = sphi 0, %s45
      %s46 = sphi 0, %s43
      %s47 = sphi 0, %s46
      %s63 = sphi 0, %s47
      %s71 = sphi 0, %s73
      %s74 = sphi 0, %s71
      %s75 = sphi 0, %s74
      %s91 = sphi 0, %s75
      %s97 = sphi 0, %s99
      %s100 = sphi 0, %s97
      %s101 = sphi 0, %s100
      %s117 = sphi 0, %s101
      %s125 = sphi 0, %s127
      %s128 = sphi 0, %s125
      %s129 = sphi 0, %s128
      %s145 = sphi 0, %s129
    $region4: #{_lambda_.21} parent=1 // loop_header_branch
      %15 = sbr.rel (%p13) target = $region8
    $region5: #{_lambda_.21} parent=1 // loop_body
      %s17 = ssub.s32 %s12, 1
      %s18 = ssub.s32 %s12, 2
      %s28 = sadd.s32 1, %s21
      %p29 = scmp.ge.s32.totalorder %s28, 1
      %s30 = scalar_select %p29, 0, %s28
      %s31 = sadd.s32 1, %s20
      %s32 = scalar_select %p29, %s31, %s20
      %p33 = scmp.ge.s32.totalorder %s32, 1
      %s34 = scalar_select %p33, 0, %s32
      %s35 = sadd.s32 1, %s19
      %s36 = scalar_select %p33, %s35, %s19
      %p37 = scmp.ge.s32.totalorder %s36, 2
      %s38 = scalar_select %p37, 0, %s36
      %s39 = ssub.s32 %s19, %s38
      %s40 = ssub.s32 %s21, %s30
      %s41 = sor.u32 %s39, %s40
      %p42 = scmp.eq.s32.totalorder %s41, 0
      %s44 = sadd.s32 %s43, 1
      %s45 = scalar_select %p42, %s43, %s44
      %p48 = pneg %p42
      %p49 = scmp.eq.s32.totalorder %s12, 1
      %p50 = por %p48, %p49
      %p51 = scmp.ne.s32.totalorder %s43, %s46
      %p52 = scmp.eq.s32.totalorder %s12, 0
      %p53 = por %p51, %p52
      %p54 = scmp.ne.s32.totalorder %s43, %s46
      %p55 = scmp.eq.s32.totalorder %s17, 1
      %p56 = por %p54, %p55
      %p57 = scmp.ne.s32.totalorder %s46, %s47
      %p58 = scmp.eq.s32.totalorder %s17, 0
      %p59 = por %p57, %p58
      %p60 = scmp.ne.s32.totalorder %s46, %s47
      %p61 = scmp.eq.s32.totalorder %s18, 1
      %p62 = por %p60, %p61
      %p64 = scmp.ne.s32.totalorder %s47, %s63
      %p65 = scmp.eq.s32.totalorder %s18, 0
      %p66 = por %p64, %p65
      %s67 = ssub.s32 %s21, %s30
      %s68 = ssub.s32 %s20, %s34
      %s69 = sor.u32 %s67, %s68
      %p70 = scmp.eq.s32.totalorder %s69, 0
      %s72 = sadd.s32 %s71, 1
      %s73 = scalar_select %p70, %s71, %s72
      %p76 = pneg %p70
      %p77 = scmp.eq.s32.totalorder %s12, 1
      %p78 = por %p76, %p77
      %p79 = scmp.ne.s32.totalorder %s71, %s74
      %p80 = scmp.eq.s32.totalorder %s12, 0
      %p81 = por %p79, %p80
      %p82 = scmp.ne.s32.totalorder %s71, %s74
      %p83 = scmp.eq.s32.totalorder %s17, 1
      %p84 = por %p82, %p83
      %p85 = scmp.ne.s32.totalorder %s74, %s75
      %p86 = scmp.eq.s32.totalorder %s17, 0
      %p87 = por %p85, %p86
      %p88 = scmp.ne.s32.totalorder %s74, %s75
      %p89 = scmp.eq.s32.totalorder %s18, 1
      %p90 = por %p88, %p89
      %p92 = scmp.ne.s32.totalorder %s75, %s91
      %p93 = scmp.eq.s32.totalorder %s18, 0
      %p94 = por %p92, %p93
      %s95 = ssub.s32 %s20, %s34
      %p96 = scmp.eq.s32.totalorder %s95, 0
      %s98 = sadd.s32 %s97, 1
      %s99 = scalar_select %p96, %s97, %s98
      %p102 = pneg %p96
      %p103 = scmp.eq.s32.totalorder %s12, 1
      %p104 = por %p102, %p103
      %p105 = scmp.ne.s32.totalorder %s97, %s100
      %p106 = scmp.eq.s32.totalorder %s12, 0
      %p107 = por %p105, %p106
      %p108 = scmp.ne.s32.totalorder %s97, %s100
      %p109 = scmp.eq.s32.totalorder %s17, 1
      %p110 = por %p108, %p109
      %p111 = scmp.ne.s32.totalorder %s100, %s101
      %p112 = scmp.eq.s32.totalorder %s17, 0
      %p113 = por %p111, %p112
      %p114 = scmp.ne.s32.totalorder %s100, %s101
      %p115 = scmp.eq.s32.totalorder %s18, 1
      %p116 = por %p114, %p115
      %p118 = scmp.ne.s32.totalorder %s101, %s117
      %p119 = scmp.eq.s32.totalorder %s18, 0
      %p120 = por %p118, %p119
      %s121 = ssub.s32 %s19, %s38
      %s122 = ssub.s32 %s20, %s34
      %s123 = sor.u32 %s121, %s122
      %p124 = scmp.eq.s32.totalorder %s123, 0
      %s126 = sadd.s32 %s125, 1
      %s127 = scalar_select %p124, %s125, %s126
      %p130 = pneg %p124
      %p131 = scmp.eq.s32.totalorder %s12, 1
      %p132 = por %p130, %p131
      %p133 = scmp.ne.s32.totalorder %s125, %s128
      %p134 = scmp.eq.s32.totalorder %s12, 0
      %p135 = por %p133, %p134
      %p136 = scmp.ne.s32.totalorder %s125, %s128
      %p137 = scmp.eq.s32.totalorder %s17, 1
      %p138 = por %p136, %p137
      %p139 = scmp.ne.s32.totalorder %s128, %s129
      %p140 = scmp.eq.s32.totalorder %s17, 0
      %p141 = por %p139, %p140
      %p142 = scmp.ne.s32.totalorder %s128, %s129
      %p143 = scmp.eq.s32.totalorder %s18, 1
      %p144 = por %p142, %p143
      %p146 = scmp.ne.s32.totalorder %s129, %s145
      %p147 = scmp.eq.s32.totalorder %s18, 0
      %p148 = por %p146, %p147
      %p149 = scmp.le.s32.totalorder 1, %s12
      %p150 = scmp.lt.s32.totalorder %s12, 3
      %p151 = pnand %p149, %p150
      %p152 = pneg %p151
      // Predicated region
      $region9: #{_lambda_.21} parent=5 // pred_check
        _
      $region10: #{_lambda_.21} parent=5 // pred_check_branch
        %154 = sbr.rel (%p151) target = $region12
      $region11: #{_lambda_.21} parent=5 // pred_region
        %s155 = ssub.s32 %s12, 1
        // Predicated region
        $region13: #{_lambda_.21} parent=11 // pred_check
          %p156 = pneg %p87
        $region14: #{_lambda_.21} parent=11 // pred_check_branch
          %158 = sbr.rel (%p156) target = $region16
        $region15: #{_lambda_.21} parent=11 // pred_region
          %s159 = smul.u32 128, %s24
          %p160 = scmp.lt.s32.totalorder %s159, 127
          %s161 = scalar_select %p160, %s159, 127
          %p162 = scmp.lt.s32.totalorder %s23, 0
          %s163 = scalar_select %p162, %s23, 0
          %s164 = sadd.s32 %s163, %s161
          %s165 = smul.addr %s164, 4
          %s166 = scalar_lea.vmem %s1, %s165
          %s167 = smul.u32 128, %s24
        $region16: #{_lambda_.21} parent=11 // pred_fallthru
          _
        // Predicated region
        $region17: #{_lambda_.21} parent=11 // pred_check
          %p168 = pneg %p113
        $region18: #{_lambda_.21} parent=11 // pred_check_branch
          %170 = sbr.rel (%p168) target = $region20
        $region19: #{_lambda_.21} parent=11 // pred_region
          %p171 = scmp.lt.s32.totalorder %s23, 0
          %s172 = scalar_select %p171, %s23, 0
          %s173 = scalar_lea.vmem %s2, %s172
        $region20: #{_lambda_.21} parent=11 // pred_fallthru
          _
      $region12: #{_lambda_.21} parent=5 // pred_fallthru
        _
      %p174 = scmp.lt.s32.totalorder %s12, 2
      // Predicated region
      $region21: #{_lambda_.21} parent=5 // pred_check
        %p175 = pneg %p174
      $region22: #{_lambda_.21} parent=5 // pred_check_branch
        %177 = sbr.rel (%p175) target = $region24
      $region23: #{_lambda_.21} parent=5 // pred_region
        // Predicated region
        $region25: #{_lambda_.21} parent=23 // pred_check
          %p178 = pneg %p53
        $region26: #{_lambda_.21} parent=23 // pred_check_branch
          %180 = sbr.rel (%p178) target = $region28
        $region27: #{_lambda_.21} parent=23 // pred_region
          %s181 = smul.u32 32, %s19
          %s182 = smul.u32 8, %s21
          %p183 = scmp.lt.s32.totalorder %s181, 63
          %s184 = scalar_select %p183, %s181, 63
          %p185 = scmp.lt.s32.totalorder %s182, 7
          %s186 = scalar_select %p185, %s182, 7
          %s187 = smul.addr %s184, 8
          %s188 = sadd.s32 %s186, %s187
          %s189 = smul.addr %s188, 4
          %s190 = scalar_lea.vmem %s0, %s189
          %s191 = smul.u32 32, %s19
          %s192 = smul.u32 8, %s21
        $region28: #{_lambda_.21} parent=23 // pred_fallthru
          _
      $region24: #{_lambda_.21} parent=5 // pred_fallthru
        _
      %p193 = scmp.le.s32.totalorder 1, %s12
      %p194 = scmp.lt.s32.totalorder %s12, 3
      %p195 = pnand %p193, %p194
      %p196 = pneg %p195
      // Predicated region
      $region29: #{_lambda_.21} parent=5 // pred_check
        _
      $region30: #{_lambda_.21} parent=5 // pred_check_branch
        %198 = sbr.rel (%p195) target = $region32
      $region31: #{_lambda_.21} parent=5 // pred_region
        %s199 = ssub.s32 %s12, 1
        %s200 = smul.u32 32, %s22
        %s201 = smul.u32 8, %s24
        %p202 = scmp.lt.s32.totalorder %s200, 63
        %s203 = scalar_select %p202, %s200, 63
        %p204 = scmp.lt.s32.totalorder %s201, 7
        %s205 = scalar_select %p204, %s201, 7
        %s206 = smul.addr %s203, 8
        %s207 = sadd.s32 %s205, %s206
        %s208 = smul.addr %s207, 4
        %s209 = scalar_lea.vmem %s0, %s208
        %p210 = pneg %p59
        %p211 = pneg %p56
        %s212 = smul.u32 128, %s24
        %p213 = scmp.lt.s32.totalorder %s212, 127
        %s214 = scalar_select %p213, %s212, 127
        %p215 = scmp.lt.s32.totalorder %s23, 0
        %s216 = scalar_select %p215, %s23, 0
        %s217 = sadd.s32 %s216, %s214
        %s218 = smul.addr %s217, 4
        %s219 = scalar_lea.vmem %s1, %s218
        %p220 = pneg %p87
        %p221 = pneg %p84
        %p222 = scmp.lt.s32.totalorder %s23, 0
        %s223 = scalar_select %p222, %s23, 0
        %s224 = scalar_lea.vmem %s2, %s223
        %p225 = pneg %p113
        %p226 = pneg %p110
        %p227 = pneg %p141
        %p228 = pneg %p138
        %s229 = sand.u32 %s128, 1
        %s230 = scalar_lea.sflag [#allocation4], %s229
        %s231 = sand.u32 %s128, 1
        %s232 = smul.addr %s231, 256
        %s233 = scalar_lea.vmem [#allocation3], %s232
        %s234 = smul.u32 32, %s22
        %s235 = smul.u32 8, %s24
        %p236 = scmp.lt.s32.totalorder %s234, 63
        %s237 = scalar_select %p236, %s234, 63
        %p238 = scmp.lt.s32.totalorder %s235, 7
        %s239 = scalar_select %p238, %s235, 7
        %s240 = smul.addr %s237, 8
        %s241 = sadd.s32 %s239, %s240
        %s242 = smul.addr %s241, 4
        %s243 = scalar_lea.vmem %s0, %s242
        %s244 = smul.u32 32, %s22
        %s245 = smul.u32 8, %s24
        %s246 = smul.u32 128, %s24
        %p247 = scmp.lt.s32.totalorder %s246, 127
        %s248 = scalar_select %p247, %s246, 127
        %p249 = scmp.lt.s32.totalorder %s23, 0
        %s250 = scalar_select %p249, %s23, 0
        %s251 = sadd.s32 %s250, %s248
        %s252 = smul.addr %s251, 4
        %s253 = scalar_lea.vmem %s1, %s252
        %s254 = smul.u32 128, %s24
        %p255 = scmp.lt.s32.totalorder %s23, 0
        %s256 = scalar_select %p255, %s23, 0
        %s257 = scalar_lea.vmem %s2, %s256
        %s258 = smul.u32 32, %s22
        %p260 = scmp.eq.s32.totalorder %s24, 0
        // Predicated region
        $region33: #{_lambda_.21} parent=31 // pred_check
          %p261 = pneg %p260
        $region34: #{_lambda_.21} parent=31 // pred_check_branch
          %263 = sbr.rel (%p261) target = $region36
        $region35: #{_lambda_.21} parent=31 // pred_region
          %264 = vst [vmem:[#allocation2] sm:$0xff] 0.0
          %265 = vst [vmem:[#allocation2 + $0x8] sm:$0xff] 0.0
          %266 = vst [vmem:[#allocation2 + $0x10] sm:$0xff] 0.0
          %267 = vst [vmem:[#allocation2 + $0x18] sm:$0xff] 0.0
          %268 = vst [vmem:[#allocation2 + $0x20] sm:$0xff] 0.0
          %269 = vst [vmem:[#allocation2 + $0x28] sm:$0xff] 0.0
          %270 = vst [vmem:[#allocation2 + $0x30] sm:$0xff] 0.0
          %271 = vst [vmem:[#allocation2 + $0x38] sm:$0xff] 0.0
          %272 = vst [vmem:[#allocation2 + $0x40] sm:$0xff] 0.0
          %273 = vst [vmem:[#allocation2 + $0x48] sm:$0xff] 0.0
          %274 = vst [vmem:[#allocation2 + $0x50] sm:$0xff] 0.0
          %275 = vst [vmem:[#allocation2 + $0x58] sm:$0xff] 0.0
          %276 = vst [vmem:[#allocation2 + $0x60] sm:$0xff] 0.0
          %277 = vst [vmem:[#allocation2 + $0x68] sm:$0xff] 0.0
          %278 = vst [vmem:[#allocation2 + $0x70] sm:$0xff] 0.0
          %279 = vst [vmem:[#allocation2 + $0x78] sm:$0xff] 0.0
          %280 = vst [vmem:[#allocation2 + $0x80] sm:$0xff] 0.0
          %281 = vst [vmem:[#allocation2 + $0x88] sm:$0xff] 0.0
          %282 = vst [vmem:[#allocation2 + $0x90] sm:$0xff] 0.0
          %283 = vst [vmem:[#allocation2 + $0x98] sm:$0xff] 0.0
          %284 = vst [vmem:[#allocation2 + $0xa0] sm:$0xff] 0.0
          %285 = vst [vmem:[#allocation2 + $0xa8] sm:$0xff] 0.0
          %286 = vst [vmem:[#allocation2 + $0xb0] sm:$0xff] 0.0
          %287 = vst [vmem:[#allocation2 + $0xb8] sm:$0xff] 0.0
          %288 = vst [vmem:[#allocation2 + $0xc0] sm:$0xff] 0.0
          %289 = vst [vmem:[#allocation2 + $0xc8] sm:$0xff] 0.0
          %290 = vst [vmem:[#allocation2 + $0xd0] sm:$0xff] 0.0
          %291 = vst [vmem:[#allocation2 + $0xd8] sm:$0xff] 0.0
          %292 = vst [vmem:[#allocation2 + $0xe0] sm:$0xff] 0.0
          %293 = vst [vmem:[#allocation2 + $0xe8] sm:$0xff] 0.0
          %294 = vst [vmem:[#allocation2 + $0xf0] sm:$0xff] 0.0
          %295 = vst [vmem:[#allocation2 + $0xf8] sm:$0xff] 0.0
        $region36: #{_lambda_.21} parent=31 // pred_fallthru
          _
        %v296 = vld [vmem:[#allocation2] sm:$0xff]
        %v297 = vld [vmem:[#allocation2 + $0x8] sm:$0xff]
        %v298 = vld [vmem:[#allocation2 + $0x10] sm:$0xff]
        %v299 = vld [vmem:[#allocation2 + $0x18] sm:$0xff]
        %v300 = vld [vmem:[#allocation2 + $0x20] sm:$0xff]
        %v301 = vld [vmem:[#allocation2 + $0x28] sm:$0xff]
        %v302 = vld [vmem:[#allocation2 + $0x30] sm:$0xff]
        %v303 = vld [vmem:[#allocation2 + $0x38] sm:$0xff]
        %v304 = vld [vmem:[#allocation2 + $0x40] sm:$0xff]
        %v305 = vld [vmem:[#allocation2 + $0x48] sm:$0xff]
        %v306 = vld [vmem:[#allocation2 + $0x50] sm:$0xff]
        %v307 = vld [vmem:[#allocation2 + $0x58] sm:$0xff]
        %v308 = vld [vmem:[#allocation2 + $0x60] sm:$0xff]
        %v309 = vld [vmem:[#allocation2 + $0x68] sm:$0xff]
        %v310 = vld [vmem:[#allocation2 + $0x70] sm:$0xff]
        %v311 = vld [vmem:[#allocation2 + $0x78] sm:$0xff]
        %v312 = vld [vmem:[#allocation2 + $0x80] sm:$0xff]
        %v313 = vld [vmem:[#allocation2 + $0x88] sm:$0xff]
        %v314 = vld [vmem:[#allocation2 + $0x90] sm:$0xff]
        %v315 = vld [vmem:[#allocation2 + $0x98] sm:$0xff]
        %v316 = vld [vmem:[#allocation2 + $0xa0] sm:$0xff]
        %v317 = vld [vmem:[#allocation2 + $0xa8] sm:$0xff]
        %v318 = vld [vmem:[#allocation2 + $0xb0] sm:$0xff]
        %v319 = vld [vmem:[#allocation2 + $0xb8] sm:$0xff]
        %v320 = vld [vmem:[#allocation2 + $0xc0] sm:$0xff]
        %v321 = vld [vmem:[#allocation2 + $0xc8] sm:$0xff]
        %v322 = vld [vmem:[#allocation2 + $0xd0] sm:$0xff]
        %v323 = vld [vmem:[#allocation2 + $0xd8] sm:$0xff]
        %v324 = vld [vmem:[#allocation2 + $0xe0] sm:$0xff]
        %v325 = vld [vmem:[#allocation2 + $0xe8] sm:$0xff]
        %v326 = vld [vmem:[#allocation2 + $0xf0] sm:$0xff]
        %v327 = vld [vmem:[#allocation2 + $0xf8] sm:$0xff]
        %v328 = vld [vmem:[%s243] sm:$0xff]
        %v329 = vld [vmem:[%s243 + $0x8] sm:$0xff]
        %v330 = vld [vmem:[%s243 + $0x10] sm:$0xff]
        %v331 = vld [vmem:[%s243 + $0x18] sm:$0xff]
        %v332 = vld [vmem:[%s243 + $0x20] sm:$0xff]
        %v333 = vld [vmem:[%s243 + $0x28] sm:$0xff]
        %v334 = vld [vmem:[%s243 + $0x30] sm:$0xff]
        %v335 = vld [vmem:[%s243 + $0x38] sm:$0xff]
        %v336 = vld [vmem:[%s243 + $0x40] sm:$0xff]
        %v337 = vld [vmem:[%s243 + $0x48] sm:$0xff]
        %v338 = vld [vmem:[%s243 + $0x50] sm:$0xff]
        %v339 = vld [vmem:[%s243 + $0x58] sm:$0xff]
        %v340 = vld [vmem:[%s243 + $0x60] sm:$0xff]
        %v341 = vld [vmem:[%s243 + $0x68] sm:$0xff]
        %v342 = vld [vmem:[%s243 + $0x70] sm:$0xff]
        %v343 = vld [vmem:[%s243 + $0x78] sm:$0xff]
        %v344 = vld [vmem:[%s243 + $0x80] sm:$0xff]
        %v345 = vld [vmem:[%s243 + $0x88] sm:$0xff]
        %v346 = vld [vmem:[%s243 + $0x90] sm:$0xff]
        %v347 = vld [vmem:[%s243 + $0x98] sm:$0xff]
        %v348 = vld [vmem:[%s243 + $0xa0] sm:$0xff]
        %v349 = vld [vmem:[%s243 + $0xa8] sm:$0xff]
        %v350 = vld [vmem:[%s243 + $0xb0] sm:$0xff]
        %v351 = vld [vmem:[%s243 + $0xb8] sm:$0xff]
        %v352 = vld [vmem:[%s243 + $0xc0] sm:$0xff]
        %v353 = vld [vmem:[%s243 + $0xc8] sm:$0xff]
        %v354 = vld [vmem:[%s243 + $0xd0] sm:$0xff]
        %v355 = vld [vmem:[%s243 + $0xd8] sm:$0xff]
        %v356 = vld [vmem:[%s243 + $0xe0] sm:$0xff]
        %v357 = vld [vmem:[%s243 + $0xe8] sm:$0xff]
        %v358 = vld [vmem:[%s243 + $0xf0] sm:$0xff]
        %v359 = vld [vmem:[%s243 + $0xf8] sm:$0xff]
        %v360 = vld [vmem:[%s243 + $0x100] sm:$0xff]
        %v361 = vld [vmem:[%s243 + $0x108] sm:$0xff]
        %v362 = vld [vmem:[%s243 + $0x110] sm:$0xff]
        %v363 = vld [vmem:[%s243 + $0x118] sm:$0xff]
        %v364 = vld [vmem:[%s243 + $0x120] sm:$0xff]
        %v365 = vld [vmem:[%s243 + $0x128] sm:$0xff]
        %v366 = vld [vmem:[%s243 + $0x130] sm:$0xff]
        %v367 = vld [vmem:[%s243 + $0x138] sm:$0xff]
        %v368 = vld [vmem:[%s243 + $0x140] sm:$0xff]
        %v369 = vld [vmem:[%s243 + $0x148] sm:$0xff]
        %v370 = vld [vmem:[%s243 + $0x150] sm:$0xff]
        %v371 = vld [vmem:[%s243 + $0x158] sm:$0xff]
        %v372 = vld [vmem:[%s243 + $0x160] sm:$0xff]
        %v373 = vld [vmem:[%s243 + $0x168] sm:$0xff]
        %v374 = vld [vmem:[%s243 + $0x170] sm:$0xff]
        %v375 = vld [vmem:[%s243 + $0x178] sm:$0xff]
        %v376 = vld [vmem:[%s243 + $0x180] sm:$0xff]
        %v377 = vld [vmem:[%s243 + $0x188] sm:$0xff]
        %v378 = vld [vmem:[%s243 + $0x190] sm:$0xff]
        %v379 = vld [vmem:[%s243 + $0x198] sm:$0xff]
        %v380 = vld [vmem:[%s243 + $0x1a0] sm:$0xff]
        %v381 = vld [vmem:[%s243 + $0x1a8] sm:$0xff]
        %v382 = vld [vmem:[%s243 + $0x1b0] sm:$0xff]
        %v383 = vld [vmem:[%s243 + $0x1b8] sm:$0xff]
        %v384 = vld [vmem:[%s243 + $0x1c0] sm:$0xff]
        %v385 = vld [vmem:[%s243 + $0x1c8] sm:$0xff]
        %v386 = vld [vmem:[%s243 + $0x1d0] sm:$0xff]
        %v387 = vld [vmem:[%s243 + $0x1d8] sm:$0xff]
        %v388 = vld [vmem:[%s243 + $0x1e0] sm:$0xff]
        %v389 = vld [vmem:[%s243 + $0x1e8] sm:$0xff]
        %v390 = vld [vmem:[%s243 + $0x1f0] sm:$0xff]
        %v391 = vld [vmem:[%s243 + $0x1f8] sm:$0xff]
        %v392 = vld [vmem:[%s243 + $0x200] sm:$0xff]
        %v393 = vld [vmem:[%s243 + $0x208] sm:$0xff]
        %v394 = vld [vmem:[%s243 + $0x210] sm:$0xff]
        %v395 = vld [vmem:[%s243 + $0x218] sm:$0xff]
        %v396 = vld [vmem:[%s243 + $0x220] sm:$0xff]
        %v397 = vld [vmem:[%s243 + $0x228] sm:$0xff]
        %v398 = vld [vmem:[%s243 + $0x230] sm:$0xff]
        %v399 = vld [vmem:[%s243 + $0x238] sm:$0xff]
        %v400 = vld [vmem:[%s243 + $0x240] sm:$0xff]
        %v401 = vld [vmem:[%s243 + $0x248] sm:$0xff]
        %v402 = vld [vmem:[%s243 + $0x250] sm:$0xff]
        %v403 = vld [vmem:[%s243 + $0x258] sm:$0xff]
        %v404 = vld [vmem:[%s243 + $0x260] sm:$0xff]
        %v405 = vld [vmem:[%s243 + $0x268] sm:$0xff]
        %v406 = vld [vmem:[%s243 + $0x270] sm:$0xff]
        %v407 = vld [vmem:[%s243 + $0x278] sm:$0xff]
        %v408 = vld [vmem:[%s243 + $0x280] sm:$0xff]
        %v409 = vld [vmem:[%s243 + $0x288] sm:$0xff]
        %v410 = vld [vmem:[%s243 + $0x290] sm:$0xff]
        %v411 = vld [vmem:[%s243 + $0x298] sm:$0xff]
        %v412 = vld [vmem:[%s243 + $0x2a0] sm:$0xff]
        %v413 = vld [vmem:[%s243 + $0x2a8] sm:$0xff]
        %v414 = vld [vmem:[%s243 + $0x2b0] sm:$0xff]
        %v415 = vld [vmem:[%s243 + $0x2b8] sm:$0xff]
        %v416 = vld [vmem:[%s243 + $0x2c0] sm:$0xff]
        %v417 = vld [vmem:[%s243 + $0x2c8] sm:$0xff]
        %v418 = vld [vmem:[%s243 + $0x2d0] sm:$0xff]
        %v419 = vld [vmem:[%s243 + $0x2d8] sm:$0xff]
        %v420 = vld [vmem:[%s243 + $0x2e0] sm:$0xff]
        %v421 = vld [vmem:[%s243 + $0x2e8] sm:$0xff]
        %v422 = vld [vmem:[%s243 + $0x2f0] sm:$0xff]
        %v423 = vld [vmem:[%s243 + $0x2f8] sm:$0xff]
        %v424 = vld [vmem:[%s243 + $0x300] sm:$0xff]
        %v425 = vld [vmem:[%s243 + $0x308] sm:$0xff]
        %v426 = vld [vmem:[%s243 + $0x310] sm:$0xff]
        %v427 = vld [vmem:[%s243 + $0x318] sm:$0xff]
        %v428 = vld [vmem:[%s243 + $0x320] sm:$0xff]
        %v429 = vld [vmem:[%s243 + $0x328] sm:$0xff]
        %v430 = vld [vmem:[%s243 + $0x330] sm:$0xff]
        %v431 = vld [vmem:[%s243 + $0x338] sm:$0xff]
        %v432 = vld [vmem:[%s243 + $0x340] sm:$0xff]
        %v433 = vld [vmem:[%s243 + $0x348] sm:$0xff]
        %v434 = vld [vmem:[%s243 + $0x350] sm:$0xff]
        %v435 = vld [vmem:[%s243 + $0x358] sm:$0xff]
        %v436 = vld [vmem:[%s243 + $0x360] sm:$0xff]
        %v437 = vld [vmem:[%s243 + $0x368] sm:$0xff]
        %v438 = vld [vmem:[%s243 + $0x370] sm:$0xff]
        %v439 = vld [vmem:[%s243 + $0x378] sm:$0xff]
        %v440 = vld [vmem:[%s243 + $0x380] sm:$0xff]
        %v441 = vld [vmem:[%s243 + $0x388] sm:$0xff]
        %v442 = vld [vmem:[%s243 + $0x390] sm:$0xff]
        %v443 = vld [vmem:[%s243 + $0x398] sm:$0xff]
        %v444 = vld [vmem:[%s243 + $0x3a0] sm:$0xff]
        %v445 = vld [vmem:[%s243 + $0x3a8] sm:$0xff]
        %v446 = vld [vmem:[%s243 + $0x3b0] sm:$0xff]
        %v447 = vld [vmem:[%s243 + $0x3b8] sm:$0xff]
        %v448 = vld [vmem:[%s243 + $0x3c0] sm:$0xff]
        %v449 = vld [vmem:[%s243 + $0x3c8] sm:$0xff]
        %v450 = vld [vmem:[%s243 + $0x3d0] sm:$0xff]
        %v451 = vld [vmem:[%s243 + $0x3d8] sm:$0xff]
        %v452 = vld [vmem:[%s243 + $0x3e0] sm:$0xff]
        %v453 = vld [vmem:[%s243 + $0x3e8] sm:$0xff]
        %v454 = vld [vmem:[%s243 + $0x3f0] sm:$0xff]
        %v455 = vld [vmem:[%s243 + $0x3f8] sm:$0xff]
        %v456 = vld [vmem:[%s253] sm:$0xf]
        %v457 = vld [vmem:[%s253 + $0x4] sm:$0xf]
        %v458 = vld [vmem:[%s253 + $0x8] sm:$0xf]
        %v459 = vld [vmem:[%s253 + $0xc] sm:$0xf]
        %v460 = vld [vmem:[%s253 + $0x10] sm:$0xf]
        %v461 = vld [vmem:[%s253 + $0x14] sm:$0xf]
        %v462 = vld [vmem:[%s253 + $0x18] sm:$0xf]
        %v463 = vld [vmem:[%s253 + $0x1c] sm:$0xf]
        %v464 = vld [vmem:[%s253 + $0x20] sm:$0xf]
        %v465 = vld [vmem:[%s253 + $0x24] sm:$0xf]
        %v466 = vld [vmem:[%s253 + $0x28] sm:$0xf]
        %v467 = vld [vmem:[%s253 + $0x2c] sm:$0xf]
        %v468 = vld [vmem:[%s253 + $0x30] sm:$0xf]
        %v469 = vld [vmem:[%s253 + $0x34] sm:$0xf]
        %v470 = vld [vmem:[%s253 + $0x38] sm:$0xf]
        %v471 = vld [vmem:[%s253 + $0x3c] sm:$0xf]
        %v472 = vld [vmem:[%s253 + $0x40] sm:$0xf]
        %v473 = vld [vmem:[%s253 + $0x44] sm:$0xf]
        %v474 = vld [vmem:[%s253 + $0x48] sm:$0xf]
        %v475 = vld [vmem:[%s253 + $0x4c] sm:$0xf]
        %v476 = vld [vmem:[%s253 + $0x50] sm:$0xf]
        %v477 = vld [vmem:[%s253 + $0x54] sm:$0xf]
        %v478 = vld [vmem:[%s253 + $0x58] sm:$0xf]
        %v479 = vld [vmem:[%s253 + $0x5c] sm:$0xf]
        %v480 = vld [vmem:[%s253 + $0x60] sm:$0xf]
        %v481 = vld [vmem:[%s253 + $0x64] sm:$0xf]
        %v482 = vld [vmem:[%s253 + $0x68] sm:$0xf]
        %v483 = vld [vmem:[%s253 + $0x6c] sm:$0xf]
        %v484 = vld [vmem:[%s253 + $0x70] sm:$0xf]
        %v485 = vld [vmem:[%s253 + $0x74] sm:$0xf]
        %v486 = vld [vmem:[%s253 + $0x78] sm:$0xf]
        %v487 = vld [vmem:[%s253 + $0x7c] sm:$0xf]
        %v488 = vld [vmem:[%s253 + $0x80] sm:$0xf]
        %v489 = vld [vmem:[%s253 + $0x84] sm:$0xf]
        %v490 = vld [vmem:[%s253 + $0x88] sm:$0xf]
        %v491 = vld [vmem:[%s253 + $0x8c] sm:$0xf]
        %v492 = vld [vmem:[%s253 + $0x90] sm:$0xf]
        %v493 = vld [vmem:[%s253 + $0x94] sm:$0xf]
        %v494 = vld [vmem:[%s253 + $0x98] sm:$0xf]
        %v495 = vld [vmem:[%s253 + $0x9c] sm:$0xf]
        %v496 = vld [vmem:[%s253 + $0xa0] sm:$0xf]
        %v497 = vld [vmem:[%s253 + $0xa4] sm:$0xf]
        %v498 = vld [vmem:[%s253 + $0xa8] sm:$0xf]
        %v499 = vld [vmem:[%s253 + $0xac] sm:$0xf]
        %v500 = vld [vmem:[%s253 + $0xb0] sm:$0xf]
        %v501 = vld [vmem:[%s253 + $0xb4] sm:$0xf]
        %v502 = vld [vmem:[%s253 + $0xb8] sm:$0xf]
        %v503 = vld [vmem:[%s253 + $0xbc] sm:$0xf]
        %v504 = vld [vmem:[%s253 + $0xc0] sm:$0xf]
        %v505 = vld [vmem:[%s253 + $0xc4] sm:$0xf]
        %v506 = vld [vmem:[%s253 + $0xc8] sm:$0xf]
        %v507 = vld [vmem:[%s253 + $0xcc] sm:$0xf]
        %v508 = vld [vmem:[%s253 + $0xd0] sm:$0xf]
        %v509 = vld [vmem:[%s253 + $0xd4] sm:$0xf]
        %v510 = vld [vmem:[%s253 + $0xd8] sm:$0xf]
        %v511 = vld [vmem:[%s253 + $0xdc] sm:$0xf]
        %v512 = vld [vmem:[%s253 + $0xe0] sm:$0xf]
        %v513 = vld [vmem:[%s253 + $0xe4] sm:$0xf]
        %v514 = vld [vmem:[%s253 + $0xe8] sm:$0xf]
        %v515 = vld [vmem:[%s253 + $0xec] sm:$0xf]
        %v516 = vld [vmem:[%s253 + $0xf0] sm:$0xf]
        %v517 = vld [vmem:[%s253 + $0xf4] sm:$0xf]
        %v518 = vld [vmem:[%s253 + $0xf8] sm:$0xf]
        %v519 = vld [vmem:[%s253 + $0xfc] sm:$0xf]
        %v520 = vld [vmem:[%s253 + $0x100] sm:$0xf]
        %v521 = vld [vmem:[%s253 + $0x104] sm:$0xf]
        %v522 = vld [vmem:[%s253 + $0x108] sm:$0xf]
        %v523 = vld [vmem:[%s253 + $0x10c] sm:$0xf]
        %v524 = vld [vmem:[%s253 + $0x110] sm:$0xf]
        %v525 = vld [vmem:[%s253 + $0x114] sm:$0xf]
        %v526 = vld [vmem:[%s253 + $0x118] sm:$0xf]
        %v527 = vld [vmem:[%s253 + $0x11c] sm:$0xf]
        %v528 = vld [vmem:[%s253 + $0x120] sm:$0xf]
        %v529 = vld [vmem:[%s253 + $0x124] sm:$0xf]
        %v530 = vld [vmem:[%s253 + $0x128] sm:$0xf]
        %v531 = vld [vmem:[%s253 + $0x12c] sm:$0xf]
        %v532 = vld [vmem:[%s253 + $0x130] sm:$0xf]
        %v533 = vld [vmem:[%s253 + $0x134] sm:$0xf]
        %v534 = vld [vmem:[%s253 + $0x138] sm:$0xf]
        %v535 = vld [vmem:[%s253 + $0x13c] sm:$0xf]
        %v536 = vld [vmem:[%s253 + $0x140] sm:$0xf]
        %v537 = vld [vmem:[%s253 + $0x144] sm:$0xf]
        %v538 = vld [vmem:[%s253 + $0x148] sm:$0xf]
        %v539 = vld [vmem:[%s253 + $0x14c] sm:$0xf]
        %v540 = vld [vmem:[%s253 + $0x150] sm:$0xf]
        %v541 = vld [vmem:[%s253 + $0x154] sm:$0xf]
        %v542 = vld [vmem:[%s253 + $0x158] sm:$0xf]
        %v543 = vld [vmem:[%s253 + $0x15c] sm:$0xf]
        %v544 = vld [vmem:[%s253 + $0x160] sm:$0xf]
        %v545 = vld [vmem:[%s253 + $0x164] sm:$0xf]
        %v546 = vld [vmem:[%s253 + $0x168] sm:$0xf]
        %v547 = vld [vmem:[%s253 + $0x16c] sm:$0xf]
        %v548 = vld [vmem:[%s253 + $0x170] sm:$0xf]
        %v549 = vld [vmem:[%s253 + $0x174] sm:$0xf]
        %v550 = vld [vmem:[%s253 + $0x178] sm:$0xf]
        %v551 = vld [vmem:[%s253 + $0x17c] sm:$0xf]
        %v552 = vld [vmem:[%s253 + $0x180] sm:$0xf]
        %v553 = vld [vmem:[%s253 + $0x184] sm:$0xf]
        %v554 = vld [vmem:[%s253 + $0x188] sm:$0xf]
        %v555 = vld [vmem:[%s253 + $0x18c] sm:$0xf]
        %v556 = vld [vmem:[%s253 + $0x190] sm:$0xf]
        %v557 = vld [vmem:[%s253 + $0x194] sm:$0xf]
        %v558 = vld [vmem:[%s253 + $0x198] sm:$0xf]
        %v559 = vld [vmem:[%s253 + $0x19c] sm:$0xf]
        %v560 = vld [vmem:[%s253 + $0x1a0] sm:$0xf]
        %v561 = vld [vmem:[%s253 + $0x1a4] sm:$0xf]
        %v562 = vld [vmem:[%s253 + $0x1a8] sm:$0xf]
        %v563 = vld [vmem:[%s253 + $0x1ac] sm:$0xf]
        %v564 = vld [vmem:[%s253 + $0x1b0] sm:$0xf]
        %v565 = vld [vmem:[%s253 + $0x1b4] sm:$0xf]
        %v566 = vld [vmem:[%s253 + $0x1b8] sm:$0xf]
        %v567 = vld [vmem:[%s253 + $0x1bc] sm:$0xf]
        %v568 = vld [vmem:[%s253 + $0x1c0] sm:$0xf]
        %v569 = vld [vmem:[%s253 + $0x1c4] sm:$0xf]
        %v570 = vld [vmem:[%s253 + $0x1c8] sm:$0xf]
        %v571 = vld [vmem:[%s253 + $0x1cc] sm:$0xf]
        %v572 = vld [vmem:[%s253 + $0x1d0] sm:$0xf]
        %v573 = vld [vmem:[%s253 + $0x1d4] sm:$0xf]
        %v574 = vld [vmem:[%s253 + $0x1d8] sm:$0xf]
        %v575 = vld [vmem:[%s253 + $0x1dc] sm:$0xf]
        %v576 = vld [vmem:[%s253 + $0x1e0] sm:$0xf]
        %v577 = vld [vmem:[%s253 + $0x1e4] sm:$0xf]
        %v578 = vld [vmem:[%s253 + $0x1e8] sm:$0xf]
        %v579 = vld [vmem:[%s253 + $0x1ec] sm:$0xf]
        %v580 = vld [vmem:[%s253 + $0x1f0] sm:$0xf]
        %v581 = vld [vmem:[%s253 + $0x1f4] sm:$0xf]
        %v582 = vld [vmem:[%s253 + $0x1f8] sm:$0xf]
        %v583 = vld [vmem:[%s253 + $0x1fc] sm:$0xf]
        %v712 = vunpack.c.l.b16 %v328
        %v713 = vunpack.c.h.b16 %v328
        %v714 = vunpack.c.l.b16 %v329
        %v715 = vunpack.c.h.b16 %v329
        %v716 = vunpack.c.l.b16 %v330
        %v717 = vunpack.c.h.b16 %v330
        %v718 = vunpack.c.l.b16 %v331
        %v719 = vunpack.c.h.b16 %v331
        %v720 = vunpack.c.l.b16 %v332
        %v721 = vunpack.c.h.b16 %v332
        %v722 = vunpack.c.l.b16 %v333
        %v723 = vunpack.c.h.b16 %v333
        %v724 = vunpack.c.l.b16 %v334
        %v725 = vunpack.c.h.b16 %v334
        %v726 = vunpack.c.l.b16 %v335
        %v727 = vunpack.c.h.b16 %v335
        %v728 = vunpack.c.l.b16 %v336
        %v729 = vunpack.c.h.b16 %v336
        %v730 = vunpack.c.l.b16 %v337
        %v731 = vunpack.c.h.b16 %v337
        %v732 = vunpack.c.l.b16 %v338
        %v733 = vunpack.c.h.b16 %v338
        %v734 = vunpack.c.l.b16 %v339
        %v735 = vunpack.c.h.b16 %v339
        %v736 = vunpack.c.l.b16 %v340
        %v737 = vunpack.c.h.b16 %v340
        %v738 = vunpack.c.l.b16 %v341
        %v739 = vunpack.c.h.b16 %v341
        %v740 = vunpack.c.l.b16 %v342
        %v741 = vunpack.c.h.b16 %v342
        %v742 = vunpack.c.l.b16 %v343
        %v743 = vunpack.c.h.b16 %v343
        %v744 = vunpack.c.l.b16 %v344
        %v745 = vunpack.c.h.b16 %v344
        %v746 = vunpack.c.l.b16 %v345
        %v747 = vunpack.c.h.b16 %v345
        %v748 = vunpack.c.l.b16 %v346
        %v749 = vunpack.c.h.b16 %v346
        %v750 = vunpack.c.l.b16 %v347
        %v751 = vunpack.c.h.b16 %v347
        %v752 = vunpack.c.l.b16 %v348
        %v753 = vunpack.c.h.b16 %v348
        %v754 = vunpack.c.l.b16 %v349
        %v755 = vunpack.c.h.b16 %v349
        %v756 = vunpack.c.l.b16 %v350
        %v757 = vunpack.c.h.b16 %v350
        %v758 = vunpack.c.l.b16 %v351
        %v759 = vunpack.c.h.b16 %v351
        %v760 = vunpack.c.l.b16 %v352
        %v761 = vunpack.c.h.b16 %v352
        %v762 = vunpack.c.l.b16 %v353
        %v763 = vunpack.c.h.b16 %v353
        %v764 = vunpack.c.l.b16 %v354
        %v765 = vunpack.c.h.b16 %v354
        %v766 = vunpack.c.l.b16 %v355
        %v767 = vunpack.c.h.b16 %v355
        %v768 = vunpack.c.l.b16 %v356
        %v769 = vunpack.c.h.b16 %v356
        %v770 = vunpack.c.l.b16 %v357
        %v771 = vunpack.c.h.b16 %v357
        %v772 = vunpack.c.l.b16 %v358
        %v773 = vunpack.c.h.b16 %v358
        %v774 = vunpack.c.l.b16 %v359
        %v775 = vunpack.c.h.b16 %v359
        %v776 = vunpack.c.l.b16 %v360
        %v777 = vunpack.c.h.b16 %v360
        %v778 = vunpack.c.l.b16 %v361
        %v779 = vunpack.c.h.b16 %v361
        %v780 = vunpack.c.l.b16 %v362
        %v781 = vunpack.c.h.b16 %v362
        %v782 = vunpack.c.l.b16 %v363
        %v783 = vunpack.c.h.b16 %v363
        %v784 = vunpack.c.l.b16 %v364
        %v785 = vunpack.c.h.b16 %v364
        %v786 = vunpack.c.l.b16 %v365
        %v787 = vunpack.c.h.b16 %v365
        %v788 = vunpack.c.l.b16 %v366
        %v789 = vunpack.c.h.b16 %v366
        %v790 = vunpack.c.l.b16 %v367
        %v791 = vunpack.c.h.b16 %v367
        %v792 = vunpack.c.l.b16 %v368
        %v793 = vunpack.c.h.b16 %v368
        %v794 = vunpack.c.l.b16 %v369
        %v795 = vunpack.c.h.b16 %v369
        %v796 = vunpack.c.l.b16 %v370
        %v797 = vunpack.c.h.b16 %v370
        %v798 = vunpack.c.l.b16 %v371
        %v799 = vunpack.c.h.b16 %v371
        %v800 = vunpack.c.l.b16 %v372
        %v801 = vunpack.c.h.b16 %v372
        %v802 = vunpack.c.l.b16 %v373
        %v803 = vunpack.c.h.b16 %v373
        %v804 = vunpack.c.l.b16 %v374
        %v805 = vunpack.c.h.b16 %v374
        %v806 = vunpack.c.l.b16 %v375
        %v807 = vunpack.c.h.b16 %v375
        %v808 = vunpack.c.l.b16 %v376
        %v809 = vunpack.c.h.b16 %v376
        %v810 = vunpack.c.l.b16 %v377
        %v811 = vunpack.c.h.b16 %v377
        %v812 = vunpack.c.l.b16 %v378
        %v813 = vunpack.c.h.b16 %v378
        %v814 = vunpack.c.l.b16 %v379
        %v815 = vunpack.c.h.b16 %v379
        %v816 = vunpack.c.l.b16 %v380
        %v817 = vunpack.c.h.b16 %v380
        %v818 = vunpack.c.l.b16 %v381
        %v819 = vunpack.c.h.b16 %v381
        %v820 = vunpack.c.l.b16 %v382
        %v821 = vunpack.c.h.b16 %v382
        %v822 = vunpack.c.l.b16 %v383
        %v823 = vunpack.c.h.b16 %v383
        %v824 = vunpack.c.l.b16 %v384
        %v825 = vunpack.c.h.b16 %v384
        %v826 = vunpack.c.l.b16 %v385
        %v827 = vunpack.c.h.b16 %v385
        %v828 = vunpack.c.l.b16 %v386
        %v829 = vunpack.c.h.b16 %v386
        %v830 = vunpack.c.l.b16 %v387
        %v831 = vunpack.c.h.b16 %v387
        %v832 = vunpack.c.l.b16 %v388
        %v833 = vunpack.c.h.b16 %v388
        %v834 = vunpack.c.l.b16 %v389
        %v835 = vunpack.c.h.b16 %v389
        %v836 = vunpack.c.l.b16 %v390
        %v837 = vunpack.c.h.b16 %v390
        %v838 = vunpack.c.l.b16 %v391
        %v839 = vunpack.c.h.b16 %v391
        %v840 = vunpack.c.l.b16 %v392
        %v841 = vunpack.c.h.b16 %v392
        %v842 = vunpack.c.l.b16 %v393
        %v843 = vunpack.c.h.b16 %v393
        %v844 = vunpack.c.l.b16 %v394
        %v845 = vunpack.c.h.b16 %v394
        %v846 = vunpack.c.l.b16 %v395
        %v847 = vunpack.c.h.b16 %v395
        %v848 = vunpack.c.l.b16 %v396
        %v849 = vunpack.c.h.b16 %v396
        %v850 = vunpack.c.l.b16 %v397
        %v851 = vunpack.c.h.b16 %v397
        %v852 = vunpack.c.l.b16 %v398
        %v853 = vunpack.c.h.b16 %v398
        %v854 = vunpack.c.l.b16 %v399
        %v855 = vunpack.c.h.b16 %v399
        %v856 = vunpack.c.l.b16 %v400
        %v857 = vunpack.c.h.b16 %v400
        %v858 = vunpack.c.l.b16 %v401
        %v859 = vunpack.c.h.b16 %v401
        %v860 = vunpack.c.l.b16 %v402
        %v861 = vunpack.c.h.b16 %v402
        %v862 = vunpack.c.l.b16 %v403
        %v863 = vunpack.c.h.b16 %v403
        %v864 = vunpack.c.l.b16 %v404
        %v865 = vunpack.c.h.b16 %v404
        %v866 = vunpack.c.l.b16 %v405
        %v867 = vunpack.c.h.b16 %v405
        %v868 = vunpack.c.l.b16 %v406
        %v869 = vunpack.c.h.b16 %v406
        %v870 = vunpack.c.l.b16 %v407
        %v871 = vunpack.c.h.b16 %v407
        %v872 = vunpack.c.l.b16 %v408
        %v873 = vunpack.c.h.b16 %v408
        %v874 = vunpack.c.l.b16 %v409
        %v875 = vunpack.c.h.b16 %v409
        %v876 = vunpack.c.l.b16 %v410
        %v877 = vunpack.c.h.b16 %v410
        %v878 = vunpack.c.l.b16 %v411
        %v879 = vunpack.c.h.b16 %v411
        %v880 = vunpack.c.l.b16 %v412
        %v881 = vunpack.c.h.b16 %v412
        %v882 = vunpack.c.l.b16 %v413
        %v883 = vunpack.c.h.b16 %v413
        %v884 = vunpack.c.l.b16 %v414
        %v885 = vunpack.c.h.b16 %v414
        %v886 = vunpack.c.l.b16 %v415
        %v887 = vunpack.c.h.b16 %v415
        %v888 = vunpack.c.l.b16 %v416
        %v889 = vunpack.c.h.b16 %v416
        %v890 = vunpack.c.l.b16 %v417
        %v891 = vunpack.c.h.b16 %v417
        %v892 = vunpack.c.l.b16 %v418
        %v893 = vunpack.c.h.b16 %v418
        %v894 = vunpack.c.l.b16 %v419
        %v895 = vunpack.c.h.b16 %v419
        %v896 = vunpack.c.l.b16 %v420
        %v897 = vunpack.c.h.b16 %v420
        %v898 = vunpack.c.l.b16 %v421
        %v899 = vunpack.c.h.b16 %v421
        %v900 = vunpack.c.l.b16 %v422
        %v901 = vunpack.c.h.b16 %v422
        %v902 = vunpack.c.l.b16 %v423
        %v903 = vunpack.c.h.b16 %v423
        %v904 = vunpack.c.l.b16 %v424
        %v905 = vunpack.c.h.b16 %v424
        %v906 = vunpack.c.l.b16 %v425
        %v907 = vunpack.c.h.b16 %v425
        %v908 = vunpack.c.l.b16 %v426
        %v909 = vunpack.c.h.b16 %v426
        %v910 = vunpack.c.l.b16 %v427
        %v911 = vunpack.c.h.b16 %v427
        %v912 = vunpack.c.l.b16 %v428
        %v913 = vunpack.c.h.b16 %v428
        %v914 = vunpack.c.l.b16 %v429
        %v915 = vunpack.c.h.b16 %v429
        %v916 = vunpack.c.l.b16 %v430
        %v917 = vunpack.c.h.b16 %v430
        %v918 = vunpack.c.l.b16 %v431
        %v919 = vunpack.c.h.b16 %v431
        %v920 = vunpack.c.l.b16 %v432
        %v921 = vunpack.c.h.b16 %v432
        %v922 = vunpack.c.l.b16 %v433
        %v923 = vunpack.c.h.b16 %v433
        %v924 = vunpack.c.l.b16 %v434
        %v925 = vunpack.c.h.b16 %v434
        %v926 = vunpack.c.l.b16 %v435
        %v927 = vunpack.c.h.b16 %v435
        %v928 = vunpack.c.l.b16 %v436
        %v929 = vunpack.c.h.b16 %v436
        %v930 = vunpack.c.l.b16 %v437
        %v931 = vunpack.c.h.b16 %v437
        %v932 = vunpack.c.l.b16 %v438
        %v933 = vunpack.c.h.b16 %v438
        %v934 = vunpack.c.l.b16 %v439
        %v935 = vunpack.c.h.b16 %v439
        %v936 = vunpack.c.l.b16 %v440
        %v937 = vunpack.c.h.b16 %v440
        %v938 = vunpack.c.l.b16 %v441
        %v939 = vunpack.c.h.b16 %v441
        %v940 = vunpack.c.l.b16 %v442
        %v941 = vunpack.c.h.b16 %v442
        %v942 = vunpack.c.l.b16 %v443
        %v943 = vunpack.c.h.b16 %v443
        %v944 = vunpack.c.l.b16 %v444
        %v945 = vunpack.c.h.b16 %v444
        %v946 = vunpack.c.l.b16 %v445
        %v947 = vunpack.c.h.b16 %v445
        %v948 = vunpack.c.l.b16 %v446
        %v949 = vunpack.c.h.b16 %v446
        %v950 = vunpack.c.l.b16 %v447
        %v951 = vunpack.c.h.b16 %v447
        %v952 = vunpack.c.l.b16 %v448
        %v953 = vunpack.c.h.b16 %v448
        %v954 = vunpack.c.l.b16 %v449
        %v955 = vunpack.c.h.b16 %v449
        %v956 = vunpack.c.l.b16 %v450
        %v957 = vunpack.c.h.b16 %v450
        %v958 = vunpack.c.l.b16 %v451
        %v959 = vunpack.c.h.b16 %v451
        %v960 = vunpack.c.l.b16 %v452
        %v961 = vunpack.c.h.b16 %v452
        %v962 = vunpack.c.l.b16 %v453
        %v963 = vunpack.c.h.b16 %v453
        %v964 = vunpack.c.l.b16 %v454
        %v965 = vunpack.c.h.b16 %v454
        %v966 = vunpack.c.l.b16 %v455
        %v967 = vunpack.c.h.b16 %v455
        %v968 = vpack.c.b16 %v720, %v712
        %v969 = vpack.c.b16 %v721, %v713
        %v970 = vpack.c.b16 %v722, %v714
        %v971 = vpack.c.b16 %v723, %v715
        %v972 = vpack.c.b16 %v724, %v716
        %v973 = vpack.c.b16 %v725, %v717
        %v974 = vpack.c.b16 %v726, %v718
        %v975 = vpack.c.b16 %v727, %v719
        %v976 = vpack.c.b16 %v736, %v728
        %v977 = vpack.c.b16 %v737, %v729
        %v978 = vpack.c.b16 %v738, %v730
        %v979 = vpack.c.b16 %v739, %v731
        %v980 = vpack.c.b16 %v740, %v732
        %v981 = vpack.c.b16 %v741, %v733
        %v982 = vpack.c.b16 %v742, %v734
        %v983 = vpack.c.b16 %v743, %v735
        %v984 = vpack.c.b16 %v752, %v744
        %v985 = vpack.c.b16 %v753, %v745
        %v986 = vpack.c.b16 %v754, %v746
        %v987 = vpack.c.b16 %v755, %v747
        %v988 = vpack.c.b16 %v756, %v748
        %v989 = vpack.c.b16 %v757, %v749
        %v990 = vpack.c.b16 %v758, %v750
        %v991 = vpack.c.b16 %v759, %v751
        %v992 = vpack.c.b16 %v768, %v760
        %v993 = vpack.c.b16 %v769, %v761
        %v994 = vpack.c.b16 %v770, %v762
        %v995 = vpack.c.b16 %v771, %v763
        %v996 = vpack.c.b16 %v772, %v764
        %v997 = vpack.c.b16 %v773, %v765
        %v998 = vpack.c.b16 %v774, %v766
        %v999 = vpack.c.b16 %v775, %v767
        %v1000 = vpack.c.b16 %v784, %v776
        %v1001 = vpack.c.b16 %v785, %v777
        %v1002 = vpack.c.b16 %v786, %v778
        %v1003 = vpack.c.b16 %v787, %v779
        %v1004 = vpack.c.b16 %v788, %v780
        %v1005 = vpack.c.b16 %v789, %v781
        %v1006 = vpack.c.b16 %v790, %v782
        %v1007 = vpack.c.b16 %v791, %v783
        %v1008 = vpack.c.b16 %v800, %v792
        %v1009 = vpack.c.b16 %v801, %v793
        %v1010 = vpack.c.b16 %v802, %v794
        %v1011 = vpack.c.b16 %v803, %v795
        %v1012 = vpack.c.b16 %v804, %v796
        %v1013 = vpack.c.b16 %v805, %v797
        %v1014 = vpack.c.b16 %v806, %v798
        %v1015 = vpack.c.b16 %v807, %v799
        %v1016 = vpack.c.b16 %v816, %v808
        %v1017 = vpack.c.b16 %v817, %v809
        %v1018 = vpack.c.b16 %v818, %v810
        %v1019 = vpack.c.b16 %v819, %v811
        %v1020 = vpack.c.b16 %v820, %v812
        %v1021 = vpack.c.b16 %v821, %v813
        %v1022 = vpack.c.b16 %v822, %v814
        %v1023 = vpack.c.b16 %v823, %v815
        %v1024 = vpack.c.b16 %v832, %v824
        %v1025 = vpack.c.b16 %v833, %v825
        %v1026 = vpack.c.b16 %v834, %v826
        %v1027 = vpack.c.b16 %v835, %v827
        %v1028 = vpack.c.b16 %v836, %v828
        %v1029 = vpack.c.b16 %v837, %v829
        %v1030 = vpack.c.b16 %v838, %v830
        %v1031 = vpack.c.b16 %v839, %v831
        %v1032 = vpack.c.b16 %v848, %v840
        %v1033 = vpack.c.b16 %v849, %v841
        %v1034 = vpack.c.b16 %v850, %v842
        %v1035 = vpack.c.b16 %v851, %v843
        %v1036 = vpack.c.b16 %v852, %v844
        %v1037 = vpack.c.b16 %v853, %v845
        %v1038 = vpack.c.b16 %v854, %v846
        %v1039 = vpack.c.b16 %v855, %v847
        %v1040 = vpack.c.b16 %v864, %v856
        %v1041 = vpack.c.b16 %v865, %v857
        %v1042 = vpack.c.b16 %v866, %v858
        %v1043 = vpack.c.b16 %v867, %v859
        %v1044 = vpack.c.b16 %v868, %v860
        %v1045 = vpack.c.b16 %v869, %v861
        %v1046 = vpack.c.b16 %v870, %v862
        %v1047 = vpack.c.b16 %v871, %v863
        %v1048 = vpack.c.b16 %v880, %v872
        %v1049 = vpack.c.b16 %v881, %v873
        %v1050 = vpack.c.b16 %v882, %v874
        %v1051 = vpack.c.b16 %v883, %v875
        %v1052 = vpack.c.b16 %v884, %v876
        %v1053 = vpack.c.b16 %v885, %v877
        %v1054 = vpack.c.b16 %v886, %v878
        %v1055 = vpack.c.b16 %v887, %v879
        %v1056 = vpack.c.b16 %v896, %v888
        %v1057 = vpack.c.b16 %v897, %v889
        %v1058 = vpack.c.b16 %v898, %v890
        %v1059 = vpack.c.b16 %v899, %v891
        %v1060 = vpack.c.b16 %v900, %v892
        %v1061 = vpack.c.b16 %v901, %v893
        %v1062 = vpack.c.b16 %v902, %v894
        %v1063 = vpack.c.b16 %v903, %v895
        %v1064 = vpack.c.b16 %v912, %v904
        %v1065 = vpack.c.b16 %v913, %v905
        %v1066 = vpack.c.b16 %v914, %v906
        %v1067 = vpack.c.b16 %v915, %v907
        %v1068 = vpack.c.b16 %v916, %v908
        %v1069 = vpack.c.b16 %v917, %v909
        %v1070 = vpack.c.b16 %v918, %v910
        %v1071 = vpack.c.b16 %v919, %v911
        %v1072 = vpack.c.b16 %v928, %v920
        %v1073 = vpack.c.b16 %v929, %v921
        %v1074 = vpack.c.b16 %v930, %v922
        %v1075 = vpack.c.b16 %v931, %v923
        %v1076 = vpack.c.b16 %v932, %v924
        %v1077 = vpack.c.b16 %v933, %v925
        %v1078 = vpack.c.b16 %v934, %v926
        %v1079 = vpack.c.b16 %v935, %v927
        %v1080 = vpack.c.b16 %v944, %v936
        %v1081 = vpack.c.b16 %v945, %v937
        %v1082 = vpack.c.b16 %v946, %v938
        %v1083 = vpack.c.b16 %v947, %v939
        %v1084 = vpack.c.b16 %v948, %v940
        %v1085 = vpack.c.b16 %v949, %v941
        %v1086 = vpack.c.b16 %v950, %v942
        %v1087 = vpack.c.b16 %v951, %v943
        %v1088 = vpack.c.b16 %v960, %v952
        %v1089 = vpack.c.b16 %v961, %v953
        %v1090 = vpack.c.b16 %v962, %v954
        %v1091 = vpack.c.b16 %v963, %v955
        %v1092 = vpack.c.b16 %v964, %v956
        %v1093 = vpack.c.b16 %v965, %v957
        %v1094 = vpack.c.b16 %v966, %v958
        %v1095 = vpack.c.b16 %v967, %v959
        %v1352 = vunpack.c.l.b16 %v456
        %v1353 = vunpack.c.l.b16 %v457
        %v1354 = vunpack.c.l.b16 %v458
        %v1355 = vunpack.c.l.b16 %v459
        %v1356 = vunpack.c.l.b16 %v460
        %v1357 = vunpack.c.l.b16 %v461
        %v1358 = vunpack.c.l.b16 %v462
        %v1359 = vunpack.c.l.b16 %v463
        %v1360 = vunpack.c.l.b16 %v464
        %v1361 = vunpack.c.l.b16 %v465
        %v1362 = vunpack.c.l.b16 %v466
        %v1363 = vunpack.c.l.b16 %v467
        %v1364 = vunpack.c.l.b16 %v468
        %v1365 = vunpack.c.l.b16 %v469
        %v1366 = vunpack.c.l.b16 %v470
        %v1367 = vunpack.c.l.b16 %v471
        %v1368 = vunpack.c.l.b16 %v472
        %v1369 = vunpack.c.l.b16 %v473
        %v1370 = vunpack.c.l.b16 %v474
        %v1371 = vunpack.c.l.b16 %v475
        %v1372 = vunpack.c.l.b16 %v476
        %v1373 = vunpack.c.l.b16 %v477
        %v1374 = vunpack.c.l.b16 %v478
        %v1375 = vunpack.c.l.b16 %v479
        %v1376 = vunpack.c.l.b16 %v480
        %v1377 = vunpack.c.l.b16 %v481
        %v1378 = vunpack.c.l.b16 %v482
        %v1379 = vunpack.c.l.b16 %v483
        %v1380 = vunpack.c.l.b16 %v484
        %v1381 = vunpack.c.l.b16 %v485
        %v1382 = vunpack.c.l.b16 %v486
        %v1383 = vunpack.c.l.b16 %v487
        %v1384 = vunpack.c.l.b16 %v488
        %v1385 = vunpack.c.l.b16 %v489
        %v1386 = vunpack.c.l.b16 %v490
        %v1387 = vunpack.c.l.b16 %v491
        %v1388 = vunpack.c.l.b16 %v492
        %v1389 = vunpack.c.l.b16 %v493
        %v1390 = vunpack.c.l.b16 %v494
        %v1391 = vunpack.c.l.b16 %v495
        %v1392 = vunpack.c.l.b16 %v496
        %v1393 = vunpack.c.l.b16 %v497
        %v1394 = vunpack.c.l.b16 %v498
        %v1395 = vunpack.c.l.b16 %v499
        %v1396 = vunpack.c.l.b16 %v500
        %v1397 = vunpack.c.l.b16 %v501
        %v1398 = vunpack.c.l.b16 %v502
        %v1399 = vunpack.c.l.b16 %v503
        %v1400 = vunpack.c.l.b16 %v504
        %v1401 = vunpack.c.l.b16 %v505
        %v1402 = vunpack.c.l.b16 %v506
        %v1403 = vunpack.c.l.b16 %v507
        %v1404 = vunpack.c.l.b16 %v508
        %v1405 = vunpack.c.l.b16 %v509
        %v1406 = vunpack.c.l.b16 %v510
        %v1407 = vunpack.c.l.b16 %v511
        %v1408 = vunpack.c.l.b16 %v512
        %v1409 = vunpack.c.l.b16 %v513
        %v1410 = vunpack.c.l.b16 %v514
        %v1411 = vunpack.c.l.b16 %v515
        %v1412 = vunpack.c.l.b16 %v516
        %v1413 = vunpack.c.l.b16 %v517
        %v1414 = vunpack.c.l.b16 %v518
        %v1415 = vunpack.c.l.b16 %v519
        %v1416 = vunpack.c.l.b16 %v520
        %v1417 = vunpack.c.l.b16 %v521
        %v1418 = vunpack.c.l.b16 %v522
        %v1419 = vunpack.c.l.b16 %v523
        %v1420 = vunpack.c.l.b16 %v524
        %v1421 = vunpack.c.l.b16 %v525
        %v1422 = vunpack.c.l.b16 %v526
        %v1423 = vunpack.c.l.b16 %v527
        %v1424 = vunpack.c.l.b16 %v528
        %v1425 = vunpack.c.l.b16 %v529
        %v1426 = vunpack.c.l.b16 %v530
        %v1427 = vunpack.c.l.b16 %v531
        %v1428 = vunpack.c.l.b16 %v532
        %v1429 = vunpack.c.l.b16 %v533
        %v1430 = vunpack.c.l.b16 %v534
        %v1431 = vunpack.c.l.b16 %v535
        %v1432 = vunpack.c.l.b16 %v536
        %v1433 = vunpack.c.l.b16 %v537
        %v1434 = vunpack.c.l.b16 %v538
        %v1435 = vunpack.c.l.b16 %v539
        %v1436 = vunpack.c.l.b16 %v540
        %v1437 = vunpack.c.l.b16 %v541
        %v1438 = vunpack.c.l.b16 %v542
        %v1439 = vunpack.c.l.b16 %v543
        %v1440 = vunpack.c.l.b16 %v544
        %v1441 = vunpack.c.l.b16 %v545
        %v1442 = vunpack.c.l.b16 %v546
        %v1443 = vunpack.c.l.b16 %v547
        %v1444 = vunpack.c.l.b16 %v548
        %v1445 = vunpack.c.l.b16 %v549
        %v1446 = vunpack.c.l.b16 %v550
        %v1447 = vunpack.c.l.b16 %v551
        %v1448 = vunpack.c.l.b16 %v552
        %v1449 = vunpack.c.l.b16 %v553
        %v1450 = vunpack.c.l.b16 %v554
        %v1451 = vunpack.c.l.b16 %v555
        %v1452 = vunpack.c.l.b16 %v556
        %v1453 = vunpack.c.l.b16 %v557
        %v1454 = vunpack.c.l.b16 %v558
        %v1455 = vunpack.c.l.b16 %v559
        %v1456 = vunpack.c.l.b16 %v560
        %v1457 = vunpack.c.l.b16 %v561
        %v1458 = vunpack.c.l.b16 %v562
        %v1459 = vunpack.c.l.b16 %v563
        %v1460 = vunpack.c.l.b16 %v564
        %v1461 = vunpack.c.l.b16 %v565
        %v1462 = vunpack.c.l.b16 %v566
        %v1463 = vunpack.c.l.b16 %v567
        %v1464 = vunpack.c.l.b16 %v568
        %v1465 = vunpack.c.l.b16 %v569
        %v1466 = vunpack.c.l.b16 %v570
        %v1467 = vunpack.c.l.b16 %v571
        %v1468 = vunpack.c.l.b16 %v572
        %v1469 = vunpack.c.l.b16 %v573
        %v1470 = vunpack.c.l.b16 %v574
        %v1471 = vunpack.c.l.b16 %v575
        %v1472 = vunpack.c.l.b16 %v576
        %v1473 = vunpack.c.l.b16 %v577
        %v1474 = vunpack.c.l.b16 %v578
        %v1475 = vunpack.c.l.b16 %v579
        %v1476 = vunpack.c.l.b16 %v580
        %v1477 = vunpack.c.l.b16 %v581
        %v1478 = vunpack.c.l.b16 %v582
        %v1479 = vunpack.c.l.b16 %v583
        %v1480 = vpack.c.b16 %v1353, %v1352
        %v1481 = vpack.c.b16 %v1355, %v1354
        %v1482 = vpack.c.b16 %v1357, %v1356
        %v1483 = vpack.c.b16 %v1359, %v1358
        %v1484 = vpack.c.b16 %v1361, %v1360
        %v1485 = vpack.c.b16 %v1363, %v1362
        %v1486 = vpack.c.b16 %v1365, %v1364
        %v1487 = vpack.c.b16 %v1367, %v1366
        %v1488 = vpack.c.b16 %v1369, %v1368
        %v1489 = vpack.c.b16 %v1371, %v1370
        %v1490 = vpack.c.b16 %v1373, %v1372
        %v1491 = vpack.c.b16 %v1375, %v1374
        %v1492 = vpack.c.b16 %v1377, %v1376
        %v1493 = vpack.c.b16 %v1379, %v1378
        %v1494 = vpack.c.b16 %v1381, %v1380
        %v1495 = vpack.c.b16 %v1383, %v1382
        %v1496 = vpack.c.b16 %v1385, %v1384
        %v1497 = vpack.c.b16 %v1387, %v1386
        %v1498 = vpack.c.b16 %v1389, %v1388
        %v1499 = vpack.c.b16 %v1391, %v1390
        %v1500 = vpack.c.b16 %v1393, %v1392
        %v1501 = vpack.c.b16 %v1395, %v1394
        %v1502 = vpack.c.b16 %v1397, %v1396
        %v1503 = vpack.c.b16 %v1399, %v1398
        %v1504 = vpack.c.b16 %v1401, %v1400
        %v1505 = vpack.c.b16 %v1403, %v1402
        %v1506 = vpack.c.b16 %v1405, %v1404
        %v1507 = vpack.c.b16 %v1407, %v1406
        %v1508 = vpack.c.b16 %v1409, %v1408
        %v1509 = vpack.c.b16 %v1411, %v1410
        %v1510 = vpack.c.b16 %v1413, %v1412
        %v1511 = vpack.c.b16 %v1415, %v1414
        %v1512 = vpack.c.b16 %v1417, %v1416
        %v1513 = vpack.c.b16 %v1419, %v1418
        %v1514 = vpack.c.b16 %v1421, %v1420
        %v1515 = vpack.c.b16 %v1423, %v1422
        %v1516 = vpack.c.b16 %v1425, %v1424
        %v1517 = vpack.c.b16 %v1427, %v1426
        %v1518 = vpack.c.b16 %v1429, %v1428
        %v1519 = vpack.c.b16 %v1431, %v1430
        %v1520 = vpack.c.b16 %v1433, %v1432
        %v1521 = vpack.c.b16 %v1435, %v1434
        %v1522 = vpack.c.b16 %v1437, %v1436
        %v1523 = vpack.c.b16 %v1439, %v1438
        %v1524 = vpack.c.b16 %v1441, %v1440
        %v1525 = vpack.c.b16 %v1443, %v1442
        %v1526 = vpack.c.b16 %v1445, %v1444
        %v1527 = vpack.c.b16 %v1447, %v1446
        %v1528 = vpack.c.b16 %v1449, %v1448
        %v1529 = vpack.c.b16 %v1451, %v1450
        %v1530 = vpack.c.b16 %v1453, %v1452
        %v1531 = vpack.c.b16 %v1455, %v1454
        %v1532 = vpack.c.b16 %v1457, %v1456
        %v1533 = vpack.c.b16 %v1459, %v1458
        %v1534 = vpack.c.b16 %v1461, %v1460
        %v1535 = vpack.c.b16 %v1463, %v1462
        %v1536 = vpack.c.b16 %v1465, %v1464
        %v1537 = vpack.c.b16 %v1467, %v1466
        %v1538 = vpack.c.b16 %v1469, %v1468
        %v1539 = vpack.c.b16 %v1471, %v1470
        %v1540 = vpack.c.b16 %v1473, %v1472
        %v1541 = vpack.c.b16 %v1475, %v1474
        %v1542 = vpack.c.b16 %v1477, %v1476
        %v1543 = vpack.c.b16 %v1479, %v1478
        %1608 = vmatprep.subr.bf16.mxu0 0
        %1609 = vmatpush1.bf16.msra.mxu0 %v1480
        %1610 = vmatprep.subr.bf16.mxu0 0
        %1611 = vmatpush1.bf16.msra.mxu0 %v1481
        %1612 = vmatprep.subr.bf16.mxu0 0
        %1613 = vmatpush1.bf16.msra.mxu0 %v1482
        %1614 = vmatprep.subr.bf16.mxu0 0
        %1615 = vmatpush1.bf16.msra.mxu0 %v1483
        %1616 = vmatprep.subr.bf16.mxu0 0
        %1617 = vmatpush1.bf16.msra.mxu0 %v1484
        %1618 = vmatprep.subr.bf16.mxu0 0
        %1619 = vmatpush1.bf16.msra.mxu0 %v1485
        %1620 = vmatprep.subr.bf16.mxu0 0
        %1621 = vmatpush1.bf16.msra.mxu0 %v1486
        %1622 = vmatprep.subr.bf16.mxu0 0
        %1623 = vmatpush1.bf16.msra.mxu0 %v1487
        %1624 = vmatprep.subr.bf16.mxu0 0
        %1625 = vmatpush1.bf16.msra.mxu0 %v1488
        %1626 = vmatprep.subr.bf16.mxu0 0
        %1627 = vmatpush1.bf16.msra.mxu0 %v1489
        %1628 = vmatprep.subr.bf16.mxu0 0
        %1629 = vmatpush1.bf16.msra.mxu0 %v1490
        %1630 = vmatprep.subr.bf16.mxu0 0
        %1631 = vmatpush1.bf16.msra.mxu0 %v1491
        %1632 = vmatprep.subr.bf16.mxu0 0
        %1633 = vmatpush1.bf16.msra.mxu0 %v1492
        %1634 = vmatprep.subr.bf16.mxu0 0
        %1635 = vmatpush1.bf16.msra.mxu0 %v1493
        %1636 = vmatprep.subr.bf16.mxu0 0
        %1637 = vmatpush1.bf16.msra.mxu0 %v1494
        %1638 = vmatprep.subr.bf16.mxu0 0
        %1639 = vmatpush1.bf16.msra.mxu0 %v1495
        %1640 = vmatprep.mubr.bf16.mxu0 %v969
        %1641 = vmatmul.mubr.bf16.gmra.mrb[0].mxu0 %v968
        %v1642 = vpop.f32.mrb[0].mxu0
        %v1643 = vadd.f32 0.0, %v1642
        %v1644 = vpop.f32.mrb[0].mxu0
        %v1645 = vpop.f32.mrb[0].mxu0
        %v1646 = vadd.f32 0.0, %v1645
        %v1647 = vpop.f32.mrb[0].mxu0
        %1648 = vmatprep.mubr.bf16.mxu0 %v977
        %1649 = vmatmul.mubr.bf16.gmra.mrb[0].mxu0 %v976
        %v1650 = vpop.f32.mrb[0].mxu0
        %v1651 = vadd.f32 0.0, %v1650
        %v1652 = vpop.f32.mrb[0].mxu0
        %v1653 = vpop.f32.mrb[0].mxu0
        %v1654 = vadd.f32 0.0, %v1653
        %v1655 = vpop.f32.mrb[0].mxu0
        %1656 = vmatprep.mubr.bf16.mxu0 %v985
        %1657 = vmatmul.mubr.bf16.gmra.mrb[0].mxu0 %v984
        %v1658 = vpop.f32.mrb[0].mxu0
        %v1659 = vadd.f32 0.0, %v1658
        %v1660 = vpop.f32.mrb[0].mxu0
        %v1661 = vpop.f32.mrb[0].mxu0
        %v1662 = vadd.f32 0.0, %v1661
        %v1663 = vpop.f32.mrb[0].mxu0
        %1664 = vmatprep.mubr.bf16.mxu0 %v993
        %1665 = vmatmul.mubr.bf16.gmra.mrb[0].mxu0 %v992
        %v1666 = vpop.f32.mrb[0].mxu0
        %v1667 = vadd.f32 0.0, %v1666
        %v1668 = vpop.f32.mrb[0].mxu0
        %v1669 = vpop.f32.mrb[0].mxu0
        %v1670 = vadd.f32 0.0, %v1669
        %v1671 = vpop.f32.mrb[0].mxu0
        %1672 = vmatprep.mubr.bf16.mxu0 %v1001
        %1673 = vmatmul.mubr.bf16.gmra.mrb[0].mxu0 %v1000
        %v1674 = vpop.f32.mrb[0].mxu0
        %v1675 = vadd.f32 0.0, %v1674
        %v1676 = vpop.f32.mrb[0].mxu0
        %v1677 = vpop.f32.mrb[0].mxu0
        %v1678 = vadd.f32 0.0, %v1677
        %v1679 = vpop.f32.mrb[0].mxu0
        %1680 = vmatprep.mubr.bf16.mxu0 %v1009
        %1681 = vmatmul.mubr.bf16.gmra.mrb[0].mxu0 %v1008
        %v1682 = vpop.f32.mrb[0].mxu0
        %v1683 = vadd.f32 0.0, %v1682
        %v1684 = vpop.f32.mrb[0].mxu0
        %v1685 = vpop.f32.mrb[0].mxu0
        %v1686 = vadd.f32 0.0, %v1685
        %v1687 = vpop.f32.mrb[0].mxu0
        %1688 = vmatprep.mubr.bf16.mxu0 %v1017
        %1689 = vmatmul.mubr.bf16.gmra.mrb[0].mxu0 %v1016
        %v1690 = vpop.f32.mrb[0].mxu0
        %v1691 = vadd.f32 0.0, %v1690
        %v1692 = vpop.f32.mrb[0].mxu0
        %v1693 = vpop.f32.mrb[0].mxu0
        %v1694 = vadd.f32 0.0, %v1693
        %v1695 = vpop.f32.mrb[0].mxu0
        %1696 = vmatprep.mubr.bf16.mxu0 %v1025
        %1697 = vmatmul.mubr.bf16.gmra.mrb[0].mxu0 %v1024
        %v1698 = vpop.f32.mrb[0].mxu0
        %v1699 = vadd.f32 0.0, %v1698
        %v1700 = vpop.f32.mrb[0].mxu0
        %v1701 = vpop.f32.mrb[0].mxu0
        %v1702 = vadd.f32 0.0, %v1701
        %v1703 = vpop.f32.mrb[0].mxu0
        %1704 = vmatprep.mubr.bf16.mxu0 %v1033
        %1705 = vmatmul.mubr.bf16.gmra.mrb[0].mxu0 %v1032
        %v1706 = vpop.f32.mrb[0].mxu0
        %v1707 = vadd.f32 0.0, %v1706
        %v1708 = vpop.f32.mrb[0].mxu0
        %v1709 = vpop.f32.mrb[0].mxu0
        %v1710 = vadd.f32 0.0, %v1709
        %v1711 = vpop.f32.mrb[0].mxu0
        %1712 = vmatprep.mubr.bf16.mxu0 %v1041
        %1713 = vmatmul.mubr.bf16.gmra.mrb[0].mxu0 %v1040
        %v1714 = vpop.f32.mrb[0].mxu0
        %v1715 = vadd.f32 0.0, %v1714
        %v1716 = vpop.f32.mrb[0].mxu0
        %v1717 = vpop.f32.mrb[0].mxu0
        %v1718 = vadd.f32 0.0, %v1717
        %v1719 = vpop.f32.mrb[0].mxu0
        %1720 = vmatprep.mubr.bf16.mxu0 %v1049
        %1721 = vmatmul.mubr.bf16.gmra.mrb[0].mxu0 %v1048
        %v1722 = vpop.f32.mrb[0].mxu0
        %v1723 = vadd.f32 0.0, %v1722
        %v1724 = vpop.f32.mrb[0].mxu0
        %v1725 = vpop.f32.mrb[0].mxu0
        %v1726 = vadd.f32 0.0, %v1725
        %v1727 = vpop.f32.mrb[0].mxu0
        %1728 = vmatprep.mubr.bf16.mxu0 %v1057
        %1729 = vmatmul.mubr.bf16.gmra.mrb[0].mxu0 %v1056
        %v1730 = vpop.f32.mrb[0].mxu0
        %v1731 = vadd.f32 0.0, %v1730
        %v1732 = vpop.f32.mrb[0].mxu0
        %v1733 = vpop.f32.mrb[0].mxu0
        %v1734 = vadd.f32 0.0, %v1733
        %v1735 = vpop.f32.mrb[0].mxu0
        %1736 = vmatprep.mubr.bf16.mxu0 %v1065
        %1737 = vmatmul.mubr.bf16.gmra.mrb[0].mxu0 %v1064
        %v1738 = vpop.f32.mrb[0].mxu0
        %v1739 = vadd.f32 0.0, %v1738
        %v1740 = vpop.f32.mrb[0].mxu0
        %v1741 = vpop.f32.mrb[0].mxu0
        %v1742 = vadd.f32 0.0, %v1741
        %v1743 = vpop.f32.mrb[0].mxu0
        %1744 = vmatprep.mubr.bf16.mxu0 %v1073
        %1745 = vmatmul.mubr.bf16.gmra.mrb[0].mxu0 %v1072
        %v1746 = vpop.f32.mrb[0].mxu0
        %v1747 = vadd.f32 0.0, %v1746
        %v1748 = vpop.f32.mrb[0].mxu0
        %v1749 = vpop.f32.mrb[0].mxu0
        %v1750 = vadd.f32 0.0, %v1749
        %v1751 = vpop.f32.mrb[0].mxu0
        %1752 = vmatprep.mubr.bf16.mxu0 %v1081
        %1753 = vmatmul.mubr.bf16.gmra.mrb[0].mxu0 %v1080
        %v1754 = vpop.f32.mrb[0].mxu0
        %v1755 = vadd.f32 0.0, %v1754
        %v1756 = vpop.f32.mrb[0].mxu0
        %v1757 = vpop.f32.mrb[0].mxu0
        %v1758 = vadd.f32 0.0, %v1757
        %v1759 = vpop.f32.mrb[0].mxu0
        %1760 = vmatprep.mubr.bf16.mxu0 %v1089
        %1761 = vmatmul.mubr.bf16.gmra.mrb[0].mxu0 %v1088
        %v1762 = vpop.f32.mrb[0].mxu0
        %v1763 = vadd.f32 0.0, %v1762
        %v1764 = vpop.f32.mrb[0].mxu0
        %v1765 = vpop.f32.mrb[0].mxu0
        %v1766 = vadd.f32 0.0, %v1765
        %v1767 = vpop.f32.mrb[0].mxu0
        %1768 = vdwg.mxu0
        %1769 = vmatprep.subr.bf16.mxu0 0
        %1770 = vmatpush1.bf16.msra.mxu0 %v1496
        %1771 = vmatprep.subr.bf16.mxu0 0
        %1772 = vmatpush1.bf16.msra.mxu0 %v1497
        %1773 = vmatprep.subr.bf16.mxu0 0
        %1774 = vmatpush1.bf16.msra.mxu0 %v1498
        %1775 = vmatprep.subr.bf16.mxu0 0
        %1776 = vmatpush1.bf16.msra.mxu0 %v1499
        %1777 = vmatprep.subr.bf16.mxu0 0
        %1778 = vmatpush1.bf16.msra.mxu0 %v1500
        %1779 = vmatprep.subr.bf16.mxu0 0
        %1780 = vmatpush1.bf16.msra.mxu0 %v1501
        %1781 = vmatprep.subr.bf16.mxu0 0
        %1782 = vmatpush1.bf16.msra.mxu0 %v1502
        %1783 = vmatprep.subr.bf16.mxu0 0
        %1784 = vmatpush1.bf16.msra.mxu0 %v1503
        %1785 = vmatprep.subr.bf16.mxu0 0
        %1786 = vmatpush1.bf16.msra.mxu0 %v1504
        %1787 = vmatprep.subr.bf16.mxu0 0
        %1788 = vmatpush1.bf16.msra.mxu0 %v1505
        %1789 = vmatprep.subr.bf16.mxu0 0
        %1790 = vmatpush1.bf16.msra.mxu0 %v1506
        %1791 = vmatprep.subr.bf16.mxu0 0
        %1792 = vmatpush1.bf16.msra.mxu0 %v1507
        %1793 = vmatprep.subr.bf16.mxu0 0
        %1794 = vmatpush1.bf16.msra.mxu0 %v1508
        %1795 = vmatprep.subr.bf16.mxu0 0
        %1796 = vmatpush1.bf16.msra.mxu0 %v1509
        %1797 = vmatprep.subr.bf16.mxu0 0
        %1798 = vmatpush1.bf16.msra.mxu0 %v1510
        %1799 = vmatprep.subr.bf16.mxu0 0
        %1800 = vmatpush1.bf16.msra.mxu0 %v1511
        %1801 = vmatprep.mubr.bf16.mxu0 %v971
        %1802 = vmatmul.mubr.bf16.gmra.mrb[0].mxu0 %v970
        %v1803 = vpop.f32.mrb[0].mxu0
        %v1804 = vadd.f32 %v1643, %v1803
        %v1805 = vpop.f32.mrb[0].mxu0
        %v1806 = vpop.f32.mrb[0].mxu0
        %v1807 = vadd.f32 %v1646, %v1806
        %v1808 = vpop.f32.mrb[0].mxu0
        %1809 = vmatprep.mubr.bf16.mxu0 %v979
        %1810 = vmatmul.mubr.bf16.gmra.mrb[0].mxu0 %v978
        %v1811 = vpop.f32.mrb[0].mxu0
        %v1812 = vadd.f32 %v1651, %v1811
        %v1813 = vpop.f32.mrb[0].mxu0
        %v1814 = vpop.f32.mrb[0].mxu0
        %v1815 = vadd.f32 %v1654, %v1814
        %v1816 = vpop.f32.mrb[0].mxu0
        %1817 = vmatprep.mubr.bf16.mxu0 %v987
        %1818 = vmatmul.mubr.bf16.gmra.mrb[0].mxu0 %v986
        %v1819 = vpop.f32.mrb[0].mxu0
        %v1820 = vadd.f32 %v1659, %v1819
        %v1821 = vpop.f32.mrb[0].mxu0
        %v1822 = vpop.f32.mrb[0].mxu0
        %v1823 = vadd.f32 %v1662, %v1822
        %v1824 = vpop.f32.mrb[0].mxu0
        %1825 = vmatprep.mubr.bf16.mxu0 %v995
        %1826 = vmatmul.mubr.bf16.gmra.mrb[0].mxu0 %v994
        %v1827 = vpop.f32.mrb[0].mxu0
        %v1828 = vadd.f32 %v1667, %v1827
        %v1829 = vpop.f32.mrb[0].mxu0
        %v1830 = vpop.f32.mrb[0].mxu0
        %v1831 = vadd.f32 %v1670, %v1830
        %v1832 = vpop.f32.mrb[0].mxu0
        %1833 = vmatprep.mubr.bf16.mxu0 %v1003
        %1834 = vmatmul.mubr.bf16.gmra.mrb[0].mxu0 %v1002
        %v1835 = vpop.f32.mrb[0].mxu0
        %v1836 = vadd.f32 %v1675, %v1835
        %v1837 = vpop.f32.mrb[0].mxu0
        %v1838 = vpop.f32.mrb[0].mxu0
        %v1839 = vadd.f32 %v1678, %v1838
        %v1840 = vpop.f32.mrb[0].mxu0
        %1841 = vmatprep.mubr.bf16.mxu0 %v1011
        %1842 = vmatmul.mubr.bf16.gmra.mrb[0].mxu0 %v1010
        %v1843 = vpop.f32.mrb[0].mxu0
        %v1844 = vadd.f32 %v1683, %v1843
        %v1845 = vpop.f32.mrb[0].mxu0
        %v1846 = vpop.f32.mrb[0].mxu0
        %v1847 = vadd.f32 %v1686, %v1846
        %v1848 = vpop.f32.mrb[0].mxu0
        %1849 = vmatprep.mubr.bf16.mxu0 %v1019
        %1850 = vmatmul.mubr.bf16.gmra.mrb[0].mxu0 %v1018
        %v1851 = vpop.f32.mrb[0].mxu0
        %v1852 = vadd.f32 %v1691, %v1851
        %v1853 = vpop.f32.mrb[0].mxu0
        %v1854 = vpop.f32.mrb[0].mxu0
        %v1855 = vadd.f32 %v1694, %v1854
        %v1856 = vpop.f32.mrb[0].mxu0
        %1857 = vmatprep.mubr.bf16.mxu0 %v1027
        %1858 = vmatmul.mubr.bf16.gmra.mrb[0].mxu0 %v1026
        %v1859 = vpop.f32.mrb[0].mxu0
        %v1860 = vadd.f32 %v1699, %v1859
        %v1861 = vpop.f32.mrb[0].mxu0
        %v1862 = vpop.f32.mrb[0].mxu0
        %v1863 = vadd.f32 %v1702, %v1862
        %v1864 = vpop.f32.mrb[0].mxu0
        %1865 = vmatprep.mubr.bf16.mxu0 %v1035
        %1866 = vmatmul.mubr.bf16.gmra.mrb[0].mxu0 %v1034
        %v1867 = vpop.f32.mrb[0].mxu0
        %v1868 = vadd.f32 %v1707, %v1867
        %v1869 = vpop.f32.mrb[0].mxu0
        %v1870 = vpop.f32.mrb[0].mxu0
        %v1871 = vadd.f32 %v1710, %v1870
        %v1872 = vpop.f32.mrb[0].mxu0
        %1873 = vmatprep.mubr.bf16.mxu0 %v1043
        %1874 = vmatmul.mubr.bf16.gmra.mrb[0].mxu0 %v1042
        %v1875 = vpop.f32.mrb[0].mxu0
        %v1876 = vadd.f32 %v1715, %v1875
        %v1877 = vpop.f32.mrb[0].mxu0
        %v1878 = vpop.f32.mrb[0].mxu0
        %v1879 = vadd.f32 %v1718, %v1878
        %v1880 = vpop.f32.mrb[0].mxu0
        %1881 = vmatprep.mubr.bf16.mxu0 %v1051
        %1882 = vmatmul.mubr.bf16.gmra.mrb[0].mxu0 %v1050
        %v1883 = vpop.f32.mrb[0].mxu0
        %v1884 = vadd.f32 %v1723, %v1883
        %v1885 = vpop.f32.mrb[0].mxu0
        %v1886 = vpop.f32.mrb[0].mxu0
        %v1887 = vadd.f32 %v1726, %v1886
        %v1888 = vpop.f32.mrb[0].mxu0
        %1889 = vmatprep.mubr.bf16.mxu0 %v1059
        %1890 = vmatmul.mubr.bf16.gmra.mrb[0].mxu0 %v1058
        %v1891 = vpop.f32.mrb[0].mxu0
        %v1892 = vadd.f32 %v1731, %v1891
        %v1893 = vpop.f32.mrb[0].mxu0
        %v1894 = vpop.f32.mrb[0].mxu0
        %v1895 = vadd.f32 %v1734, %v1894
        %v1896 = vpop.f32.mrb[0].mxu0
        %1897 = vmatprep.mubr.bf16.mxu0 %v1067
        %1898 = vmatmul.mubr.bf16.gmra.mrb[0].mxu0 %v1066
        %v1899 = vpop.f32.mrb[0].mxu0
        %v1900 = vadd.f32 %v1739, %v1899
        %v1901 = vpop.f32.mrb[0].mxu0
        %v1902 = vpop.f32.mrb[0].mxu0
        %v1903 = vadd.f32 %v1742, %v1902
        %v1904 = vpop.f32.mrb[0].mxu0
        %1905 = vmatprep.mubr.bf16.mxu0 %v1075
        %1906 = vmatmul.mubr.bf16.gmra.mrb[0].mxu0 %v1074
        %v1907 = vpop.f32.mrb[0].mxu0
        %v1908 = vadd.f32 %v1747, %v1907
        %v1909 = vpop.f32.mrb[0].mxu0
        %v1910 = vpop.f32.mrb[0].mxu0
        %v1911 = vadd.f32 %v1750, %v1910
        %v1912 = vpop.f32.mrb[0].mxu0
        %1913 = vmatprep.mubr.bf16.mxu0 %v1083
        %1914 = vmatmul.mubr.bf16.gmra.mrb[0].mxu0 %v1082
        %v1915 = vpop.f32.mrb[0].mxu0
        %v1916 = vadd.f32 %v1755, %v1915
        %v1917 = vpop.f32.mrb[0].mxu0
        %v1918 = vpop.f32.mrb[0].mxu0
        %v1919 = vadd.f32 %v1758, %v1918
        %v1920 = vpop.f32.mrb[0].mxu0
        %1921 = vmatprep.mubr.bf16.mxu0 %v1091
        %1922 = vmatmul.mubr.bf16.gmra.mrb[0].mxu0 %v1090
        %v1923 = vpop.f32.mrb[0].mxu0
        %v1924 = vadd.f32 %v1763, %v1923
        %v1925 = vpop.f32.mrb[0].mxu0
        %v1926 = vpop.f32.mrb[0].mxu0
        %v1927 = vadd.f32 %v1766, %v1926
        %v1928 = vpop.f32.mrb[0].mxu0
        %1929 = vdwg.mxu0
        %1930 = vmatprep.subr.bf16.mxu0 0
        %1931 = vmatpush1.bf16.msra.mxu0 %v1512
        %1932 = vmatprep.subr.bf16.mxu0 0
        %1933 = vmatpush1.bf16.msra.mxu0 %v1513
        %1934 = vmatprep.subr.bf16.mxu0 0
        %1935 = vmatpush1.bf16.msra.mxu0 %v1514
        %1936 = vmatprep.subr.bf16.mxu0 0
        %1937 = vmatpush1.bf16.msra.mxu0 %v1515
        %1938 = vmatprep.subr.bf16.mxu0 0
        %1939 = vmatpush1.bf16.msra.mxu0 %v1516
        %1940 = vmatprep.subr.bf16.mxu0 0
        %1941 = vmatpush1.bf16.msra.mxu0 %v1517
        %1942 = vmatprep.subr.bf16.mxu0 0
        %1943 = vmatpush1.bf16.msra.mxu0 %v1518
        %1944 = vmatprep.subr.bf16.mxu0 0
        %1945 = vmatpush1.bf16.msra.mxu0 %v1519
        %1946 = vmatprep.subr.bf16.mxu0 0
        %1947 = vmatpush1.bf16.msra.mxu0 %v1520
        %1948 = vmatprep.subr.bf16.mxu0 0
        %1949 = vmatpush1.bf16.msra.mxu0 %v1521
        %1950 = vmatprep.subr.bf16.mxu0 0
        %1951 = vmatpush1.bf16.msra.mxu0 %v1522
        %1952 = vmatprep.subr.bf16.mxu0 0
        %1953 = vmatpush1.bf16.msra.mxu0 %v1523
        %1954 = vmatprep.subr.bf16.mxu0 0
        %1955 = vmatpush1.bf16.msra.mxu0 %v1524
        %1956 = vmatprep.subr.bf16.mxu0 0
        %1957 = vmatpush1.bf16.msra.mxu0 %v1525
        %1958 = vmatprep.subr.bf16.mxu0 0
        %1959 = vmatpush1.bf16.msra.mxu0 %v1526
        %1960 = vmatprep.subr.bf16.mxu0 0
        %1961 = vmatpush1.bf16.msra.mxu0 %v1527
        %1962 = vmatprep.mubr.bf16.mxu0 %v973
        %1963 = vmatmul.mubr.bf16.gmra.mrb[0].mxu0 %v972
        %v1964 = vpop.f32.mrb[0].mxu0
        %v1965 = vadd.f32 %v1804, %v1964
        %v1966 = vpop.f32.mrb[0].mxu0
        %v1967 = vpop.f32.mrb[0].mxu0
        %v1968 = vadd.f32 %v1807, %v1967
        %v1969 = vpop.f32.mrb[0].mxu0
        %1970 = vmatprep.mubr.bf16.mxu0 %v981
        %1971 = vmatmul.mubr.bf16.gmra.mrb[0].mxu0 %v980
        %v1972 = vpop.f32.mrb[0].mxu0
        %v1973 = vadd.f32 %v1812, %v1972
        %v1974 = vpop.f32.mrb[0].mxu0
        %v1975 = vpop.f32.mrb[0].mxu0
        %v1976 = vadd.f32 %v1815, %v1975
        %v1977 = vpop.f32.mrb[0].mxu0
        %1978 = vmatprep.mubr.bf16.mxu0 %v989
        %1979 = vmatmul.mubr.bf16.gmra.mrb[0].mxu0 %v988
        %v1980 = vpop.f32.mrb[0].mxu0
        %v1981 = vadd.f32 %v1820, %v1980
        %v1982 = vpop.f32.mrb[0].mxu0
        %v1983 = vpop.f32.mrb[0].mxu0
        %v1984 = vadd.f32 %v1823, %v1983
        %v1985 = vpop.f32.mrb[0].mxu0
        %1986 = vmatprep.mubr.bf16.mxu0 %v997
        %1987 = vmatmul.mubr.bf16.gmra.mrb[0].mxu0 %v996
        %v1988 = vpop.f32.mrb[0].mxu0
        %v1989 = vadd.f32 %v1828, %v1988
        %v1990 = vpop.f32.mrb[0].mxu0
        %v1991 = vpop.f32.mrb[0].mxu0
        %v1992 = vadd.f32 %v1831, %v1991
        %v1993 = vpop.f32.mrb[0].mxu0
        %1994 = vmatprep.mubr.bf16.mxu0 %v1005
        %1995 = vmatmul.mubr.bf16.gmra.mrb[0].mxu0 %v1004
        %v1996 = vpop.f32.mrb[0].mxu0
        %v1997 = vadd.f32 %v1836, %v1996
        %v1998 = vpop.f32.mrb[0].mxu0
        %v1999 = vpop.f32.mrb[0].mxu0
        %v2000 = vadd.f32 %v1839, %v1999
        %v2001 = vpop.f32.mrb[0].mxu0
        %2002 = vmatprep.mubr.bf16.mxu0 %v1013
        %2003 = vmatmul.mubr.bf16.gmra.mrb[0].mxu0 %v1012
        %v2004 = vpop.f32.mrb[0].mxu0
        %v2005 = vadd.f32 %v1844, %v2004
        %v2006 = vpop.f32.mrb[0].mxu0
        %v2007 = vpop.f32.mrb[0].mxu0
        %v2008 = vadd.f32 %v1847, %v2007
        %v2009 = vpop.f32.mrb[0].mxu0
        %2010 = vmatprep.mubr.bf16.mxu0 %v1021
        %2011 = vmatmul.mubr.bf16.gmra.mrb[0].mxu0 %v1020
        %v2012 = vpop.f32.mrb[0].mxu0
        %v2013 = vadd.f32 %v1852, %v2012
        %v2014 = vpop.f32.mrb[0].mxu0
        %v2015 = vpop.f32.mrb[0].mxu0
        %v2016 = vadd.f32 %v1855, %v2015
        %v2017 = vpop.f32.mrb[0].mxu0
        %2018 = vmatprep.mubr.bf16.mxu0 %v1029
        %2019 = vmatmul.mubr.bf16.gmra.mrb[0].mxu0 %v1028
        %v2020 = vpop.f32.mrb[0].mxu0
        %v2021 = vadd.f32 %v1860, %v2020
        %v2022 = vpop.f32.mrb[0].mxu0
        %v2023 = vpop.f32.mrb[0].mxu0
        %v2024 = vadd.f32 %v1863, %v2023
        %v2025 = vpop.f32.mrb[0].mxu0
        %2026 = vmatprep.mubr.bf16.mxu0 %v1037
        %2027 = vmatmul.mubr.bf16.gmra.mrb[0].mxu0 %v1036
        %v2028 = vpop.f32.mrb[0].mxu0
        %v2029 = vadd.f32 %v1868, %v2028
        %v2030 = vpop.f32.mrb[0].mxu0
        %v2031 = vpop.f32.mrb[0].mxu0
        %v2032 = vadd.f32 %v1871, %v2031
        %v2033 = vpop.f32.mrb[0].mxu0
        %2034 = vmatprep.mubr.bf16.mxu0 %v1045
        %2035 = vmatmul.mubr.bf16.gmra.mrb[0].mxu0 %v1044
        %v2036 = vpop.f32.mrb[0].mxu0
        %v2037 = vadd.f32 %v1876, %v2036
        %v2038 = vpop.f32.mrb[0].mxu0
        %v2039 = vpop.f32.mrb[0].mxu0
        %v2040 = vadd.f32 %v1879, %v2039
        %v2041 = vpop.f32.mrb[0].mxu0
        %2042 = vmatprep.mubr.bf16.mxu0 %v1053
        %2043 = vmatmul.mubr.bf16.gmra.mrb[0].mxu0 %v1052
        %v2044 = vpop.f32.mrb[0].mxu0
        %v2045 = vadd.f32 %v1884, %v2044
        %v2046 = vpop.f32.mrb[0].mxu0
        %v2047 = vpop.f32.mrb[0].mxu0
        %v2048 = vadd.f32 %v1887, %v2047
        %v2049 = vpop.f32.mrb[0].mxu0
        %2050 = vmatprep.mubr.bf16.mxu0 %v1061
        %2051 = vmatmul.mubr.bf16.gmra.mrb[0].mxu0 %v1060
        %v2052 = vpop.f32.mrb[0].mxu0
        %v2053 = vadd.f32 %v1892, %v2052
        %v2054 = vpop.f32.mrb[0].mxu0
        %v2055 = vpop.f32.mrb[0].mxu0
        %v2056 = vadd.f32 %v1895, %v2055
        %v2057 = vpop.f32.mrb[0].mxu0
        %2058 = vmatprep.mubr.bf16.mxu0 %v1069
        %2059 = vmatmul.mubr.bf16.gmra.mrb[0].mxu0 %v1068
        %v2060 = vpop.f32.mrb[0].mxu0
        %v2061 = vadd.f32 %v1900, %v2060
        %v2062 = vpop.f32.mrb[0].mxu0
        %v2063 = vpop.f32.mrb[0].mxu0
        %v2064 = vadd.f32 %v1903, %v2063
        %v2065 = vpop.f32.mrb[0].mxu0
        %2066 = vmatprep.mubr.bf16.mxu0 %v1077
        %2067 = vmatmul.mubr.bf16.gmra.mrb[0].mxu0 %v1076
        %v2068 = vpop.f32.mrb[0].mxu0
        %v2069 = vadd.f32 %v1908, %v2068
        %v2070 = vpop.f32.mrb[0].mxu0
        %v2071 = vpop.f32.mrb[0].mxu0
        %v2072 = vadd.f32 %v1911, %v2071
        %v2073 = vpop.f32.mrb[0].mxu0
        %2074 = vmatprep.mubr.bf16.mxu0 %v1085
        %2075 = vmatmul.mubr.bf16.gmra.mrb[0].mxu0 %v1084
        %v2076 = vpop.f32.mrb[0].mxu0
        %v2077 = vadd.f32 %v1916, %v2076
        %v2078 = vpop.f32.mrb[0].mxu0
        %v2079 = vpop.f32.mrb[0].mxu0
        %v2080 = vadd.f32 %v1919, %v2079
        %v2081 = vpop.f32.mrb[0].mxu0
        %2082 = vmatprep.mubr.bf16.mxu0 %v1093
        %2083 = vmatmul.mubr.bf16.gmra.mrb[0].mxu0 %v1092
        %v2084 = vpop.f32.mrb[0].mxu0
        %v2085 = vadd.f32 %v1924, %v2084
        %v2086 = vpop.f32.mrb[0].mxu0
        %v2087 = vpop.f32.mrb[0].mxu0
        %v2088 = vadd.f32 %v1927, %v2087
        %v2089 = vpop.f32.mrb[0].mxu0
        %2090 = vdwg.mxu0
        %2091 = vmatprep.subr.bf16.mxu0 0
        %2092 = vmatpush1.bf16.msra.mxu0 %v1528
        %2093 = vmatprep.subr.bf16.mxu0 0
        %2094 = vmatpush1.bf16.msra.mxu0 %v1529
        %2095 = vmatprep.subr.bf16.mxu0 0
        %2096 = vmatpush1.bf16.msra.mxu0 %v1530
        %2097 = vmatprep.subr.bf16.mxu0 0
        %2098 = vmatpush1.bf16.msra.mxu0 %v1531
        %2099 = vmatprep.subr.bf16.mxu0 0
        %2100 = vmatpush1.bf16.msra.mxu0 %v1532
        %2101 = vmatprep.subr.bf16.mxu0 0
        %2102 = vmatpush1.bf16.msra.mxu0 %v1533
        %2103 = vmatprep.subr.bf16.mxu0 0
        %2104 = vmatpush1.bf16.msra.mxu0 %v1534
        %2105 = vmatprep.subr.bf16.mxu0 0
        %2106 = vmatpush1.bf16.msra.mxu0 %v1535
        %2107 = vmatprep.subr.bf16.mxu0 0
        %2108 = vmatpush1.bf16.msra.mxu0 %v1536
        %2109 = vmatprep.subr.bf16.mxu0 0
        %2110 = vmatpush1.bf16.msra.mxu0 %v1537
        %2111 = vmatprep.subr.bf16.mxu0 0
        %2112 = vmatpush1.bf16.msra.mxu0 %v1538
        %2113 = vmatprep.subr.bf16.mxu0 0
        %2114 = vmatpush1.bf16.msra.mxu0 %v1539
        %2115 = vmatprep.subr.bf16.mxu0 0
        %2116 = vmatpush1.bf16.msra.mxu0 %v1540
        %2117 = vmatprep.subr.bf16.mxu0 0
        %2118 = vmatpush1.bf16.msra.mxu0 %v1541
        %2119 = vmatprep.subr.bf16.mxu0 0
        %2120 = vmatpush1.bf16.msra.mxu0 %v1542
        %2121 = vmatprep.subr.bf16.mxu0 0
        %2122 = vmatpush1.bf16.msra.mxu0 %v1543
        %2123 = vmatprep.mubr.bf16.mxu0 %v975
        %2124 = vmatmul.mubr.bf16.gmra.mrb[0].mxu0 %v974
        %v2125 = vpop.f32.mrb[0].mxu0
        %v2126 = vadd.f32 %v1965, %v2125
        %v2127 = vpop.f32.mrb[0].mxu0
        %v2128 = vpop.f32.mrb[0].mxu0
        %v2129 = vadd.f32 %v1968, %v2128
        %v2130 = vpop.f32.mrb[0].mxu0
        %2131 = vmatprep.mubr.bf16.mxu0 %v983
        %2132 = vmatmul.mubr.bf16.gmra.mrb[0].mxu0 %v982
        %v2133 = vpop.f32.mrb[0].mxu0
        %v2134 = vadd.f32 %v1973, %v2133
        %v2135 = vpop.f32.mrb[0].mxu0
        %v2136 = vpop.f32.mrb[0].mxu0
        %v2137 = vadd.f32 %v1976, %v2136
        %v2138 = vpop.f32.mrb[0].mxu0
        %2139 = vmatprep.mubr.bf16.mxu0 %v991
        %2140 = vmatmul.mubr.bf16.gmra.mrb[0].mxu0 %v990
        %v2141 = vpop.f32.mrb[0].mxu0
        %v2142 = vadd.f32 %v1981, %v2141
        %v2143 = vpop.f32.mrb[0].mxu0
        %v2144 = vpop.f32.mrb[0].mxu0
        %v2145 = vadd.f32 %v1984, %v2144
        %v2146 = vpop.f32.mrb[0].mxu0
        %2147 = vmatprep.mubr.bf16.mxu0 %v999
        %2148 = vmatmul.mubr.bf16.gmra.mrb[0].mxu0 %v998
        %v2149 = vpop.f32.mrb[0].mxu0
        %v2150 = vadd.f32 %v1989, %v2149
        %v2151 = vpop.f32.mrb[0].mxu0
        %v2152 = vpop.f32.mrb[0].mxu0
        %v2153 = vadd.f32 %v1992, %v2152
        %v2154 = vpop.f32.mrb[0].mxu0
        %2155 = vmatprep.mubr.bf16.mxu0 %v1007
        %2156 = vmatmul.mubr.bf16.gmra.mrb[0].mxu0 %v1006
        %v2157 = vpop.f32.mrb[0].mxu0
        %v2158 = vadd.f32 %v1997, %v2157
        %v2159 = vpop.f32.mrb[0].mxu0
        %v2160 = vpop.f32.mrb[0].mxu0
        %v2161 = vadd.f32 %v2000, %v2160
        %v2162 = vpop.f32.mrb[0].mxu0
        %2163 = vmatprep.mubr.bf16.mxu0 %v1015
        %2164 = vmatmul.mubr.bf16.gmra.mrb[0].mxu0 %v1014
        %v2165 = vpop.f32.mrb[0].mxu0
        %v2166 = vadd.f32 %v2005, %v2165
        %v2167 = vpop.f32.mrb[0].mxu0
        %v2168 = vpop.f32.mrb[0].mxu0
        %v2169 = vadd.f32 %v2008, %v2168
        %v2170 = vpop.f32.mrb[0].mxu0
        %2171 = vmatprep.mubr.bf16.mxu0 %v1023
        %2172 = vmatmul.mubr.bf16.gmra.mrb[0].mxu0 %v1022
        %v2173 = vpop.f32.mrb[0].mxu0
        %v2174 = vadd.f32 %v2013, %v2173
        %v2175 = vpop.f32.mrb[0].mxu0
        %v2176 = vpop.f32.mrb[0].mxu0
        %v2177 = vadd.f32 %v2016, %v2176
        %v2178 = vpop.f32.mrb[0].mxu0
        %2179 = vmatprep.mubr.bf16.mxu0 %v1031
        %2180 = vmatmul.mubr.bf16.gmra.mrb[0].mxu0 %v1030
        %v2181 = vpop.f32.mrb[0].mxu0
        %v2182 = vadd.f32 %v2021, %v2181
        %v2183 = vpop.f32.mrb[0].mxu0
        %v2184 = vpop.f32.mrb[0].mxu0
        %v2185 = vadd.f32 %v2024, %v2184
        %v2186 = vpop.f32.mrb[0].mxu0
        %2187 = vmatprep.mubr.bf16.mxu0 %v1039
        %2188 = vmatmul.mubr.bf16.gmra.mrb[0].mxu0 %v1038
        %v2189 = vpop.f32.mrb[0].mxu0
        %v2190 = vadd.f32 %v2029, %v2189
        %v2191 = vpop.f32.mrb[0].mxu0
        %v2192 = vpop.f32.mrb[0].mxu0
        %v2193 = vadd.f32 %v2032, %v2192
        %v2194 = vpop.f32.mrb[0].mxu0
        %2195 = vmatprep.mubr.bf16.mxu0 %v1047
        %2196 = vmatmul.mubr.bf16.gmra.mrb[0].mxu0 %v1046
        %v2197 = vpop.f32.mrb[0].mxu0
        %v2198 = vadd.f32 %v2037, %v2197
        %v2199 = vpop.f32.mrb[0].mxu0
        %v2200 = vpop.f32.mrb[0].mxu0
        %v2201 = vadd.f32 %v2040, %v2200
        %v2202 = vpop.f32.mrb[0].mxu0
        %2203 = vmatprep.mubr.bf16.mxu0 %v1055
        %2204 = vmatmul.mubr.bf16.gmra.mrb[0].mxu0 %v1054
        %v2205 = vpop.f32.mrb[0].mxu0
        %v2206 = vadd.f32 %v2045, %v2205
        %v2207 = vpop.f32.mrb[0].mxu0
        %v2208 = vpop.f32.mrb[0].mxu0
        %v2209 = vadd.f32 %v2048, %v2208
        %v2210 = vpop.f32.mrb[0].mxu0
        %2211 = vmatprep.mubr.bf16.mxu0 %v1063
        %2212 = vmatmul.mubr.bf16.gmra.mrb[0].mxu0 %v1062
        %v2213 = vpop.f32.mrb[0].mxu0
        %v2214 = vadd.f32 %v2053, %v2213
        %v2215 = vpop.f32.mrb[0].mxu0
        %v2216 = vpop.f32.mrb[0].mxu0
        %v2217 = vadd.f32 %v2056, %v2216
        %v2218 = vpop.f32.mrb[0].mxu0
        %2219 = vmatprep.mubr.bf16.mxu0 %v1071
        %2220 = vmatmul.mubr.bf16.gmra.mrb[0].mxu0 %v1070
        %v2221 = vpop.f32.mrb[0].mxu0
        %v2222 = vadd.f32 %v2061, %v2221
        %v2223 = vpop.f32.mrb[0].mxu0
        %v2224 = vpop.f32.mrb[0].mxu0
        %v2225 = vadd.f32 %v2064, %v2224
        %v2226 = vpop.f32.mrb[0].mxu0
        %2227 = vmatprep.mubr.bf16.mxu0 %v1079
        %2228 = vmatmul.mubr.bf16.gmra.mrb[0].mxu0 %v1078
        %v2229 = vpop.f32.mrb[0].mxu0
        %v2230 = vadd.f32 %v2069, %v2229
        %v2231 = vpop.f32.mrb[0].mxu0
        %v2232 = vpop.f32.mrb[0].mxu0
        %v2233 = vadd.f32 %v2072, %v2232
        %v2234 = vpop.f32.mrb[0].mxu0
        %2235 = vmatprep.mubr.bf16.mxu0 %v1087
        %2236 = vmatmul.mubr.bf16.gmra.mrb[0].mxu0 %v1086
        %v2237 = vpop.f32.mrb[0].mxu0
        %v2238 = vadd.f32 %v2077, %v2237
        %v2239 = vpop.f32.mrb[0].mxu0
        %v2240 = vpop.f32.mrb[0].mxu0
        %v2241 = vadd.f32 %v2080, %v2240
        %v2242 = vpop.f32.mrb[0].mxu0
        %2243 = vmatprep.mubr.bf16.mxu0 %v1095
        %2244 = vmatmul.mubr.bf16.gmra.mrb[0].mxu0 %v1094
        %v2245 = vpop.f32.mrb[0].mxu0
        %v2246 = vadd.f32 %v2085, %v2245
        %v2247 = vpop.f32.mrb[0].mxu0
        %v2248 = vpop.f32.mrb[0].mxu0
        %v2249 = vadd.f32 %v2088, %v2248
        %v2250 = vpop.f32.mrb[0].mxu0
        %2251 = vdwg.mxu0
        %v2252 = vadd.f32 %v296, %v2126
        %v2253 = vadd.f32 %v297, %v2129
        %v2254 = vadd.f32 %v298, %v2134
        %v2255 = vadd.f32 %v299, %v2137
        %v2256 = vadd.f32 %v300, %v2142
        %v2257 = vadd.f32 %v301, %v2145
        %v2258 = vadd.f32 %v302, %v2150
        %v2259 = vadd.f32 %v303, %v2153
        %v2260 = vadd.f32 %v304, %v2158
        %v2261 = vadd.f32 %v305, %v2161
        %v2262 = vadd.f32 %v306, %v2166
        %v2263 = vadd.f32 %v307, %v2169
        %v2264 = vadd.f32 %v308, %v2174
        %v2265 = vadd.f32 %v309, %v2177
        %v2266 = vadd.f32 %v310, %v2182
        %v2267 = vadd.f32 %v311, %v2185
        %v2268 = vadd.f32 %v312, %v2190
        %v2269 = vadd.f32 %v313, %v2193
        %v2270 = vadd.f32 %v314, %v2198
        %v2271 = vadd.f32 %v315, %v2201
        %v2272 = vadd.f32 %v316, %v2206
        %v2273 = vadd.f32 %v317, %v2209
        %v2274 = vadd.f32 %v318, %v2214
        %v2275 = vadd.f32 %v319, %v2217
        %v2276 = vadd.f32 %v320, %v2222
        %v2277 = vadd.f32 %v321, %v2225
        %v2278 = vadd.f32 %v322, %v2230
        %v2279 = vadd.f32 %v323, %v2233
        %v2280 = vadd.f32 %v324, %v2238
        %v2281 = vadd.f32 %v325, %v2241
        %v2282 = vadd.f32 %v326, %v2246
        %v2283 = vadd.f32 %v327, %v2249
        %2284 = vst [vmem:[#allocation2] sm:$0xff] %v2252
        %2285 = vst [vmem:[#allocation2 + $0x8] sm:$0xff] %v2253
        %2286 = vst [vmem:[#allocation2 + $0x10] sm:$0xff] %v2254
        %2287 = vst [vmem:[#allocation2 + $0x18] sm:$0xff] %v2255
        %2288 = vst [vmem:[#allocation2 + $0x20] sm:$0xff] %v2256
        %2289 = vst [vmem:[#allocation2 + $0x28] sm:$0xff] %v2257
        %2290 = vst [vmem:[#allocation2 + $0x30] sm:$0xff] %v2258
        %2291 = vst [vmem:[#allocation2 + $0x38] sm:$0xff] %v2259
        %2292 = vst [vmem:[#allocation2 + $0x40] sm:$0xff] %v2260
        %2293 = vst [vmem:[#allocation2 + $0x48] sm:$0xff] %v2261
        %2294 = vst [vmem:[#allocation2 + $0x50] sm:$0xff] %v2262
        %2295 = vst [vmem:[#allocation2 + $0x58] sm:$0xff] %v2263
        %2296 = vst [vmem:[#allocation2 + $0x60] sm:$0xff] %v2264
        %2297 = vst [vmem:[#allocation2 + $0x68] sm:$0xff] %v2265
        %2298 = vst [vmem:[#allocation2 + $0x70] sm:$0xff] %v2266
        %2299 = vst [vmem:[#allocation2 + $0x78] sm:$0xff] %v2267
        %2300 = vst [vmem:[#allocation2 + $0x80] sm:$0xff] %v2268
        %2301 = vst [vmem:[#allocation2 + $0x88] sm:$0xff] %v2269
        %2302 = vst [vmem:[#allocation2 + $0x90] sm:$0xff] %v2270
        %2303 = vst [vmem:[#allocation2 + $0x98] sm:$0xff] %v2271
        %2304 = vst [vmem:[#allocation2 + $0xa0] sm:$0xff] %v2272
        %2305 = vst [vmem:[#allocation2 + $0xa8] sm:$0xff] %v2273
        %2306 = vst [vmem:[#allocation2 + $0xb0] sm:$0xff] %v2274
        %2307 = vst [vmem:[#allocation2 + $0xb8] sm:$0xff] %v2275
        %2308 = vst [vmem:[#allocation2 + $0xc0] sm:$0xff] %v2276
        %2309 = vst [vmem:[#allocation2 + $0xc8] sm:$0xff] %v2277
        %2310 = vst [vmem:[#allocation2 + $0xd0] sm:$0xff] %v2278
        %2311 = vst [vmem:[#allocation2 + $0xd8] sm:$0xff] %v2279
        %2312 = vst [vmem:[#allocation2 + $0xe0] sm:$0xff] %v2280
        %2313 = vst [vmem:[#allocation2 + $0xe8] sm:$0xff] %v2281
        %2314 = vst [vmem:[#allocation2 + $0xf0] sm:$0xff] %v2282
        %2315 = vst [vmem:[#allocation2 + $0xf8] sm:$0xff] %v2283
        // Predicated region
        $region37: #{_lambda_.21} parent=31 // pred_check
          %p2316 = pneg %p260
        $region38: #{_lambda_.21} parent=31 // pred_check_branch
          %2318 = sbr.rel (%p2316) target = $region40
        $region39: #{_lambda_.21} parent=31 // pred_region
          %v2319 = vld [vmem:[#allocation2] sm:$0xff]
          %v2320 = vld [vmem:[#allocation2 + $0x8] sm:$0xff]
          %v2321 = vld [vmem:[#allocation2 + $0x10] sm:$0xff]
          %v2322 = vld [vmem:[#allocation2 + $0x18] sm:$0xff]
          %v2323 = vld [vmem:[#allocation2 + $0x20] sm:$0xff]
          %v2324 = vld [vmem:[#allocation2 + $0x28] sm:$0xff]
          %v2325 = vld [vmem:[#allocation2 + $0x30] sm:$0xff]
          %v2326 = vld [vmem:[#allocation2 + $0x38] sm:$0xff]
          %v2327 = vld [vmem:[#allocation2 + $0x40] sm:$0xff]
          %v2328 = vld [vmem:[#allocation2 + $0x48] sm:$0xff]
          %v2329 = vld [vmem:[#allocation2 + $0x50] sm:$0xff]
          %v2330 = vld [vmem:[#allocation2 + $0x58] sm:$0xff]
          %v2331 = vld [vmem:[#allocation2 + $0x60] sm:$0xff]
          %v2332 = vld [vmem:[#allocation2 + $0x68] sm:$0xff]
          %v2333 = vld [vmem:[#allocation2 + $0x70] sm:$0xff]
          %v2334 = vld [vmem:[#allocation2 + $0x78] sm:$0xff]
          %v2335 = vld [vmem:[#allocation2 + $0x80] sm:$0xff]
          %v2336 = vld [vmem:[#allocation2 + $0x88] sm:$0xff]
          %v2337 = vld [vmem:[#allocation2 + $0x90] sm:$0xff]
          %v2338 = vld [vmem:[#allocation2 + $0x98] sm:$0xff]
          %v2339 = vld [vmem:[#allocation2 + $0xa0] sm:$0xff]
          %v2340 = vld [vmem:[#allocation2 + $0xa8] sm:$0xff]
          %v2341 = vld [vmem:[#allocation2 + $0xb0] sm:$0xff]
          %v2342 = vld [vmem:[#allocation2 + $0xb8] sm:$0xff]
          %v2343 = vld [vmem:[#allocation2 + $0xc0] sm:$0xff]
          %v2344 = vld [vmem:[#allocation2 + $0xc8] sm:$0xff]
          %v2345 = vld [vmem:[#allocation2 + $0xd0] sm:$0xff]
          %v2346 = vld [vmem:[#allocation2 + $0xd8] sm:$0xff]
          %v2347 = vld [vmem:[#allocation2 + $0xe0] sm:$0xff]
          %v2348 = vld [vmem:[#allocation2 + $0xe8] sm:$0xff]
          %v2349 = vld [vmem:[#allocation2 + $0xf0] sm:$0xff]
          %v2350 = vld [vmem:[#allocation2 + $0xf8] sm:$0xff]
          %v2351 = vld [vmem:[%s257] sm:$0x1]
          %v2353 = vlaneseq
          %v2354 = vshrl.u32 %v2353, 7
          %v2355 = vsub.s32 0, %v2354
          %v2356 = vrot.slane %v2351, %v2355
          %v2358 = vadd.f32 %v2319, %v2356
          %v2359 = vadd.f32 %v2320, %v2356
          %v2360 = vadd.f32 %v2321, %v2356
          %v2361 = vadd.f32 %v2322, %v2356
          %v2362 = vadd.f32 %v2323, %v2356
          %v2363 = vadd.f32 %v2324, %v2356
          %v2364 = vadd.f32 %v2325, %v2356
          %v2365 = vadd.f32 %v2326, %v2356
          %v2366 = vadd.f32 %v2327, %v2356
          %v2367 = vadd.f32 %v2328, %v2356
          %v2368 = vadd.f32 %v2329, %v2356
          %v2369 = vadd.f32 %v2330, %v2356
          %v2370 = vadd.f32 %v2331, %v2356
          %v2371 = vadd.f32 %v2332, %v2356
          %v2372 = vadd.f32 %v2333, %v2356
          %v2373 = vadd.f32 %v2334, %v2356
          %v2374 = vadd.f32 %v2335, %v2356
          %v2375 = vadd.f32 %v2336, %v2356
          %v2376 = vadd.f32 %v2337, %v2356
          %v2377 = vadd.f32 %v2338, %v2356
          %v2378 = vadd.f32 %v2339, %v2356
          %v2379 = vadd.f32 %v2340, %v2356
          %v2380 = vadd.f32 %v2341, %v2356
          %v2381 = vadd.f32 %v2342, %v2356
          %v2382 = vadd.f32 %v2343, %v2356
          %v2383 = vadd.f32 %v2344, %v2356
          %v2384 = vadd.f32 %v2345, %v2356
          %v2385 = vadd.f32 %v2346, %v2356
          %v2386 = vadd.f32 %v2347, %v2356
          %v2387 = vadd.f32 %v2348, %v2356
          %v2388 = vadd.f32 %v2349, %v2356
          %v2389 = vadd.f32 %v2350, %v2356
          %v2390 = vmax.f32 %v2358, 0.0
          %v2391 = vmax.f32 %v2359, 0.0
          %v2392 = vmax.f32 %v2360, 0.0
          %v2393 = vmax.f32 %v2361, 0.0
          %v2394 = vmax.f32 %v2362, 0.0
          %v2395 = vmax.f32 %v2363, 0.0
          %v2396 = vmax.f32 %v2364, 0.0
          %v2397 = vmax.f32 %v2365, 0.0
          %v2398 = vmax.f32 %v2366, 0.0
          %v2399 = vmax.f32 %v2367, 0.0
          %v2400 = vmax.f32 %v2368, 0.0
          %v2401 = vmax.f32 %v2369, 0.0
          %v2402 = vmax.f32 %v2370, 0.0
          %v2403 = vmax.f32 %v2371, 0.0
          %v2404 = vmax.f32 %v2372, 0.0
          %v2405 = vmax.f32 %v2373, 0.0
          %v2406 = vmax.f32 %v2374, 0.0
          %v2407 = vmax.f32 %v2375, 0.0
          %v2408 = vmax.f32 %v2376, 0.0
          %v2409 = vmax.f32 %v2377, 0.0
          %v2410 = vmax.f32 %v2378, 0.0
          %v2411 = vmax.f32 %v2379, 0.0
          %v2412 = vmax.f32 %v2380, 0.0
          %v2413 = vmax.f32 %v2381, 0.0
          %v2414 = vmax.f32 %v2382, 0.0
          %v2415 = vmax.f32 %v2383, 0.0
          %v2416 = vmax.f32 %v2384, 0.0
          %v2417 = vmax.f32 %v2385, 0.0
          %v2418 = vmax.f32 %v2386, 0.0
          %v2419 = vmax.f32 %v2387, 0.0
          %v2420 = vmax.f32 %v2388, 0.0
          %v2421 = vmax.f32 %v2389, 0.0
          %2422 = vst [vmem:[%s233] sm:$0xff] %v2390
          %2423 = vst [vmem:[%s233 + $0x8] sm:$0xff] %v2391
          %2424 = vst [vmem:[%s233 + $0x10] sm:$0xff] %v2392
          %2425 = vst [vmem:[%s233 + $0x18] sm:$0xff] %v2393
          %2426 = vst [vmem:[%s233 + $0x20] sm:$0xff] %v2394
          %2427 = vst [vmem:[%s233 + $0x28] sm:$0xff] %v2395
          %2428 = vst [vmem:[%s233 + $0x30] sm:$0xff] %v2396
          %2429 = vst [vmem:[%s233 + $0x38] sm:$0xff] %v2397
          %2430 = vst [vmem:[%s233 + $0x40] sm:$0xff] %v2398
          %2431 = vst [vmem:[%s233 + $0x48] sm:$0xff] %v2399
          %2432 = vst [vmem:[%s233 + $0x50] sm:$0xff] %v2400
          %2433 = vst [vmem:[%s233 + $0x58] sm:$0xff] %v2401
          %2434 = vst [vmem:[%s233 + $0x60] sm:$0xff] %v2402
          %2435 = vst [vmem:[%s233 + $0x68] sm:$0xff] %v2403
          %2436 = vst [vmem:[%s233 + $0x70] sm:$0xff] %v2404
          %2437 = vst [vmem:[%s233 + $0x78] sm:$0xff] %v2405
          %2438 = vst [vmem:[%s233 + $0x80] sm:$0xff] %v2406
          %2439 = vst [vmem:[%s233 + $0x88] sm:$0xff] %v2407
          %2440 = vst [vmem:[%s233 + $0x90] sm:$0xff] %v2408
          %2441 = vst [vmem:[%s233 + $0x98] sm:$0xff] %v2409
          %2442 = vst [vmem:[%s233 + $0xa0] sm:$0xff] %v2410
          %2443 = vst [vmem:[%s233 + $0xa8] sm:$0xff] %v2411
          %2444 = vst [vmem:[%s233 + $0xb0] sm:$0xff] %v2412
          %2445 = vst [vmem:[%s233 + $0xb8] sm:$0xff] %v2413
          %2446 = vst [vmem:[%s233 + $0xc0] sm:$0xff] %v2414
          %2447 = vst [vmem:[%s233 + $0xc8] sm:$0xff] %v2415
          %2448 = vst [vmem:[%s233 + $0xd0] sm:$0xff] %v2416
          %2449 = vst [vmem:[%s233 + $0xd8] sm:$0xff] %v2417
          %2450 = vst [vmem:[%s233 + $0xe0] sm:$0xff] %v2418
          %2451 = vst [vmem:[%s233 + $0xe8] sm:$0xff] %v2419
          %2452 = vst [vmem:[%s233 + $0xf0] sm:$0xff] %v2420
          %2453 = vst [vmem:[%s233 + $0xf8] sm:$0xff] %v2421
        $region40: #{_lambda_.21} parent=31 // pred_fallthru
          _
        %s2454 = sand.u32 %s128, 1
        %s2455 = scalar_lea.sflag [#allocation4], %s2454
        %s2456 = sand.u32 %s128, 1
        %s2457 = smul.addr %s2456, 256
        %s2458 = scalar_lea.vmem [#allocation3], %s2457
        // Predicated region
        $region41: #{_lambda_.21} parent=31 // pred_check
          %p2459 = pneg %p138
        $region42: #{_lambda_.21} parent=31 // pred_check_branch
          %2461 = sbr.rel (%p2459) target = $region44
        $region43: #{_lambda_.21} parent=31 // pred_region
          %s2462 = smul.u32 32, %s22
          %s2464 = ssub.s32 4096, 4096
          %2465 = vsyncadd %s2455, %s2464
          %s2466 = sadd.s32 %s23, %s2462
          %s2467 = smul.addr %s2466, 128
          %s2468 = scalar_lea.hbm %s3, %s2467
          %s2469 = sshll.u32 %s2458, 4
          %s2470 = int_to_ptr.vmem [resolvable:$true] %s2469
          %2475 = dma.vmem_to_hbm [thread:$0]  %s2470, 4096, %s2468, %s2455, 128, 128, 8
        $region44: #{_lambda_.21} parent=31 // pred_fallthru
          _
      $region32: #{_lambda_.21} parent=5 // pred_fallthru
        _
      %p2476 = scmp.le.s32.totalorder 2, %s12
      // Predicated region
      $region45: #{_lambda_.21} parent=5 // pred_check
        %p2477 = pneg %p2476
      $region46: #{_lambda_.21} parent=5 // pred_check_branch
        %2479 = sbr.rel (%p2477) target = $region48
      $region47: #{_lambda_.21} parent=5 // pred_region
        %s2480 = ssub.s32 %s12, 2
        // Predicated region
        $region49: #{_lambda_.21} parent=47 // pred_check
          %p2481 = pneg %p144
        $region50: #{_lambda_.21} parent=47 // pred_check_branch
          %2483 = sbr.rel (%p2481) target = $region52
        $region51: #{_lambda_.21} parent=47 // pred_region
          %s2484 = sand.u32 %s129, 1
          %s2485 = scalar_lea.sflag [#allocation4], %s2484
          %s2486 = sand.u32 %s129, 1
          %s2487 = smul.addr %s2486, 256
          %s2488 = scalar_lea.vmem [#allocation3], %s2487
          %2489 = dma.done %s2485, 4096
        $region52: #{_lambda_.21} parent=47 // pred_fallthru
          _
      $region48: #{_lambda_.21} parent=5 // pred_fallthru
        _
    $region6: #{_lambda_.21} parent=1 // loop_footer
      %s16 = sadd.s32 1, %s12
    $region7: #{_lambda_.21} parent=1 // loop_footer_branch
      %11 = sbr.rel target = $region3
    $region8: #{_lambda_.21} parent=1 // loop_exit
      _
    %2490 = vsyncpa [#allocation4], 1
    %s2491 = scalar_lea.sflag [#allocation4], 1
    %2492 = vsyncpa %s2491, 1

</llo_original>
